<compile_context>
chip_gen: v6e
topology: v6e:2x2x1
jax: 0.10.0
libtpu: 0.0.40
codegen_flags: <defaults>
</compile_context>

<pallas_src>
import math

import jax
import jax.numpy as jnp
from jax.experimental import pallas as pl
from jax.experimental.pallas import tpu as pltpu

# ----------------------------- hyper-parameters ------------------------------
VOCAB_SIZE = 100
D_MODEL = 32
NUM_HEADS = 4
NUM_DEC_LAYERS = 2
DIM_FF = 64
MAX_SEQ = 8
NCLASS = 5
HEAD_DIM = D_MODEL // NUM_HEADS
NEG_INF = -1e9  # used in place of float('-inf') for numerical safety


def _round_up(x, m):
    return (x + m - 1) // m * m


VOCAB_PAD = _round_up(VOCAB_SIZE, 128)  # lane-aligned one-hot / embedding rows


# ------------------------- fused forward Pallas kernel ------------------------
def _make_forward_kernel(treedef, n_params, S):
    """One grid step == one batch element; whole forward fused in VMEM."""
    sqrt_d = math.sqrt(D_MODEL)
    inv_sqrt_dh = 1.0 / math.sqrt(HEAD_DIM)

    def dot(a, b):
        return jnp.dot(a, b, preferred_element_type=jnp.float32)

    def kernel(*refs):
        ids_ref, src_mask_ref, tgt_mask_ref = refs[0], refs[1], refs[2]
        param_refs = refs[3:3 + n_params]
        out_ref, attn_ref = refs[3 + n_params], refs[4 + n_params]
        p = jax.tree_util.tree_unflatten(treedef, param_refs)

        def layer_norm(x, g_ref, b_ref):
            mu = jnp.mean(x, axis=-1, keepdims=True)
            var = jnp.mean((x - mu) ** 2, axis=-1, keepdims=True)
            return (x - mu) * jax.lax.rsqrt(var + 1e-5) * g_ref[...] + b_ref[...]

        def feed_forward(x, lp):
            h = dot(x, lp["ff_w1"][...]) + lp["ff_b1"][...]
            h = jnp.maximum(h, 0.0)  # ReLU
            return dot(h, lp["ff_w2"][...]) + lp["ff_b2"][...]

        def mha(xq, xkv, ap, mask, attn_out=None):
            wqkv = ap["wqkv"][...]          # (D, 3D) fused projection
            bqkv = ap["bqkv"][...]          # (1, 3D)
            if xq is xkv:                   # self-attention: single fused QKV matmul
                qkv = dot(xq, wqkv) + bqkv
                q = qkv[:, :D_MODEL]
                k = qkv[:, D_MODEL:2 * D_MODEL]
                v = qkv[:, 2 * D_MODEL:]
            else:                           # cross-attention: Q from xq, fused KV from xkv
                q = dot(xq, wqkv[:, :D_MODEL]) + bqkv[:, :D_MODEL]
                kv = dot(xkv, wqkv[:, D_MODEL:]) + bqkv[:, D_MODEL:]
                k = kv[:, :D_MODEL]
                v = kv[:, D_MODEL:]
            head_outs = []
            for h in range(NUM_HEADS):      # static unroll over heads (H=4)
                sl = slice(h * HEAD_DIM, (h + 1) * HEAD_DIM)
                qh, kh, vh = q[:, sl], k[:, sl], v[:, sl]
                s = jax.lax.dot_general(
                    qh, kh, (((1,), (1,)), ((), ())),
                    preferred_element_type=jnp.float32) * inv_sqrt_dh
                if mask is not None:
                    s = s + mask
                s = s - jnp.max(s, axis=-1, keepdims=True)
                e = jnp.exp(s)
                w = e * pl.reciprocal(jnp.sum(e, axis=-1, keepdims=True), approx=True)
                if attn_out is not None:    # only the last cross-attn is written out
                    attn_out[h] = w
                head_outs.append(dot(w, vh))
            ctx = jnp.concatenate(head_outs, axis=-1)        # (S, D)
            return dot(ctx, ap["wo"][...]) + ap["bo"][...]

        # ---- token one-hot (shared by encoder & decoder embeddings) ----
        ids = ids_ref[...]                                   # (S, 1) int32
        vocab_iota = jax.lax.broadcasted_iota(jnp.int32, (S, VOCAB_PAD), 1)
        onehot = (vocab_iota == ids).astype(jnp.float32)     # (S, VOCAB_PAD)

        # ---- encoder: embedding * sqrt(d) -> one post-norm encoder layer ----
        x = dot(onehot, p["embedding"][...]) * sqrt_d        # (S, D)
        ep = p["encoder"]
        a = mha(x, x, ep["self_attn"], mask=None)            # unmasked self-attn
        x = layer_norm(x + a, ep["ln1_g"], ep["ln1_b"])
        f = feed_forward(x, ep)
        enc = layer_norm(x + f, ep["ln2_g"], ep["ln2_b"])

        # ---- decoder: own embedding + sinusoidal PE, N post-norm layers ----
        dp = p["decoder"]
        y = dot(onehot, dp["embedding"][...]) * sqrt_d + dp["pos_encoding"][...]
        src_mask = src_mask_ref[...]
        tgt_mask = tgt_mask_ref[...]
        n_layers = len(dp["layers"])
        for li, lp in enumerate(dp["layers"]):
            a1 = mha(y, y, lp["self_attn"], mask=tgt_mask)
            y = layer_norm(y + a1, lp["ln1_g"], lp["ln1_b"])
            last = (li == n_layers - 1)
            a2 = mha(y, enc, lp["cross_attn"], mask=src_mask,
                     attn_out=attn_ref if last else None)
            y = layer_norm(y + a2, lp["ln2_g"], lp["ln2_b"])
            f = feed_forward(y, lp)
            y = layer_norm(y + f, lp["ln3_g"], lp["ln3_b"])

        # ---- per-token classification head ----
        out_ref[...] = dot(y, dp["fc_w"][...]) + dp["fc_b"][...]

    return kernel


# ------------------------------- forward wrapper ------------------------------
def _prep_kernel_params(params, S):
    """Pad vocab tables to a lane multiple and slice PE to the live length."""
    pad = VOCAB_PAD - VOCAB_SIZE
    dec = dict(params["decoder"])
    dec["embedding"] = jnp.pad(dec["embedding"], ((0, pad), (0, 0)))
    dec["pos_encoding"] = dec["pos_encoding"][:S]
    kp = dict(params)
    kp["embedding"] = jnp.pad(params["embedding"], ((0, pad), (0, 0)))
    kp["decoder"] = dec
    return kp


def transformer_forward(params, src_input_ids, encoder_outputs, src_mask, tgt_mask):
    # `encoder_outputs` argument is shadowed (unused), exactly as in the reference.
    del encoder_outputs
    B, S = src_input_ids.shape

    kernel_params = _prep_kernel_params(params, S)
    leaves, treedef = jax.tree_util.tree_flatten(kernel_params)
    n_params = len(leaves)

    ids2d = src_input_ids.reshape(B * S, 1).astype(jnp.int32)
    src_mask = src_mask.astype(jnp.float32)
    tgt_mask = tgt_mask.astype(jnp.float32)

    def resident_spec(shape):  # full-array block, same block every grid step
        nd = len(shape)
        return pl.BlockSpec(shape, lambda b, _nd=nd: (0,) * _nd)

    in_specs = (
        [pl.BlockSpec((S, 1), lambda b: (b, 0)),      # this batch element's token ids
         pl.BlockSpec((S, S), lambda b: (0, 0)),      # src_mask (shared)
         pl.BlockSpec((S, S), lambda b: (0, 0))]      # tgt_mask (shared)
        + [resident_spec(leaf.shape) for leaf in leaves]
    )
    out_specs = (
        pl.BlockSpec((S, NCLASS), lambda b: (b, 0)),
        pl.BlockSpec((NUM_HEADS, S, S), lambda b: (b, 0, 0)),
    )

    out2d, attn3d = pl.pallas_call(
        _make_forward_kernel(treedef, n_params, S),
        grid=(B,),
        out_shape=(
            jax.ShapeDtypeStruct((B * S, NCLASS), jnp.float32),
            jax.ShapeDtypeStruct((B * NUM_HEADS, S, S), jnp.float32),
        ),
        in_specs=in_specs,
        out_specs=out_specs,
        compiler_params=pltpu.CompilerParams(
            dimension_semantics=("parallel",)),  # v7x: one TC per batch element
    )(ids2d, src_mask, tgt_mask, *leaves)

    output = out2d.reshape(B, S, NCLASS)
    attn_weights = attn3d.reshape(B, NUM_HEADS, S, S)
    return output, attn_weights


# ------------------------------- parameter init -------------------------------
def _dense(key, fan_in, fan_out):
    w = jax.random.normal(key, (fan_in, fan_out), jnp.float32) * 0.02
    b = jnp.zeros((1, fan_out), jnp.float32)
    return w, b


def _mha_params(key):
    k_qkv, k_o = jax.random.split(key)
    wqkv, bqkv = _dense(k_qkv, D_MODEL, 3 * D_MODEL)   # fused Q|K|V projection
    wo, bo = _dense(k_o, D_MODEL, D_MODEL)
    return {"wqkv": wqkv, "bqkv": bqkv, "wo": wo, "bo": bo}


def _ln_params():
    return jnp.ones((1, D_MODEL), jnp.float32), jnp.zeros((1, D_MODEL), jnp.float32)


def _enc_layer_params(key):
    k1, k2, k3 = jax.random.split(key, 3)
    w1, b1 = _dense(k2, D_MODEL, DIM_FF)
    w2, b2 = _dense(k3, DIM_FF, D_MODEL)
    g1, be1 = _ln_params()
    g2, be2 = _ln_params()
    return {"self_attn": _mha_params(k1),
            "ff_w1": w1, "ff_b1": b1, "ff_w2": w2, "ff_b2": b2,
            "ln1_g": g1, "ln1_b": be1, "ln2_g": g2, "ln2_b": be2}


def _dec_layer_params(key):
    k1, k2, k3, k4 = jax.random.split(key, 4)
    w1, b1 = _dense(k3, D_MODEL, DIM_FF)
    w2, b2 = _dense(k4, DIM_FF, D_MODEL)
    g1, be1 = _ln_params()
    g2, be2 = _ln_params()
    g3, be3 = _ln_params()
    return {"self_attn": _mha_params(k1), "cross_attn": _mha_params(k2),
            "ff_w1": w1, "ff_b1": b1, "ff_w2": w2, "ff_b2": b2,
            "ln1_g": g1, "ln1_b": be1, "ln2_g": g2, "ln2_b": be2,
            "ln3_g": g3, "ln3_b": be3}


def _positional_encoding(max_len, d_model):
    pos = jnp.arange(max_len, dtype=jnp.float32)[:, None]
    div = jnp.exp(jnp.arange(0, d_model, 2, dtype=jnp.float32) * (-math.log(10000.0) / d_model))
    pe = jnp.zeros((max_len, d_model), jnp.float32)
    pe = pe.at[:, 0::2].set(jnp.sin(pos * div))
    pe = pe.at[:, 1::2].set(jnp.cos(pos * div))
    return pe


def init_params(key):
    k_emb, k_dec_emb, k_enc, k_dec, k_fc = jax.random.split(key, 5)
    dec_layer_keys = jax.random.split(k_dec, NUM_DEC_LAYERS)
    fc_w, fc_b = _dense(k_fc, D_MODEL, NCLASS)
    return {
        "embedding": jax.random.normal(k_emb, (VOCAB_SIZE, D_MODEL), jnp.float32) * 0.02,
        "encoder": _enc_layer_params(k_enc),
        "decoder": {
            "embedding": jax.random.normal(k_dec_emb, (VOCAB_SIZE, D_MODEL), jnp.float32) * 0.02,
            "pos_encoding": _positional_encoding(MAX_SEQ, D_MODEL),
            "layers": [_dec_layer_params(k) for k in dec_layer_keys],
            "fc_w": fc_w, "fc_b": fc_b,
        },
    }


def generate_square_subsequent_mask(sz):
    allowed = jnp.tril(jnp.ones((sz, sz), jnp.float32)) == 1.0
    return jnp.where(allowed, 0.0, NEG_INF).astype(jnp.float32)


# ------------------------------------ main ------------------------------------
if __name__ == "__main__":
    key = jax.random.PRNGKey(0)
    k_params, k_ids = jax.random.split(key)
    params = init_params(k_params)

    B, S = 2, MAX_SEQ
    src_input_ids = jax.random.randint(k_ids, (B, S), 0, VOCAB_SIZE, dtype=jnp.int32)
    encoder_outputs_unused = jnp.zeros((B, S, D_MODEL), jnp.float32)  # shadowed in forward
    src_mask = jnp.zeros((S, S), jnp.float32)
    tgt_mask = generate_square_subsequent_mask(S)

    fwd = jax.jit(transformer_forward)
    output, attn_weights = fwd(params, src_input_ids, encoder_outputs_unused, src_mask, tgt_mask)
    jax.block_until_ready((output, attn_weights))

    assert output.shape == (B, S, NCLASS)
    assert attn_weights.shape == (B, NUM_HEADS, S, S)
    print("KERNEL_OK")
</pallas_src>

<mosaic_0001>
module attributes {stable_mosaic.version = 11 : i64} {
  func.func @kernel(%arg0: i32, %arg1: memref<8x1xi32, #tpu.memory_space<vmem>>, %arg2: memref<8x8xf32, #tpu.memory_space<vmem>>, %arg3: memref<8x8xf32, #tpu.memory_space<vmem>>, %arg4: memref<128x32xf32, #tpu.memory_space<vmem>>, %arg5: memref<1x5xf32, #tpu.memory_space<vmem>>, %arg6: memref<32x5xf32, #tpu.memory_space<vmem>>, %arg7: memref<1x32xf32, #tpu.memory_space<vmem>>, %arg8: memref<1x96xf32, #tpu.memory_space<vmem>>, %arg9: memref<32x32xf32, #tpu.memory_space<vmem>>, %arg10: memref<32x96xf32, #tpu.memory_space<vmem>>, %arg11: memref<1x64xf32, #tpu.memory_space<vmem>>, %arg12: memref<1x32xf32, #tpu.memory_space<vmem>>, %arg13: memref<32x64xf32, #tpu.memory_space<vmem>>, %arg14: memref<64x32xf32, #tpu.memory_space<vmem>>, %arg15: memref<1x32xf32, #tpu.memory_space<vmem>>, %arg16: memref<1x32xf32, #tpu.memory_space<vmem>>, %arg17: memref<1x32xf32, #tpu.memory_space<vmem>>, %arg18: memref<1x32xf32, #tpu.memory_space<vmem>>, %arg19: memref<1x32xf32, #tpu.memory_space<vmem>>, %arg20: memref<1x32xf32, #tpu.memory_space<vmem>>, %arg21: memref<1x32xf32, #tpu.memory_space<vmem>>, %arg22: memref<1x96xf32, #tpu.memory_space<vmem>>, %arg23: memref<32x32xf32, #tpu.memory_space<vmem>>, %arg24: memref<32x96xf32, #tpu.memory_space<vmem>>, %arg25: memref<1x32xf32, #tpu.memory_space<vmem>>, %arg26: memref<1x96xf32, #tpu.memory_space<vmem>>, %arg27: memref<32x32xf32, #tpu.memory_space<vmem>>, %arg28: memref<32x96xf32, #tpu.memory_space<vmem>>, %arg29: memref<1x64xf32, #tpu.memory_space<vmem>>, %arg30: memref<1x32xf32, #tpu.memory_space<vmem>>, %arg31: memref<32x64xf32, #tpu.memory_space<vmem>>, %arg32: memref<64x32xf32, #tpu.memory_space<vmem>>, %arg33: memref<1x32xf32, #tpu.memory_space<vmem>>, %arg34: memref<1x32xf32, #tpu.memory_space<vmem>>, %arg35: memref<1x32xf32, #tpu.memory_space<vmem>>, %arg36: memref<1x32xf32, #tpu.memory_space<vmem>>, %arg37: memref<1x32xf32, #tpu.memory_space<vmem>>, %arg38: memref<1x32xf32, #tpu.memory_space<vmem>>, %arg39: memref<1x32xf32, #tpu.memory_space<vmem>>, %arg40: memref<1x96xf32, #tpu.memory_space<vmem>>, %arg41: memref<32x32xf32, #tpu.memory_space<vmem>>, %arg42: memref<32x96xf32, #tpu.memory_space<vmem>>, %arg43: memref<8x32xf32, #tpu.memory_space<vmem>>, %arg44: memref<128x32xf32, #tpu.memory_space<vmem>>, %arg45: memref<1x64xf32, #tpu.memory_space<vmem>>, %arg46: memref<1x32xf32, #tpu.memory_space<vmem>>, %arg47: memref<32x64xf32, #tpu.memory_space<vmem>>, %arg48: memref<64x32xf32, #tpu.memory_space<vmem>>, %arg49: memref<1x32xf32, #tpu.memory_space<vmem>>, %arg50: memref<1x32xf32, #tpu.memory_space<vmem>>, %arg51: memref<1x32xf32, #tpu.memory_space<vmem>>, %arg52: memref<1x32xf32, #tpu.memory_space<vmem>>, %arg53: memref<1x32xf32, #tpu.memory_space<vmem>>, %arg54: memref<1x96xf32, #tpu.memory_space<vmem>>, %arg55: memref<32x32xf32, #tpu.memory_space<vmem>>, %arg56: memref<32x96xf32, #tpu.memory_space<vmem>>, %arg57: memref<8x5xf32, #tpu.memory_space<vmem>>, %arg58: memref<4x8x8xf32, #tpu.memory_space<vmem>>) attributes {dimension_semantics = [#tpu.dimension_semantics<parallel>], iteration_bounds = array<i64: 2>, scalar_prefetch = 0 : i64, scratch_operands = 0 : i64, tpu.core_type = #tpu.core_type<tc>, window_params = [{transform_indices = @transform_0, window_bounds = array<i64: 8, 1>}, {pipeline_mode = #tpu.pipeline_mode<synchronous>, transform_indices = @transform_1, window_bounds = array<i64: 8, 8>}, {pipeline_mode = #tpu.pipeline_mode<synchronous>, transform_indices = @transform_2, window_bounds = array<i64: 8, 8>}, {pipeline_mode = #tpu.pipeline_mode<synchronous>, transform_indices = @transform_3, window_bounds = array<i64: 128, 32>}, {pipeline_mode = #tpu.pipeline_mode<synchronous>, transform_indices = @transform_4, window_bounds = array<i64: 1, 5>}, {pipeline_mode = #tpu.pipeline_mode<synchronous>, transform_indices = @transform_5, window_bounds = array<i64: 32, 5>}, {pipeline_mode = #tpu.pipeline_mode<synchronous>, transform_indices = @transform_6, window_bounds = array<i64: 1, 32>}, {pipeline_mode = #tpu.pipeline_mode<synchronous>, transform_indices = @transform_7, window_bounds = array<i64: 1, 96>}, {pipeline_mode = #tpu.pipeline_mode<synchronous>, transform_indices = @transform_8, window_bounds = array<i64: 32, 32>}, {pipeline_mode = #tpu.pipeline_mode<synchronous>, transform_indices = @transform_9, window_bounds = array<i64: 32, 96>}, {pipeline_mode = #tpu.pipeline_mode<synchronous>, transform_indices = @transform_10, window_bounds = array<i64: 1, 64>}, {pipeline_mode = #tpu.pipeline_mode<synchronous>, transform_indices = @transform_11, window_bounds = array<i64: 1, 32>}, {pipeline_mode = #tpu.pipeline_mode<synchronous>, transform_indices = @transform_12, window_bounds = array<i64: 32, 64>}, {pipeline_mode = #tpu.pipeline_mode<synchronous>, transform_indices = @transform_13, window_bounds = array<i64: 64, 32>}, {pipeline_mode = #tpu.pipeline_mode<synchronous>, transform_indices = @transform_14, window_bounds = array<i64: 1, 32>}, {pipeline_mode = #tpu.pipeline_mode<synchronous>, transform_indices = @transform_15, window_bounds = array<i64: 1, 32>}, {pipeline_mode = #tpu.pipeline_mode<synchronous>, transform_indices = @transform_16, window_bounds = array<i64: 1, 32>}, {pipeline_mode = #tpu.pipeline_mode<synchronous>, transform_indices = @transform_17, window_bounds = array<i64: 1, 32>}, {pipeline_mode = #tpu.pipeline_mode<synchronous>, transform_indices = @transform_18, window_bounds = array<i64: 1, 32>}, {pipeline_mode = #tpu.pipeline_mode<synchronous>, transform_indices = @transform_19, window_bounds = array<i64: 1, 32>}, {pipeline_mode = #tpu.pipeline_mode<synchronous>, transform_indices = @transform_20, window_bounds = array<i64: 1, 32>}, {pipeline_mode = #tpu.pipeline_mode<synchronous>, transform_indices = @transform_21, window_bounds = array<i64: 1, 96>}, {pipeline_mode = #tpu.pipeline_mode<synchronous>, transform_indices = @transform_22, window_bounds = array<i64: 32, 32>}, {pipeline_mode = #tpu.pipeline_mode<synchronous>, transform_indices = @transform_23, window_bounds = array<i64: 32, 96>}, {pipeline_mode = #tpu.pipeline_mode<synchronous>, transform_indices = @transform_24, window_bounds = array<i64: 1, 32>}, {pipeline_mode = #tpu.pipeline_mode<synchronous>, transform_indices = @transform_25, window_bounds = array<i64: 1, 96>}, {pipeline_mode = #tpu.pipeline_mode<synchronous>, transform_indices = @transform_26, window_bounds = array<i64: 32, 32>}, {pipeline_mode = #tpu.pipeline_mode<synchronous>, transform_indices = @transform_27, window_bounds = array<i64: 32, 96>}, {pipeline_mode = #tpu.pipeline_mode<synchronous>, transform_indices = @transform_28, window_bounds = array<i64: 1, 64>}, {pipeline_mode = #tpu.pipeline_mode<synchronous>, transform_indices = @transform_29, window_bounds = array<i64: 1, 32>}, {pipeline_mode = #tpu.pipeline_mode<synchronous>, transform_indices = @transform_30, window_bounds = array<i64: 32, 64>}, {pipeline_mode = #tpu.pipeline_mode<synchronous>, transform_indices = @transform_31, window_bounds = array<i64: 64, 32>}, {pipeline_mode = #tpu.pipeline_mode<synchronous>, transform_indices = @transform_32, window_bounds = array<i64: 1, 32>}, {pipeline_mode = #tpu.pipeline_mode<synchronous>, transform_indices = @transform_33, window_bounds = array<i64: 1, 32>}, {pipeline_mode = #tpu.pipeline_mode<synchronous>, transform_indices = @transform_34, window_bounds = array<i64: 1, 32>}, {pipeline_mode = #tpu.pipeline_mode<synchronous>, transform_indices = @transform_35, window_bounds = array<i64: 1, 32>}, {pipeline_mode = #tpu.pipeline_mode<synchronous>, transform_indices = @transform_36, window_bounds = array<i64: 1, 32>}, {pipeline_mode = #tpu.pipeline_mode<synchronous>, transform_indices = @transform_37, window_bounds = array<i64: 1, 32>}, {pipeline_mode = #tpu.pipeline_mode<synchronous>, transform_indices = @transform_38, window_bounds = array<i64: 1, 32>}, {pipeline_mode = #tpu.pipeline_mode<synchronous>, transform_indices = @transform_39, window_bounds = array<i64: 1, 96>}, {pipeline_mode = #tpu.pipeline_mode<synchronous>, transform_indices = @transform_40, window_bounds = array<i64: 32, 32>}, {pipeline_mode = #tpu.pipeline_mode<synchronous>, transform_indices = @transform_41, window_bounds = array<i64: 32, 96>}, {pipeline_mode = #tpu.pipeline_mode<synchronous>, transform_indices = @transform_42, window_bounds = array<i64: 8, 32>}, {pipeline_mode = #tpu.pipeline_mode<synchronous>, transform_indices = @transform_43, window_bounds = array<i64: 128, 32>}, {pipeline_mode = #tpu.pipeline_mode<synchronous>, transform_indices = @transform_44, window_bounds = array<i64: 1, 64>}, {pipeline_mode = #tpu.pipeline_mode<synchronous>, transform_indices = @transform_45, window_bounds = array<i64: 1, 32>}, {pipeline_mode = #tpu.pipeline_mode<synchronous>, transform_indices = @transform_46, window_bounds = array<i64: 32, 64>}, {pipeline_mode = #tpu.pipeline_mode<synchronous>, transform_indices = @transform_47, window_bounds = array<i64: 64, 32>}, {pipeline_mode = #tpu.pipeline_mode<synchronous>, transform_indices = @transform_48, window_bounds = array<i64: 1, 32>}, {pipeline_mode = #tpu.pipeline_mode<synchronous>, transform_indices = @transform_49, window_bounds = array<i64: 1, 32>}, {pipeline_mode = #tpu.pipeline_mode<synchronous>, transform_indices = @transform_50, window_bounds = array<i64: 1, 32>}, {pipeline_mode = #tpu.pipeline_mode<synchronous>, transform_indices = @transform_51, window_bounds = array<i64: 1, 32>}, {pipeline_mode = #tpu.pipeline_mode<synchronous>, transform_indices = @transform_52, window_bounds = array<i64: 1, 32>}, {pipeline_mode = #tpu.pipeline_mode<synchronous>, transform_indices = @transform_53, window_bounds = array<i64: 1, 96>}, {pipeline_mode = #tpu.pipeline_mode<synchronous>, transform_indices = @transform_54, window_bounds = array<i64: 32, 32>}, {pipeline_mode = #tpu.pipeline_mode<synchronous>, transform_indices = @transform_55, window_bounds = array<i64: 32, 96>}, {transform_indices = @transform_56, window_bounds = array<i64: 8, 5>}, {transform_indices = @transform_57, window_bounds = array<i64: 4, 8, 8>}]} {
    %c0 = arith.constant 0 : index
    %c0_0 = arith.constant 0 : index
    %0 = vector.load %arg1[%c0, %c0_0] : memref<8x1xi32, #tpu.memory_space<vmem>>, vector<8x1xi32>
    %1 = tpu.iota {dimensions = array<i32: 1>} : vector<8x128xi32>
    %2 = vector.broadcast %0 : vector<8x1xi32> to vector<8x128xi32>
    %3 = arith.cmpi eq, %1, %2 : vector<8x128xi32>
    %4 = arith.extui %3 : vector<8x128xi1> to vector<8x128xi32>
    %5 = arith.sitofp %4 : vector<8x128xi32> to vector<8x128xf32>
    %c0_1 = arith.constant 0 : index
    %c0_2 = arith.constant 0 : index
    %6 = vector.load %arg44[%c0_1, %c0_2] : memref<128x32xf32, #tpu.memory_space<vmem>>, vector<128x32xf32>
    %cst = arith.constant dense<0.000000e+00> : vector<8x32xf32>
    %7 = tpu.matmul %5, %6, %cst {dimension_numbers = #tpu.dot_dimension_numbers<[1], [0], [0], [1], [0, 0, 1, 1], [], []>} : vector<8x128xf32>, vector<128x32xf32>, vector<8x32xf32> -> vector<8x32xf32>
    %cst_3 = arith.constant 5.65685415 : f32
    %8 = vector.broadcast %cst_3 : f32 to vector<8x32xf32>
    %9 = arith.mulf %7, %8 : vector<8x32xf32>
    %c0_4 = arith.constant 0 : index
    %c0_5 = arith.constant 0 : index
    %10 = vector.load %arg56[%c0_4, %c0_5] : memref<32x96xf32, #tpu.memory_space<vmem>>, vector<32x96xf32>
    %c0_6 = arith.constant 0 : index
    %c0_7 = arith.constant 0 : index
    %11 = vector.load %arg54[%c0_6, %c0_7] : memref<1x96xf32, #tpu.memory_space<vmem>>, vector<1x96xf32>
    %cst_8 = arith.constant dense<0.000000e+00> : vector<8x96xf32>
    %12 = tpu.matmul %9, %10, %cst_8 {dimension_numbers = #tpu.dot_dimension_numbers<[1], [0], [0], [1], [0, 0, 1, 1], [], []>} : vector<8x32xf32>, vector<32x96xf32>, vector<8x96xf32> -> vector<8x96xf32>
    %13 = vector.broadcast %11 : vector<1x96xf32> to vector<8x96xf32>
    %14 = arith.addf %12, %13 : vector<8x96xf32>
    %15 = vector.extract_strided_slice %14 {offsets = [0, 0], sizes = [8, 32], strides = [1, 1]} : vector<8x96xf32> to vector<8x32xf32>
    %16 = vector.extract_strided_slice %14 {offsets = [0, 32], sizes = [8, 32], strides = [1, 1]} : vector<8x96xf32> to vector<8x32xf32>
    %17 = vector.extract_strided_slice %14 {offsets = [0, 64], sizes = [8, 32], strides = [1, 1]} : vector<8x96xf32> to vector<8x32xf32>
    %18 = vector.extract_strided_slice %15 {offsets = [0, 0], sizes = [8, 8], strides = [1, 1]} : vector<8x32xf32> to vector<8x8xf32>
    %19 = vector.extract_strided_slice %16 {offsets = [0, 0], sizes = [8, 8], strides = [1, 1]} : vector<8x32xf32> to vector<8x8xf32>
    %20 = vector.extract_strided_slice %17 {offsets = [0, 0], sizes = [8, 8], strides = [1, 1]} : vector<8x32xf32> to vector<8x8xf32>
    %cst_9 = arith.constant dense<0.000000e+00> : vector<8x8xf32>
    %21 = tpu.matmul %18, %19, %cst_9 {dimension_numbers = #tpu.dot_dimension_numbers<[1], [1], [0], [0], [0, 0, 1, 0], [], []>} : vector<8x8xf32>, vector<8x8xf32>, vector<8x8xf32> -> vector<8x8xf32>
    %cst_10 = arith.constant 0.353553385 : f32
    %22 = vector.broadcast %cst_10 : f32 to vector<8x8xf32>
    %23 = arith.mulf %21, %22 : vector<8x8xf32>
    %cst_11 = arith.constant dense<0xFF800000> : vector<8xf32>
    %24 = vector.multi_reduction <maximumf>, %23, %cst_11 [1] : vector<8x8xf32> to vector<8xf32>
    %25 = vector.shape_cast %24 : vector<8xf32> to vector<8x1xf32>
    %26 = vector.broadcast %25 : vector<8x1xf32> to vector<8x8xf32>
    %27 = arith.subf %23, %26 : vector<8x8xf32>
    %28 = math.exp %27 : vector<8x8xf32>
    %cst_12 = arith.constant dense<0.000000e+00> : vector<8xf32>
    %29 = vector.multi_reduction <add>, %28, %cst_12 [1] : vector<8x8xf32> to vector<8xf32>
    %30 = vector.shape_cast %29 : vector<8xf32> to vector<8x1xf32>
    %31 = tpu.reciprocal %30 {approx = true} : vector<8x1xf32> -> vector<8x1xf32>
    %32 = vector.broadcast %31 : vector<8x1xf32> to vector<8x8xf32>
    %33 = arith.mulf %28, %32 : vector<8x8xf32>
    %cst_13 = arith.constant dense<0.000000e+00> : vector<8x8xf32>
    %34 = tpu.matmul %33, %20, %cst_13 {dimension_numbers = #tpu.dot_dimension_numbers<[1], [0], [0], [1], [0, 0, 1, 1], [], []>} : vector<8x8xf32>, vector<8x8xf32>, vector<8x8xf32> -> vector<8x8xf32>
    %35 = vector.extract_strided_slice %15 {offsets = [0, 8], sizes = [8, 8], strides = [1, 1]} : vector<8x32xf32> to vector<8x8xf32>
    %36 = vector.extract_strided_slice %16 {offsets = [0, 8], sizes = [8, 8], strides = [1, 1]} : vector<8x32xf32> to vector<8x8xf32>
    %37 = vector.extract_strided_slice %17 {offsets = [0, 8], sizes = [8, 8], strides = [1, 1]} : vector<8x32xf32> to vector<8x8xf32>
    %cst_14 = arith.constant dense<0.000000e+00> : vector<8x8xf32>
    %38 = tpu.matmul %35, %36, %cst_14 {dimension_numbers = #tpu.dot_dimension_numbers<[1], [1], [0], [0], [0, 0, 1, 0], [], []>} : vector<8x8xf32>, vector<8x8xf32>, vector<8x8xf32> -> vector<8x8xf32>
    %cst_15 = arith.constant 0.353553385 : f32
    %39 = vector.broadcast %cst_15 : f32 to vector<8x8xf32>
    %40 = arith.mulf %38, %39 : vector<8x8xf32>
    %cst_16 = arith.constant dense<0xFF800000> : vector<8xf32>
    %41 = vector.multi_reduction <maximumf>, %40, %cst_16 [1] : vector<8x8xf32> to vector<8xf32>
    %42 = vector.shape_cast %41 : vector<8xf32> to vector<8x1xf32>
    %43 = vector.broadcast %42 : vector<8x1xf32> to vector<8x8xf32>
    %44 = arith.subf %40, %43 : vector<8x8xf32>
    %45 = math.exp %44 : vector<8x8xf32>
    %cst_17 = arith.constant dense<0.000000e+00> : vector<8xf32>
    %46 = vector.multi_reduction <add>, %45, %cst_17 [1] : vector<8x8xf32> to vector<8xf32>
    %47 = vector.shape_cast %46 : vector<8xf32> to vector<8x1xf32>
    %48 = tpu.reciprocal %47 {approx = true} : vector<8x1xf32> -> vector<8x1xf32>
    %49 = vector.broadcast %48 : vector<8x1xf32> to vector<8x8xf32>
    %50 = arith.mulf %45, %49 : vector<8x8xf32>
    %cst_18 = arith.constant dense<0.000000e+00> : vector<8x8xf32>
    %51 = tpu.matmul %50, %37, %cst_18 {dimension_numbers = #tpu.dot_dimension_numbers<[1], [0], [0], [1], [0, 0, 1, 1], [], []>} : vector<8x8xf32>, vector<8x8xf32>, vector<8x8xf32> -> vector<8x8xf32>
    %52 = vector.extract_strided_slice %15 {offsets = [0, 16], sizes = [8, 8], strides = [1, 1]} : vector<8x32xf32> to vector<8x8xf32>
    %53 = vector.extract_strided_slice %16 {offsets = [0, 16], sizes = [8, 8], strides = [1, 1]} : vector<8x32xf32> to vector<8x8xf32>
    %54 = vector.extract_strided_slice %17 {offsets = [0, 16], sizes = [8, 8], strides = [1, 1]} : vector<8x32xf32> to vector<8x8xf32>
    %cst_19 = arith.constant dense<0.000000e+00> : vector<8x8xf32>
    %55 = tpu.matmul %52, %53, %cst_19 {dimension_numbers = #tpu.dot_dimension_numbers<[1], [1], [0], [0], [0, 0, 1, 0], [], []>} : vector<8x8xf32>, vector<8x8xf32>, vector<8x8xf32> -> vector<8x8xf32>
    %cst_20 = arith.constant 0.353553385 : f32
    %56 = vector.broadcast %cst_20 : f32 to vector<8x8xf32>
    %57 = arith.mulf %55, %56 : vector<8x8xf32>
    %cst_21 = arith.constant dense<0xFF800000> : vector<8xf32>
    %58 = vector.multi_reduction <maximumf>, %57, %cst_21 [1] : vector<8x8xf32> to vector<8xf32>
    %59 = vector.shape_cast %58 : vector<8xf32> to vector<8x1xf32>
    %60 = vector.broadcast %59 : vector<8x1xf32> to vector<8x8xf32>
    %61 = arith.subf %57, %60 : vector<8x8xf32>
    %62 = math.exp %61 : vector<8x8xf32>
    %cst_22 = arith.constant dense<0.000000e+00> : vector<8xf32>
    %63 = vector.multi_reduction <add>, %62, %cst_22 [1] : vector<8x8xf32> to vector<8xf32>
    %64 = vector.shape_cast %63 : vector<8xf32> to vector<8x1xf32>
    %65 = tpu.reciprocal %64 {approx = true} : vector<8x1xf32> -> vector<8x1xf32>
    %66 = vector.broadcast %65 : vector<8x1xf32> to vector<8x8xf32>
    %67 = arith.mulf %62, %66 : vector<8x8xf32>
    %cst_23 = arith.constant dense<0.000000e+00> : vector<8x8xf32>
    %68 = tpu.matmul %67, %54, %cst_23 {dimension_numbers = #tpu.dot_dimension_numbers<[1], [0], [0], [1], [0, 0, 1, 1], [], []>} : vector<8x8xf32>, vector<8x8xf32>, vector<8x8xf32> -> vector<8x8xf32>
    %69 = vector.extract_strided_slice %15 {offsets = [0, 24], sizes = [8, 8], strides = [1, 1]} : vector<8x32xf32> to vector<8x8xf32>
    %70 = vector.extract_strided_slice %16 {offsets = [0, 24], sizes = [8, 8], strides = [1, 1]} : vector<8x32xf32> to vector<8x8xf32>
    %71 = vector.extract_strided_slice %17 {offsets = [0, 24], sizes = [8, 8], strides = [1, 1]} : vector<8x32xf32> to vector<8x8xf32>
    %cst_24 = arith.constant dense<0.000000e+00> : vector<8x8xf32>
    %72 = tpu.matmul %69, %70, %cst_24 {dimension_numbers = #tpu.dot_dimension_numbers<[1], [1], [0], [0], [0, 0, 1, 0], [], []>} : vector<8x8xf32>, vector<8x8xf32>, vector<8x8xf32> -> vector<8x8xf32>
    %cst_25 = arith.constant 0.353553385 : f32
    %73 = vector.broadcast %cst_25 : f32 to vector<8x8xf32>
    %74 = arith.mulf %72, %73 : vector<8x8xf32>
    %cst_26 = arith.constant dense<0xFF800000> : vector<8xf32>
    %75 = vector.multi_reduction <maximumf>, %74, %cst_26 [1] : vector<8x8xf32> to vector<8xf32>
    %76 = vector.shape_cast %75 : vector<8xf32> to vector<8x1xf32>
    %77 = vector.broadcast %76 : vector<8x1xf32> to vector<8x8xf32>
    %78 = arith.subf %74, %77 : vector<8x8xf32>
    %79 = math.exp %78 : vector<8x8xf32>
    %cst_27 = arith.constant dense<0.000000e+00> : vector<8xf32>
    %80 = vector.multi_reduction <add>, %79, %cst_27 [1] : vector<8x8xf32> to vector<8xf32>
    %81 = vector.shape_cast %80 : vector<8xf32> to vector<8x1xf32>
    %82 = tpu.reciprocal %81 {approx = true} : vector<8x1xf32> -> vector<8x1xf32>
    %83 = vector.broadcast %82 : vector<8x1xf32> to vector<8x8xf32>
    %84 = arith.mulf %79, %83 : vector<8x8xf32>
    %cst_28 = arith.constant dense<0.000000e+00> : vector<8x8xf32>
    %85 = tpu.matmul %84, %71, %cst_28 {dimension_numbers = #tpu.dot_dimension_numbers<[1], [0], [0], [1], [0, 0, 1, 1], [], []>} : vector<8x8xf32>, vector<8x8xf32>, vector<8x8xf32> -> vector<8x8xf32>
    %86 = tpu.concatenate %34, %51, %68, %85 in 1 : vector<8x8xf32>, vector<8x8xf32>, vector<8x8xf32>, vector<8x8xf32> -> vector<8x32xf32>
    %c0_29 = arith.constant 0 : index
    %c0_30 = arith.constant 0 : index
    %87 = vector.load %arg55[%c0_29, %c0_30] : memref<32x32xf32, #tpu.memory_space<vmem>>, vector<32x32xf32>
    %cst_31 = arith.constant dense<0.000000e+00> : vector<8x32xf32>
    %88 = tpu.matmul %86, %87, %cst_31 {dimension_numbers = #tpu.dot_dimension_numbers<[1], [0], [0], [1], [0, 0, 1, 1], [], []>} : vector<8x32xf32>, vector<32x32xf32>, vector<8x32xf32> -> vector<8x32xf32>
    %c0_32 = arith.constant 0 : index
    %c0_33 = arith.constant 0 : index
    %89 = vector.load %arg53[%c0_32, %c0_33] : memref<1x32xf32, #tpu.memory_space<vmem>>, vector<1x32xf32>
    %90 = vector.broadcast %89 : vector<1x32xf32> to vector<8x32xf32>
    %91 = arith.addf %88, %90 : vector<8x32xf32>
    %92 = arith.addf %9, %91 : vector<8x32xf32>
    %cst_34 = arith.constant dense<0.000000e+00> : vector<8xf32>
    %93 = vector.multi_reduction <add>, %92, %cst_34 [1] : vector<8x32xf32> to vector<8xf32>
    %94 = vector.shape_cast %93 : vector<8xf32> to vector<8x1xf32>
    %cst_35 = arith.constant 3.200000e+01 : f32
    %95 = vector.broadcast %cst_35 : f32 to vector<8x1xf32>
    %96 = arith.divf %94, %95 : vector<8x1xf32>
    %97 = vector.broadcast %96 : vector<8x1xf32> to vector<8x32xf32>
    %98 = arith.subf %92, %97 : vector<8x32xf32>
    %99 = arith.mulf %98, %98 : vector<8x32xf32>
    %cst_36 = arith.constant dense<0.000000e+00> : vector<8xf32>
    %100 = vector.multi_reduction <add>, %99, %cst_36 [1] : vector<8x32xf32> to vector<8xf32>
    %101 = vector.shape_cast %100 : vector<8xf32> to vector<8x1xf32>
    %cst_37 = arith.constant 3.200000e+01 : f32
    %102 = vector.broadcast %cst_37 : f32 to vector<8x1xf32>
    %103 = arith.divf %101, %102 : vector<8x1xf32>
    %104 = vector.broadcast %96 : vector<8x1xf32> to vector<8x32xf32>
    %105 = arith.subf %92, %104 : vector<8x32xf32>
    %cst_38 = arith.constant 9.99999974E-6 : f32
    %106 = vector.broadcast %cst_38 : f32 to vector<8x1xf32>
    %107 = arith.addf %103, %106 : vector<8x1xf32>
    %108 = math.rsqrt %107 : vector<8x1xf32>
    %109 = vector.broadcast %108 : vector<8x1xf32> to vector<8x32xf32>
    %110 = arith.mulf %105, %109 : vector<8x32xf32>
    %c0_39 = arith.constant 0 : index
    %c0_40 = arith.constant 0 : index
    %111 = vector.load %arg50[%c0_39, %c0_40] : memref<1x32xf32, #tpu.memory_space<vmem>>, vector<1x32xf32>
    %112 = vector.broadcast %111 : vector<1x32xf32> to vector<8x32xf32>
    %113 = arith.mulf %110, %112 : vector<8x32xf32>
    %c0_41 = arith.constant 0 : index
    %c0_42 = arith.constant 0 : index
    %114 = vector.load %arg49[%c0_41, %c0_42] : memref<1x32xf32, #tpu.memory_space<vmem>>, vector<1x32xf32>
    %115 = vector.broadcast %114 : vector<1x32xf32> to vector<8x32xf32>
    %116 = arith.addf %113, %115 : vector<8x32xf32>
    %c0_43 = arith.constant 0 : index
    %c0_44 = arith.constant 0 : index
    %117 = vector.load %arg47[%c0_43, %c0_44] : memref<32x64xf32, #tpu.memory_space<vmem>>, vector<32x64xf32>
    %cst_45 = arith.constant dense<0.000000e+00> : vector<8x64xf32>
    %118 = tpu.matmul %116, %117, %cst_45 {dimension_numbers = #tpu.dot_dimension_numbers<[1], [0], [0], [1], [0, 0, 1, 1], [], []>} : vector<8x32xf32>, vector<32x64xf32>, vector<8x64xf32> -> vector<8x64xf32>
    %c0_46 = arith.constant 0 : index
    %c0_47 = arith.constant 0 : index
    %119 = vector.load %arg45[%c0_46, %c0_47] : memref<1x64xf32, #tpu.memory_space<vmem>>, vector<1x64xf32>
    %120 = vector.broadcast %119 : vector<1x64xf32> to vector<8x64xf32>
    %121 = arith.addf %118, %120 : vector<8x64xf32>
    %cst_48 = arith.constant 0.000000e+00 : f32
    %122 = vector.broadcast %cst_48 : f32 to vector<8x64xf32>
    %123 = arith.maximumf %121, %122 : vector<8x64xf32>
    %c0_49 = arith.constant 0 : index
    %c0_50 = arith.constant 0 : index
    %124 = vector.load %arg48[%c0_49, %c0_50] : memref<64x32xf32, #tpu.memory_space<vmem>>, vector<64x32xf32>
    %cst_51 = arith.constant dense<0.000000e+00> : vector<8x32xf32>
    %125 = tpu.matmul %123, %124, %cst_51 {dimension_numbers = #tpu.dot_dimension_numbers<[1], [0], [0], [1], [0, 0, 1, 1], [], []>} : vector<8x64xf32>, vector<64x32xf32>, vector<8x32xf32> -> vector<8x32xf32>
    %c0_52 = arith.constant 0 : index
    %c0_53 = arith.constant 0 : index
    %126 = vector.load %arg46[%c0_52, %c0_53] : memref<1x32xf32, #tpu.memory_space<vmem>>, vector<1x32xf32>
    %127 = vector.broadcast %126 : vector<1x32xf32> to vector<8x32xf32>
    %128 = arith.addf %125, %127 : vector<8x32xf32>
    %129 = arith.addf %116, %128 : vector<8x32xf32>
    %cst_54 = arith.constant dense<0.000000e+00> : vector<8xf32>
    %130 = vector.multi_reduction <add>, %129, %cst_54 [1] : vector<8x32xf32> to vector<8xf32>
    %131 = vector.shape_cast %130 : vector<8xf32> to vector<8x1xf32>
    %cst_55 = arith.constant 3.200000e+01 : f32
    %132 = vector.broadcast %cst_55 : f32 to vector<8x1xf32>
    %133 = arith.divf %131, %132 : vector<8x1xf32>
    %134 = vector.broadcast %133 : vector<8x1xf32> to vector<8x32xf32>
    %135 = arith.subf %129, %134 : vector<8x32xf32>
    %136 = arith.mulf %135, %135 : vector<8x32xf32>
    %cst_56 = arith.constant dense<0.000000e+00> : vector<8xf32>
    %137 = vector.multi_reduction <add>, %136, %cst_56 [1] : vector<8x32xf32> to vector<8xf32>
    %138 = vector.shape_cast %137 : vector<8xf32> to vector<8x1xf32>
    %cst_57 = arith.constant 3.200000e+01 : f32
    %139 = vector.broadcast %cst_57 : f32 to vector<8x1xf32>
    %140 = arith.divf %138, %139 : vector<8x1xf32>
    %141 = vector.broadcast %133 : vector<8x1xf32> to vector<8x32xf32>
    %142 = arith.subf %129, %141 : vector<8x32xf32>
    %cst_58 = arith.constant 9.99999974E-6 : f32
    %143 = vector.broadcast %cst_58 : f32 to vector<8x1xf32>
    %144 = arith.addf %140, %143 : vector<8x1xf32>
    %145 = math.rsqrt %144 : vector<8x1xf32>
    %146 = vector.broadcast %145 : vector<8x1xf32> to vector<8x32xf32>
    %147 = arith.mulf %142, %146 : vector<8x32xf32>
    %c0_59 = arith.constant 0 : index
    %c0_60 = arith.constant 0 : index
    %148 = vector.load %arg52[%c0_59, %c0_60] : memref<1x32xf32, #tpu.memory_space<vmem>>, vector<1x32xf32>
    %149 = vector.broadcast %148 : vector<1x32xf32> to vector<8x32xf32>
    %150 = arith.mulf %147, %149 : vector<8x32xf32>
    %c0_61 = arith.constant 0 : index
    %c0_62 = arith.constant 0 : index
    %151 = vector.load %arg51[%c0_61, %c0_62] : memref<1x32xf32, #tpu.memory_space<vmem>>, vector<1x32xf32>
    %152 = vector.broadcast %151 : vector<1x32xf32> to vector<8x32xf32>
    %153 = arith.addf %150, %152 : vector<8x32xf32>
    %c0_63 = arith.constant 0 : index
    %c0_64 = arith.constant 0 : index
    %154 = vector.load %arg4[%c0_63, %c0_64] : memref<128x32xf32, #tpu.memory_space<vmem>>, vector<128x32xf32>
    %cst_65 = arith.constant dense<0.000000e+00> : vector<8x32xf32>
    %155 = tpu.matmul %5, %154, %cst_65 {dimension_numbers = #tpu.dot_dimension_numbers<[1], [0], [0], [1], [0, 0, 1, 1], [], []>} : vector<8x128xf32>, vector<128x32xf32>, vector<8x32xf32> -> vector<8x32xf32>
    %cst_66 = arith.constant 5.65685415 : f32
    %156 = vector.broadcast %cst_66 : f32 to vector<8x32xf32>
    %157 = arith.mulf %155, %156 : vector<8x32xf32>
    %c0_67 = arith.constant 0 : index
    %c0_68 = arith.constant 0 : index
    %158 = vector.load %arg43[%c0_67, %c0_68] : memref<8x32xf32, #tpu.memory_space<vmem>>, vector<8x32xf32>
    %159 = arith.addf %157, %158 : vector<8x32xf32>
    %c0_69 = arith.constant 0 : index
    %c0_70 = arith.constant 0 : index
    %160 = vector.load %arg2[%c0_69, %c0_70] : memref<8x8xf32, #tpu.memory_space<vmem>>, vector<8x8xf32>
    %c0_71 = arith.constant 0 : index
    %c0_72 = arith.constant 0 : index
    %161 = vector.load %arg3[%c0_71, %c0_72] : memref<8x8xf32, #tpu.memory_space<vmem>>, vector<8x8xf32>
    %c0_73 = arith.constant 0 : index
    %c0_74 = arith.constant 0 : index
    %162 = vector.load %arg24[%c0_73, %c0_74] : memref<32x96xf32, #tpu.memory_space<vmem>>, vector<32x96xf32>
    %c0_75 = arith.constant 0 : index
    %c0_76 = arith.constant 0 : index
    %163 = vector.load %arg22[%c0_75, %c0_76] : memref<1x96xf32, #tpu.memory_space<vmem>>, vector<1x96xf32>
    %cst_77 = arith.constant dense<0.000000e+00> : vector<8x96xf32>
    %164 = tpu.matmul %159, %162, %cst_77 {dimension_numbers = #tpu.dot_dimension_numbers<[1], [0], [0], [1], [0, 0, 1, 1], [], []>} : vector<8x32xf32>, vector<32x96xf32>, vector<8x96xf32> -> vector<8x96xf32>
    %165 = vector.broadcast %163 : vector<1x96xf32> to vector<8x96xf32>
    %166 = arith.addf %164, %165 : vector<8x96xf32>
    %167 = vector.extract_strided_slice %166 {offsets = [0, 0], sizes = [8, 32], strides = [1, 1]} : vector<8x96xf32> to vector<8x32xf32>
    %168 = vector.extract_strided_slice %166 {offsets = [0, 32], sizes = [8, 32], strides = [1, 1]} : vector<8x96xf32> to vector<8x32xf32>
    %169 = vector.extract_strided_slice %166 {offsets = [0, 64], sizes = [8, 32], strides = [1, 1]} : vector<8x96xf32> to vector<8x32xf32>
    %170 = vector.extract_strided_slice %167 {offsets = [0, 0], sizes = [8, 8], strides = [1, 1]} : vector<8x32xf32> to vector<8x8xf32>
    %171 = vector.extract_strided_slice %168 {offsets = [0, 0], sizes = [8, 8], strides = [1, 1]} : vector<8x32xf32> to vector<8x8xf32>
    %172 = vector.extract_strided_slice %169 {offsets = [0, 0], sizes = [8, 8], strides = [1, 1]} : vector<8x32xf32> to vector<8x8xf32>
    %cst_78 = arith.constant dense<0.000000e+00> : vector<8x8xf32>
    %173 = tpu.matmul %170, %171, %cst_78 {dimension_numbers = #tpu.dot_dimension_numbers<[1], [1], [0], [0], [0, 0, 1, 0], [], []>} : vector<8x8xf32>, vector<8x8xf32>, vector<8x8xf32> -> vector<8x8xf32>
    %cst_79 = arith.constant 0.353553385 : f32
    %174 = vector.broadcast %cst_79 : f32 to vector<8x8xf32>
    %175 = arith.mulf %173, %174 : vector<8x8xf32>
    %176 = arith.addf %175, %161 : vector<8x8xf32>
    %cst_80 = arith.constant dense<0xFF800000> : vector<8xf32>
    %177 = vector.multi_reduction <maximumf>, %176, %cst_80 [1] : vector<8x8xf32> to vector<8xf32>
    %178 = vector.shape_cast %177 : vector<8xf32> to vector<8x1xf32>
    %179 = vector.broadcast %178 : vector<8x1xf32> to vector<8x8xf32>
    %180 = arith.subf %176, %179 : vector<8x8xf32>
    %181 = math.exp %180 : vector<8x8xf32>
    %cst_81 = arith.constant dense<0.000000e+00> : vector<8xf32>
    %182 = vector.multi_reduction <add>, %181, %cst_81 [1] : vector<8x8xf32> to vector<8xf32>
    %183 = vector.shape_cast %182 : vector<8xf32> to vector<8x1xf32>
    %184 = tpu.reciprocal %183 {approx = true} : vector<8x1xf32> -> vector<8x1xf32>
    %185 = vector.broadcast %184 : vector<8x1xf32> to vector<8x8xf32>
    %186 = arith.mulf %181, %185 : vector<8x8xf32>
    %cst_82 = arith.constant dense<0.000000e+00> : vector<8x8xf32>
    %187 = tpu.matmul %186, %172, %cst_82 {dimension_numbers = #tpu.dot_dimension_numbers<[1], [0], [0], [1], [0, 0, 1, 1], [], []>} : vector<8x8xf32>, vector<8x8xf32>, vector<8x8xf32> -> vector<8x8xf32>
    %188 = vector.extract_strided_slice %167 {offsets = [0, 8], sizes = [8, 8], strides = [1, 1]} : vector<8x32xf32> to vector<8x8xf32>
    %189 = vector.extract_strided_slice %168 {offsets = [0, 8], sizes = [8, 8], strides = [1, 1]} : vector<8x32xf32> to vector<8x8xf32>
    %190 = vector.extract_strided_slice %169 {offsets = [0, 8], sizes = [8, 8], strides = [1, 1]} : vector<8x32xf32> to vector<8x8xf32>
    %cst_83 = arith.constant dense<0.000000e+00> : vector<8x8xf32>
    %191 = tpu.matmul %188, %189, %cst_83 {dimension_numbers = #tpu.dot_dimension_numbers<[1], [1], [0], [0], [0, 0, 1, 0], [], []>} : vector<8x8xf32>, vector<8x8xf32>, vector<8x8xf32> -> vector<8x8xf32>
    %cst_84 = arith.constant 0.353553385 : f32
    %192 = vector.broadcast %cst_84 : f32 to vector<8x8xf32>
    %193 = arith.mulf %191, %192 : vector<8x8xf32>
    %194 = arith.addf %193, %161 : vector<8x8xf32>
    %cst_85 = arith.constant dense<0xFF800000> : vector<8xf32>
    %195 = vector.multi_reduction <maximumf>, %194, %cst_85 [1] : vector<8x8xf32> to vector<8xf32>
    %196 = vector.shape_cast %195 : vector<8xf32> to vector<8x1xf32>
    %197 = vector.broadcast %196 : vector<8x1xf32> to vector<8x8xf32>
    %198 = arith.subf %194, %197 : vector<8x8xf32>
    %199 = math.exp %198 : vector<8x8xf32>
    %cst_86 = arith.constant dense<0.000000e+00> : vector<8xf32>
    %200 = vector.multi_reduction <add>, %199, %cst_86 [1] : vector<8x8xf32> to vector<8xf32>
    %201 = vector.shape_cast %200 : vector<8xf32> to vector<8x1xf32>
    %202 = tpu.reciprocal %201 {approx = true} : vector<8x1xf32> -> vector<8x1xf32>
    %203 = vector.broadcast %202 : vector<8x1xf32> to vector<8x8xf32>
    %204 = arith.mulf %199, %203 : vector<8x8xf32>
    %cst_87 = arith.constant dense<0.000000e+00> : vector<8x8xf32>
    %205 = tpu.matmul %204, %190, %cst_87 {dimension_numbers = #tpu.dot_dimension_numbers<[1], [0], [0], [1], [0, 0, 1, 1], [], []>} : vector<8x8xf32>, vector<8x8xf32>, vector<8x8xf32> -> vector<8x8xf32>
    %206 = vector.extract_strided_slice %167 {offsets = [0, 16], sizes = [8, 8], strides = [1, 1]} : vector<8x32xf32> to vector<8x8xf32>
    %207 = vector.extract_strided_slice %168 {offsets = [0, 16], sizes = [8, 8], strides = [1, 1]} : vector<8x32xf32> to vector<8x8xf32>
    %208 = vector.extract_strided_slice %169 {offsets = [0, 16], sizes = [8, 8], strides = [1, 1]} : vector<8x32xf32> to vector<8x8xf32>
    %cst_88 = arith.constant dense<0.000000e+00> : vector<8x8xf32>
    %209 = tpu.matmul %206, %207, %cst_88 {dimension_numbers = #tpu.dot_dimension_numbers<[1], [1], [0], [0], [0, 0, 1, 0], [], []>} : vector<8x8xf32>, vector<8x8xf32>, vector<8x8xf32> -> vector<8x8xf32>
    %cst_89 = arith.constant 0.353553385 : f32
    %210 = vector.broadcast %cst_89 : f32 to vector<8x8xf32>
    %211 = arith.mulf %209, %210 : vector<8x8xf32>
    %212 = arith.addf %211, %161 : vector<8x8xf32>
    %cst_90 = arith.constant dense<0xFF800000> : vector<8xf32>
    %213 = vector.multi_reduction <maximumf>, %212, %cst_90 [1] : vector<8x8xf32> to vector<8xf32>
    %214 = vector.shape_cast %213 : vector<8xf32> to vector<8x1xf32>
    %215 = vector.broadcast %214 : vector<8x1xf32> to vector<8x8xf32>
    %216 = arith.subf %212, %215 : vector<8x8xf32>
    %217 = math.exp %216 : vector<8x8xf32>
    %cst_91 = arith.constant dense<0.000000e+00> : vector<8xf32>
    %218 = vector.multi_reduction <add>, %217, %cst_91 [1] : vector<8x8xf32> to vector<8xf32>
    %219 = vector.shape_cast %218 : vector<8xf32> to vector<8x1xf32>
    %220 = tpu.reciprocal %219 {approx = true} : vector<8x1xf32> -> vector<8x1xf32>
    %221 = vector.broadcast %220 : vector<8x1xf32> to vector<8x8xf32>
    %222 = arith.mulf %217, %221 : vector<8x8xf32>
    %cst_92 = arith.constant dense<0.000000e+00> : vector<8x8xf32>
    %223 = tpu.matmul %222, %208, %cst_92 {dimension_numbers = #tpu.dot_dimension_numbers<[1], [0], [0], [1], [0, 0, 1, 1], [], []>} : vector<8x8xf32>, vector<8x8xf32>, vector<8x8xf32> -> vector<8x8xf32>
    %224 = vector.extract_strided_slice %167 {offsets = [0, 24], sizes = [8, 8], strides = [1, 1]} : vector<8x32xf32> to vector<8x8xf32>
    %225 = vector.extract_strided_slice %168 {offsets = [0, 24], sizes = [8, 8], strides = [1, 1]} : vector<8x32xf32> to vector<8x8xf32>
    %226 = vector.extract_strided_slice %169 {offsets = [0, 24], sizes = [8, 8], strides = [1, 1]} : vector<8x32xf32> to vector<8x8xf32>
    %cst_93 = arith.constant dense<0.000000e+00> : vector<8x8xf32>
    %227 = tpu.matmul %224, %225, %cst_93 {dimension_numbers = #tpu.dot_dimension_numbers<[1], [1], [0], [0], [0, 0, 1, 0], [], []>} : vector<8x8xf32>, vector<8x8xf32>, vector<8x8xf32> -> vector<8x8xf32>
    %cst_94 = arith.constant 0.353553385 : f32
    %228 = vector.broadcast %cst_94 : f32 to vector<8x8xf32>
    %229 = arith.mulf %227, %228 : vector<8x8xf32>
    %230 = arith.addf %229, %161 : vector<8x8xf32>
    %cst_95 = arith.constant dense<0xFF800000> : vector<8xf32>
    %231 = vector.multi_reduction <maximumf>, %230, %cst_95 [1] : vector<8x8xf32> to vector<8xf32>
    %232 = vector.shape_cast %231 : vector<8xf32> to vector<8x1xf32>
    %233 = vector.broadcast %232 : vector<8x1xf32> to vector<8x8xf32>
    %234 = arith.subf %230, %233 : vector<8x8xf32>
    %235 = math.exp %234 : vector<8x8xf32>
    %cst_96 = arith.constant dense<0.000000e+00> : vector<8xf32>
    %236 = vector.multi_reduction <add>, %235, %cst_96 [1] : vector<8x8xf32> to vector<8xf32>
    %237 = vector.shape_cast %236 : vector<8xf32> to vector<8x1xf32>
    %238 = tpu.reciprocal %237 {approx = true} : vector<8x1xf32> -> vector<8x1xf32>
    %239 = vector.broadcast %238 : vector<8x1xf32> to vector<8x8xf32>
    %240 = arith.mulf %235, %239 : vector<8x8xf32>
    %cst_97 = arith.constant dense<0.000000e+00> : vector<8x8xf32>
    %241 = tpu.matmul %240, %226, %cst_97 {dimension_numbers = #tpu.dot_dimension_numbers<[1], [0], [0], [1], [0, 0, 1, 1], [], []>} : vector<8x8xf32>, vector<8x8xf32>, vector<8x8xf32> -> vector<8x8xf32>
    %242 = tpu.concatenate %187, %205, %223, %241 in 1 : vector<8x8xf32>, vector<8x8xf32>, vector<8x8xf32>, vector<8x8xf32> -> vector<8x32xf32>
    %c0_98 = arith.constant 0 : index
    %c0_99 = arith.constant 0 : index
    %243 = vector.load %arg23[%c0_98, %c0_99] : memref<32x32xf32, #tpu.memory_space<vmem>>, vector<32x32xf32>
    %cst_100 = arith.constant dense<0.000000e+00> : vector<8x32xf32>
    %244 = tpu.matmul %242, %243, %cst_100 {dimension_numbers = #tpu.dot_dimension_numbers<[1], [0], [0], [1], [0, 0, 1, 1], [], []>} : vector<8x32xf32>, vector<32x32xf32>, vector<8x32xf32> -> vector<8x32xf32>
    %c0_101 = arith.constant 0 : index
    %c0_102 = arith.constant 0 : index
    %245 = vector.load %arg21[%c0_101, %c0_102] : memref<1x32xf32, #tpu.memory_space<vmem>>, vector<1x32xf32>
    %246 = vector.broadcast %245 : vector<1x32xf32> to vector<8x32xf32>
    %247 = arith.addf %244, %246 : vector<8x32xf32>
    %248 = arith.addf %159, %247 : vector<8x32xf32>
    %cst_103 = arith.constant dense<0.000000e+00> : vector<8xf32>
    %249 = vector.multi_reduction <add>, %248, %cst_103 [1] : vector<8x32xf32> to vector<8xf32>
    %250 = vector.shape_cast %249 : vector<8xf32> to vector<8x1xf32>
    %cst_104 = arith.constant 3.200000e+01 : f32
    %251 = vector.broadcast %cst_104 : f32 to vector<8x1xf32>
    %252 = arith.divf %250, %251 : vector<8x1xf32>
    %253 = vector.broadcast %252 : vector<8x1xf32> to vector<8x32xf32>
    %254 = arith.subf %248, %253 : vector<8x32xf32>
    %255 = arith.mulf %254, %254 : vector<8x32xf32>
    %cst_105 = arith.constant dense<0.000000e+00> : vector<8xf32>
    %256 = vector.multi_reduction <add>, %255, %cst_105 [1] : vector<8x32xf32> to vector<8xf32>
    %257 = vector.shape_cast %256 : vector<8xf32> to vector<8x1xf32>
    %cst_106 = arith.constant 3.200000e+01 : f32
    %258 = vector.broadcast %cst_106 : f32 to vector<8x1xf32>
    %259 = arith.divf %257, %258 : vector<8x1xf32>
    %260 = vector.broadcast %252 : vector<8x1xf32> to vector<8x32xf32>
    %261 = arith.subf %248, %260 : vector<8x32xf32>
    %cst_107 = arith.constant 9.99999974E-6 : f32
    %262 = vector.broadcast %cst_107 : f32 to vector<8x1xf32>
    %263 = arith.addf %259, %262 : vector<8x1xf32>
    %264 = math.rsqrt %263 : vector<8x1xf32>
    %265 = vector.broadcast %264 : vector<8x1xf32> to vector<8x32xf32>
    %266 = arith.mulf %261, %265 : vector<8x32xf32>
    %c0_108 = arith.constant 0 : index
    %c0_109 = arith.constant 0 : index
    %267 = vector.load %arg16[%c0_108, %c0_109] : memref<1x32xf32, #tpu.memory_space<vmem>>, vector<1x32xf32>
    %268 = vector.broadcast %267 : vector<1x32xf32> to vector<8x32xf32>
    %269 = arith.mulf %266, %268 : vector<8x32xf32>
    %c0_110 = arith.constant 0 : index
    %c0_111 = arith.constant 0 : index
    %270 = vector.load %arg15[%c0_110, %c0_111] : memref<1x32xf32, #tpu.memory_space<vmem>>, vector<1x32xf32>
    %271 = vector.broadcast %270 : vector<1x32xf32> to vector<8x32xf32>
    %272 = arith.addf %269, %271 : vector<8x32xf32>
    %c0_112 = arith.constant 0 : index
    %c0_113 = arith.constant 0 : index
    %273 = vector.load %arg10[%c0_112, %c0_113] : memref<32x96xf32, #tpu.memory_space<vmem>>, vector<32x96xf32>
    %c0_114 = arith.constant 0 : index
    %c0_115 = arith.constant 0 : index
    %274 = vector.load %arg8[%c0_114, %c0_115] : memref<1x96xf32, #tpu.memory_space<vmem>>, vector<1x96xf32>
    %275 = vector.extract_strided_slice %273 {offsets = [0, 0], sizes = [32, 32], strides = [1, 1]} : vector<32x96xf32> to vector<32x32xf32>
    %cst_116 = arith.constant dense<0.000000e+00> : vector<8x32xf32>
    %276 = tpu.matmul %272, %275, %cst_116 {dimension_numbers = #tpu.dot_dimension_numbers<[1], [0], [0], [1], [0, 0, 1, 1], [], []>} : vector<8x32xf32>, vector<32x32xf32>, vector<8x32xf32> -> vector<8x32xf32>
    %277 = vector.extract_strided_slice %274 {offsets = [0, 0], sizes = [1, 32], strides = [1, 1]} : vector<1x96xf32> to vector<1x32xf32>
    %278 = vector.broadcast %277 : vector<1x32xf32> to vector<8x32xf32>
    %279 = arith.addf %276, %278 : vector<8x32xf32>
    %280 = vector.extract_strided_slice %273 {offsets = [0, 32], sizes = [32, 64], strides = [1, 1]} : vector<32x96xf32> to vector<32x64xf32>
    %cst_117 = arith.constant dense<0.000000e+00> : vector<8x64xf32>
    %281 = tpu.matmul %153, %280, %cst_117 {dimension_numbers = #tpu.dot_dimension_numbers<[1], [0], [0], [1], [0, 0, 1, 1], [], []>} : vector<8x32xf32>, vector<32x64xf32>, vector<8x64xf32> -> vector<8x64xf32>
    %282 = vector.extract_strided_slice %274 {offsets = [0, 32], sizes = [1, 64], strides = [1, 1]} : vector<1x96xf32> to vector<1x64xf32>
    %283 = vector.broadcast %282 : vector<1x64xf32> to vector<8x64xf32>
    %284 = arith.addf %281, %283 : vector<8x64xf32>
    %285 = vector.extract_strided_slice %284 {offsets = [0, 0], sizes = [8, 32], strides = [1, 1]} : vector<8x64xf32> to vector<8x32xf32>
    %286 = vector.extract_strided_slice %284 {offsets = [0, 32], sizes = [8, 32], strides = [1, 1]} : vector<8x64xf32> to vector<8x32xf32>
    %287 = vector.extract_strided_slice %279 {offsets = [0, 0], sizes = [8, 8], strides = [1, 1]} : vector<8x32xf32> to vector<8x8xf32>
    %288 = vector.extract_strided_slice %285 {offsets = [0, 0], sizes = [8, 8], strides = [1, 1]} : vector<8x32xf32> to vector<8x8xf32>
    %289 = vector.extract_strided_slice %286 {offsets = [0, 0], sizes = [8, 8], strides = [1, 1]} : vector<8x32xf32> to vector<8x8xf32>
    %cst_118 = arith.constant dense<0.000000e+00> : vector<8x8xf32>
    %290 = tpu.matmul %287, %288, %cst_118 {dimension_numbers = #tpu.dot_dimension_numbers<[1], [1], [0], [0], [0, 0, 1, 0], [], []>} : vector<8x8xf32>, vector<8x8xf32>, vector<8x8xf32> -> vector<8x8xf32>
    %cst_119 = arith.constant 0.353553385 : f32
    %291 = vector.broadcast %cst_119 : f32 to vector<8x8xf32>
    %292 = arith.mulf %290, %291 : vector<8x8xf32>
    %293 = arith.addf %292, %160 : vector<8x8xf32>
    %cst_120 = arith.constant dense<0xFF800000> : vector<8xf32>
    %294 = vector.multi_reduction <maximumf>, %293, %cst_120 [1] : vector<8x8xf32> to vector<8xf32>
    %295 = vector.shape_cast %294 : vector<8xf32> to vector<8x1xf32>
    %296 = vector.broadcast %295 : vector<8x1xf32> to vector<8x8xf32>
    %297 = arith.subf %293, %296 : vector<8x8xf32>
    %298 = math.exp %297 : vector<8x8xf32>
    %cst_121 = arith.constant dense<0.000000e+00> : vector<8xf32>
    %299 = vector.multi_reduction <add>, %298, %cst_121 [1] : vector<8x8xf32> to vector<8xf32>
    %300 = vector.shape_cast %299 : vector<8xf32> to vector<8x1xf32>
    %301 = tpu.reciprocal %300 {approx = true} : vector<8x1xf32> -> vector<8x1xf32>
    %302 = vector.broadcast %301 : vector<8x1xf32> to vector<8x8xf32>
    %303 = arith.mulf %298, %302 : vector<8x8xf32>
    %cst_122 = arith.constant dense<0.000000e+00> : vector<8x8xf32>
    %304 = tpu.matmul %303, %289, %cst_122 {dimension_numbers = #tpu.dot_dimension_numbers<[1], [0], [0], [1], [0, 0, 1, 1], [], []>} : vector<8x8xf32>, vector<8x8xf32>, vector<8x8xf32> -> vector<8x8xf32>
    %305 = vector.extract_strided_slice %279 {offsets = [0, 8], sizes = [8, 8], strides = [1, 1]} : vector<8x32xf32> to vector<8x8xf32>
    %306 = vector.extract_strided_slice %285 {offsets = [0, 8], sizes = [8, 8], strides = [1, 1]} : vector<8x32xf32> to vector<8x8xf32>
    %307 = vector.extract_strided_slice %286 {offsets = [0, 8], sizes = [8, 8], strides = [1, 1]} : vector<8x32xf32> to vector<8x8xf32>
    %cst_123 = arith.constant dense<0.000000e+00> : vector<8x8xf32>
    %308 = tpu.matmul %305, %306, %cst_123 {dimension_numbers = #tpu.dot_dimension_numbers<[1], [1], [0], [0], [0, 0, 1, 0], [], []>} : vector<8x8xf32>, vector<8x8xf32>, vector<8x8xf32> -> vector<8x8xf32>
    %cst_124 = arith.constant 0.353553385 : f32
    %309 = vector.broadcast %cst_124 : f32 to vector<8x8xf32>
    %310 = arith.mulf %308, %309 : vector<8x8xf32>
    %311 = arith.addf %310, %160 : vector<8x8xf32>
    %cst_125 = arith.constant dense<0xFF800000> : vector<8xf32>
    %312 = vector.multi_reduction <maximumf>, %311, %cst_125 [1] : vector<8x8xf32> to vector<8xf32>
    %313 = vector.shape_cast %312 : vector<8xf32> to vector<8x1xf32>
    %314 = vector.broadcast %313 : vector<8x1xf32> to vector<8x8xf32>
    %315 = arith.subf %311, %314 : vector<8x8xf32>
    %316 = math.exp %315 : vector<8x8xf32>
    %cst_126 = arith.constant dense<0.000000e+00> : vector<8xf32>
    %317 = vector.multi_reduction <add>, %316, %cst_126 [1] : vector<8x8xf32> to vector<8xf32>
    %318 = vector.shape_cast %317 : vector<8xf32> to vector<8x1xf32>
    %319 = tpu.reciprocal %318 {approx = true} : vector<8x1xf32> -> vector<8x1xf32>
    %320 = vector.broadcast %319 : vector<8x1xf32> to vector<8x8xf32>
    %321 = arith.mulf %316, %320 : vector<8x8xf32>
    %cst_127 = arith.constant dense<0.000000e+00> : vector<8x8xf32>
    %322 = tpu.matmul %321, %307, %cst_127 {dimension_numbers = #tpu.dot_dimension_numbers<[1], [0], [0], [1], [0, 0, 1, 1], [], []>} : vector<8x8xf32>, vector<8x8xf32>, vector<8x8xf32> -> vector<8x8xf32>
    %323 = vector.extract_strided_slice %279 {offsets = [0, 16], sizes = [8, 8], strides = [1, 1]} : vector<8x32xf32> to vector<8x8xf32>
    %324 = vector.extract_strided_slice %285 {offsets = [0, 16], sizes = [8, 8], strides = [1, 1]} : vector<8x32xf32> to vector<8x8xf32>
    %325 = vector.extract_strided_slice %286 {offsets = [0, 16], sizes = [8, 8], strides = [1, 1]} : vector<8x32xf32> to vector<8x8xf32>
    %cst_128 = arith.constant dense<0.000000e+00> : vector<8x8xf32>
    %326 = tpu.matmul %323, %324, %cst_128 {dimension_numbers = #tpu.dot_dimension_numbers<[1], [1], [0], [0], [0, 0, 1, 0], [], []>} : vector<8x8xf32>, vector<8x8xf32>, vector<8x8xf32> -> vector<8x8xf32>
    %cst_129 = arith.constant 0.353553385 : f32
    %327 = vector.broadcast %cst_129 : f32 to vector<8x8xf32>
    %328 = arith.mulf %326, %327 : vector<8x8xf32>
    %329 = arith.addf %328, %160 : vector<8x8xf32>
    %cst_130 = arith.constant dense<0xFF800000> : vector<8xf32>
    %330 = vector.multi_reduction <maximumf>, %329, %cst_130 [1] : vector<8x8xf32> to vector<8xf32>
    %331 = vector.shape_cast %330 : vector<8xf32> to vector<8x1xf32>
    %332 = vector.broadcast %331 : vector<8x1xf32> to vector<8x8xf32>
    %333 = arith.subf %329, %332 : vector<8x8xf32>
    %334 = math.exp %333 : vector<8x8xf32>
    %cst_131 = arith.constant dense<0.000000e+00> : vector<8xf32>
    %335 = vector.multi_reduction <add>, %334, %cst_131 [1] : vector<8x8xf32> to vector<8xf32>
    %336 = vector.shape_cast %335 : vector<8xf32> to vector<8x1xf32>
    %337 = tpu.reciprocal %336 {approx = true} : vector<8x1xf32> -> vector<8x1xf32>
    %338 = vector.broadcast %337 : vector<8x1xf32> to vector<8x8xf32>
    %339 = arith.mulf %334, %338 : vector<8x8xf32>
    %cst_132 = arith.constant dense<0.000000e+00> : vector<8x8xf32>
    %340 = tpu.matmul %339, %325, %cst_132 {dimension_numbers = #tpu.dot_dimension_numbers<[1], [0], [0], [1], [0, 0, 1, 1], [], []>} : vector<8x8xf32>, vector<8x8xf32>, vector<8x8xf32> -> vector<8x8xf32>
    %341 = vector.extract_strided_slice %279 {offsets = [0, 24], sizes = [8, 8], strides = [1, 1]} : vector<8x32xf32> to vector<8x8xf32>
    %342 = vector.extract_strided_slice %285 {offsets = [0, 24], sizes = [8, 8], strides = [1, 1]} : vector<8x32xf32> to vector<8x8xf32>
    %343 = vector.extract_strided_slice %286 {offsets = [0, 24], sizes = [8, 8], strides = [1, 1]} : vector<8x32xf32> to vector<8x8xf32>
    %cst_133 = arith.constant dense<0.000000e+00> : vector<8x8xf32>
    %344 = tpu.matmul %341, %342, %cst_133 {dimension_numbers = #tpu.dot_dimension_numbers<[1], [1], [0], [0], [0, 0, 1, 0], [], []>} : vector<8x8xf32>, vector<8x8xf32>, vector<8x8xf32> -> vector<8x8xf32>
    %cst_134 = arith.constant 0.353553385 : f32
    %345 = vector.broadcast %cst_134 : f32 to vector<8x8xf32>
    %346 = arith.mulf %344, %345 : vector<8x8xf32>
    %347 = arith.addf %346, %160 : vector<8x8xf32>
    %cst_135 = arith.constant dense<0xFF800000> : vector<8xf32>
    %348 = vector.multi_reduction <maximumf>, %347, %cst_135 [1] : vector<8x8xf32> to vector<8xf32>
    %349 = vector.shape_cast %348 : vector<8xf32> to vector<8x1xf32>
    %350 = vector.broadcast %349 : vector<8x1xf32> to vector<8x8xf32>
    %351 = arith.subf %347, %350 : vector<8x8xf32>
    %352 = math.exp %351 : vector<8x8xf32>
    %cst_136 = arith.constant dense<0.000000e+00> : vector<8xf32>
    %353 = vector.multi_reduction <add>, %352, %cst_136 [1] : vector<8x8xf32> to vector<8xf32>
    %354 = vector.shape_cast %353 : vector<8xf32> to vector<8x1xf32>
    %355 = tpu.reciprocal %354 {approx = true} : vector<8x1xf32> -> vector<8x1xf32>
    %356 = vector.broadcast %355 : vector<8x1xf32> to vector<8x8xf32>
    %357 = arith.mulf %352, %356 : vector<8x8xf32>
    %cst_137 = arith.constant dense<0.000000e+00> : vector<8x8xf32>
    %358 = tpu.matmul %357, %343, %cst_137 {dimension_numbers = #tpu.dot_dimension_numbers<[1], [0], [0], [1], [0, 0, 1, 1], [], []>} : vector<8x8xf32>, vector<8x8xf32>, vector<8x8xf32> -> vector<8x8xf32>
    %359 = tpu.concatenate %304, %322, %340, %358 in 1 : vector<8x8xf32>, vector<8x8xf32>, vector<8x8xf32>, vector<8x8xf32> -> vector<8x32xf32>
    %c0_138 = arith.constant 0 : index
    %c0_139 = arith.constant 0 : index
    %360 = vector.load %arg9[%c0_138, %c0_139] : memref<32x32xf32, #tpu.memory_space<vmem>>, vector<32x32xf32>
    %cst_140 = arith.constant dense<0.000000e+00> : vector<8x32xf32>
    %361 = tpu.matmul %359, %360, %cst_140 {dimension_numbers = #tpu.dot_dimension_numbers<[1], [0], [0], [1], [0, 0, 1, 1], [], []>} : vector<8x32xf32>, vector<32x32xf32>, vector<8x32xf32> -> vector<8x32xf32>
    %c0_141 = arith.constant 0 : index
    %c0_142 = arith.constant 0 : index
    %362 = vector.load %arg7[%c0_141, %c0_142] : memref<1x32xf32, #tpu.memory_space<vmem>>, vector<1x32xf32>
    %363 = vector.broadcast %362 : vector<1x32xf32> to vector<8x32xf32>
    %364 = arith.addf %361, %363 : vector<8x32xf32>
    %365 = arith.addf %272, %364 : vector<8x32xf32>
    %cst_143 = arith.constant dense<0.000000e+00> : vector<8xf32>
    %366 = vector.multi_reduction <add>, %365, %cst_143 [1] : vector<8x32xf32> to vector<8xf32>
    %367 = vector.shape_cast %366 : vector<8xf32> to vector<8x1xf32>
    %cst_144 = arith.constant 3.200000e+01 : f32
    %368 = vector.broadcast %cst_144 : f32 to vector<8x1xf32>
    %369 = arith.divf %367, %368 : vector<8x1xf32>
    %370 = vector.broadcast %369 : vector<8x1xf32> to vector<8x32xf32>
    %371 = arith.subf %365, %370 : vector<8x32xf32>
    %372 = arith.mulf %371, %371 : vector<8x32xf32>
    %cst_145 = arith.constant dense<0.000000e+00> : vector<8xf32>
    %373 = vector.multi_reduction <add>, %372, %cst_145 [1] : vector<8x32xf32> to vector<8xf32>
    %374 = vector.shape_cast %373 : vector<8xf32> to vector<8x1xf32>
    %cst_146 = arith.constant 3.200000e+01 : f32
    %375 = vector.broadcast %cst_146 : f32 to vector<8x1xf32>
    %376 = arith.divf %374, %375 : vector<8x1xf32>
    %377 = vector.broadcast %369 : vector<8x1xf32> to vector<8x32xf32>
    %378 = arith.subf %365, %377 : vector<8x32xf32>
    %cst_147 = arith.constant 9.99999974E-6 : f32
    %379 = vector.broadcast %cst_147 : f32 to vector<8x1xf32>
    %380 = arith.addf %376, %379 : vector<8x1xf32>
    %381 = math.rsqrt %380 : vector<8x1xf32>
    %382 = vector.broadcast %381 : vector<8x1xf32> to vector<8x32xf32>
    %383 = arith.mulf %378, %382 : vector<8x32xf32>
    %c0_148 = arith.constant 0 : index
    %c0_149 = arith.constant 0 : index
    %384 = vector.load %arg18[%c0_148, %c0_149] : memref<1x32xf32, #tpu.memory_space<vmem>>, vector<1x32xf32>
    %385 = vector.broadcast %384 : vector<1x32xf32> to vector<8x32xf32>
    %386 = arith.mulf %383, %385 : vector<8x32xf32>
    %c0_150 = arith.constant 0 : index
    %c0_151 = arith.constant 0 : index
    %387 = vector.load %arg17[%c0_150, %c0_151] : memref<1x32xf32, #tpu.memory_space<vmem>>, vector<1x32xf32>
    %388 = vector.broadcast %387 : vector<1x32xf32> to vector<8x32xf32>
    %389 = arith.addf %386, %388 : vector<8x32xf32>
    %c0_152 = arith.constant 0 : index
    %c0_153 = arith.constant 0 : index
    %390 = vector.load %arg13[%c0_152, %c0_153] : memref<32x64xf32, #tpu.memory_space<vmem>>, vector<32x64xf32>
    %cst_154 = arith.constant dense<0.000000e+00> : vector<8x64xf32>
    %391 = tpu.matmul %389, %390, %cst_154 {dimension_numbers = #tpu.dot_dimension_numbers<[1], [0], [0], [1], [0, 0, 1, 1], [], []>} : vector<8x32xf32>, vector<32x64xf32>, vector<8x64xf32> -> vector<8x64xf32>
    %c0_155 = arith.constant 0 : index
    %c0_156 = arith.constant 0 : index
    %392 = vector.load %arg11[%c0_155, %c0_156] : memref<1x64xf32, #tpu.memory_space<vmem>>, vector<1x64xf32>
    %393 = vector.broadcast %392 : vector<1x64xf32> to vector<8x64xf32>
    %394 = arith.addf %391, %393 : vector<8x64xf32>
    %cst_157 = arith.constant 0.000000e+00 : f32
    %395 = vector.broadcast %cst_157 : f32 to vector<8x64xf32>
    %396 = arith.maximumf %394, %395 : vector<8x64xf32>
    %c0_158 = arith.constant 0 : index
    %c0_159 = arith.constant 0 : index
    %397 = vector.load %arg14[%c0_158, %c0_159] : memref<64x32xf32, #tpu.memory_space<vmem>>, vector<64x32xf32>
    %cst_160 = arith.constant dense<0.000000e+00> : vector<8x32xf32>
    %398 = tpu.matmul %396, %397, %cst_160 {dimension_numbers = #tpu.dot_dimension_numbers<[1], [0], [0], [1], [0, 0, 1, 1], [], []>} : vector<8x64xf32>, vector<64x32xf32>, vector<8x32xf32> -> vector<8x32xf32>
    %c0_161 = arith.constant 0 : index
    %c0_162 = arith.constant 0 : index
    %399 = vector.load %arg12[%c0_161, %c0_162] : memref<1x32xf32, #tpu.memory_space<vmem>>, vector<1x32xf32>
    %400 = vector.broadcast %399 : vector<1x32xf32> to vector<8x32xf32>
    %401 = arith.addf %398, %400 : vector<8x32xf32>
    %402 = arith.addf %389, %401 : vector<8x32xf32>
    %cst_163 = arith.constant dense<0.000000e+00> : vector<8xf32>
    %403 = vector.multi_reduction <add>, %402, %cst_163 [1] : vector<8x32xf32> to vector<8xf32>
    %404 = vector.shape_cast %403 : vector<8xf32> to vector<8x1xf32>
    %cst_164 = arith.constant 3.200000e+01 : f32
    %405 = vector.broadcast %cst_164 : f32 to vector<8x1xf32>
    %406 = arith.divf %404, %405 : vector<8x1xf32>
    %407 = vector.broadcast %406 : vector<8x1xf32> to vector<8x32xf32>
    %408 = arith.subf %402, %407 : vector<8x32xf32>
    %409 = arith.mulf %408, %408 : vector<8x32xf32>
    %cst_165 = arith.constant dense<0.000000e+00> : vector<8xf32>
    %410 = vector.multi_reduction <add>, %409, %cst_165 [1] : vector<8x32xf32> to vector<8xf32>
    %411 = vector.shape_cast %410 : vector<8xf32> to vector<8x1xf32>
    %cst_166 = arith.constant 3.200000e+01 : f32
    %412 = vector.broadcast %cst_166 : f32 to vector<8x1xf32>
    %413 = arith.divf %411, %412 : vector<8x1xf32>
    %414 = vector.broadcast %406 : vector<8x1xf32> to vector<8x32xf32>
    %415 = arith.subf %402, %414 : vector<8x32xf32>
    %cst_167 = arith.constant 9.99999974E-6 : f32
    %416 = vector.broadcast %cst_167 : f32 to vector<8x1xf32>
    %417 = arith.addf %413, %416 : vector<8x1xf32>
    %418 = math.rsqrt %417 : vector<8x1xf32>
    %419 = vector.broadcast %418 : vector<8x1xf32> to vector<8x32xf32>
    %420 = arith.mulf %415, %419 : vector<8x32xf32>
    %c0_168 = arith.constant 0 : index
    %c0_169 = arith.constant 0 : index
    %421 = vector.load %arg20[%c0_168, %c0_169] : memref<1x32xf32, #tpu.memory_space<vmem>>, vector<1x32xf32>
    %422 = vector.broadcast %421 : vector<1x32xf32> to vector<8x32xf32>
    %423 = arith.mulf %420, %422 : vector<8x32xf32>
    %c0_170 = arith.constant 0 : index
    %c0_171 = arith.constant 0 : index
    %424 = vector.load %arg19[%c0_170, %c0_171] : memref<1x32xf32, #tpu.memory_space<vmem>>, vector<1x32xf32>
    %425 = vector.broadcast %424 : vector<1x32xf32> to vector<8x32xf32>
    %426 = arith.addf %423, %425 : vector<8x32xf32>
    %c0_172 = arith.constant 0 : index
    %c0_173 = arith.constant 0 : index
    %427 = vector.load %arg42[%c0_172, %c0_173] : memref<32x96xf32, #tpu.memory_space<vmem>>, vector<32x96xf32>
    %c0_174 = arith.constant 0 : index
    %c0_175 = arith.constant 0 : index
    %428 = vector.load %arg40[%c0_174, %c0_175] : memref<1x96xf32, #tpu.memory_space<vmem>>, vector<1x96xf32>
    %cst_176 = arith.constant dense<0.000000e+00> : vector<8x96xf32>
    %429 = tpu.matmul %426, %427, %cst_176 {dimension_numbers = #tpu.dot_dimension_numbers<[1], [0], [0], [1], [0, 0, 1, 1], [], []>} : vector<8x32xf32>, vector<32x96xf32>, vector<8x96xf32> -> vector<8x96xf32>
    %430 = vector.broadcast %428 : vector<1x96xf32> to vector<8x96xf32>
    %431 = arith.addf %429, %430 : vector<8x96xf32>
    %432 = vector.extract_strided_slice %431 {offsets = [0, 0], sizes = [8, 32], strides = [1, 1]} : vector<8x96xf32> to vector<8x32xf32>
    %433 = vector.extract_strided_slice %431 {offsets = [0, 32], sizes = [8, 32], strides = [1, 1]} : vector<8x96xf32> to vector<8x32xf32>
    %434 = vector.extract_strided_slice %431 {offsets = [0, 64], sizes = [8, 32], strides = [1, 1]} : vector<8x96xf32> to vector<8x32xf32>
    %435 = vector.extract_strided_slice %432 {offsets = [0, 0], sizes = [8, 8], strides = [1, 1]} : vector<8x32xf32> to vector<8x8xf32>
    %436 = vector.extract_strided_slice %433 {offsets = [0, 0], sizes = [8, 8], strides = [1, 1]} : vector<8x32xf32> to vector<8x8xf32>
    %437 = vector.extract_strided_slice %434 {offsets = [0, 0], sizes = [8, 8], strides = [1, 1]} : vector<8x32xf32> to vector<8x8xf32>
    %cst_177 = arith.constant dense<0.000000e+00> : vector<8x8xf32>
    %438 = tpu.matmul %435, %436, %cst_177 {dimension_numbers = #tpu.dot_dimension_numbers<[1], [1], [0], [0], [0, 0, 1, 0], [], []>} : vector<8x8xf32>, vector<8x8xf32>, vector<8x8xf32> -> vector<8x8xf32>
    %cst_178 = arith.constant 0.353553385 : f32
    %439 = vector.broadcast %cst_178 : f32 to vector<8x8xf32>
    %440 = arith.mulf %438, %439 : vector<8x8xf32>
    %441 = arith.addf %440, %161 : vector<8x8xf32>
    %cst_179 = arith.constant dense<0xFF800000> : vector<8xf32>
    %442 = vector.multi_reduction <maximumf>, %441, %cst_179 [1] : vector<8x8xf32> to vector<8xf32>
    %443 = vector.shape_cast %442 : vector<8xf32> to vector<8x1xf32>
    %444 = vector.broadcast %443 : vector<8x1xf32> to vector<8x8xf32>
    %445 = arith.subf %441, %444 : vector<8x8xf32>
    %446 = math.exp %445 : vector<8x8xf32>
    %cst_180 = arith.constant dense<0.000000e+00> : vector<8xf32>
    %447 = vector.multi_reduction <add>, %446, %cst_180 [1] : vector<8x8xf32> to vector<8xf32>
    %448 = vector.shape_cast %447 : vector<8xf32> to vector<8x1xf32>
    %449 = tpu.reciprocal %448 {approx = true} : vector<8x1xf32> -> vector<8x1xf32>
    %450 = vector.broadcast %449 : vector<8x1xf32> to vector<8x8xf32>
    %451 = arith.mulf %446, %450 : vector<8x8xf32>
    %cst_181 = arith.constant dense<0.000000e+00> : vector<8x8xf32>
    %452 = tpu.matmul %451, %437, %cst_181 {dimension_numbers = #tpu.dot_dimension_numbers<[1], [0], [0], [1], [0, 0, 1, 1], [], []>} : vector<8x8xf32>, vector<8x8xf32>, vector<8x8xf32> -> vector<8x8xf32>
    %453 = vector.extract_strided_slice %432 {offsets = [0, 8], sizes = [8, 8], strides = [1, 1]} : vector<8x32xf32> to vector<8x8xf32>
    %454 = vector.extract_strided_slice %433 {offsets = [0, 8], sizes = [8, 8], strides = [1, 1]} : vector<8x32xf32> to vector<8x8xf32>
    %455 = vector.extract_strided_slice %434 {offsets = [0, 8], sizes = [8, 8], strides = [1, 1]} : vector<8x32xf32> to vector<8x8xf32>
    %cst_182 = arith.constant dense<0.000000e+00> : vector<8x8xf32>
    %456 = tpu.matmul %453, %454, %cst_182 {dimension_numbers = #tpu.dot_dimension_numbers<[1], [1], [0], [0], [0, 0, 1, 0], [], []>} : vector<8x8xf32>, vector<8x8xf32>, vector<8x8xf32> -> vector<8x8xf32>
    %cst_183 = arith.constant 0.353553385 : f32
    %457 = vector.broadcast %cst_183 : f32 to vector<8x8xf32>
    %458 = arith.mulf %456, %457 : vector<8x8xf32>
    %459 = arith.addf %458, %161 : vector<8x8xf32>
    %cst_184 = arith.constant dense<0xFF800000> : vector<8xf32>
    %460 = vector.multi_reduction <maximumf>, %459, %cst_184 [1] : vector<8x8xf32> to vector<8xf32>
    %461 = vector.shape_cast %460 : vector<8xf32> to vector<8x1xf32>
    %462 = vector.broadcast %461 : vector<8x1xf32> to vector<8x8xf32>
    %463 = arith.subf %459, %462 : vector<8x8xf32>
    %464 = math.exp %463 : vector<8x8xf32>
    %cst_185 = arith.constant dense<0.000000e+00> : vector<8xf32>
    %465 = vector.multi_reduction <add>, %464, %cst_185 [1] : vector<8x8xf32> to vector<8xf32>
    %466 = vector.shape_cast %465 : vector<8xf32> to vector<8x1xf32>
    %467 = tpu.reciprocal %466 {approx = true} : vector<8x1xf32> -> vector<8x1xf32>
    %468 = vector.broadcast %467 : vector<8x1xf32> to vector<8x8xf32>
    %469 = arith.mulf %464, %468 : vector<8x8xf32>
    %cst_186 = arith.constant dense<0.000000e+00> : vector<8x8xf32>
    %470 = tpu.matmul %469, %455, %cst_186 {dimension_numbers = #tpu.dot_dimension_numbers<[1], [0], [0], [1], [0, 0, 1, 1], [], []>} : vector<8x8xf32>, vector<8x8xf32>, vector<8x8xf32> -> vector<8x8xf32>
    %471 = vector.extract_strided_slice %432 {offsets = [0, 16], sizes = [8, 8], strides = [1, 1]} : vector<8x32xf32> to vector<8x8xf32>
    %472 = vector.extract_strided_slice %433 {offsets = [0, 16], sizes = [8, 8], strides = [1, 1]} : vector<8x32xf32> to vector<8x8xf32>
    %473 = vector.extract_strided_slice %434 {offsets = [0, 16], sizes = [8, 8], strides = [1, 1]} : vector<8x32xf32> to vector<8x8xf32>
    %cst_187 = arith.constant dense<0.000000e+00> : vector<8x8xf32>
    %474 = tpu.matmul %471, %472, %cst_187 {dimension_numbers = #tpu.dot_dimension_numbers<[1], [1], [0], [0], [0, 0, 1, 0], [], []>} : vector<8x8xf32>, vector<8x8xf32>, vector<8x8xf32> -> vector<8x8xf32>
    %cst_188 = arith.constant 0.353553385 : f32
    %475 = vector.broadcast %cst_188 : f32 to vector<8x8xf32>
    %476 = arith.mulf %474, %475 : vector<8x8xf32>
    %477 = arith.addf %476, %161 : vector<8x8xf32>
    %cst_189 = arith.constant dense<0xFF800000> : vector<8xf32>
    %478 = vector.multi_reduction <maximumf>, %477, %cst_189 [1] : vector<8x8xf32> to vector<8xf32>
    %479 = vector.shape_cast %478 : vector<8xf32> to vector<8x1xf32>
    %480 = vector.broadcast %479 : vector<8x1xf32> to vector<8x8xf32>
    %481 = arith.subf %477, %480 : vector<8x8xf32>
    %482 = math.exp %481 : vector<8x8xf32>
    %cst_190 = arith.constant dense<0.000000e+00> : vector<8xf32>
    %483 = vector.multi_reduction <add>, %482, %cst_190 [1] : vector<8x8xf32> to vector<8xf32>
    %484 = vector.shape_cast %483 : vector<8xf32> to vector<8x1xf32>
    %485 = tpu.reciprocal %484 {approx = true} : vector<8x1xf32> -> vector<8x1xf32>
    %486 = vector.broadcast %485 : vector<8x1xf32> to vector<8x8xf32>
    %487 = arith.mulf %482, %486 : vector<8x8xf32>
    %cst_191 = arith.constant dense<0.000000e+00> : vector<8x8xf32>
    %488 = tpu.matmul %487, %473, %cst_191 {dimension_numbers = #tpu.dot_dimension_numbers<[1], [0], [0], [1], [0, 0, 1, 1], [], []>} : vector<8x8xf32>, vector<8x8xf32>, vector<8x8xf32> -> vector<8x8xf32>
    %489 = vector.extract_strided_slice %432 {offsets = [0, 24], sizes = [8, 8], strides = [1, 1]} : vector<8x32xf32> to vector<8x8xf32>
    %490 = vector.extract_strided_slice %433 {offsets = [0, 24], sizes = [8, 8], strides = [1, 1]} : vector<8x32xf32> to vector<8x8xf32>
    %491 = vector.extract_strided_slice %434 {offsets = [0, 24], sizes = [8, 8], strides = [1, 1]} : vector<8x32xf32> to vector<8x8xf32>
    %cst_192 = arith.constant dense<0.000000e+00> : vector<8x8xf32>
    %492 = tpu.matmul %489, %490, %cst_192 {dimension_numbers = #tpu.dot_dimension_numbers<[1], [1], [0], [0], [0, 0, 1, 0], [], []>} : vector<8x8xf32>, vector<8x8xf32>, vector<8x8xf32> -> vector<8x8xf32>
    %cst_193 = arith.constant 0.353553385 : f32
    %493 = vector.broadcast %cst_193 : f32 to vector<8x8xf32>
    %494 = arith.mulf %492, %493 : vector<8x8xf32>
    %495 = arith.addf %494, %161 : vector<8x8xf32>
    %cst_194 = arith.constant dense<0xFF800000> : vector<8xf32>
    %496 = vector.multi_reduction <maximumf>, %495, %cst_194 [1] : vector<8x8xf32> to vector<8xf32>
    %497 = vector.shape_cast %496 : vector<8xf32> to vector<8x1xf32>
    %498 = vector.broadcast %497 : vector<8x1xf32> to vector<8x8xf32>
    %499 = arith.subf %495, %498 : vector<8x8xf32>
    %500 = math.exp %499 : vector<8x8xf32>
    %cst_195 = arith.constant dense<0.000000e+00> : vector<8xf32>
    %501 = vector.multi_reduction <add>, %500, %cst_195 [1] : vector<8x8xf32> to vector<8xf32>
    %502 = vector.shape_cast %501 : vector<8xf32> to vector<8x1xf32>
    %503 = tpu.reciprocal %502 {approx = true} : vector<8x1xf32> -> vector<8x1xf32>
    %504 = vector.broadcast %503 : vector<8x1xf32> to vector<8x8xf32>
    %505 = arith.mulf %500, %504 : vector<8x8xf32>
    %cst_196 = arith.constant dense<0.000000e+00> : vector<8x8xf32>
    %506 = tpu.matmul %505, %491, %cst_196 {dimension_numbers = #tpu.dot_dimension_numbers<[1], [0], [0], [1], [0, 0, 1, 1], [], []>} : vector<8x8xf32>, vector<8x8xf32>, vector<8x8xf32> -> vector<8x8xf32>
    %507 = tpu.concatenate %452, %470, %488, %506 in 1 : vector<8x8xf32>, vector<8x8xf32>, vector<8x8xf32>, vector<8x8xf32> -> vector<8x32xf32>
    %c0_197 = arith.constant 0 : index
    %c0_198 = arith.constant 0 : index
    %508 = vector.load %arg41[%c0_197, %c0_198] : memref<32x32xf32, #tpu.memory_space<vmem>>, vector<32x32xf32>
    %cst_199 = arith.constant dense<0.000000e+00> : vector<8x32xf32>
    %509 = tpu.matmul %507, %508, %cst_199 {dimension_numbers = #tpu.dot_dimension_numbers<[1], [0], [0], [1], [0, 0, 1, 1], [], []>} : vector<8x32xf32>, vector<32x32xf32>, vector<8x32xf32> -> vector<8x32xf32>
    %c0_200 = arith.constant 0 : index
    %c0_201 = arith.constant 0 : index
    %510 = vector.load %arg39[%c0_200, %c0_201] : memref<1x32xf32, #tpu.memory_space<vmem>>, vector<1x32xf32>
    %511 = vector.broadcast %510 : vector<1x32xf32> to vector<8x32xf32>
    %512 = arith.addf %509, %511 : vector<8x32xf32>
    %513 = arith.addf %426, %512 : vector<8x32xf32>
    %cst_202 = arith.constant dense<0.000000e+00> : vector<8xf32>
    %514 = vector.multi_reduction <add>, %513, %cst_202 [1] : vector<8x32xf32> to vector<8xf32>
    %515 = vector.shape_cast %514 : vector<8xf32> to vector<8x1xf32>
    %cst_203 = arith.constant 3.200000e+01 : f32
    %516 = vector.broadcast %cst_203 : f32 to vector<8x1xf32>
    %517 = arith.divf %515, %516 : vector<8x1xf32>
    %518 = vector.broadcast %517 : vector<8x1xf32> to vector<8x32xf32>
    %519 = arith.subf %513, %518 : vector<8x32xf32>
    %520 = arith.mulf %519, %519 : vector<8x32xf32>
    %cst_204 = arith.constant dense<0.000000e+00> : vector<8xf32>
    %521 = vector.multi_reduction <add>, %520, %cst_204 [1] : vector<8x32xf32> to vector<8xf32>
    %522 = vector.shape_cast %521 : vector<8xf32> to vector<8x1xf32>
    %cst_205 = arith.constant 3.200000e+01 : f32
    %523 = vector.broadcast %cst_205 : f32 to vector<8x1xf32>
    %524 = arith.divf %522, %523 : vector<8x1xf32>
    %525 = vector.broadcast %517 : vector<8x1xf32> to vector<8x32xf32>
    %526 = arith.subf %513, %525 : vector<8x32xf32>
    %cst_206 = arith.constant 9.99999974E-6 : f32
    %527 = vector.broadcast %cst_206 : f32 to vector<8x1xf32>
    %528 = arith.addf %524, %527 : vector<8x1xf32>
    %529 = math.rsqrt %528 : vector<8x1xf32>
    %530 = vector.broadcast %529 : vector<8x1xf32> to vector<8x32xf32>
    %531 = arith.mulf %526, %530 : vector<8x32xf32>
    %c0_207 = arith.constant 0 : index
    %c0_208 = arith.constant 0 : index
    %532 = vector.load %arg34[%c0_207, %c0_208] : memref<1x32xf32, #tpu.memory_space<vmem>>, vector<1x32xf32>
    %533 = vector.broadcast %532 : vector<1x32xf32> to vector<8x32xf32>
    %534 = arith.mulf %531, %533 : vector<8x32xf32>
    %c0_209 = arith.constant 0 : index
    %c0_210 = arith.constant 0 : index
    %535 = vector.load %arg33[%c0_209, %c0_210] : memref<1x32xf32, #tpu.memory_space<vmem>>, vector<1x32xf32>
    %536 = vector.broadcast %535 : vector<1x32xf32> to vector<8x32xf32>
    %537 = arith.addf %534, %536 : vector<8x32xf32>
    %c0_211 = arith.constant 0 : index
    %c0_212 = arith.constant 0 : index
    %538 = vector.load %arg28[%c0_211, %c0_212] : memref<32x96xf32, #tpu.memory_space<vmem>>, vector<32x96xf32>
    %c0_213 = arith.constant 0 : index
    %c0_214 = arith.constant 0 : index
    %539 = vector.load %arg26[%c0_213, %c0_214] : memref<1x96xf32, #tpu.memory_space<vmem>>, vector<1x96xf32>
    %540 = vector.extract_strided_slice %538 {offsets = [0, 0], sizes = [32, 32], strides = [1, 1]} : vector<32x96xf32> to vector<32x32xf32>
    %cst_215 = arith.constant dense<0.000000e+00> : vector<8x32xf32>
    %541 = tpu.matmul %537, %540, %cst_215 {dimension_numbers = #tpu.dot_dimension_numbers<[1], [0], [0], [1], [0, 0, 1, 1], [], []>} : vector<8x32xf32>, vector<32x32xf32>, vector<8x32xf32> -> vector<8x32xf32>
    %542 = vector.extract_strided_slice %539 {offsets = [0, 0], sizes = [1, 32], strides = [1, 1]} : vector<1x96xf32> to vector<1x32xf32>
    %543 = vector.broadcast %542 : vector<1x32xf32> to vector<8x32xf32>
    %544 = arith.addf %541, %543 : vector<8x32xf32>
    %545 = vector.extract_strided_slice %538 {offsets = [0, 32], sizes = [32, 64], strides = [1, 1]} : vector<32x96xf32> to vector<32x64xf32>
    %cst_216 = arith.constant dense<0.000000e+00> : vector<8x64xf32>
    %546 = tpu.matmul %153, %545, %cst_216 {dimension_numbers = #tpu.dot_dimension_numbers<[1], [0], [0], [1], [0, 0, 1, 1], [], []>} : vector<8x32xf32>, vector<32x64xf32>, vector<8x64xf32> -> vector<8x64xf32>
    %547 = vector.extract_strided_slice %539 {offsets = [0, 32], sizes = [1, 64], strides = [1, 1]} : vector<1x96xf32> to vector<1x64xf32>
    %548 = vector.broadcast %547 : vector<1x64xf32> to vector<8x64xf32>
    %549 = arith.addf %546, %548 : vector<8x64xf32>
    %550 = vector.extract_strided_slice %549 {offsets = [0, 0], sizes = [8, 32], strides = [1, 1]} : vector<8x64xf32> to vector<8x32xf32>
    %551 = vector.extract_strided_slice %549 {offsets = [0, 32], sizes = [8, 32], strides = [1, 1]} : vector<8x64xf32> to vector<8x32xf32>
    %552 = vector.extract_strided_slice %544 {offsets = [0, 0], sizes = [8, 8], strides = [1, 1]} : vector<8x32xf32> to vector<8x8xf32>
    %553 = vector.extract_strided_slice %550 {offsets = [0, 0], sizes = [8, 8], strides = [1, 1]} : vector<8x32xf32> to vector<8x8xf32>
    %554 = vector.extract_strided_slice %551 {offsets = [0, 0], sizes = [8, 8], strides = [1, 1]} : vector<8x32xf32> to vector<8x8xf32>
    %cst_217 = arith.constant dense<0.000000e+00> : vector<8x8xf32>
    %555 = tpu.matmul %552, %553, %cst_217 {dimension_numbers = #tpu.dot_dimension_numbers<[1], [1], [0], [0], [0, 0, 1, 0], [], []>} : vector<8x8xf32>, vector<8x8xf32>, vector<8x8xf32> -> vector<8x8xf32>
    %cst_218 = arith.constant 0.353553385 : f32
    %556 = vector.broadcast %cst_218 : f32 to vector<8x8xf32>
    %557 = arith.mulf %555, %556 : vector<8x8xf32>
    %558 = arith.addf %557, %160 : vector<8x8xf32>
    %cst_219 = arith.constant dense<0xFF800000> : vector<8xf32>
    %559 = vector.multi_reduction <maximumf>, %558, %cst_219 [1] : vector<8x8xf32> to vector<8xf32>
    %560 = vector.shape_cast %559 : vector<8xf32> to vector<8x1xf32>
    %561 = vector.broadcast %560 : vector<8x1xf32> to vector<8x8xf32>
    %562 = arith.subf %558, %561 : vector<8x8xf32>
    %563 = math.exp %562 : vector<8x8xf32>
    %cst_220 = arith.constant dense<0.000000e+00> : vector<8xf32>
    %564 = vector.multi_reduction <add>, %563, %cst_220 [1] : vector<8x8xf32> to vector<8xf32>
    %565 = vector.shape_cast %564 : vector<8xf32> to vector<8x1xf32>
    %566 = tpu.reciprocal %565 {approx = true} : vector<8x1xf32> -> vector<8x1xf32>
    %567 = vector.broadcast %566 : vector<8x1xf32> to vector<8x8xf32>
    %568 = arith.mulf %563, %567 : vector<8x8xf32>
    %c0_221 = arith.constant 0 : index
    %c0_222 = arith.constant 0 : index
    %c0_223 = arith.constant 0 : index
    %569 = vector.load %arg58[%c0_221, %c0_222, %c0_223] : memref<4x8x8xf32, #tpu.memory_space<vmem>>, vector<1x8x8xf32>
    %570 = vector.shape_cast %569 : vector<1x8x8xf32> to vector<8x8xf32>
    %571 = vector.shape_cast %568 : vector<8x8xf32> to vector<1x8x8xf32>
    tpu.vector_store %arg58[%c0_221, %c0_222, %c0_223], %571 {strides = array<i32>} : memref<4x8x8xf32, #tpu.memory_space<vmem>>, vector<1x8x8xf32>,
    %cst_224 = arith.constant dense<0.000000e+00> : vector<8x8xf32>
    %572 = tpu.matmul %568, %554, %cst_224 {dimension_numbers = #tpu.dot_dimension_numbers<[1], [0], [0], [1], [0, 0, 1, 1], [], []>} : vector<8x8xf32>, vector<8x8xf32>, vector<8x8xf32> -> vector<8x8xf32>
    %573 = vector.extract_strided_slice %544 {offsets = [0, 8], sizes = [8, 8], strides = [1, 1]} : vector<8x32xf32> to vector<8x8xf32>
    %574 = vector.extract_strided_slice %550 {offsets = [0, 8], sizes = [8, 8], strides = [1, 1]} : vector<8x32xf32> to vector<8x8xf32>
    %575 = vector.extract_strided_slice %551 {offsets = [0, 8], sizes = [8, 8], strides = [1, 1]} : vector<8x32xf32> to vector<8x8xf32>
    %cst_225 = arith.constant dense<0.000000e+00> : vector<8x8xf32>
    %576 = tpu.matmul %573, %574, %cst_225 {dimension_numbers = #tpu.dot_dimension_numbers<[1], [1], [0], [0], [0, 0, 1, 0], [], []>} : vector<8x8xf32>, vector<8x8xf32>, vector<8x8xf32> -> vector<8x8xf32>
    %cst_226 = arith.constant 0.353553385 : f32
    %577 = vector.broadcast %cst_226 : f32 to vector<8x8xf32>
    %578 = arith.mulf %576, %577 : vector<8x8xf32>
    %579 = arith.addf %578, %160 : vector<8x8xf32>
    %cst_227 = arith.constant dense<0xFF800000> : vector<8xf32>
    %580 = vector.multi_reduction <maximumf>, %579, %cst_227 [1] : vector<8x8xf32> to vector<8xf32>
    %581 = vector.shape_cast %580 : vector<8xf32> to vector<8x1xf32>
    %582 = vector.broadcast %581 : vector<8x1xf32> to vector<8x8xf32>
    %583 = arith.subf %579, %582 : vector<8x8xf32>
    %584 = math.exp %583 : vector<8x8xf32>
    %cst_228 = arith.constant dense<0.000000e+00> : vector<8xf32>
    %585 = vector.multi_reduction <add>, %584, %cst_228 [1] : vector<8x8xf32> to vector<8xf32>
    %586 = vector.shape_cast %585 : vector<8xf32> to vector<8x1xf32>
    %587 = tpu.reciprocal %586 {approx = true} : vector<8x1xf32> -> vector<8x1xf32>
    %588 = vector.broadcast %587 : vector<8x1xf32> to vector<8x8xf32>
    %589 = arith.mulf %584, %588 : vector<8x8xf32>
    %c1 = arith.constant 1 : index
    %c0_229 = arith.constant 0 : index
    %c0_230 = arith.constant 0 : index
    %590 = vector.load %arg58[%c1, %c0_229, %c0_230] : memref<4x8x8xf32, #tpu.memory_space<vmem>>, vector<1x8x8xf32>
    %591 = vector.shape_cast %590 : vector<1x8x8xf32> to vector<8x8xf32>
    %592 = vector.shape_cast %589 : vector<8x8xf32> to vector<1x8x8xf32>
    tpu.vector_store %arg58[%c1, %c0_229, %c0_230], %592 {strides = array<i32>} : memref<4x8x8xf32, #tpu.memory_space<vmem>>, vector<1x8x8xf32>,
    %cst_231 = arith.constant dense<0.000000e+00> : vector<8x8xf32>
    %593 = tpu.matmul %589, %575, %cst_231 {dimension_numbers = #tpu.dot_dimension_numbers<[1], [0], [0], [1], [0, 0, 1, 1], [], []>} : vector<8x8xf32>, vector<8x8xf32>, vector<8x8xf32> -> vector<8x8xf32>
    %594 = vector.extract_strided_slice %544 {offsets = [0, 16], sizes = [8, 8], strides = [1, 1]} : vector<8x32xf32> to vector<8x8xf32>
    %595 = vector.extract_strided_slice %550 {offsets = [0, 16], sizes = [8, 8], strides = [1, 1]} : vector<8x32xf32> to vector<8x8xf32>
    %596 = vector.extract_strided_slice %551 {offsets = [0, 16], sizes = [8, 8], strides = [1, 1]} : vector<8x32xf32> to vector<8x8xf32>
    %cst_232 = arith.constant dense<0.000000e+00> : vector<8x8xf32>
    %597 = tpu.matmul %594, %595, %cst_232 {dimension_numbers = #tpu.dot_dimension_numbers<[1], [1], [0], [0], [0, 0, 1, 0], [], []>} : vector<8x8xf32>, vector<8x8xf32>, vector<8x8xf32> -> vector<8x8xf32>
    %cst_233 = arith.constant 0.353553385 : f32
    %598 = vector.broadcast %cst_233 : f32 to vector<8x8xf32>
    %599 = arith.mulf %597, %598 : vector<8x8xf32>
    %600 = arith.addf %599, %160 : vector<8x8xf32>
    %cst_234 = arith.constant dense<0xFF800000> : vector<8xf32>
    %601 = vector.multi_reduction <maximumf>, %600, %cst_234 [1] : vector<8x8xf32> to vector<8xf32>
    %602 = vector.shape_cast %601 : vector<8xf32> to vector<8x1xf32>
    %603 = vector.broadcast %602 : vector<8x1xf32> to vector<8x8xf32>
    %604 = arith.subf %600, %603 : vector<8x8xf32>
    %605 = math.exp %604 : vector<8x8xf32>
    %cst_235 = arith.constant dense<0.000000e+00> : vector<8xf32>
    %606 = vector.multi_reduction <add>, %605, %cst_235 [1] : vector<8x8xf32> to vector<8xf32>
    %607 = vector.shape_cast %606 : vector<8xf32> to vector<8x1xf32>
    %608 = tpu.reciprocal %607 {approx = true} : vector<8x1xf32> -> vector<8x1xf32>
    %609 = vector.broadcast %608 : vector<8x1xf32> to vector<8x8xf32>
    %610 = arith.mulf %605, %609 : vector<8x8xf32>
    %c2 = arith.constant 2 : index
    %c0_236 = arith.constant 0 : index
    %c0_237 = arith.constant 0 : index
    %611 = vector.load %arg58[%c2, %c0_236, %c0_237] : memref<4x8x8xf32, #tpu.memory_space<vmem>>, vector<1x8x8xf32>
    %612 = vector.shape_cast %611 : vector<1x8x8xf32> to vector<8x8xf32>
    %613 = vector.shape_cast %610 : vector<8x8xf32> to vector<1x8x8xf32>
    tpu.vector_store %arg58[%c2, %c0_236, %c0_237], %613 {strides = array<i32>} : memref<4x8x8xf32, #tpu.memory_space<vmem>>, vector<1x8x8xf32>,
    %cst_238 = arith.constant dense<0.000000e+00> : vector<8x8xf32>
    %614 = tpu.matmul %610, %596, %cst_238 {dimension_numbers = #tpu.dot_dimension_numbers<[1], [0], [0], [1], [0, 0, 1, 1], [], []>} : vector<8x8xf32>, vector<8x8xf32>, vector<8x8xf32> -> vector<8x8xf32>
    %615 = vector.extract_strided_slice %544 {offsets = [0, 24], sizes = [8, 8], strides = [1, 1]} : vector<8x32xf32> to vector<8x8xf32>
    %616 = vector.extract_strided_slice %550 {offsets = [0, 24], sizes = [8, 8], strides = [1, 1]} : vector<8x32xf32> to vector<8x8xf32>
    %617 = vector.extract_strided_slice %551 {offsets = [0, 24], sizes = [8, 8], strides = [1, 1]} : vector<8x32xf32> to vector<8x8xf32>
    %cst_239 = arith.constant dense<0.000000e+00> : vector<8x8xf32>
    %618 = tpu.matmul %615, %616, %cst_239 {dimension_numbers = #tpu.dot_dimension_numbers<[1], [1], [0], [0], [0, 0, 1, 0], [], []>} : vector<8x8xf32>, vector<8x8xf32>, vector<8x8xf32> -> vector<8x8xf32>
    %cst_240 = arith.constant 0.353553385 : f32
    %619 = vector.broadcast %cst_240 : f32 to vector<8x8xf32>
    %620 = arith.mulf %618, %619 : vector<8x8xf32>
    %621 = arith.addf %620, %160 : vector<8x8xf32>
    %cst_241 = arith.constant dense<0xFF800000> : vector<8xf32>
    %622 = vector.multi_reduction <maximumf>, %621, %cst_241 [1] : vector<8x8xf32> to vector<8xf32>
    %623 = vector.shape_cast %622 : vector<8xf32> to vector<8x1xf32>
    %624 = vector.broadcast %623 : vector<8x1xf32> to vector<8x8xf32>
    %625 = arith.subf %621, %624 : vector<8x8xf32>
    %626 = math.exp %625 : vector<8x8xf32>
    %cst_242 = arith.constant dense<0.000000e+00> : vector<8xf32>
    %627 = vector.multi_reduction <add>, %626, %cst_242 [1] : vector<8x8xf32> to vector<8xf32>
    %628 = vector.shape_cast %627 : vector<8xf32> to vector<8x1xf32>
    %629 = tpu.reciprocal %628 {approx = true} : vector<8x1xf32> -> vector<8x1xf32>
    %630 = vector.broadcast %629 : vector<8x1xf32> to vector<8x8xf32>
    %631 = arith.mulf %626, %630 : vector<8x8xf32>
    %c3 = arith.constant 3 : index
    %c0_243 = arith.constant 0 : index
    %c0_244 = arith.constant 0 : index
    %632 = vector.load %arg58[%c3, %c0_243, %c0_244] : memref<4x8x8xf32, #tpu.memory_space<vmem>>, vector<1x8x8xf32>
    %633 = vector.shape_cast %632 : vector<1x8x8xf32> to vector<8x8xf32>
    %634 = vector.shape_cast %631 : vector<8x8xf32> to vector<1x8x8xf32>
    tpu.vector_store %arg58[%c3, %c0_243, %c0_244], %634 {strides = array<i32>} : memref<4x8x8xf32, #tpu.memory_space<vmem>>, vector<1x8x8xf32>,
    %cst_245 = arith.constant dense<0.000000e+00> : vector<8x8xf32>
    %635 = tpu.matmul %631, %617, %cst_245 {dimension_numbers = #tpu.dot_dimension_numbers<[1], [0], [0], [1], [0, 0, 1, 1], [], []>} : vector<8x8xf32>, vector<8x8xf32>, vector<8x8xf32> -> vector<8x8xf32>
    %636 = tpu.concatenate %572, %593, %614, %635 in 1 : vector<8x8xf32>, vector<8x8xf32>, vector<8x8xf32>, vector<8x8xf32> -> vector<8x32xf32>
    %c0_246 = arith.constant 0 : index
    %c0_247 = arith.constant 0 : index
    %637 = vector.load %arg27[%c0_246, %c0_247] : memref<32x32xf32, #tpu.memory_space<vmem>>, vector<32x32xf32>
    %cst_248 = arith.constant dense<0.000000e+00> : vector<8x32xf32>
    %638 = tpu.matmul %636, %637, %cst_248 {dimension_numbers = #tpu.dot_dimension_numbers<[1], [0], [0], [1], [0, 0, 1, 1], [], []>} : vector<8x32xf32>, vector<32x32xf32>, vector<8x32xf32> -> vector<8x32xf32>
    %c0_249 = arith.constant 0 : index
    %c0_250 = arith.constant 0 : index
    %639 = vector.load %arg25[%c0_249, %c0_250] : memref<1x32xf32, #tpu.memory_space<vmem>>, vector<1x32xf32>
    %640 = vector.broadcast %639 : vector<1x32xf32> to vector<8x32xf32>
    %641 = arith.addf %638, %640 : vector<8x32xf32>
    %642 = arith.addf %537, %641 : vector<8x32xf32>
    %cst_251 = arith.constant dense<0.000000e+00> : vector<8xf32>
    %643 = vector.multi_reduction <add>, %642, %cst_251 [1] : vector<8x32xf32> to vector<8xf32>
    %644 = vector.shape_cast %643 : vector<8xf32> to vector<8x1xf32>
    %cst_252 = arith.constant 3.200000e+01 : f32
    %645 = vector.broadcast %cst_252 : f32 to vector<8x1xf32>
    %646 = arith.divf %644, %645 : vector<8x1xf32>
    %647 = vector.broadcast %646 : vector<8x1xf32> to vector<8x32xf32>
    %648 = arith.subf %642, %647 : vector<8x32xf32>
    %649 = arith.mulf %648, %648 : vector<8x32xf32>
    %cst_253 = arith.constant dense<0.000000e+00> : vector<8xf32>
    %650 = vector.multi_reduction <add>, %649, %cst_253 [1] : vector<8x32xf32> to vector<8xf32>
    %651 = vector.shape_cast %650 : vector<8xf32> to vector<8x1xf32>
    %cst_254 = arith.constant 3.200000e+01 : f32
    %652 = vector.broadcast %cst_254 : f32 to vector<8x1xf32>
    %653 = arith.divf %651, %652 : vector<8x1xf32>
    %654 = vector.broadcast %646 : vector<8x1xf32> to vector<8x32xf32>
    %655 = arith.subf %642, %654 : vector<8x32xf32>
    %cst_255 = arith.constant 9.99999974E-6 : f32
    %656 = vector.broadcast %cst_255 : f32 to vector<8x1xf32>
    %657 = arith.addf %653, %656 : vector<8x1xf32>
    %658 = math.rsqrt %657 : vector<8x1xf32>
    %659 = vector.broadcast %658 : vector<8x1xf32> to vector<8x32xf32>
    %660 = arith.mulf %655, %659 : vector<8x32xf32>
    %c0_256 = arith.constant 0 : index
    %c0_257 = arith.constant 0 : index
    %661 = vector.load %arg36[%c0_256, %c0_257] : memref<1x32xf32, #tpu.memory_space<vmem>>, vector<1x32xf32>
    %662 = vector.broadcast %661 : vector<1x32xf32> to vector<8x32xf32>
    %663 = arith.mulf %660, %662 : vector<8x32xf32>
    %c0_258 = arith.constant 0 : index
    %c0_259 = arith.constant 0 : index
    %664 = vector.load %arg35[%c0_258, %c0_259] : memref<1x32xf32, #tpu.memory_space<vmem>>, vector<1x32xf32>
    %665 = vector.broadcast %664 : vector<1x32xf32> to vector<8x32xf32>
    %666 = arith.addf %663, %665 : vector<8x32xf32>
    %c0_260 = arith.constant 0 : index
    %c0_261 = arith.constant 0 : index
    %667 = vector.load %arg31[%c0_260, %c0_261] : memref<32x64xf32, #tpu.memory_space<vmem>>, vector<32x64xf32>
    %cst_262 = arith.constant dense<0.000000e+00> : vector<8x64xf32>
    %668 = tpu.matmul %666, %667, %cst_262 {dimension_numbers = #tpu.dot_dimension_numbers<[1], [0], [0], [1], [0, 0, 1, 1], [], []>} : vector<8x32xf32>, vector<32x64xf32>, vector<8x64xf32> -> vector<8x64xf32>
    %c0_263 = arith.constant 0 : index
    %c0_264 = arith.constant 0 : index
    %669 = vector.load %arg29[%c0_263, %c0_264] : memref<1x64xf32, #tpu.memory_space<vmem>>, vector<1x64xf32>
    %670 = vector.broadcast %669 : vector<1x64xf32> to vector<8x64xf32>
    %671 = arith.addf %668, %670 : vector<8x64xf32>
    %cst_265 = arith.constant 0.000000e+00 : f32
    %672 = vector.broadcast %cst_265 : f32 to vector<8x64xf32>
    %673 = arith.maximumf %671, %672 : vector<8x64xf32>
    %c0_266 = arith.constant 0 : index
    %c0_267 = arith.constant 0 : index
    %674 = vector.load %arg32[%c0_266, %c0_267] : memref<64x32xf32, #tpu.memory_space<vmem>>, vector<64x32xf32>
    %cst_268 = arith.constant dense<0.000000e+00> : vector<8x32xf32>
    %675 = tpu.matmul %673, %674, %cst_268 {dimension_numbers = #tpu.dot_dimension_numbers<[1], [0], [0], [1], [0, 0, 1, 1], [], []>} : vector<8x64xf32>, vector<64x32xf32>, vector<8x32xf32> -> vector<8x32xf32>
    %c0_269 = arith.constant 0 : index
    %c0_270 = arith.constant 0 : index
    %676 = vector.load %arg30[%c0_269, %c0_270] : memref<1x32xf32, #tpu.memory_space<vmem>>, vector<1x32xf32>
    %677 = vector.broadcast %676 : vector<1x32xf32> to vector<8x32xf32>
    %678 = arith.addf %675, %677 : vector<8x32xf32>
    %679 = arith.addf %666, %678 : vector<8x32xf32>
    %cst_271 = arith.constant dense<0.000000e+00> : vector<8xf32>
    %680 = vector.multi_reduction <add>, %679, %cst_271 [1] : vector<8x32xf32> to vector<8xf32>
    %681 = vector.shape_cast %680 : vector<8xf32> to vector<8x1xf32>
    %cst_272 = arith.constant 3.200000e+01 : f32
    %682 = vector.broadcast %cst_272 : f32 to vector<8x1xf32>
    %683 = arith.divf %681, %682 : vector<8x1xf32>
    %684 = vector.broadcast %683 : vector<8x1xf32> to vector<8x32xf32>
    %685 = arith.subf %679, %684 : vector<8x32xf32>
    %686 = arith.mulf %685, %685 : vector<8x32xf32>
    %cst_273 = arith.constant dense<0.000000e+00> : vector<8xf32>
    %687 = vector.multi_reduction <add>, %686, %cst_273 [1] : vector<8x32xf32> to vector<8xf32>
    %688 = vector.shape_cast %687 : vector<8xf32> to vector<8x1xf32>
    %cst_274 = arith.constant 3.200000e+01 : f32
    %689 = vector.broadcast %cst_274 : f32 to vector<8x1xf32>
    %690 = arith.divf %688, %689 : vector<8x1xf32>
    %691 = vector.broadcast %683 : vector<8x1xf32> to vector<8x32xf32>
    %692 = arith.subf %679, %691 : vector<8x32xf32>
    %cst_275 = arith.constant 9.99999974E-6 : f32
    %693 = vector.broadcast %cst_275 : f32 to vector<8x1xf32>
    %694 = arith.addf %690, %693 : vector<8x1xf32>
    %695 = math.rsqrt %694 : vector<8x1xf32>
    %696 = vector.broadcast %695 : vector<8x1xf32> to vector<8x32xf32>
    %697 = arith.mulf %692, %696 : vector<8x32xf32>
    %c0_276 = arith.constant 0 : index
    %c0_277 = arith.constant 0 : index
    %698 = vector.load %arg38[%c0_276, %c0_277] : memref<1x32xf32, #tpu.memory_space<vmem>>, vector<1x32xf32>
    %699 = vector.broadcast %698 : vector<1x32xf32> to vector<8x32xf32>
    %700 = arith.mulf %697, %699 : vector<8x32xf32>
    %c0_278 = arith.constant 0 : index
    %c0_279 = arith.constant 0 : index
    %701 = vector.load %arg37[%c0_278, %c0_279] : memref<1x32xf32, #tpu.memory_space<vmem>>, vector<1x32xf32>
    %702 = vector.broadcast %701 : vector<1x32xf32> to vector<8x32xf32>
    %703 = arith.addf %700, %702 : vector<8x32xf32>
    %c0_280 = arith.constant 0 : index
    %c0_281 = arith.constant 0 : index
    %704 = vector.load %arg6[%c0_280, %c0_281] : memref<32x5xf32, #tpu.memory_space<vmem>>, vector<32x5xf32>
    %cst_282 = arith.constant dense<0.000000e+00> : vector<8x5xf32>
    %705 = tpu.matmul %703, %704, %cst_282 {dimension_numbers = #tpu.dot_dimension_numbers<[1], [0], [0], [1], [0, 0, 1, 1], [], []>} : vector<8x32xf32>, vector<32x5xf32>, vector<8x5xf32> -> vector<8x5xf32>
    %c0_283 = arith.constant 0 : index
    %c0_284 = arith.constant 0 : index
    %706 = vector.load %arg5[%c0_283, %c0_284] : memref<1x5xf32, #tpu.memory_space<vmem>>, vector<1x5xf32>
    %707 = vector.broadcast %706 : vector<1x5xf32> to vector<8x5xf32>
    %708 = arith.addf %705, %707 : vector<8x5xf32>
    %c0_285 = arith.constant 0 : index
    %c0_286 = arith.constant 0 : index
    %709 = vector.load %arg57[%c0_285, %c0_286] : memref<8x5xf32, #tpu.memory_space<vmem>>, vector<8x5xf32>
    tpu.vector_store %arg57[%c0_285, %c0_286], %708 {strides = array<i32>} : memref<8x5xf32, #tpu.memory_space<vmem>>, vector<8x5xf32>,
    return
  }
  func.func @transform_0(%arg0: i32) -> (i32, i32) {
    %c0_i32 = arith.constant 0 : i32
    %c0_i32_0 = arith.constant 0 : i32
    return %arg0, %c0_i32 : i32, i32
  }
  func.func @transform_1(%arg0: i32) -> (i32, i32) {
    %c0_i32 = arith.constant 0 : i32
    %c0_i32_0 = arith.constant 0 : i32
    %c0_i32_1 = arith.constant 0 : i32
    return %c0_i32, %c0_i32_0 : i32, i32
  }
  func.func @transform_2(%arg0: i32) -> (i32, i32) {
    %c0_i32 = arith.constant 0 : i32
    %c0_i32_0 = arith.constant 0 : i32
    %c0_i32_1 = arith.constant 0 : i32
    return %c0_i32, %c0_i32_0 : i32, i32
  }
  func.func @transform_3(%arg0: i32) -> (i32, i32) {
    %c0_i32 = arith.constant 0 : i32
    %c0_i32_0 = arith.constant 0 : i32
    %c0_i32_1 = arith.constant 0 : i32
    return %c0_i32, %c0_i32_0 : i32, i32
  }
  func.func @transform_4(%arg0: i32) -> (i32, i32) {
    %c0_i32 = arith.constant 0 : i32
    %c0_i32_0 = arith.constant 0 : i32
    %c0_i32_1 = arith.constant 0 : i32
    return %c0_i32, %c0_i32_0 : i32, i32
  }
  func.func @transform_5(%arg0: i32) -> (i32, i32) {
    %c0_i32 = arith.constant 0 : i32
    %c0_i32_0 = arith.constant 0 : i32
    %c0_i32_1 = arith.constant 0 : i32
    return %c0_i32, %c0_i32_0 : i32, i32
  }
  func.func @transform_6(%arg0: i32) -> (i32, i32) {
    %c0_i32 = arith.constant 0 : i32
    %c0_i32_0 = arith.constant 0 : i32
    %c0_i32_1 = arith.constant 0 : i32
    return %c0_i32, %c0_i32_0 : i32, i32
  }
  func.func @transform_7(%arg0: i32) -> (i32, i32) {
    %c0_i32 = arith.constant 0 : i32
    %c0_i32_0 = arith.constant 0 : i32
    %c0_i32_1 = arith.constant 0 : i32
    return %c0_i32, %c0_i32_0 : i32, i32
  }
  func.func @transform_8(%arg0: i32) -> (i32, i32) {
    %c0_i32 = arith.constant 0 : i32
    %c0_i32_0 = arith.constant 0 : i32
    %c0_i32_1 = arith.constant 0 : i32
    return %c0_i32, %c0_i32_0 : i32, i32
  }
  func.func @transform_9(%arg0: i32) -> (i32, i32) {
    %c0_i32 = arith.constant 0 : i32
    %c0_i32_0 = arith.constant 0 : i32
    %c0_i32_1 = arith.constant 0 : i32
    return %c0_i32, %c0_i32_0 : i32, i32
  }
  func.func @transform_10(%arg0: i32) -> (i32, i32) {
    %c0_i32 = arith.constant 0 : i32
    %c0_i32_0 = arith.constant 0 : i32
    %c0_i32_1 = arith.constant 0 : i32
    return %c0_i32, %c0_i32_0 : i32, i32
  }
  func.func @transform_11(%arg0: i32) -> (i32, i32) {
    %c0_i32 = arith.constant 0 : i32
    %c0_i32_0 = arith.constant 0 : i32
    %c0_i32_1 = arith.constant 0 : i32
    return %c0_i32, %c0_i32_0 : i32, i32
  }
  func.func @transform_12(%arg0: i32) -> (i32, i32) {
    %c0_i32 = arith.constant 0 : i32
    %c0_i32_0 = arith.constant 0 : i32
    %c0_i32_1 = arith.constant 0 : i32
    return %c0_i32, %c0_i32_0 : i32, i32
  }
  func.func @transform_13(%arg0: i32) -> (i32, i32) {
    %c0_i32 = arith.constant 0 : i32
    %c0_i32_0 = arith.constant 0 : i32
    %c0_i32_1 = arith.constant 0 : i32
    return %c0_i32, %c0_i32_0 : i32, i32
  }
  func.func @transform_14(%arg0: i32) -> (i32, i32) {
    %c0_i32 = arith.constant 0 : i32
    %c0_i32_0 = arith.constant 0 : i32
    %c0_i32_1 = arith.constant 0 : i32
    return %c0_i32, %c0_i32_0 : i32, i32
  }
  func.func @transform_15(%arg0: i32) -> (i32, i32) {
    %c0_i32 = arith.constant 0 : i32
    %c0_i32_0 = arith.constant 0 : i32
    %c0_i32_1 = arith.constant 0 : i32
    return %c0_i32, %c0_i32_0 : i32, i32
  }
  func.func @transform_16(%arg0: i32) -> (i32, i32) {
    %c0_i32 = arith.constant 0 : i32
    %c0_i32_0 = arith.constant 0 : i32
    %c0_i32_1 = arith.constant 0 : i32
    return %c0_i32, %c0_i32_0 : i32, i32
  }
  func.func @transform_17(%arg0: i32) -> (i32, i32) {
    %c0_i32 = arith.constant 0 : i32
    %c0_i32_0 = arith.constant 0 : i32
    %c0_i32_1 = arith.constant 0 : i32
    return %c0_i32, %c0_i32_0 : i32, i32
  }
  func.func @transform_18(%arg0: i32) -> (i32, i32) {
    %c0_i32 = arith.constant 0 : i32
    %c0_i32_0 = arith.constant 0 : i32
    %c0_i32_1 = arith.constant 0 : i32
    return %c0_i32, %c0_i32_0 : i32, i32
  }
  func.func @transform_19(%arg0: i32) -> (i32, i32) {
    %c0_i32 = arith.constant 0 : i32
    %c0_i32_0 = arith.constant 0 : i32
    %c0_i32_1 = arith.constant 0 : i32
    return %c0_i32, %c0_i32_0 : i32, i32
  }
  func.func @transform_20(%arg0: i32) -> (i32, i32) {
    %c0_i32 = arith.constant 0 : i32
    %c0_i32_0 = arith.constant 0 : i32
    %c0_i32_1 = arith.constant 0 : i32
    return %c0_i32, %c0_i32_0 : i32, i32
  }
  func.func @transform_21(%arg0: i32) -> (i32, i32) {
    %c0_i32 = arith.constant 0 : i32
    %c0_i32_0 = arith.constant 0 : i32
    %c0_i32_1 = arith.constant 0 : i32
    return %c0_i32, %c0_i32_0 : i32, i32
  }
  func.func @transform_22(%arg0: i32) -> (i32, i32) {
    %c0_i32 = arith.constant 0 : i32
    %c0_i32_0 = arith.constant 0 : i32
    %c0_i32_1 = arith.constant 0 : i32
    return %c0_i32, %c0_i32_0 : i32, i32
  }
  func.func @transform_23(%arg0: i32) -> (i32, i32) {
    %c0_i32 = arith.constant 0 : i32
    %c0_i32_0 = arith.constant 0 : i32
    %c0_i32_1 = arith.constant 0 : i32
    return %c0_i32, %c0_i32_0 : i32, i32
  }
  func.func @transform_24(%arg0: i32) -> (i32, i32) {
    %c0_i32 = arith.constant 0 : i32
    %c0_i32_0 = arith.constant 0 : i32
    %c0_i32_1 = arith.constant 0 : i32
    return %c0_i32, %c0_i32_0 : i32, i32
  }
  func.func @transform_25(%arg0: i32) -> (i32, i32) {
    %c0_i32 = arith.constant 0 : i32
    %c0_i32_0 = arith.constant 0 : i32
    %c0_i32_1 = arith.constant 0 : i32
    return %c0_i32, %c0_i32_0 : i32, i32
  }
  func.func @transform_26(%arg0: i32) -> (i32, i32) {
    %c0_i32 = arith.constant 0 : i32
    %c0_i32_0 = arith.constant 0 : i32
    %c0_i32_1 = arith.constant 0 : i32
    return %c0_i32, %c0_i32_0 : i32, i32
  }
  func.func @transform_27(%arg0: i32) -> (i32, i32) {
    %c0_i32 = arith.constant 0 : i32
    %c0_i32_0 = arith.constant 0 : i32
    %c0_i32_1 = arith.constant 0 : i32
    return %c0_i32, %c0_i32_0 : i32, i32
  }
  func.func @transform_28(%arg0: i32) -> (i32, i32) {
    %c0_i32 = arith.constant 0 : i32
    %c0_i32_0 = arith.constant 0 : i32
    %c0_i32_1 = arith.constant 0 : i32
    return %c0_i32, %c0_i32_0 : i32, i32
  }
  func.func @transform_29(%arg0: i32) -> (i32, i32) {
    %c0_i32 = arith.constant 0 : i32
    %c0_i32_0 = arith.constant 0 : i32
    %c0_i32_1 = arith.constant 0 : i32
    return %c0_i32, %c0_i32_0 : i32, i32
  }
  func.func @transform_30(%arg0: i32) -> (i32, i32) {
    %c0_i32 = arith.constant 0 : i32
    %c0_i32_0 = arith.constant 0 : i32
    %c0_i32_1 = arith.constant 0 : i32
    return %c0_i32, %c0_i32_0 : i32, i32
  }
  func.func @transform_31(%arg0: i32) -> (i32, i32) {
    %c0_i32 = arith.constant 0 : i32
    %c0_i32_0 = arith.constant 0 : i32
    %c0_i32_1 = arith.constant 0 : i32
    return %c0_i32, %c0_i32_0 : i32, i32
  }
  func.func @transform_32(%arg0: i32) -> (i32, i32) {
    %c0_i32 = arith.constant 0 : i32
    %c0_i32_0 = arith.constant 0 : i32
    %c0_i32_1 = arith.constant 0 : i32
    return %c0_i32, %c0_i32_0 : i32, i32
  }
  func.func @transform_33(%arg0: i32) -> (i32, i32) {
    %c0_i32 = arith.constant 0 : i32
    %c0_i32_0 = arith.constant 0 : i32
    %c0_i32_1 = arith.constant 0 : i32
    return %c0_i32, %c0_i32_0 : i32, i32
  }
  func.func @transform_34(%arg0: i32) -> (i32, i32) {
    %c0_i32 = arith.constant 0 : i32
    %c0_i32_0 = arith.constant 0 : i32
    %c0_i32_1 = arith.constant 0 : i32
    return %c0_i32, %c0_i32_0 : i32, i32
  }
  func.func @transform_35(%arg0: i32) -> (i32, i32) {
    %c0_i32 = arith.constant 0 : i32
    %c0_i32_0 = arith.constant 0 : i32
    %c0_i32_1 = arith.constant 0 : i32
    return %c0_i32, %c0_i32_0 : i32, i32
  }
  func.func @transform_36(%arg0: i32) -> (i32, i32) {
    %c0_i32 = arith.constant 0 : i32
    %c0_i32_0 = arith.constant 0 : i32
    %c0_i32_1 = arith.constant 0 : i32
    return %c0_i32, %c0_i32_0 : i32, i32
  }
  func.func @transform_37(%arg0: i32) -> (i32, i32) {
    %c0_i32 = arith.constant 0 : i32
    %c0_i32_0 = arith.constant 0 : i32
    %c0_i32_1 = arith.constant 0 : i32
    return %c0_i32, %c0_i32_0 : i32, i32
  }
  func.func @transform_38(%arg0: i32) -> (i32, i32) {
    %c0_i32 = arith.constant 0 : i32
    %c0_i32_0 = arith.constant 0 : i32
    %c0_i32_1 = arith.constant 0 : i32
    return %c0_i32, %c0_i32_0 : i32, i32
  }
  func.func @transform_39(%arg0: i32) -> (i32, i32) {
    %c0_i32 = arith.constant 0 : i32
    %c0_i32_0 = arith.constant 0 : i32
    %c0_i32_1 = arith.constant 0 : i32
    return %c0_i32, %c0_i32_0 : i32, i32
  }
  func.func @transform_40(%arg0: i32) -> (i32, i32) {
    %c0_i32 = arith.constant 0 : i32
    %c0_i32_0 = arith.constant 0 : i32
    %c0_i32_1 = arith.constant 0 : i32
    return %c0_i32, %c0_i32_0 : i32, i32
  }
  func.func @transform_41(%arg0: i32) -> (i32, i32) {
    %c0_i32 = arith.constant 0 : i32
    %c0_i32_0 = arith.constant 0 : i32
    %c0_i32_1 = arith.constant 0 : i32
    return %c0_i32, %c0_i32_0 : i32, i32
  }
  func.func @transform_42(%arg0: i32) -> (i32, i32) {
    %c0_i32 = arith.constant 0 : i32
    %c0_i32_0 = arith.constant 0 : i32
    %c0_i32_1 = arith.constant 0 : i32
    return %c0_i32, %c0_i32_0 : i32, i32
  }
  func.func @transform_43(%arg0: i32) -> (i32, i32) {
    %c0_i32 = arith.constant 0 : i32
    %c0_i32_0 = arith.constant 0 : i32
    %c0_i32_1 = arith.constant 0 : i32
    return %c0_i32, %c0_i32_0 : i32, i32
  }
  func.func @transform_44(%arg0: i32) -> (i32, i32) {
    %c0_i32 = arith.constant 0 : i32
    %c0_i32_0 = arith.constant 0 : i32
    %c0_i32_1 = arith.constant 0 : i32
    return %c0_i32, %c0_i32_0 : i32, i32
  }
  func.func @transform_45(%arg0: i32) -> (i32, i32) {
    %c0_i32 = arith.constant 0 : i32
    %c0_i32_0 = arith.constant 0 : i32
    %c0_i32_1 = arith.constant 0 : i32
    return %c0_i32, %c0_i32_0 : i32, i32
  }
  func.func @transform_46(%arg0: i32) -> (i32, i32) {
    %c0_i32 = arith.constant 0 : i32
    %c0_i32_0 = arith.constant 0 : i32
    %c0_i32_1 = arith.constant 0 : i32
    return %c0_i32, %c0_i32_0 : i32, i32
  }
  func.func @transform_47(%arg0: i32) -> (i32, i32) {
    %c0_i32 = arith.constant 0 : i32
    %c0_i32_0 = arith.constant 0 : i32
    %c0_i32_1 = arith.constant 0 : i32
    return %c0_i32, %c0_i32_0 : i32, i32
  }
  func.func @transform_48(%arg0: i32) -> (i32, i32) {
    %c0_i32 = arith.constant 0 : i32
    %c0_i32_0 = arith.constant 0 : i32
    %c0_i32_1 = arith.constant 0 : i32
    return %c0_i32, %c0_i32_0 : i32, i32
  }
  func.func @transform_49(%arg0: i32) -> (i32, i32) {
    %c0_i32 = arith.constant 0 : i32
    %c0_i32_0 = arith.constant 0 : i32
    %c0_i32_1 = arith.constant 0 : i32
    return %c0_i32, %c0_i32_0 : i32, i32
  }
  func.func @transform_50(%arg0: i32) -> (i32, i32) {
    %c0_i32 = arith.constant 0 : i32
    %c0_i32_0 = arith.constant 0 : i32
    %c0_i32_1 = arith.constant 0 : i32
    return %c0_i32, %c0_i32_0 : i32, i32
  }
  func.func @transform_51(%arg0: i32) -> (i32, i32) {
    %c0_i32 = arith.constant 0 : i32
    %c0_i32_0 = arith.constant 0 : i32
    %c0_i32_1 = arith.constant 0 : i32
    return %c0_i32, %c0_i32_0 : i32, i32
  }
  func.func @transform_52(%arg0: i32) -> (i32, i32) {
    %c0_i32 = arith.constant 0 : i32
    %c0_i32_0 = arith.constant 0 : i32
    %c0_i32_1 = arith.constant 0 : i32
    return %c0_i32, %c0_i32_0 : i32, i32
  }
  func.func @transform_53(%arg0: i32) -> (i32, i32) {
    %c0_i32 = arith.constant 0 : i32
    %c0_i32_0 = arith.constant 0 : i32
    %c0_i32_1 = arith.constant 0 : i32
    return %c0_i32, %c0_i32_0 : i32, i32
  }
  func.func @transform_54(%arg0: i32) -> (i32, i32) {
    %c0_i32 = arith.constant 0 : i32
    %c0_i32_0 = arith.constant 0 : i32
    %c0_i32_1 = arith.constant 0 : i32
    return %c0_i32, %c0_i32_0 : i32, i32
  }
  func.func @transform_55(%arg0: i32) -> (i32, i32) {
    %c0_i32 = arith.constant 0 : i32
    %c0_i32_0 = arith.constant 0 : i32
    %c0_i32_1 = arith.constant 0 : i32
    return %c0_i32, %c0_i32_0 : i32, i32
  }
  func.func @transform_56(%arg0: i32) -> (i32, i32) {
    %c0_i32 = arith.constant 0 : i32
    %c0_i32_0 = arith.constant 0 : i32
    return %arg0, %c0_i32 : i32, i32
  }
  func.func @transform_57(%arg0: i32) -> (i32, i32, i32) {
    %c0_i32 = arith.constant 0 : i32
    %c0_i32_0 = arith.constant 0 : i32
    %c0_i32_1 = arith.constant 0 : i32
    return %arg0, %c0_i32, %c0_i32_0 : i32, i32, i32
  }
}

</mosaic_0001>

<llo_original>
// kernel: transformer_forward.1
$region0: #{transformer_forward.1}
  #allocation0 [shape = 'u32[]', space=smem, size = 0x4, offset = 0x4, fixed_abs, tag = 'smem constant byte address 0x4 - core index']
  #allocation1 [shape = 'u32[144,128]{1,0:T(1,128)}', space=vmem, size = 0x12000, scoped, tag = 'internal scratch']
  %s0 = inlined_call_operand.smem [shape: u32[58], index: -1, kind: input, shape index: {}]
  %s1 = sld [smem:[%s0]]
  %s2 = scalar_lea.smem %s0, 1
  %s3 = sld [smem:[%s2]]
  %s4 = scalar_lea.smem %s0, 2
  %s5 = sld [smem:[%s4]]
  %s6 = scalar_lea.smem %s0, 3
  %s7 = sld [smem:[%s6]]
  %s8 = scalar_lea.smem %s0, 4
  %s9 = sld [smem:[%s8]]
  %s10 = scalar_lea.smem %s0, 5
  %s11 = sld [smem:[%s10]]
  %s12 = scalar_lea.smem %s0, 6
  %s13 = sld [smem:[%s12]]
  %s14 = scalar_lea.smem %s0, 7
  %s15 = sld [smem:[%s14]]
  %s16 = scalar_lea.smem %s0, 8
  %s17 = sld [smem:[%s16]]
  %s18 = scalar_lea.smem %s0, 9
  %s19 = sld [smem:[%s18]]
  %s20 = scalar_lea.smem %s0, 10
  %s21 = sld [smem:[%s20]]
  %s22 = scalar_lea.smem %s0, 11
  %s23 = sld [smem:[%s22]]
  %s24 = scalar_lea.smem %s0, 12
  %s25 = sld [smem:[%s24]]
  %s26 = scalar_lea.smem %s0, 13
  %s27 = sld [smem:[%s26]]
  %s28 = scalar_lea.smem %s0, 14
  %s29 = sld [smem:[%s28]]
  %s30 = scalar_lea.smem %s0, 15
  %s31 = sld [smem:[%s30]]
  %s32 = scalar_lea.smem %s0, 16
  %s33 = sld [smem:[%s32]]
  %s34 = scalar_lea.smem %s0, 17
  %s35 = sld [smem:[%s34]]
  %s36 = scalar_lea.smem %s0, 18
  %s37 = sld [smem:[%s36]]
  %s38 = scalar_lea.smem %s0, 19
  %s39 = sld [smem:[%s38]]
  %s40 = scalar_lea.smem %s0, 20
  %s41 = sld [smem:[%s40]]
  %s42 = scalar_lea.smem %s0, 21
  %s43 = sld [smem:[%s42]]
  %s44 = scalar_lea.smem %s0, 22
  %s45 = sld [smem:[%s44]]
  %s46 = scalar_lea.smem %s0, 23
  %s47 = sld [smem:[%s46]]
  %s48 = scalar_lea.smem %s0, 24
  %s49 = sld [smem:[%s48]]
  %s50 = scalar_lea.smem %s0, 25
  %s51 = sld [smem:[%s50]]
  %s52 = scalar_lea.smem %s0, 26
  %s53 = sld [smem:[%s52]]
  %s54 = scalar_lea.smem %s0, 27
  %s55 = sld [smem:[%s54]]
  %s56 = scalar_lea.smem %s0, 28
  %s57 = sld [smem:[%s56]]
  %s58 = scalar_lea.smem %s0, 29
  %s59 = sld [smem:[%s58]]
  %s60 = scalar_lea.smem %s0, 30
  %s61 = sld [smem:[%s60]]
  %s62 = scalar_lea.smem %s0, 31
  %s63 = sld [smem:[%s62]]
  %s64 = scalar_lea.smem %s0, 32
  %s65 = sld [smem:[%s64]]
  %s66 = scalar_lea.smem %s0, 33
  %s67 = sld [smem:[%s66]]
  %s68 = scalar_lea.smem %s0, 34
  %s69 = sld [smem:[%s68]]
  %s70 = scalar_lea.smem %s0, 35
  %s71 = sld [smem:[%s70]]
  %s72 = scalar_lea.smem %s0, 36
  %s73 = sld [smem:[%s72]]
  %s74 = scalar_lea.smem %s0, 37
  %s75 = sld [smem:[%s74]]
  %s76 = scalar_lea.smem %s0, 38
  %s77 = sld [smem:[%s76]]
  %s78 = scalar_lea.smem %s0, 39
  %s79 = sld [smem:[%s78]]
  %s80 = scalar_lea.smem %s0, 40
  %s81 = sld [smem:[%s80]]
  %s82 = scalar_lea.smem %s0, 41
  %s83 = sld [smem:[%s82]]
  %s84 = scalar_lea.smem %s0, 42
  %s85 = sld [smem:[%s84]]
  %s86 = scalar_lea.smem %s0, 43
  %s87 = sld [smem:[%s86]]
  %s88 = scalar_lea.smem %s0, 44
  %s89 = sld [smem:[%s88]]
  %s90 = scalar_lea.smem %s0, 45
  %s91 = sld [smem:[%s90]]
  %s92 = scalar_lea.smem %s0, 46
  %s93 = sld [smem:[%s92]]
  %s94 = scalar_lea.smem %s0, 47
  %s95 = sld [smem:[%s94]]
  %s96 = scalar_lea.smem %s0, 48
  %s97 = sld [smem:[%s96]]
  %s98 = scalar_lea.smem %s0, 49
  %s99 = sld [smem:[%s98]]
  %s100 = scalar_lea.smem %s0, 50
  %s101 = sld [smem:[%s100]]
  %s102 = scalar_lea.smem %s0, 51
  %s103 = sld [smem:[%s102]]
  %s104 = scalar_lea.smem %s0, 52
  %s105 = sld [smem:[%s104]]
  %s106 = scalar_lea.smem %s0, 53
  %s107 = sld [smem:[%s106]]
  %s108 = scalar_lea.smem %s0, 54
  %s109 = sld [smem:[%s108]]
  %s110 = scalar_lea.smem %s0, 55
  %s111 = sld [smem:[%s110]]
  %s112 = scalar_lea.smem %s0, 56
  %s113 = sld [smem:[%s112]]
  %s114 = scalar_lea.smem %s0, 57
  %s115 = sld [smem:[%s114]]
  %116 = xla_tuple %s113, %s115
  %s117 = sld [smem:[#allocation0]]
  $region325: #{transformer_forward.1} parent=0
    _
  %s119 = ssub.s32 1, %s117
  %s120 = scalar_select 0, %s119, %s117
  $region1: #{transformer_forward.1} parent=0
    #allocation2 [shape = 'u8[512]{0}', space=vmem, size = 0x400, scoped, tag = 'input window, operand 33, single buffered']
    #allocation3 [shape = 's32[2]{0}', space=sflag, size = 0x8, scoped, tag = 'scoped memory for transformer_forward.1']
    #allocation4 [shape = 's32[2]{0}', space=sflag, size = 0x8, scoped, tag = 'scoped memory for transformer_forward.1']
    #allocation5 [shape = 'u8[512]{0}', space=vmem, size = 0x400, scoped, tag = 'input window, operand 34, single buffered']
    #allocation6 [shape = 's32[1]{0}', space=sflag, size = 0x4, scoped, tag = 'scoped memory for transformer_forward.1']
    #allocation7 [shape = 'u8[512]{0}', space=vmem, size = 0x400, scoped, tag = 'input window, operand 35, single buffered']
    #allocation8 [shape = 'u8[512]{0}', space=vmem, size = 0x400, scoped, tag = 'input window, operand 36, single buffered']
    #allocation9 [shape = 's32[1]{0}', space=sflag, size = 0x4, scoped, tag = 'scoped memory for transformer_forward.1']
    #allocation10 [shape = 'u8[512]{0}', space=vmem, size = 0x400, scoped, tag = 'input window, operand 37, single buffered']
    #allocation11 [shape = 'u8[512]{0}', space=vmem, size = 0x400, scoped, tag = 'input window, operand 38, single buffered']
    #allocation12 [shape = 's32[1]{0}', space=sflag, size = 0x4, scoped, tag = 'scoped memory for transformer_forward.1']
    #allocation13 [shape = 'u8[512]{0}', space=vmem, size = 0x400, scoped, tag = 'input window, operand 39, single buffered']
    #allocation14 [shape = 'u8[512]{0}', space=vmem, size = 0x400, scoped, tag = 'input window, operand 44, single buffered']
    #allocation15 [shape = 's32[1]{0}', space=sflag, size = 0x4, scoped, tag = 'scoped memory for transformer_forward.1']
    #allocation16 [shape = 'u8[512]{0}', space=vmem, size = 0x400, scoped, tag = 'input window, operand 45, single buffered']
    #allocation17 [shape = 'u8[512]{0}', space=vmem, size = 0x400, scoped, tag = 'input window, operand 48, single buffered']
    #allocation18 [shape = 's32[1]{0}', space=sflag, size = 0x4, scoped, tag = 'scoped memory for transformer_forward.1']
    #allocation19 [shape = 'u8[512]{0}', space=vmem, size = 0x400, scoped, tag = 'input window, operand 49, single buffered']
    #allocation20 [shape = 'u8[512]{0}', space=vmem, size = 0x400, scoped, tag = 'input window, operand 50, single buffered']
    #allocation21 [shape = 's32[1]{0}', space=sflag, size = 0x4, scoped, tag = 'scoped memory for transformer_forward.1']
    #allocation22 [shape = 'u8[512]{0}', space=vmem, size = 0x400, scoped, tag = 'input window, operand 51, single buffered']
    #allocation23 [shape = 'u8[512]{0}', space=vmem, size = 0x400, scoped, tag = 'input window, operand 52, single buffered']
    #allocation24 [shape = 's32[1]{0}', space=sflag, size = 0x4, scoped, tag = 'scoped memory for transformer_forward.1']
    #allocation25 [shape = 'u8[512]{0}', space=vmem, size = 0x400, scoped, tag = 'input window, operand 53, single buffered']
    #allocation26 [shape = 'u8[32768]{0}', space=vmem, size = 0x8000, scoped, tag = 'output window, operand 1']
    %121 = vsyncpa [#allocation3], 0
    %122 = vsyncpa [#allocation6], 0
    %123 = vsyncpa [#allocation9], 0
    %124 = vsyncpa [#allocation12], 0
    %125 = vsyncpa [#allocation15], 0
    %126 = vsyncpa [#allocation18], 0
    %127 = vsyncpa [#allocation21], 0
    %128 = vsyncpa [#allocation24], 0
    %129 = vsyncpa [#allocation4], 0
    %s130 = scalar_lea.sflag [#allocation4], 1
    %131 = vsyncpa %s130, 0
    loop: start=0, step=1, limit=4
    $region2: #{transformer_forward.1} parent=1 // loop_pre_header
      _
    $region3: #{transformer_forward.1} parent=1 // loop_header
      %s133 = sphi 0, %s137
      %p134 = scmp.ge.s32.totalorder %s133, 4
      %s143 = sphi 0, %s145
      %s146 = sphi 0, %s143
      %s147 = sphi 0, %s146
      %s163 = sphi 0, %s147
      %s167 = sphi 0, %s167
      %s169 = sphi 0, %s167
      %s170 = sphi 0, %s169
      %s184 = sphi 0, %s170
      %s188 = sphi 0, %s188
      %s190 = sphi 0, %s188
      %s191 = sphi 0, %s190
      %s205 = sphi 0, %s191
      %s209 = sphi 0, %s209
      %s211 = sphi 0, %s209
      %s212 = sphi 0, %s211
      %s226 = sphi 0, %s212
      %s230 = sphi 0, %s230
      %s232 = sphi 0, %s230
      %s233 = sphi 0, %s232
      %s247 = sphi 0, %s233
      %s251 = sphi 0, %s251
      %s253 = sphi 0, %s251
      %s254 = sphi 0, %s253
      %s268 = sphi 0, %s254
      %s272 = sphi 0, %s272
      %s274 = sphi 0, %s272
      %s275 = sphi 0, %s274
      %s289 = sphi 0, %s275
      %s293 = sphi 0, %s293
      %s295 = sphi 0, %s293
      %s296 = sphi 0, %s295
      %s310 = sphi 0, %s296
      %s314 = sphi 0, %s314
      %s316 = sphi 0, %s314
      %s317 = sphi 0, %s316
      %s331 = sphi 0, %s317
      %s335 = sphi 0, %s335
      %s337 = sphi 0, %s335
      %s338 = sphi 0, %s337
      %s352 = sphi 0, %s338
      %s356 = sphi 0, %s356
      %s358 = sphi 0, %s356
      %s359 = sphi 0, %s358
      %s373 = sphi 0, %s359
      %s377 = sphi 0, %s377
      %s379 = sphi 0, %s377
      %s380 = sphi 0, %s379
      %s394 = sphi 0, %s380
      %s398 = sphi 0, %s398
      %s400 = sphi 0, %s398
      %s401 = sphi 0, %s400
      %s415 = sphi 0, %s401
      %s419 = sphi 0, %s419
      %s421 = sphi 0, %s419
      %s422 = sphi 0, %s421
      %s436 = sphi 0, %s422
      %s440 = sphi 0, %s440
      %s442 = sphi 0, %s440
      %s443 = sphi 0, %s442
      %s457 = sphi 0, %s443
      %s461 = sphi 0, %s461
      %s463 = sphi 0, %s461
      %s464 = sphi 0, %s463
      %s478 = sphi 0, %s464
      %s482 = sphi 0, %s482
      %s484 = sphi 0, %s482
      %s485 = sphi 0, %s484
      %s499 = sphi 0, %s485
      %s503 = sphi 0, %s503
      %s505 = sphi 0, %s503
      %s506 = sphi 0, %s505
      %s520 = sphi 0, %s506
      %s524 = sphi 0, %s524
      %s526 = sphi 0, %s524
      %s527 = sphi 0, %s526
      %s541 = sphi 0, %s527
      %s545 = sphi 0, %s545
      %s547 = sphi 0, %s545
      %s548 = sphi 0, %s547
      %s562 = sphi 0, %s548
      %s566 = sphi 0, %s566
      %s568 = sphi 0, %s566
      %s569 = sphi 0, %s568
      %s583 = sphi 0, %s569
      %s587 = sphi 0, %s587
      %s589 = sphi 0, %s587
      %s590 = sphi 0, %s589
      %s604 = sphi 0, %s590
      %s608 = sphi 0, %s608
      %s610 = sphi 0, %s608
      %s611 = sphi 0, %s610
      %s625 = sphi 0, %s611
      %s629 = sphi 0, %s629
      %s631 = sphi 0, %s629
      %s632 = sphi 0, %s631
      %s646 = sphi 0, %s632
      %s650 = sphi 0, %s650
      %s652 = sphi 0, %s650
      %s653 = sphi 0, %s652
      %s667 = sphi 0, %s653
      %s671 = sphi 0, %s671
      %s673 = sphi 0, %s671
      %s674 = sphi 0, %s673
      %s688 = sphi 0, %s674
      %s692 = sphi 0, %s692
      %s694 = sphi 0, %s692
      %s695 = sphi 0, %s694
      %s709 = sphi 0, %s695
      %s713 = sphi 0, %s713
      %s715 = sphi 0, %s713
      %s716 = sphi 0, %s715
      %s730 = sphi 0, %s716
      %s734 = sphi 0, %s734
      %s736 = sphi 0, %s734
      %s737 = sphi 0, %s736
      %s751 = sphi 0, %s737
      %s755 = sphi 0, %s755
      %s757 = sphi 0, %s755
      %s758 = sphi 0, %s757
      %s772 = sphi 0, %s758
      %s776 = sphi 0, %s776
      %s778 = sphi 0, %s776
      %s779 = sphi 0, %s778
      %s793 = sphi 0, %s779
      %s797 = sphi 0, %s797
      %s799 = sphi 0, %s797
      %s800 = sphi 0, %s799
      %s814 = sphi 0, %s800
      %s818 = sphi 0, %s818
      %s820 = sphi 0, %s818
      %s821 = sphi 0, %s820
      %s835 = sphi 0, %s821
      %s839 = sphi 0, %s839
      %s841 = sphi 0, %s839
      %s842 = sphi 0, %s841
      %s856 = sphi 0, %s842
      %s860 = sphi 0, %s860
      %s862 = sphi 0, %s860
      %s863 = sphi 0, %s862
      %s877 = sphi 0, %s863
      %s881 = sphi 0, %s881
      %s883 = sphi 0, %s881
      %s884 = sphi 0, %s883
      %s898 = sphi 0, %s884
      %s902 = sphi 0, %s902
      %s904 = sphi 0, %s902
      %s905 = sphi 0, %s904
      %s919 = sphi 0, %s905
      %s923 = sphi 0, %s923
      %s925 = sphi 0, %s923
      %s926 = sphi 0, %s925
      %s940 = sphi 0, %s926
      %s944 = sphi 0, %s944
      %s946 = sphi 0, %s944
      %s947 = sphi 0, %s946
      %s961 = sphi 0, %s947
      %s965 = sphi 0, %s965
      %s967 = sphi 0, %s965
      %s968 = sphi 0, %s967
      %s982 = sphi 0, %s968
      %s986 = sphi 0, %s986
      %s988 = sphi 0, %s986
      %s989 = sphi 0, %s988
      %s1003 = sphi 0, %s989
      %s1007 = sphi 0, %s1007
      %s1009 = sphi 0, %s1007
      %s1010 = sphi 0, %s1009
      %s1024 = sphi 0, %s1010
      %s1028 = sphi 0, %s1028
      %s1030 = sphi 0, %s1028
      %s1031 = sphi 0, %s1030
      %s1045 = sphi 0, %s1031
      %s1049 = sphi 0, %s1049
      %s1051 = sphi 0, %s1049
      %s1052 = sphi 0, %s1051
      %s1066 = sphi 0, %s1052
      %s1070 = sphi 0, %s1070
      %s1072 = sphi 0, %s1070
      %s1073 = sphi 0, %s1072
      %s1087 = sphi 0, %s1073
      %s1091 = sphi 0, %s1091
      %s1093 = sphi 0, %s1091
      %s1094 = sphi 0, %s1093
      %s1108 = sphi 0, %s1094
      %s1112 = sphi 0, %s1112
      %s1114 = sphi 0, %s1112
      %s1115 = sphi 0, %s1114
      %s1129 = sphi 0, %s1115
      %s1133 = sphi 0, %s1133
      %s1135 = sphi 0, %s1133
      %s1136 = sphi 0, %s1135
      %s1150 = sphi 0, %s1136
      %s1154 = sphi 0, %s1154
      %s1156 = sphi 0, %s1154
      %s1157 = sphi 0, %s1156
      %s1171 = sphi 0, %s1157
      %s1175 = sphi 0, %s1175
      %s1177 = sphi 0, %s1175
      %s1178 = sphi 0, %s1177
      %s1192 = sphi 0, %s1178
      %s1196 = sphi 0, %s1196
      %s1198 = sphi 0, %s1196
      %s1199 = sphi 0, %s1198
      %s1213 = sphi 0, %s1199
      %s1217 = sphi 0, %s1217
      %s1219 = sphi 0, %s1217
      %s1220 = sphi 0, %s1219
      %s1234 = sphi 0, %s1220
      %s1238 = sphi 0, %s1238
      %s1240 = sphi 0, %s1238
      %s1241 = sphi 0, %s1240
      %s1255 = sphi 0, %s1241
      %s1259 = sphi 0, %s1259
      %s1261 = sphi 0, %s1259
      %s1262 = sphi 0, %s1261
      %s1276 = sphi 0, %s1262
      %s1280 = sphi 0, %s1280
      %s1282 = sphi 0, %s1280
      %s1283 = sphi 0, %s1282
      %s1297 = sphi 0, %s1283
      %s1301 = sphi 0, %s1301
      %s1303 = sphi 0, %s1301
      %s1304 = sphi 0, %s1303
      %s1318 = sphi 0, %s1304
      %s1324 = sphi 0, %s1326
      %s1327 = sphi 0, %s1324
      %s1328 = sphi 0, %s1327
      %s1344 = sphi 0, %s1328
      %s1350 = sphi 0, %s1352
      %s1353 = sphi 0, %s1350
      %s1354 = sphi 0, %s1353
      %s1370 = sphi 0, %s1354
    $region4: #{transformer_forward.1} parent=1 // loop_header_branch
      %136 = sbr.rel (%p134) target = $region8
    $region5: #{transformer_forward.1} parent=1 // loop_body
      %s138 = ssub.s32 %s133, 1
      %s139 = ssub.s32 %s133, 2
      %s140 = sadd.s32 %s133, 1
      %s141 = ssub.s32 %s133, %s140
      %p142 = scmp.eq.s32.totalorder %s141, 0
      %s144 = sadd.s32 %s143, 1
      %s145 = scalar_select %p142, %s143, %s144
      %p148 = pneg %p142
      %p149 = scmp.eq.s32.totalorder %s133, 1
      %p150 = por %p148, %p149
      %p151 = scmp.ne.s32.totalorder %s143, %s146
      %p152 = scmp.eq.s32.totalorder %s133, 0
      %p153 = por %p151, %p152
      %p154 = scmp.ne.s32.totalorder %s143, %s146
      %p155 = scmp.eq.s32.totalorder %s138, 1
      %p156 = por %p154, %p155
      %p157 = scmp.ne.s32.totalorder %s146, %s147
      %p158 = scmp.eq.s32.totalorder %s138, 0
      %p159 = por %p157, %p158
      %p160 = scmp.ne.s32.totalorder %s146, %s147
      %p161 = scmp.eq.s32.totalorder %s139, 1
      %p162 = por %p160, %p161
      %p164 = scmp.ne.s32.totalorder %s147, %s163
      %p165 = scmp.eq.s32.totalorder %s139, 0
      %p166 = por %p164, %p165
      %s168 = sadd.s32 %s167, 1
      %p171 = scmp.eq.s32.totalorder %s133, 1
      %p172 = scmp.ne.s32.totalorder %s167, %s169
      %p173 = scmp.eq.s32.totalorder %s133, 0
      %p174 = por %p172, %p173
      %p175 = scmp.ne.s32.totalorder %s167, %s169
      %p176 = scmp.eq.s32.totalorder %s138, 1
      %p177 = por %p175, %p176
      %p178 = scmp.ne.s32.totalorder %s169, %s170
      %p179 = scmp.eq.s32.totalorder %s138, 0
      %p180 = por %p178, %p179
      %p181 = scmp.ne.s32.totalorder %s169, %s170
      %p182 = scmp.eq.s32.totalorder %s139, 1
      %p183 = por %p181, %p182
      %p185 = scmp.ne.s32.totalorder %s170, %s184
      %p186 = scmp.eq.s32.totalorder %s139, 0
      %p187 = por %p185, %p186
      %s189 = sadd.s32 %s188, 1
      %p192 = scmp.eq.s32.totalorder %s133, 1
      %p193 = scmp.ne.s32.totalorder %s188, %s190
      %p194 = scmp.eq.s32.totalorder %s133, 0
      %p195 = por %p193, %p194
      %p196 = scmp.ne.s32.totalorder %s188, %s190
      %p197 = scmp.eq.s32.totalorder %s138, 1
      %p198 = por %p196, %p197
      %p199 = scmp.ne.s32.totalorder %s190, %s191
      %p200 = scmp.eq.s32.totalorder %s138, 0
      %p201 = por %p199, %p200
      %p202 = scmp.ne.s32.totalorder %s190, %s191
      %p203 = scmp.eq.s32.totalorder %s139, 1
      %p204 = por %p202, %p203
      %p206 = scmp.ne.s32.totalorder %s191, %s205
      %p207 = scmp.eq.s32.totalorder %s139, 0
      %p208 = por %p206, %p207
      %s210 = sadd.s32 %s209, 1
      %p213 = scmp.eq.s32.totalorder %s133, 1
      %p214 = scmp.ne.s32.totalorder %s209, %s211
      %p215 = scmp.eq.s32.totalorder %s133, 0
      %p216 = por %p214, %p215
      %p217 = scmp.ne.s32.totalorder %s209, %s211
      %p218 = scmp.eq.s32.totalorder %s138, 1
      %p219 = por %p217, %p218
      %p220 = scmp.ne.s32.totalorder %s211, %s212
      %p221 = scmp.eq.s32.totalorder %s138, 0
      %p222 = por %p220, %p221
      %p223 = scmp.ne.s32.totalorder %s211, %s212
      %p224 = scmp.eq.s32.totalorder %s139, 1
      %p225 = por %p223, %p224
      %p227 = scmp.ne.s32.totalorder %s212, %s226
      %p228 = scmp.eq.s32.totalorder %s139, 0
      %p229 = por %p227, %p228
      %s231 = sadd.s32 %s230, 1
      %p234 = scmp.eq.s32.totalorder %s133, 1
      %p235 = scmp.ne.s32.totalorder %s230, %s232
      %p236 = scmp.eq.s32.totalorder %s133, 0
      %p237 = por %p235, %p236
      %p238 = scmp.ne.s32.totalorder %s230, %s232
      %p239 = scmp.eq.s32.totalorder %s138, 1
      %p240 = por %p238, %p239
      %p241 = scmp.ne.s32.totalorder %s232, %s233
      %p242 = scmp.eq.s32.totalorder %s138, 0
      %p243 = por %p241, %p242
      %p244 = scmp.ne.s32.totalorder %s232, %s233
      %p245 = scmp.eq.s32.totalorder %s139, 1
      %p246 = por %p244, %p245
      %p248 = scmp.ne.s32.totalorder %s233, %s247
      %p249 = scmp.eq.s32.totalorder %s139, 0
      %p250 = por %p248, %p249
      %s252 = sadd.s32 %s251, 1
      %p255 = scmp.eq.s32.totalorder %s133, 1
      %p256 = scmp.ne.s32.totalorder %s251, %s253
      %p257 = scmp.eq.s32.totalorder %s133, 0
      %p258 = por %p256, %p257
      %p259 = scmp.ne.s32.totalorder %s251, %s253
      %p260 = scmp.eq.s32.totalorder %s138, 1
      %p261 = por %p259, %p260
      %p262 = scmp.ne.s32.totalorder %s253, %s254
      %p263 = scmp.eq.s32.totalorder %s138, 0
      %p264 = por %p262, %p263
      %p265 = scmp.ne.s32.totalorder %s253, %s254
      %p266 = scmp.eq.s32.totalorder %s139, 1
      %p267 = por %p265, %p266
      %p269 = scmp.ne.s32.totalorder %s254, %s268
      %p270 = scmp.eq.s32.totalorder %s139, 0
      %p271 = por %p269, %p270
      %s273 = sadd.s32 %s272, 1
      %p276 = scmp.eq.s32.totalorder %s133, 1
      %p277 = scmp.ne.s32.totalorder %s272, %s274
      %p278 = scmp.eq.s32.totalorder %s133, 0
      %p279 = por %p277, %p278
      %p280 = scmp.ne.s32.totalorder %s272, %s274
      %p281 = scmp.eq.s32.totalorder %s138, 1
      %p282 = por %p280, %p281
      %p283 = scmp.ne.s32.totalorder %s274, %s275
      %p284 = scmp.eq.s32.totalorder %s138, 0
      %p285 = por %p283, %p284
      %p286 = scmp.ne.s32.totalorder %s274, %s275
      %p287 = scmp.eq.s32.totalorder %s139, 1
      %p288 = por %p286, %p287
      %p290 = scmp.ne.s32.totalorder %s275, %s289
      %p291 = scmp.eq.s32.totalorder %s139, 0
      %p292 = por %p290, %p291
      %s294 = sadd.s32 %s293, 1
      %p297 = scmp.eq.s32.totalorder %s133, 1
      %p298 = scmp.ne.s32.totalorder %s293, %s295
      %p299 = scmp.eq.s32.totalorder %s133, 0
      %p300 = por %p298, %p299
      %p301 = scmp.ne.s32.totalorder %s293, %s295
      %p302 = scmp.eq.s32.totalorder %s138, 1
      %p303 = por %p301, %p302
      %p304 = scmp.ne.s32.totalorder %s295, %s296
      %p305 = scmp.eq.s32.totalorder %s138, 0
      %p306 = por %p304, %p305
      %p307 = scmp.ne.s32.totalorder %s295, %s296
      %p308 = scmp.eq.s32.totalorder %s139, 1
      %p309 = por %p307, %p308
      %p311 = scmp.ne.s32.totalorder %s296, %s310
      %p312 = scmp.eq.s32.totalorder %s139, 0
      %p313 = por %p311, %p312
      %s315 = sadd.s32 %s314, 1
      %p318 = scmp.eq.s32.totalorder %s133, 1
      %p319 = scmp.ne.s32.totalorder %s314, %s316
      %p320 = scmp.eq.s32.totalorder %s133, 0
      %p321 = por %p319, %p320
      %p322 = scmp.ne.s32.totalorder %s314, %s316
      %p323 = scmp.eq.s32.totalorder %s138, 1
      %p324 = por %p322, %p323
      %p325 = scmp.ne.s32.totalorder %s316, %s317
      %p326 = scmp.eq.s32.totalorder %s138, 0
      %p327 = por %p325, %p326
      %p328 = scmp.ne.s32.totalorder %s316, %s317
      %p329 = scmp.eq.s32.totalorder %s139, 1
      %p330 = por %p328, %p329
      %p332 = scmp.ne.s32.totalorder %s317, %s331
      %p333 = scmp.eq.s32.totalorder %s139, 0
      %p334 = por %p332, %p333
      %s336 = sadd.s32 %s335, 1
      %p339 = scmp.eq.s32.totalorder %s133, 1
      %p340 = scmp.ne.s32.totalorder %s335, %s337
      %p341 = scmp.eq.s32.totalorder %s133, 0
      %p342 = por %p340, %p341
      %p343 = scmp.ne.s32.totalorder %s335, %s337
      %p344 = scmp.eq.s32.totalorder %s138, 1
      %p345 = por %p343, %p344
      %p346 = scmp.ne.s32.totalorder %s337, %s338
      %p347 = scmp.eq.s32.totalorder %s138, 0
      %p348 = por %p346, %p347
      %p349 = scmp.ne.s32.totalorder %s337, %s338
      %p350 = scmp.eq.s32.totalorder %s139, 1
      %p351 = por %p349, %p350
      %p353 = scmp.ne.s32.totalorder %s338, %s352
      %p354 = scmp.eq.s32.totalorder %s139, 0
      %p355 = por %p353, %p354
      %s357 = sadd.s32 %s356, 1
      %p360 = scmp.eq.s32.totalorder %s133, 1
      %p361 = scmp.ne.s32.totalorder %s356, %s358
      %p362 = scmp.eq.s32.totalorder %s133, 0
      %p363 = por %p361, %p362
      %p364 = scmp.ne.s32.totalorder %s356, %s358
      %p365 = scmp.eq.s32.totalorder %s138, 1
      %p366 = por %p364, %p365
      %p367 = scmp.ne.s32.totalorder %s358, %s359
      %p368 = scmp.eq.s32.totalorder %s138, 0
      %p369 = por %p367, %p368
      %p370 = scmp.ne.s32.totalorder %s358, %s359
      %p371 = scmp.eq.s32.totalorder %s139, 1
      %p372 = por %p370, %p371
      %p374 = scmp.ne.s32.totalorder %s359, %s373
      %p375 = scmp.eq.s32.totalorder %s139, 0
      %p376 = por %p374, %p375
      %s378 = sadd.s32 %s377, 1
      %p381 = scmp.eq.s32.totalorder %s133, 1
      %p382 = scmp.ne.s32.totalorder %s377, %s379
      %p383 = scmp.eq.s32.totalorder %s133, 0
      %p384 = por %p382, %p383
      %p385 = scmp.ne.s32.totalorder %s377, %s379
      %p386 = scmp.eq.s32.totalorder %s138, 1
      %p387 = por %p385, %p386
      %p388 = scmp.ne.s32.totalorder %s379, %s380
      %p389 = scmp.eq.s32.totalorder %s138, 0
      %p390 = por %p388, %p389
      %p391 = scmp.ne.s32.totalorder %s379, %s380
      %p392 = scmp.eq.s32.totalorder %s139, 1
      %p393 = por %p391, %p392
      %p395 = scmp.ne.s32.totalorder %s380, %s394
      %p396 = scmp.eq.s32.totalorder %s139, 0
      %p397 = por %p395, %p396
      %s399 = sadd.s32 %s398, 1
      %p402 = scmp.eq.s32.totalorder %s133, 1
      %p403 = scmp.ne.s32.totalorder %s398, %s400
      %p404 = scmp.eq.s32.totalorder %s133, 0
      %p405 = por %p403, %p404
      %p406 = scmp.ne.s32.totalorder %s398, %s400
      %p407 = scmp.eq.s32.totalorder %s138, 1
      %p408 = por %p406, %p407
      %p409 = scmp.ne.s32.totalorder %s400, %s401
      %p410 = scmp.eq.s32.totalorder %s138, 0
      %p411 = por %p409, %p410
      %p412 = scmp.ne.s32.totalorder %s400, %s401
      %p413 = scmp.eq.s32.totalorder %s139, 1
      %p414 = por %p412, %p413
      %p416 = scmp.ne.s32.totalorder %s401, %s415
      %p417 = scmp.eq.s32.totalorder %s139, 0
      %p418 = por %p416, %p417
      %s420 = sadd.s32 %s419, 1
      %p423 = scmp.eq.s32.totalorder %s133, 1
      %p424 = scmp.ne.s32.totalorder %s419, %s421
      %p425 = scmp.eq.s32.totalorder %s133, 0
      %p426 = por %p424, %p425
      %p427 = scmp.ne.s32.totalorder %s419, %s421
      %p428 = scmp.eq.s32.totalorder %s138, 1
      %p429 = por %p427, %p428
      %p430 = scmp.ne.s32.totalorder %s421, %s422
      %p431 = scmp.eq.s32.totalorder %s138, 0
      %p432 = por %p430, %p431
      %p433 = scmp.ne.s32.totalorder %s421, %s422
      %p434 = scmp.eq.s32.totalorder %s139, 1
      %p435 = por %p433, %p434
      %p437 = scmp.ne.s32.totalorder %s422, %s436
      %p438 = scmp.eq.s32.totalorder %s139, 0
      %p439 = por %p437, %p438
      %s441 = sadd.s32 %s440, 1
      %p444 = scmp.eq.s32.totalorder %s133, 1
      %p445 = scmp.ne.s32.totalorder %s440, %s442
      %p446 = scmp.eq.s32.totalorder %s133, 0
      %p447 = por %p445, %p446
      %p448 = scmp.ne.s32.totalorder %s440, %s442
      %p449 = scmp.eq.s32.totalorder %s138, 1
      %p450 = por %p448, %p449
      %p451 = scmp.ne.s32.totalorder %s442, %s443
      %p452 = scmp.eq.s32.totalorder %s138, 0
      %p453 = por %p451, %p452
      %p454 = scmp.ne.s32.totalorder %s442, %s443
      %p455 = scmp.eq.s32.totalorder %s139, 1
      %p456 = por %p454, %p455
      %p458 = scmp.ne.s32.totalorder %s443, %s457
      %p459 = scmp.eq.s32.totalorder %s139, 0
      %p460 = por %p458, %p459
      %s462 = sadd.s32 %s461, 1
      %p465 = scmp.eq.s32.totalorder %s133, 1
      %p466 = scmp.ne.s32.totalorder %s461, %s463
      %p467 = scmp.eq.s32.totalorder %s133, 0
      %p468 = por %p466, %p467
      %p469 = scmp.ne.s32.totalorder %s461, %s463
      %p470 = scmp.eq.s32.totalorder %s138, 1
      %p471 = por %p469, %p470
      %p472 = scmp.ne.s32.totalorder %s463, %s464
      %p473 = scmp.eq.s32.totalorder %s138, 0
      %p474 = por %p472, %p473
      %p475 = scmp.ne.s32.totalorder %s463, %s464
      %p476 = scmp.eq.s32.totalorder %s139, 1
      %p477 = por %p475, %p476
      %p479 = scmp.ne.s32.totalorder %s464, %s478
      %p480 = scmp.eq.s32.totalorder %s139, 0
      %p481 = por %p479, %p480
      %s483 = sadd.s32 %s482, 1
      %p486 = scmp.eq.s32.totalorder %s133, 1
      %p487 = scmp.ne.s32.totalorder %s482, %s484
      %p488 = scmp.eq.s32.totalorder %s133, 0
      %p489 = por %p487, %p488
      %p490 = scmp.ne.s32.totalorder %s482, %s484
      %p491 = scmp.eq.s32.totalorder %s138, 1
      %p492 = por %p490, %p491
      %p493 = scmp.ne.s32.totalorder %s484, %s485
      %p494 = scmp.eq.s32.totalorder %s138, 0
      %p495 = por %p493, %p494
      %p496 = scmp.ne.s32.totalorder %s484, %s485
      %p497 = scmp.eq.s32.totalorder %s139, 1
      %p498 = por %p496, %p497
      %p500 = scmp.ne.s32.totalorder %s485, %s499
      %p501 = scmp.eq.s32.totalorder %s139, 0
      %p502 = por %p500, %p501
      %s504 = sadd.s32 %s503, 1
      %p507 = scmp.eq.s32.totalorder %s133, 1
      %p508 = scmp.ne.s32.totalorder %s503, %s505
      %p509 = scmp.eq.s32.totalorder %s133, 0
      %p510 = por %p508, %p509
      %p511 = scmp.ne.s32.totalorder %s503, %s505
      %p512 = scmp.eq.s32.totalorder %s138, 1
      %p513 = por %p511, %p512
      %p514 = scmp.ne.s32.totalorder %s505, %s506
      %p515 = scmp.eq.s32.totalorder %s138, 0
      %p516 = por %p514, %p515
      %p517 = scmp.ne.s32.totalorder %s505, %s506
      %p518 = scmp.eq.s32.totalorder %s139, 1
      %p519 = por %p517, %p518
      %p521 = scmp.ne.s32.totalorder %s506, %s520
      %p522 = scmp.eq.s32.totalorder %s139, 0
      %p523 = por %p521, %p522
      %s525 = sadd.s32 %s524, 1
      %p528 = scmp.eq.s32.totalorder %s133, 1
      %p529 = scmp.ne.s32.totalorder %s524, %s526
      %p530 = scmp.eq.s32.totalorder %s133, 0
      %p531 = por %p529, %p530
      %p532 = scmp.ne.s32.totalorder %s524, %s526
      %p533 = scmp.eq.s32.totalorder %s138, 1
      %p534 = por %p532, %p533
      %p535 = scmp.ne.s32.totalorder %s526, %s527
      %p536 = scmp.eq.s32.totalorder %s138, 0
      %p537 = por %p535, %p536
      %p538 = scmp.ne.s32.totalorder %s526, %s527
      %p539 = scmp.eq.s32.totalorder %s139, 1
      %p540 = por %p538, %p539
      %p542 = scmp.ne.s32.totalorder %s527, %s541
      %p543 = scmp.eq.s32.totalorder %s139, 0
      %p544 = por %p542, %p543
      %s546 = sadd.s32 %s545, 1
      %p549 = scmp.eq.s32.totalorder %s133, 1
      %p550 = scmp.ne.s32.totalorder %s545, %s547
      %p551 = scmp.eq.s32.totalorder %s133, 0
      %p552 = por %p550, %p551
      %p553 = scmp.ne.s32.totalorder %s545, %s547
      %p554 = scmp.eq.s32.totalorder %s138, 1
      %p555 = por %p553, %p554
      %p556 = scmp.ne.s32.totalorder %s547, %s548
      %p557 = scmp.eq.s32.totalorder %s138, 0
      %p558 = por %p556, %p557
      %p559 = scmp.ne.s32.totalorder %s547, %s548
      %p560 = scmp.eq.s32.totalorder %s139, 1
      %p561 = por %p559, %p560
      %p563 = scmp.ne.s32.totalorder %s548, %s562
      %p564 = scmp.eq.s32.totalorder %s139, 0
      %p565 = por %p563, %p564
      %s567 = sadd.s32 %s566, 1
      %p570 = scmp.eq.s32.totalorder %s133, 1
      %p571 = scmp.ne.s32.totalorder %s566, %s568
      %p572 = scmp.eq.s32.totalorder %s133, 0
      %p573 = por %p571, %p572
      %p574 = scmp.ne.s32.totalorder %s566, %s568
      %p575 = scmp.eq.s32.totalorder %s138, 1
      %p576 = por %p574, %p575
      %p577 = scmp.ne.s32.totalorder %s568, %s569
      %p578 = scmp.eq.s32.totalorder %s138, 0
      %p579 = por %p577, %p578
      %p580 = scmp.ne.s32.totalorder %s568, %s569
      %p581 = scmp.eq.s32.totalorder %s139, 1
      %p582 = por %p580, %p581
      %p584 = scmp.ne.s32.totalorder %s569, %s583
      %p585 = scmp.eq.s32.totalorder %s139, 0
      %p586 = por %p584, %p585
      %s588 = sadd.s32 %s587, 1
      %p591 = scmp.eq.s32.totalorder %s133, 1
      %p592 = scmp.ne.s32.totalorder %s587, %s589
      %p593 = scmp.eq.s32.totalorder %s133, 0
      %p594 = por %p592, %p593
      %p595 = scmp.ne.s32.totalorder %s587, %s589
      %p596 = scmp.eq.s32.totalorder %s138, 1
      %p597 = por %p595, %p596
      %p598 = scmp.ne.s32.totalorder %s589, %s590
      %p599 = scmp.eq.s32.totalorder %s138, 0
      %p600 = por %p598, %p599
      %p601 = scmp.ne.s32.totalorder %s589, %s590
      %p602 = scmp.eq.s32.totalorder %s139, 1
      %p603 = por %p601, %p602
      %p605 = scmp.ne.s32.totalorder %s590, %s604
      %p606 = scmp.eq.s32.totalorder %s139, 0
      %p607 = por %p605, %p606
      %s609 = sadd.s32 %s608, 1
      %p612 = scmp.eq.s32.totalorder %s133, 1
      %p613 = scmp.ne.s32.totalorder %s608, %s610
      %p614 = scmp.eq.s32.totalorder %s133, 0
      %p615 = por %p613, %p614
      %p616 = scmp.ne.s32.totalorder %s608, %s610
      %p617 = scmp.eq.s32.totalorder %s138, 1
      %p618 = por %p616, %p617
      %p619 = scmp.ne.s32.totalorder %s610, %s611
      %p620 = scmp.eq.s32.totalorder %s138, 0
      %p621 = por %p619, %p620
      %p622 = scmp.ne.s32.totalorder %s610, %s611
      %p623 = scmp.eq.s32.totalorder %s139, 1
      %p624 = por %p622, %p623
      %p626 = scmp.ne.s32.totalorder %s611, %s625
      %p627 = scmp.eq.s32.totalorder %s139, 0
      %p628 = por %p626, %p627
      %s630 = sadd.s32 %s629, 1
      %p633 = scmp.eq.s32.totalorder %s133, 1
      %p634 = scmp.ne.s32.totalorder %s629, %s631
      %p635 = scmp.eq.s32.totalorder %s133, 0
      %p636 = por %p634, %p635
      %p637 = scmp.ne.s32.totalorder %s629, %s631
      %p638 = scmp.eq.s32.totalorder %s138, 1
      %p639 = por %p637, %p638
      %p640 = scmp.ne.s32.totalorder %s631, %s632
      %p641 = scmp.eq.s32.totalorder %s138, 0
      %p642 = por %p640, %p641
      %p643 = scmp.ne.s32.totalorder %s631, %s632
      %p644 = scmp.eq.s32.totalorder %s139, 1
      %p645 = por %p643, %p644
      %p647 = scmp.ne.s32.totalorder %s632, %s646
      %p648 = scmp.eq.s32.totalorder %s139, 0
      %p649 = por %p647, %p648
      %s651 = sadd.s32 %s650, 1
      %p654 = scmp.eq.s32.totalorder %s133, 1
      %p655 = scmp.ne.s32.totalorder %s650, %s652
      %p656 = scmp.eq.s32.totalorder %s133, 0
      %p657 = por %p655, %p656
      %p658 = scmp.ne.s32.totalorder %s650, %s652
      %p659 = scmp.eq.s32.totalorder %s138, 1
      %p660 = por %p658, %p659
      %p661 = scmp.ne.s32.totalorder %s652, %s653
      %p662 = scmp.eq.s32.totalorder %s138, 0
      %p663 = por %p661, %p662
      %p664 = scmp.ne.s32.totalorder %s652, %s653
      %p665 = scmp.eq.s32.totalorder %s139, 1
      %p666 = por %p664, %p665
      %p668 = scmp.ne.s32.totalorder %s653, %s667
      %p669 = scmp.eq.s32.totalorder %s139, 0
      %p670 = por %p668, %p669
      %s672 = sadd.s32 %s671, 1
      %p675 = scmp.eq.s32.totalorder %s133, 1
      %p676 = scmp.ne.s32.totalorder %s671, %s673
      %p677 = scmp.eq.s32.totalorder %s133, 0
      %p678 = por %p676, %p677
      %p679 = scmp.ne.s32.totalorder %s671, %s673
      %p680 = scmp.eq.s32.totalorder %s138, 1
      %p681 = por %p679, %p680
      %p682 = scmp.ne.s32.totalorder %s673, %s674
      %p683 = scmp.eq.s32.totalorder %s138, 0
      %p684 = por %p682, %p683
      %p685 = scmp.ne.s32.totalorder %s673, %s674
      %p686 = scmp.eq.s32.totalorder %s139, 1
      %p687 = por %p685, %p686
      %p689 = scmp.ne.s32.totalorder %s674, %s688
      %p690 = scmp.eq.s32.totalorder %s139, 0
      %p691 = por %p689, %p690
      %s693 = sadd.s32 %s692, 1
      %p696 = scmp.eq.s32.totalorder %s133, 1
      %p697 = scmp.ne.s32.totalorder %s692, %s694
      %p698 = scmp.eq.s32.totalorder %s133, 0
      %p699 = por %p697, %p698
      %p700 = scmp.ne.s32.totalorder %s692, %s694
      %p701 = scmp.eq.s32.totalorder %s138, 1
      %p702 = por %p700, %p701
      %p703 = scmp.ne.s32.totalorder %s694, %s695
      %p704 = scmp.eq.s32.totalorder %s138, 0
      %p705 = por %p703, %p704
      %p706 = scmp.ne.s32.totalorder %s694, %s695
      %p707 = scmp.eq.s32.totalorder %s139, 1
      %p708 = por %p706, %p707
      %p710 = scmp.ne.s32.totalorder %s695, %s709
      %p711 = scmp.eq.s32.totalorder %s139, 0
      %p712 = por %p710, %p711
      %s714 = sadd.s32 %s713, 1
      %p717 = scmp.eq.s32.totalorder %s133, 1
      %p718 = scmp.ne.s32.totalorder %s713, %s715
      %p719 = scmp.eq.s32.totalorder %s133, 0
      %p720 = por %p718, %p719
      %p721 = scmp.ne.s32.totalorder %s713, %s715
      %p722 = scmp.eq.s32.totalorder %s138, 1
      %p723 = por %p721, %p722
      %p724 = scmp.ne.s32.totalorder %s715, %s716
      %p725 = scmp.eq.s32.totalorder %s138, 0
      %p726 = por %p724, %p725
      %p727 = scmp.ne.s32.totalorder %s715, %s716
      %p728 = scmp.eq.s32.totalorder %s139, 1
      %p729 = por %p727, %p728
      %p731 = scmp.ne.s32.totalorder %s716, %s730
      %p732 = scmp.eq.s32.totalorder %s139, 0
      %p733 = por %p731, %p732
      %s735 = sadd.s32 %s734, 1
      %p738 = scmp.eq.s32.totalorder %s133, 1
      %p739 = scmp.ne.s32.totalorder %s734, %s736
      %p740 = scmp.eq.s32.totalorder %s133, 0
      %p741 = por %p739, %p740
      %p742 = scmp.ne.s32.totalorder %s734, %s736
      %p743 = scmp.eq.s32.totalorder %s138, 1
      %p744 = por %p742, %p743
      %p745 = scmp.ne.s32.totalorder %s736, %s737
      %p746 = scmp.eq.s32.totalorder %s138, 0
      %p747 = por %p745, %p746
      %p748 = scmp.ne.s32.totalorder %s736, %s737
      %p749 = scmp.eq.s32.totalorder %s139, 1
      %p750 = por %p748, %p749
      %p752 = scmp.ne.s32.totalorder %s737, %s751
      %p753 = scmp.eq.s32.totalorder %s139, 0
      %p754 = por %p752, %p753
      %s756 = sadd.s32 %s755, 1
      %p759 = scmp.eq.s32.totalorder %s133, 1
      %p760 = scmp.ne.s32.totalorder %s755, %s757
      %p761 = scmp.eq.s32.totalorder %s133, 0
      %p762 = por %p760, %p761
      %p763 = scmp.ne.s32.totalorder %s755, %s757
      %p764 = scmp.eq.s32.totalorder %s138, 1
      %p765 = por %p763, %p764
      %p766 = scmp.ne.s32.totalorder %s757, %s758
      %p767 = scmp.eq.s32.totalorder %s138, 0
      %p768 = por %p766, %p767
      %p769 = scmp.ne.s32.totalorder %s757, %s758
      %p770 = scmp.eq.s32.totalorder %s139, 1
      %p771 = por %p769, %p770
      %p773 = scmp.ne.s32.totalorder %s758, %s772
      %p774 = scmp.eq.s32.totalorder %s139, 0
      %p775 = por %p773, %p774
      %s777 = sadd.s32 %s776, 1
      %p780 = scmp.eq.s32.totalorder %s133, 1
      %p781 = scmp.ne.s32.totalorder %s776, %s778
      %p782 = scmp.eq.s32.totalorder %s133, 0
      %p783 = por %p781, %p782
      %p784 = scmp.ne.s32.totalorder %s776, %s778
      %p785 = scmp.eq.s32.totalorder %s138, 1
      %p786 = por %p784, %p785
      %p787 = scmp.ne.s32.totalorder %s778, %s779
      %p788 = scmp.eq.s32.totalorder %s138, 0
      %p789 = por %p787, %p788
      %p790 = scmp.ne.s32.totalorder %s778, %s779
      %p791 = scmp.eq.s32.totalorder %s139, 1
      %p792 = por %p790, %p791
      %p794 = scmp.ne.s32.totalorder %s779, %s793
      %p795 = scmp.eq.s32.totalorder %s139, 0
      %p796 = por %p794, %p795
      %s798 = sadd.s32 %s797, 1
      %p801 = scmp.eq.s32.totalorder %s133, 1
      %p802 = scmp.ne.s32.totalorder %s797, %s799
      %p803 = scmp.eq.s32.totalorder %s133, 0
      %p804 = por %p802, %p803
      %p805 = scmp.ne.s32.totalorder %s797, %s799
      %p806 = scmp.eq.s32.totalorder %s138, 1
      %p807 = por %p805, %p806
      %p808 = scmp.ne.s32.totalorder %s799, %s800
      %p809 = scmp.eq.s32.totalorder %s138, 0
      %p810 = por %p808, %p809
      %p811 = scmp.ne.s32.totalorder %s799, %s800
      %p812 = scmp.eq.s32.totalorder %s139, 1
      %p813 = por %p811, %p812
      %p815 = scmp.ne.s32.totalorder %s800, %s814
      %p816 = scmp.eq.s32.totalorder %s139, 0
      %p817 = por %p815, %p816
      %s819 = sadd.s32 %s818, 1
      %p822 = scmp.eq.s32.totalorder %s133, 1
      %p823 = scmp.ne.s32.totalorder %s818, %s820
      %p824 = scmp.eq.s32.totalorder %s133, 0
      %p825 = por %p823, %p824
      %p826 = scmp.ne.s32.totalorder %s818, %s820
      %p827 = scmp.eq.s32.totalorder %s138, 1
      %p828 = por %p826, %p827
      %p829 = scmp.ne.s32.totalorder %s820, %s821
      %p830 = scmp.eq.s32.totalorder %s138, 0
      %p831 = por %p829, %p830
      %p832 = scmp.ne.s32.totalorder %s820, %s821
      %p833 = scmp.eq.s32.totalorder %s139, 1
      %p834 = por %p832, %p833
      %p836 = scmp.ne.s32.totalorder %s821, %s835
      %p837 = scmp.eq.s32.totalorder %s139, 0
      %p838 = por %p836, %p837
      %s840 = sadd.s32 %s839, 1
      %p843 = scmp.eq.s32.totalorder %s133, 1
      %p844 = scmp.ne.s32.totalorder %s839, %s841
      %p845 = scmp.eq.s32.totalorder %s133, 0
      %p846 = por %p844, %p845
      %p847 = scmp.ne.s32.totalorder %s839, %s841
      %p848 = scmp.eq.s32.totalorder %s138, 1
      %p849 = por %p847, %p848
      %p850 = scmp.ne.s32.totalorder %s841, %s842
      %p851 = scmp.eq.s32.totalorder %s138, 0
      %p852 = por %p850, %p851
      %p853 = scmp.ne.s32.totalorder %s841, %s842
      %p854 = scmp.eq.s32.totalorder %s139, 1
      %p855 = por %p853, %p854
      %p857 = scmp.ne.s32.totalorder %s842, %s856
      %p858 = scmp.eq.s32.totalorder %s139, 0
      %p859 = por %p857, %p858
      %s861 = sadd.s32 %s860, 1
      %p864 = scmp.eq.s32.totalorder %s133, 1
      %p865 = scmp.ne.s32.totalorder %s860, %s862
      %p866 = scmp.eq.s32.totalorder %s133, 0
      %p867 = por %p865, %p866
      %p868 = scmp.ne.s32.totalorder %s860, %s862
      %p869 = scmp.eq.s32.totalorder %s138, 1
      %p870 = por %p868, %p869
      %p871 = scmp.ne.s32.totalorder %s862, %s863
      %p872 = scmp.eq.s32.totalorder %s138, 0
      %p873 = por %p871, %p872
      %p874 = scmp.ne.s32.totalorder %s862, %s863
      %p875 = scmp.eq.s32.totalorder %s139, 1
      %p876 = por %p874, %p875
      %p878 = scmp.ne.s32.totalorder %s863, %s877
      %p879 = scmp.eq.s32.totalorder %s139, 0
      %p880 = por %p878, %p879
      %s882 = sadd.s32 %s881, 1
      %p885 = scmp.eq.s32.totalorder %s133, 1
      %p886 = scmp.ne.s32.totalorder %s881, %s883
      %p887 = scmp.eq.s32.totalorder %s133, 0
      %p888 = por %p886, %p887
      %p889 = scmp.ne.s32.totalorder %s881, %s883
      %p890 = scmp.eq.s32.totalorder %s138, 1
      %p891 = por %p889, %p890
      %p892 = scmp.ne.s32.totalorder %s883, %s884
      %p893 = scmp.eq.s32.totalorder %s138, 0
      %p894 = por %p892, %p893
      %p895 = scmp.ne.s32.totalorder %s883, %s884
      %p896 = scmp.eq.s32.totalorder %s139, 1
      %p897 = por %p895, %p896
      %p899 = scmp.ne.s32.totalorder %s884, %s898
      %p900 = scmp.eq.s32.totalorder %s139, 0
      %p901 = por %p899, %p900
      %s903 = sadd.s32 %s902, 1
      %p906 = scmp.eq.s32.totalorder %s133, 1
      %p907 = scmp.ne.s32.totalorder %s902, %s904
      %p908 = scmp.eq.s32.totalorder %s133, 0
      %p909 = por %p907, %p908
      %p910 = scmp.ne.s32.totalorder %s902, %s904
      %p911 = scmp.eq.s32.totalorder %s138, 1
      %p912 = por %p910, %p911
      %p913 = scmp.ne.s32.totalorder %s904, %s905
      %p914 = scmp.eq.s32.totalorder %s138, 0
      %p915 = por %p913, %p914
      %p916 = scmp.ne.s32.totalorder %s904, %s905
      %p917 = scmp.eq.s32.totalorder %s139, 1
      %p918 = por %p916, %p917
      %p920 = scmp.ne.s32.totalorder %s905, %s919
      %p921 = scmp.eq.s32.totalorder %s139, 0
      %p922 = por %p920, %p921
      %s924 = sadd.s32 %s923, 1
      %p927 = scmp.eq.s32.totalorder %s133, 1
      %p928 = scmp.ne.s32.totalorder %s923, %s925
      %p929 = scmp.eq.s32.totalorder %s133, 0
      %p930 = por %p928, %p929
      %p931 = scmp.ne.s32.totalorder %s923, %s925
      %p932 = scmp.eq.s32.totalorder %s138, 1
      %p933 = por %p931, %p932
      %p934 = scmp.ne.s32.totalorder %s925, %s926
      %p935 = scmp.eq.s32.totalorder %s138, 0
      %p936 = por %p934, %p935
      %p937 = scmp.ne.s32.totalorder %s925, %s926
      %p938 = scmp.eq.s32.totalorder %s139, 1
      %p939 = por %p937, %p938
      %p941 = scmp.ne.s32.totalorder %s926, %s940
      %p942 = scmp.eq.s32.totalorder %s139, 0
      %p943 = por %p941, %p942
      %s945 = sadd.s32 %s944, 1
      %p948 = scmp.eq.s32.totalorder %s133, 1
      %p949 = scmp.ne.s32.totalorder %s944, %s946
      %p950 = scmp.eq.s32.totalorder %s133, 0
      %p951 = por %p949, %p950
      %p952 = scmp.ne.s32.totalorder %s944, %s946
      %p953 = scmp.eq.s32.totalorder %s138, 1
      %p954 = por %p952, %p953
      %p955 = scmp.ne.s32.totalorder %s946, %s947
      %p956 = scmp.eq.s32.totalorder %s138, 0
      %p957 = por %p955, %p956
      %p958 = scmp.ne.s32.totalorder %s946, %s947
      %p959 = scmp.eq.s32.totalorder %s139, 1
      %p960 = por %p958, %p959
      %p962 = scmp.ne.s32.totalorder %s947, %s961
      %p963 = scmp.eq.s32.totalorder %s139, 0
      %p964 = por %p962, %p963
      %s966 = sadd.s32 %s965, 1
      %p969 = scmp.eq.s32.totalorder %s133, 1
      %p970 = scmp.ne.s32.totalorder %s965, %s967
      %p971 = scmp.eq.s32.totalorder %s133, 0
      %p972 = por %p970, %p971
      %p973 = scmp.ne.s32.totalorder %s965, %s967
      %p974 = scmp.eq.s32.totalorder %s138, 1
      %p975 = por %p973, %p974
      %p976 = scmp.ne.s32.totalorder %s967, %s968
      %p977 = scmp.eq.s32.totalorder %s138, 0
      %p978 = por %p976, %p977
      %p979 = scmp.ne.s32.totalorder %s967, %s968
      %p980 = scmp.eq.s32.totalorder %s139, 1
      %p981 = por %p979, %p980
      %p983 = scmp.ne.s32.totalorder %s968, %s982
      %p984 = scmp.eq.s32.totalorder %s139, 0
      %p985 = por %p983, %p984
      %s987 = sadd.s32 %s986, 1
      %p990 = scmp.eq.s32.totalorder %s133, 1
      %p991 = scmp.ne.s32.totalorder %s986, %s988
      %p992 = scmp.eq.s32.totalorder %s133, 0
      %p993 = por %p991, %p992
      %p994 = scmp.ne.s32.totalorder %s986, %s988
      %p995 = scmp.eq.s32.totalorder %s138, 1
      %p996 = por %p994, %p995
      %p997 = scmp.ne.s32.totalorder %s988, %s989
      %p998 = scmp.eq.s32.totalorder %s138, 0
      %p999 = por %p997, %p998
      %p1000 = scmp.ne.s32.totalorder %s988, %s989
      %p1001 = scmp.eq.s32.totalorder %s139, 1
      %p1002 = por %p1000, %p1001
      %p1004 = scmp.ne.s32.totalorder %s989, %s1003
      %p1005 = scmp.eq.s32.totalorder %s139, 0
      %p1006 = por %p1004, %p1005
      %s1008 = sadd.s32 %s1007, 1
      %p1011 = scmp.eq.s32.totalorder %s133, 1
      %p1012 = scmp.ne.s32.totalorder %s1007, %s1009
      %p1013 = scmp.eq.s32.totalorder %s133, 0
      %p1014 = por %p1012, %p1013
      %p1015 = scmp.ne.s32.totalorder %s1007, %s1009
      %p1016 = scmp.eq.s32.totalorder %s138, 1
      %p1017 = por %p1015, %p1016
      %p1018 = scmp.ne.s32.totalorder %s1009, %s1010
      %p1019 = scmp.eq.s32.totalorder %s138, 0
      %p1020 = por %p1018, %p1019
      %p1021 = scmp.ne.s32.totalorder %s1009, %s1010
      %p1022 = scmp.eq.s32.totalorder %s139, 1
      %p1023 = por %p1021, %p1022
      %p1025 = scmp.ne.s32.totalorder %s1010, %s1024
      %p1026 = scmp.eq.s32.totalorder %s139, 0
      %p1027 = por %p1025, %p1026
      %s1029 = sadd.s32 %s1028, 1
      %p1032 = scmp.eq.s32.totalorder %s133, 1
      %p1033 = scmp.ne.s32.totalorder %s1028, %s1030
      %p1034 = scmp.eq.s32.totalorder %s133, 0
      %p1035 = por %p1033, %p1034
      %p1036 = scmp.ne.s32.totalorder %s1028, %s1030
      %p1037 = scmp.eq.s32.totalorder %s138, 1
      %p1038 = por %p1036, %p1037
      %p1039 = scmp.ne.s32.totalorder %s1030, %s1031
      %p1040 = scmp.eq.s32.totalorder %s138, 0
      %p1041 = por %p1039, %p1040
      %p1042 = scmp.ne.s32.totalorder %s1030, %s1031
      %p1043 = scmp.eq.s32.totalorder %s139, 1
      %p1044 = por %p1042, %p1043
      %p1046 = scmp.ne.s32.totalorder %s1031, %s1045
      %p1047 = scmp.eq.s32.totalorder %s139, 0
      %p1048 = por %p1046, %p1047
      %s1050 = sadd.s32 %s1049, 1
      %p1053 = scmp.eq.s32.totalorder %s133, 1
      %p1054 = scmp.ne.s32.totalorder %s1049, %s1051
      %p1055 = scmp.eq.s32.totalorder %s133, 0
      %p1056 = por %p1054, %p1055
      %p1057 = scmp.ne.s32.totalorder %s1049, %s1051
      %p1058 = scmp.eq.s32.totalorder %s138, 1
      %p1059 = por %p1057, %p1058
      %p1060 = scmp.ne.s32.totalorder %s1051, %s1052
      %p1061 = scmp.eq.s32.totalorder %s138, 0
      %p1062 = por %p1060, %p1061
      %p1063 = scmp.ne.s32.totalorder %s1051, %s1052
      %p1064 = scmp.eq.s32.totalorder %s139, 1
      %p1065 = por %p1063, %p1064
      %p1067 = scmp.ne.s32.totalorder %s1052, %s1066
      %p1068 = scmp.eq.s32.totalorder %s139, 0
      %p1069 = por %p1067, %p1068
      %s1071 = sadd.s32 %s1070, 1
      %p1074 = scmp.eq.s32.totalorder %s133, 1
      %p1075 = scmp.ne.s32.totalorder %s1070, %s1072
      %p1076 = scmp.eq.s32.totalorder %s133, 0
      %p1077 = por %p1075, %p1076
      %p1078 = scmp.ne.s32.totalorder %s1070, %s1072
      %p1079 = scmp.eq.s32.totalorder %s138, 1
      %p1080 = por %p1078, %p1079
      %p1081 = scmp.ne.s32.totalorder %s1072, %s1073
      %p1082 = scmp.eq.s32.totalorder %s138, 0
      %p1083 = por %p1081, %p1082
      %p1084 = scmp.ne.s32.totalorder %s1072, %s1073
      %p1085 = scmp.eq.s32.totalorder %s139, 1
      %p1086 = por %p1084, %p1085
      %p1088 = scmp.ne.s32.totalorder %s1073, %s1087
      %p1089 = scmp.eq.s32.totalorder %s139, 0
      %p1090 = por %p1088, %p1089
      %s1092 = sadd.s32 %s1091, 1
      %p1095 = scmp.eq.s32.totalorder %s133, 1
      %p1096 = scmp.ne.s32.totalorder %s1091, %s1093
      %p1097 = scmp.eq.s32.totalorder %s133, 0
      %p1098 = por %p1096, %p1097
      %p1099 = scmp.ne.s32.totalorder %s1091, %s1093
      %p1100 = scmp.eq.s32.totalorder %s138, 1
      %p1101 = por %p1099, %p1100
      %p1102 = scmp.ne.s32.totalorder %s1093, %s1094
      %p1103 = scmp.eq.s32.totalorder %s138, 0
      %p1104 = por %p1102, %p1103
      %p1105 = scmp.ne.s32.totalorder %s1093, %s1094
      %p1106 = scmp.eq.s32.totalorder %s139, 1
      %p1107 = por %p1105, %p1106
      %p1109 = scmp.ne.s32.totalorder %s1094, %s1108
      %p1110 = scmp.eq.s32.totalorder %s139, 0
      %p1111 = por %p1109, %p1110
      %s1113 = sadd.s32 %s1112, 1
      %p1116 = scmp.eq.s32.totalorder %s133, 1
      %p1117 = scmp.ne.s32.totalorder %s1112, %s1114
      %p1118 = scmp.eq.s32.totalorder %s133, 0
      %p1119 = por %p1117, %p1118
      %p1120 = scmp.ne.s32.totalorder %s1112, %s1114
      %p1121 = scmp.eq.s32.totalorder %s138, 1
      %p1122 = por %p1120, %p1121
      %p1123 = scmp.ne.s32.totalorder %s1114, %s1115
      %p1124 = scmp.eq.s32.totalorder %s138, 0
      %p1125 = por %p1123, %p1124
      %p1126 = scmp.ne.s32.totalorder %s1114, %s1115
      %p1127 = scmp.eq.s32.totalorder %s139, 1
      %p1128 = por %p1126, %p1127
      %p1130 = scmp.ne.s32.totalorder %s1115, %s1129
      %p1131 = scmp.eq.s32.totalorder %s139, 0
      %p1132 = por %p1130, %p1131
      %s1134 = sadd.s32 %s1133, 1
      %p1137 = scmp.eq.s32.totalorder %s133, 1
      %p1138 = scmp.ne.s32.totalorder %s1133, %s1135
      %p1139 = scmp.eq.s32.totalorder %s133, 0
      %p1140 = por %p1138, %p1139
      %p1141 = scmp.ne.s32.totalorder %s1133, %s1135
      %p1142 = scmp.eq.s32.totalorder %s138, 1
      %p1143 = por %p1141, %p1142
      %p1144 = scmp.ne.s32.totalorder %s1135, %s1136
      %p1145 = scmp.eq.s32.totalorder %s138, 0
      %p1146 = por %p1144, %p1145
      %p1147 = scmp.ne.s32.totalorder %s1135, %s1136
      %p1148 = scmp.eq.s32.totalorder %s139, 1
      %p1149 = por %p1147, %p1148
      %p1151 = scmp.ne.s32.totalorder %s1136, %s1150
      %p1152 = scmp.eq.s32.totalorder %s139, 0
      %p1153 = por %p1151, %p1152
      %s1155 = sadd.s32 %s1154, 1
      %p1158 = scmp.eq.s32.totalorder %s133, 1
      %p1159 = scmp.ne.s32.totalorder %s1154, %s1156
      %p1160 = scmp.eq.s32.totalorder %s133, 0
      %p1161 = por %p1159, %p1160
      %p1162 = scmp.ne.s32.totalorder %s1154, %s1156
      %p1163 = scmp.eq.s32.totalorder %s138, 1
      %p1164 = por %p1162, %p1163
      %p1165 = scmp.ne.s32.totalorder %s1156, %s1157
      %p1166 = scmp.eq.s32.totalorder %s138, 0
      %p1167 = por %p1165, %p1166
      %p1168 = scmp.ne.s32.totalorder %s1156, %s1157
      %p1169 = scmp.eq.s32.totalorder %s139, 1
      %p1170 = por %p1168, %p1169
      %p1172 = scmp.ne.s32.totalorder %s1157, %s1171
      %p1173 = scmp.eq.s32.totalorder %s139, 0
      %p1174 = por %p1172, %p1173
      %s1176 = sadd.s32 %s1175, 1
      %p1179 = scmp.eq.s32.totalorder %s133, 1
      %p1180 = scmp.ne.s32.totalorder %s1175, %s1177
      %p1181 = scmp.eq.s32.totalorder %s133, 0
      %p1182 = por %p1180, %p1181
      %p1183 = scmp.ne.s32.totalorder %s1175, %s1177
      %p1184 = scmp.eq.s32.totalorder %s138, 1
      %p1185 = por %p1183, %p1184
      %p1186 = scmp.ne.s32.totalorder %s1177, %s1178
      %p1187 = scmp.eq.s32.totalorder %s138, 0
      %p1188 = por %p1186, %p1187
      %p1189 = scmp.ne.s32.totalorder %s1177, %s1178
      %p1190 = scmp.eq.s32.totalorder %s139, 1
      %p1191 = por %p1189, %p1190
      %p1193 = scmp.ne.s32.totalorder %s1178, %s1192
      %p1194 = scmp.eq.s32.totalorder %s139, 0
      %p1195 = por %p1193, %p1194
      %s1197 = sadd.s32 %s1196, 1
      %p1200 = scmp.eq.s32.totalorder %s133, 1
      %p1201 = scmp.ne.s32.totalorder %s1196, %s1198
      %p1202 = scmp.eq.s32.totalorder %s133, 0
      %p1203 = por %p1201, %p1202
      %p1204 = scmp.ne.s32.totalorder %s1196, %s1198
      %p1205 = scmp.eq.s32.totalorder %s138, 1
      %p1206 = por %p1204, %p1205
      %p1207 = scmp.ne.s32.totalorder %s1198, %s1199
      %p1208 = scmp.eq.s32.totalorder %s138, 0
      %p1209 = por %p1207, %p1208
      %p1210 = scmp.ne.s32.totalorder %s1198, %s1199
      %p1211 = scmp.eq.s32.totalorder %s139, 1
      %p1212 = por %p1210, %p1211
      %p1214 = scmp.ne.s32.totalorder %s1199, %s1213
      %p1215 = scmp.eq.s32.totalorder %s139, 0
      %p1216 = por %p1214, %p1215
      %s1218 = sadd.s32 %s1217, 1
      %p1221 = scmp.eq.s32.totalorder %s133, 1
      %p1222 = scmp.ne.s32.totalorder %s1217, %s1219
      %p1223 = scmp.eq.s32.totalorder %s133, 0
      %p1224 = por %p1222, %p1223
      %p1225 = scmp.ne.s32.totalorder %s1217, %s1219
      %p1226 = scmp.eq.s32.totalorder %s138, 1
      %p1227 = por %p1225, %p1226
      %p1228 = scmp.ne.s32.totalorder %s1219, %s1220
      %p1229 = scmp.eq.s32.totalorder %s138, 0
      %p1230 = por %p1228, %p1229
      %p1231 = scmp.ne.s32.totalorder %s1219, %s1220
      %p1232 = scmp.eq.s32.totalorder %s139, 1
      %p1233 = por %p1231, %p1232
      %p1235 = scmp.ne.s32.totalorder %s1220, %s1234
      %p1236 = scmp.eq.s32.totalorder %s139, 0
      %p1237 = por %p1235, %p1236
      %s1239 = sadd.s32 %s1238, 1
      %p1242 = scmp.eq.s32.totalorder %s133, 1
      %p1243 = scmp.ne.s32.totalorder %s1238, %s1240
      %p1244 = scmp.eq.s32.totalorder %s133, 0
      %p1245 = por %p1243, %p1244
      %p1246 = scmp.ne.s32.totalorder %s1238, %s1240
      %p1247 = scmp.eq.s32.totalorder %s138, 1
      %p1248 = por %p1246, %p1247
      %p1249 = scmp.ne.s32.totalorder %s1240, %s1241
      %p1250 = scmp.eq.s32.totalorder %s138, 0
      %p1251 = por %p1249, %p1250
      %p1252 = scmp.ne.s32.totalorder %s1240, %s1241
      %p1253 = scmp.eq.s32.totalorder %s139, 1
      %p1254 = por %p1252, %p1253
      %p1256 = scmp.ne.s32.totalorder %s1241, %s1255
      %p1257 = scmp.eq.s32.totalorder %s139, 0
      %p1258 = por %p1256, %p1257
      %s1260 = sadd.s32 %s1259, 1
      %p1263 = scmp.eq.s32.totalorder %s133, 1
      %p1264 = scmp.ne.s32.totalorder %s1259, %s1261
      %p1265 = scmp.eq.s32.totalorder %s133, 0
      %p1266 = por %p1264, %p1265
      %p1267 = scmp.ne.s32.totalorder %s1259, %s1261
      %p1268 = scmp.eq.s32.totalorder %s138, 1
      %p1269 = por %p1267, %p1268
      %p1270 = scmp.ne.s32.totalorder %s1261, %s1262
      %p1271 = scmp.eq.s32.totalorder %s138, 0
      %p1272 = por %p1270, %p1271
      %p1273 = scmp.ne.s32.totalorder %s1261, %s1262
      %p1274 = scmp.eq.s32.totalorder %s139, 1
      %p1275 = por %p1273, %p1274
      %p1277 = scmp.ne.s32.totalorder %s1262, %s1276
      %p1278 = scmp.eq.s32.totalorder %s139, 0
      %p1279 = por %p1277, %p1278
      %s1281 = sadd.s32 %s1280, 1
      %p1284 = scmp.eq.s32.totalorder %s133, 1
      %p1285 = scmp.ne.s32.totalorder %s1280, %s1282
      %p1286 = scmp.eq.s32.totalorder %s133, 0
      %p1287 = por %p1285, %p1286
      %p1288 = scmp.ne.s32.totalorder %s1280, %s1282
      %p1289 = scmp.eq.s32.totalorder %s138, 1
      %p1290 = por %p1288, %p1289
      %p1291 = scmp.ne.s32.totalorder %s1282, %s1283
      %p1292 = scmp.eq.s32.totalorder %s138, 0
      %p1293 = por %p1291, %p1292
      %p1294 = scmp.ne.s32.totalorder %s1282, %s1283
      %p1295 = scmp.eq.s32.totalorder %s139, 1
      %p1296 = por %p1294, %p1295
      %p1298 = scmp.ne.s32.totalorder %s1283, %s1297
      %p1299 = scmp.eq.s32.totalorder %s139, 0
      %p1300 = por %p1298, %p1299
      %s1302 = sadd.s32 %s1301, 1
      %p1305 = scmp.eq.s32.totalorder %s133, 1
      %p1306 = scmp.ne.s32.totalorder %s1301, %s1303
      %p1307 = scmp.eq.s32.totalorder %s133, 0
      %p1308 = por %p1306, %p1307
      %p1309 = scmp.ne.s32.totalorder %s1301, %s1303
      %p1310 = scmp.eq.s32.totalorder %s138, 1
      %p1311 = por %p1309, %p1310
      %p1312 = scmp.ne.s32.totalorder %s1303, %s1304
      %p1313 = scmp.eq.s32.totalorder %s138, 0
      %p1314 = por %p1312, %p1313
      %p1315 = scmp.ne.s32.totalorder %s1303, %s1304
      %p1316 = scmp.eq.s32.totalorder %s139, 1
      %p1317 = por %p1315, %p1316
      %p1319 = scmp.ne.s32.totalorder %s1304, %s1318
      %p1320 = scmp.eq.s32.totalorder %s139, 0
      %p1321 = por %p1319, %p1320
      %s1322 = ssub.s32 %s133, %s140
      %p1323 = scmp.eq.s32.totalorder %s1322, 0
      %s1325 = sadd.s32 %s1324, 1
      %s1326 = scalar_select %p1323, %s1324, %s1325
      %p1329 = pneg %p1323
      %p1330 = scmp.eq.s32.totalorder %s133, 1
      %p1331 = por %p1329, %p1330
      %p1332 = scmp.ne.s32.totalorder %s1324, %s1327
      %p1333 = scmp.eq.s32.totalorder %s133, 0
      %p1334 = por %p1332, %p1333
      %p1335 = scmp.ne.s32.totalorder %s1324, %s1327
      %p1336 = scmp.eq.s32.totalorder %s138, 1
      %p1337 = por %p1335, %p1336
      %p1338 = scmp.ne.s32.totalorder %s1327, %s1328
      %p1339 = scmp.eq.s32.totalorder %s138, 0
      %p1340 = por %p1338, %p1339
      %p1341 = scmp.ne.s32.totalorder %s1327, %s1328
      %p1342 = scmp.eq.s32.totalorder %s139, 1
      %p1343 = por %p1341, %p1342
      %p1345 = scmp.ne.s32.totalorder %s1328, %s1344
      %p1346 = scmp.eq.s32.totalorder %s139, 0
      %p1347 = por %p1345, %p1346
      %s1348 = ssub.s32 %s133, %s140
      %p1349 = scmp.eq.s32.totalorder %s1348, 0
      %s1351 = sadd.s32 %s1350, 1
      %s1352 = scalar_select %p1349, %s1350, %s1351
      %p1355 = pneg %p1349
      %p1356 = scmp.eq.s32.totalorder %s133, 1
      %p1357 = por %p1355, %p1356
      %p1358 = scmp.ne.s32.totalorder %s1350, %s1353
      %p1359 = scmp.eq.s32.totalorder %s133, 0
      %p1360 = por %p1358, %p1359
      %p1361 = scmp.ne.s32.totalorder %s1350, %s1353
      %p1362 = scmp.eq.s32.totalorder %s138, 1
      %p1363 = por %p1361, %p1362
      %p1364 = scmp.ne.s32.totalorder %s1353, %s1354
      %p1365 = scmp.eq.s32.totalorder %s138, 0
      %p1366 = por %p1364, %p1365
      %p1367 = scmp.ne.s32.totalorder %s1353, %s1354
      %p1368 = scmp.eq.s32.totalorder %s139, 1
      %p1369 = por %p1367, %p1368
      %p1371 = scmp.ne.s32.totalorder %s1354, %s1370
      %p1372 = scmp.eq.s32.totalorder %s139, 0
      %p1373 = por %p1371, %p1372
      %p1374 = scmp.le.s32.totalorder 1, %s133
      %p1375 = scmp.lt.s32.totalorder %s133, 3
      %p1376 = pnand %p1374, %p1375
      %p1377 = pneg %p1376
      // Predicated region
      $region9: #{transformer_forward.1} parent=5 // pred_check
        _
      $region10: #{transformer_forward.1} parent=5 // pred_check_branch
        %1379 = sbr.rel (%p1376) target = $region12
      $region11: #{transformer_forward.1} parent=5 // pred_region
        %s1380 = ssub.s32 %s133, 1
        // Predicated region
        $region13: #{transformer_forward.1} parent=11 // pred_check
          %p1381 = pneg %p180
        $region14: #{transformer_forward.1} parent=11 // pred_check_branch
          %1383 = sbr.rel (%p1381) target = $region16
        $region15: #{transformer_forward.1} parent=11 // pred_region
          _
        $region16: #{transformer_forward.1} parent=11 // pred_fallthru
          _
        // Predicated region
        $region17: #{transformer_forward.1} parent=11 // pred_check
          %p1384 = pneg %p201
        $region18: #{transformer_forward.1} parent=11 // pred_check_branch
          %1386 = sbr.rel (%p1384) target = $region20
        $region19: #{transformer_forward.1} parent=11 // pred_region
          _
        $region20: #{transformer_forward.1} parent=11 // pred_fallthru
          _
        // Predicated region
        $region21: #{transformer_forward.1} parent=11 // pred_check
          %p1387 = pneg %p222
        $region22: #{transformer_forward.1} parent=11 // pred_check_branch
          %1389 = sbr.rel (%p1387) target = $region24
        $region23: #{transformer_forward.1} parent=11 // pred_region
          _
        $region24: #{transformer_forward.1} parent=11 // pred_fallthru
          _
        // Predicated region
        $region25: #{transformer_forward.1} parent=11 // pred_check
          %p1390 = pneg %p243
        $region26: #{transformer_forward.1} parent=11 // pred_check_branch
          %1392 = sbr.rel (%p1390) target = $region28
        $region27: #{transformer_forward.1} parent=11 // pred_region
          _
        $region28: #{transformer_forward.1} parent=11 // pred_fallthru
          _
        // Predicated region
        $region29: #{transformer_forward.1} parent=11 // pred_check
          %p1393 = pneg %p264
        $region30: #{transformer_forward.1} parent=11 // pred_check_branch
          %1395 = sbr.rel (%p1393) target = $region32
        $region31: #{transformer_forward.1} parent=11 // pred_region
          _
        $region32: #{transformer_forward.1} parent=11 // pred_fallthru
          _
        // Predicated region
        $region33: #{transformer_forward.1} parent=11 // pred_check
          %p1396 = pneg %p285
        $region34: #{transformer_forward.1} parent=11 // pred_check_branch
          %1398 = sbr.rel (%p1396) target = $region36
        $region35: #{transformer_forward.1} parent=11 // pred_region
          _
        $region36: #{transformer_forward.1} parent=11 // pred_fallthru
          _
        // Predicated region
        $region37: #{transformer_forward.1} parent=11 // pred_check
          %p1399 = pneg %p306
        $region38: #{transformer_forward.1} parent=11 // pred_check_branch
          %1401 = sbr.rel (%p1399) target = $region40
        $region39: #{transformer_forward.1} parent=11 // pred_region
          _
        $region40: #{transformer_forward.1} parent=11 // pred_fallthru
          _
        // Predicated region
        $region41: #{transformer_forward.1} parent=11 // pred_check
          %p1402 = pneg %p327
        $region42: #{transformer_forward.1} parent=11 // pred_check_branch
          %1404 = sbr.rel (%p1402) target = $region44
        $region43: #{transformer_forward.1} parent=11 // pred_region
          _
        $region44: #{transformer_forward.1} parent=11 // pred_fallthru
          _
        // Predicated region
        $region45: #{transformer_forward.1} parent=11 // pred_check
          %p1405 = pneg %p348
        $region46: #{transformer_forward.1} parent=11 // pred_check_branch
          %1407 = sbr.rel (%p1405) target = $region48
        $region47: #{transformer_forward.1} parent=11 // pred_region
          _
        $region48: #{transformer_forward.1} parent=11 // pred_fallthru
          _
        // Predicated region
        $region49: #{transformer_forward.1} parent=11 // pred_check
          %p1408 = pneg %p369
        $region50: #{transformer_forward.1} parent=11 // pred_check_branch
          %1410 = sbr.rel (%p1408) target = $region52
        $region51: #{transformer_forward.1} parent=11 // pred_region
          _
        $region52: #{transformer_forward.1} parent=11 // pred_fallthru
          _
        // Predicated region
        $region53: #{transformer_forward.1} parent=11 // pred_check
          %p1411 = pneg %p390
        $region54: #{transformer_forward.1} parent=11 // pred_check_branch
          %1413 = sbr.rel (%p1411) target = $region56
        $region55: #{transformer_forward.1} parent=11 // pred_region
          _
        $region56: #{transformer_forward.1} parent=11 // pred_fallthru
          _
        // Predicated region
        $region57: #{transformer_forward.1} parent=11 // pred_check
          %p1414 = pneg %p411
        $region58: #{transformer_forward.1} parent=11 // pred_check_branch
          %1416 = sbr.rel (%p1414) target = $region60
        $region59: #{transformer_forward.1} parent=11 // pred_region
          _
        $region60: #{transformer_forward.1} parent=11 // pred_fallthru
          _
        // Predicated region
        $region61: #{transformer_forward.1} parent=11 // pred_check
          %p1417 = pneg %p432
        $region62: #{transformer_forward.1} parent=11 // pred_check_branch
          %1419 = sbr.rel (%p1417) target = $region64
        $region63: #{transformer_forward.1} parent=11 // pred_region
          _
        $region64: #{transformer_forward.1} parent=11 // pred_fallthru
          _
        // Predicated region
        $region65: #{transformer_forward.1} parent=11 // pred_check
          %p1420 = pneg %p453
        $region66: #{transformer_forward.1} parent=11 // pred_check_branch
          %1422 = sbr.rel (%p1420) target = $region68
        $region67: #{transformer_forward.1} parent=11 // pred_region
          _
        $region68: #{transformer_forward.1} parent=11 // pred_fallthru
          _
        // Predicated region
        $region69: #{transformer_forward.1} parent=11 // pred_check
          %p1423 = pneg %p474
        $region70: #{transformer_forward.1} parent=11 // pred_check_branch
          %1425 = sbr.rel (%p1423) target = $region72
        $region71: #{transformer_forward.1} parent=11 // pred_region
          _
        $region72: #{transformer_forward.1} parent=11 // pred_fallthru
          _
        // Predicated region
        $region73: #{transformer_forward.1} parent=11 // pred_check
          %p1426 = pneg %p495
        $region74: #{transformer_forward.1} parent=11 // pred_check_branch
          %1428 = sbr.rel (%p1426) target = $region76
        $region75: #{transformer_forward.1} parent=11 // pred_region
          _
        $region76: #{transformer_forward.1} parent=11 // pred_fallthru
          _
        // Predicated region
        $region77: #{transformer_forward.1} parent=11 // pred_check
          %p1429 = pneg %p516
        $region78: #{transformer_forward.1} parent=11 // pred_check_branch
          %1431 = sbr.rel (%p1429) target = $region80
        $region79: #{transformer_forward.1} parent=11 // pred_region
          _
        $region80: #{transformer_forward.1} parent=11 // pred_fallthru
          _
        // Predicated region
        $region81: #{transformer_forward.1} parent=11 // pred_check
          %p1432 = pneg %p537
        $region82: #{transformer_forward.1} parent=11 // pred_check_branch
          %1434 = sbr.rel (%p1432) target = $region84
        $region83: #{transformer_forward.1} parent=11 // pred_region
          _
        $region84: #{transformer_forward.1} parent=11 // pred_fallthru
          _
        // Predicated region
        $region85: #{transformer_forward.1} parent=11 // pred_check
          %p1435 = pneg %p558
        $region86: #{transformer_forward.1} parent=11 // pred_check_branch
          %1437 = sbr.rel (%p1435) target = $region88
        $region87: #{transformer_forward.1} parent=11 // pred_region
          _
        $region88: #{transformer_forward.1} parent=11 // pred_fallthru
          _
        // Predicated region
        $region89: #{transformer_forward.1} parent=11 // pred_check
          %p1438 = pneg %p579
        $region90: #{transformer_forward.1} parent=11 // pred_check_branch
          %1440 = sbr.rel (%p1438) target = $region92
        $region91: #{transformer_forward.1} parent=11 // pred_region
          _
        $region92: #{transformer_forward.1} parent=11 // pred_fallthru
          _
        // Predicated region
        $region93: #{transformer_forward.1} parent=11 // pred_check
          %p1441 = pneg %p600
        $region94: #{transformer_forward.1} parent=11 // pred_check_branch
          %1443 = sbr.rel (%p1441) target = $region96
        $region95: #{transformer_forward.1} parent=11 // pred_region
          _
        $region96: #{transformer_forward.1} parent=11 // pred_fallthru
          _
        // Predicated region
        $region97: #{transformer_forward.1} parent=11 // pred_check
          %p1444 = pneg %p621
        $region98: #{transformer_forward.1} parent=11 // pred_check_branch
          %1446 = sbr.rel (%p1444) target = $region100
        $region99: #{transformer_forward.1} parent=11 // pred_region
          _
        $region100: #{transformer_forward.1} parent=11 // pred_fallthru
          _
        // Predicated region
        $region101: #{transformer_forward.1} parent=11 // pred_check
          %p1447 = pneg %p642
        $region102: #{transformer_forward.1} parent=11 // pred_check_branch
          %1449 = sbr.rel (%p1447) target = $region104
        $region103: #{transformer_forward.1} parent=11 // pred_region
          _
        $region104: #{transformer_forward.1} parent=11 // pred_fallthru
          _
        // Predicated region
        $region105: #{transformer_forward.1} parent=11 // pred_check
          %p1450 = pneg %p663
        $region106: #{transformer_forward.1} parent=11 // pred_check_branch
          %1452 = sbr.rel (%p1450) target = $region108
        $region107: #{transformer_forward.1} parent=11 // pred_region
          _
        $region108: #{transformer_forward.1} parent=11 // pred_fallthru
          _
        // Predicated region
        $region109: #{transformer_forward.1} parent=11 // pred_check
          %p1453 = pneg %p684
        $region110: #{transformer_forward.1} parent=11 // pred_check_branch
          %1455 = sbr.rel (%p1453) target = $region112
        $region111: #{transformer_forward.1} parent=11 // pred_region
          _
        $region112: #{transformer_forward.1} parent=11 // pred_fallthru
          _
        // Predicated region
        $region113: #{transformer_forward.1} parent=11 // pred_check
          %p1456 = pneg %p705
        $region114: #{transformer_forward.1} parent=11 // pred_check_branch
          %1458 = sbr.rel (%p1456) target = $region116
        $region115: #{transformer_forward.1} parent=11 // pred_region
          _
        $region116: #{transformer_forward.1} parent=11 // pred_fallthru
          _
        // Predicated region
        $region117: #{transformer_forward.1} parent=11 // pred_check
          %p1459 = pneg %p726
        $region118: #{transformer_forward.1} parent=11 // pred_check_branch
          %1461 = sbr.rel (%p1459) target = $region120
        $region119: #{transformer_forward.1} parent=11 // pred_region
          _
        $region120: #{transformer_forward.1} parent=11 // pred_fallthru
          _
        // Predicated region
        $region121: #{transformer_forward.1} parent=11 // pred_check
          %p1462 = pneg %p747
        $region122: #{transformer_forward.1} parent=11 // pred_check_branch
          %1464 = sbr.rel (%p1462) target = $region124
        $region123: #{transformer_forward.1} parent=11 // pred_region
          _
        $region124: #{transformer_forward.1} parent=11 // pred_fallthru
          _
        // Predicated region
        $region125: #{transformer_forward.1} parent=11 // pred_check
          %p1465 = pneg %p768
        $region126: #{transformer_forward.1} parent=11 // pred_check_branch
          %1467 = sbr.rel (%p1465) target = $region128
        $region127: #{transformer_forward.1} parent=11 // pred_region
          _
        $region128: #{transformer_forward.1} parent=11 // pred_fallthru
          _
        // Predicated region
        $region129: #{transformer_forward.1} parent=11 // pred_check
          %p1468 = pneg %p789
        $region130: #{transformer_forward.1} parent=11 // pred_check_branch
          %1470 = sbr.rel (%p1468) target = $region132
        $region131: #{transformer_forward.1} parent=11 // pred_region
          _
        $region132: #{transformer_forward.1} parent=11 // pred_fallthru
          _
        // Predicated region
        $region133: #{transformer_forward.1} parent=11 // pred_check
          %p1471 = pneg %p810
        $region134: #{transformer_forward.1} parent=11 // pred_check_branch
          %1473 = sbr.rel (%p1471) target = $region136
        $region135: #{transformer_forward.1} parent=11 // pred_region
          _
        $region136: #{transformer_forward.1} parent=11 // pred_fallthru
          _
        // Predicated region
        $region137: #{transformer_forward.1} parent=11 // pred_check
          %p1474 = pneg %p831
        $region138: #{transformer_forward.1} parent=11 // pred_check_branch
          %1476 = sbr.rel (%p1474) target = $region140
        $region139: #{transformer_forward.1} parent=11 // pred_region
          _
        $region140: #{transformer_forward.1} parent=11 // pred_fallthru
          _
        // Predicated region
        $region141: #{transformer_forward.1} parent=11 // pred_check
          %p1477 = pneg %p852
        $region142: #{transformer_forward.1} parent=11 // pred_check_branch
          %1479 = sbr.rel (%p1477) target = $region144
        $region143: #{transformer_forward.1} parent=11 // pred_region
          %s1481 = ssub.s32 16, 16
          %1482 = vsyncadd [#allocation3], %s1481
          %s1484 = sshll.u32 [#allocation2], 4
          %s1485 = int_to_ptr.vmem [resolvable:$true] %s1484
          %1487 = dma.hbm_to_vmem [thread:$0]  %s67, 16, %s1485, [#allocation3]
        $region144: #{transformer_forward.1} parent=11 // pred_fallthru
          _
        // Predicated region
        $region145: #{transformer_forward.1} parent=11 // pred_check
          %p1488 = pneg %p873
        $region146: #{transformer_forward.1} parent=11 // pred_check_branch
          %1490 = sbr.rel (%p1488) target = $region148
        $region147: #{transformer_forward.1} parent=11 // pred_region
          %s1492 = ssub.s32 16, 16
          %1493 = vsyncadd [#allocation6], %s1492
          %s1495 = sshll.u32 [#allocation5], 4
          %s1496 = int_to_ptr.vmem [resolvable:$true] %s1495
          %1498 = dma.hbm_to_vmem [thread:$0]  %s69, 16, %s1496, [#allocation6]
        $region148: #{transformer_forward.1} parent=11 // pred_fallthru
          _
        // Predicated region
        $region149: #{transformer_forward.1} parent=11 // pred_check
          %p1499 = pneg %p894
        $region150: #{transformer_forward.1} parent=11 // pred_check_branch
          %1501 = sbr.rel (%p1499) target = $region152
        $region151: #{transformer_forward.1} parent=11 // pred_region
          %s1503 = ssub.s32 16, 16
          %1504 = vsyncadd [#allocation6], %s1503
          %s1506 = sshll.u32 [#allocation7], 4
          %s1507 = int_to_ptr.vmem [resolvable:$true] %s1506
          %1509 = dma.hbm_to_vmem [thread:$0]  %s71, 16, %s1507, [#allocation6]
        $region152: #{transformer_forward.1} parent=11 // pred_fallthru
          _
        // Predicated region
        $region153: #{transformer_forward.1} parent=11 // pred_check
          %p1510 = pneg %p915
        $region154: #{transformer_forward.1} parent=11 // pred_check_branch
          %1512 = sbr.rel (%p1510) target = $region156
        $region155: #{transformer_forward.1} parent=11 // pred_region
          %s1514 = ssub.s32 16, 16
          %1515 = vsyncadd [#allocation9], %s1514
          %s1517 = sshll.u32 [#allocation8], 4
          %s1518 = int_to_ptr.vmem [resolvable:$true] %s1517
          %1520 = dma.hbm_to_vmem [thread:$0]  %s73, 16, %s1518, [#allocation9]
        $region156: #{transformer_forward.1} parent=11 // pred_fallthru
          _
        // Predicated region
        $region157: #{transformer_forward.1} parent=11 // pred_check
          %p1521 = pneg %p936
        $region158: #{transformer_forward.1} parent=11 // pred_check_branch
          %1523 = sbr.rel (%p1521) target = $region160
        $region159: #{transformer_forward.1} parent=11 // pred_region
          %s1525 = ssub.s32 16, 16
          %1526 = vsyncadd [#allocation9], %s1525
          %s1528 = sshll.u32 [#allocation10], 4
          %s1529 = int_to_ptr.vmem [resolvable:$true] %s1528
          %1531 = dma.hbm_to_vmem [thread:$0]  %s75, 16, %s1529, [#allocation9]
        $region160: #{transformer_forward.1} parent=11 // pred_fallthru
          _
        // Predicated region
        $region161: #{transformer_forward.1} parent=11 // pred_check
          %p1532 = pneg %p957
        $region162: #{transformer_forward.1} parent=11 // pred_check_branch
          %1534 = sbr.rel (%p1532) target = $region164
        $region163: #{transformer_forward.1} parent=11 // pred_region
          %s1536 = ssub.s32 16, 16
          %1537 = vsyncadd [#allocation12], %s1536
          %s1539 = sshll.u32 [#allocation11], 4
          %s1540 = int_to_ptr.vmem [resolvable:$true] %s1539
          %1542 = dma.hbm_to_vmem [thread:$0]  %s77, 16, %s1540, [#allocation12]
        $region164: #{transformer_forward.1} parent=11 // pred_fallthru
          _
        // Predicated region
        $region165: #{transformer_forward.1} parent=11 // pred_check
          %p1543 = pneg %p978
        $region166: #{transformer_forward.1} parent=11 // pred_check_branch
          %1545 = sbr.rel (%p1543) target = $region168
        $region167: #{transformer_forward.1} parent=11 // pred_region
          %s1547 = ssub.s32 16, 16
          %1548 = vsyncadd [#allocation12], %s1547
          %s1550 = sshll.u32 [#allocation13], 4
          %s1551 = int_to_ptr.vmem [resolvable:$true] %s1550
          %1553 = dma.hbm_to_vmem [thread:$0]  %s79, 16, %s1551, [#allocation12]
        $region168: #{transformer_forward.1} parent=11 // pred_fallthru
          _
        // Predicated region
        $region169: #{transformer_forward.1} parent=11 // pred_check
          %p1554 = pneg %p999
        $region170: #{transformer_forward.1} parent=11 // pred_check_branch
          %1556 = sbr.rel (%p1554) target = $region172
        $region171: #{transformer_forward.1} parent=11 // pred_region
          _
        $region172: #{transformer_forward.1} parent=11 // pred_fallthru
          _
        // Predicated region
        $region173: #{transformer_forward.1} parent=11 // pred_check
          %p1557 = pneg %p1020
        $region174: #{transformer_forward.1} parent=11 // pred_check_branch
          %1559 = sbr.rel (%p1557) target = $region176
        $region175: #{transformer_forward.1} parent=11 // pred_region
          _
        $region176: #{transformer_forward.1} parent=11 // pred_fallthru
          _
        // Predicated region
        $region177: #{transformer_forward.1} parent=11 // pred_check
          %p1560 = pneg %p1041
        $region178: #{transformer_forward.1} parent=11 // pred_check_branch
          %1562 = sbr.rel (%p1560) target = $region180
        $region179: #{transformer_forward.1} parent=11 // pred_region
          _
        $region180: #{transformer_forward.1} parent=11 // pred_fallthru
          _
        // Predicated region
        $region181: #{transformer_forward.1} parent=11 // pred_check
          %p1563 = pneg %p1062
        $region182: #{transformer_forward.1} parent=11 // pred_check_branch
          %1565 = sbr.rel (%p1563) target = $region184
        $region183: #{transformer_forward.1} parent=11 // pred_region
          _
        $region184: #{transformer_forward.1} parent=11 // pred_fallthru
          _
        // Predicated region
        $region185: #{transformer_forward.1} parent=11 // pred_check
          %p1566 = pneg %p1083
        $region186: #{transformer_forward.1} parent=11 // pred_check_branch
          %1568 = sbr.rel (%p1566) target = $region188
        $region187: #{transformer_forward.1} parent=11 // pred_region
          %s1570 = ssub.s32 16, 16
          %1571 = vsyncadd [#allocation15], %s1570
          %s1573 = sshll.u32 [#allocation14], 4
          %s1574 = int_to_ptr.vmem [resolvable:$true] %s1573
          %1576 = dma.hbm_to_vmem [thread:$0]  %s89, 16, %s1574, [#allocation15]
        $region188: #{transformer_forward.1} parent=11 // pred_fallthru
          _
        // Predicated region
        $region189: #{transformer_forward.1} parent=11 // pred_check
          %p1577 = pneg %p1104
        $region190: #{transformer_forward.1} parent=11 // pred_check_branch
          %1579 = sbr.rel (%p1577) target = $region192
        $region191: #{transformer_forward.1} parent=11 // pred_region
          %s1581 = ssub.s32 16, 16
          %1582 = vsyncadd [#allocation15], %s1581
          %s1584 = sshll.u32 [#allocation16], 4
          %s1585 = int_to_ptr.vmem [resolvable:$true] %s1584
          %1587 = dma.hbm_to_vmem [thread:$0]  %s91, 16, %s1585, [#allocation15]
        $region192: #{transformer_forward.1} parent=11 // pred_fallthru
          _
        // Predicated region
        $region193: #{transformer_forward.1} parent=11 // pred_check
          %p1588 = pneg %p1125
        $region194: #{transformer_forward.1} parent=11 // pred_check_branch
          %1590 = sbr.rel (%p1588) target = $region196
        $region195: #{transformer_forward.1} parent=11 // pred_region
          _
        $region196: #{transformer_forward.1} parent=11 // pred_fallthru
          _
        // Predicated region
        $region197: #{transformer_forward.1} parent=11 // pred_check
          %p1591 = pneg %p1146
        $region198: #{transformer_forward.1} parent=11 // pred_check_branch
          %1593 = sbr.rel (%p1591) target = $region200
        $region199: #{transformer_forward.1} parent=11 // pred_region
          _
        $region200: #{transformer_forward.1} parent=11 // pred_fallthru
          _
        // Predicated region
        $region201: #{transformer_forward.1} parent=11 // pred_check
          %p1594 = pneg %p1167
        $region202: #{transformer_forward.1} parent=11 // pred_check_branch
          %1596 = sbr.rel (%p1594) target = $region204
        $region203: #{transformer_forward.1} parent=11 // pred_region
          %s1598 = ssub.s32 16, 16
          %1599 = vsyncadd [#allocation18], %s1598
          %s1601 = sshll.u32 [#allocation17], 4
          %s1602 = int_to_ptr.vmem [resolvable:$true] %s1601
          %1604 = dma.hbm_to_vmem [thread:$0]  %s97, 16, %s1602, [#allocation18]
        $region204: #{transformer_forward.1} parent=11 // pred_fallthru
          _
        // Predicated region
        $region205: #{transformer_forward.1} parent=11 // pred_check
          %p1605 = pneg %p1188
        $region206: #{transformer_forward.1} parent=11 // pred_check_branch
          %1607 = sbr.rel (%p1605) target = $region208
        $region207: #{transformer_forward.1} parent=11 // pred_region
          %s1609 = ssub.s32 16, 16
          %1610 = vsyncadd [#allocation18], %s1609
          %s1612 = sshll.u32 [#allocation19], 4
          %s1613 = int_to_ptr.vmem [resolvable:$true] %s1612
          %1615 = dma.hbm_to_vmem [thread:$0]  %s99, 16, %s1613, [#allocation18]
        $region208: #{transformer_forward.1} parent=11 // pred_fallthru
          _
        // Predicated region
        $region209: #{transformer_forward.1} parent=11 // pred_check
          %p1616 = pneg %p1209
        $region210: #{transformer_forward.1} parent=11 // pred_check_branch
          %1618 = sbr.rel (%p1616) target = $region212
        $region211: #{transformer_forward.1} parent=11 // pred_region
          %s1620 = ssub.s32 16, 16
          %1621 = vsyncadd [#allocation21], %s1620
          %s1623 = sshll.u32 [#allocation20], 4
          %s1624 = int_to_ptr.vmem [resolvable:$true] %s1623
          %1626 = dma.hbm_to_vmem [thread:$0]  %s101, 16, %s1624, [#allocation21]
        $region212: #{transformer_forward.1} parent=11 // pred_fallthru
          _
        // Predicated region
        $region213: #{transformer_forward.1} parent=11 // pred_check
          %p1627 = pneg %p1230
        $region214: #{transformer_forward.1} parent=11 // pred_check_branch
          %1629 = sbr.rel (%p1627) target = $region216
        $region215: #{transformer_forward.1} parent=11 // pred_region
          %s1631 = ssub.s32 16, 16
          %1632 = vsyncadd [#allocation21], %s1631
          %s1634 = sshll.u32 [#allocation22], 4
          %s1635 = int_to_ptr.vmem [resolvable:$true] %s1634
          %1637 = dma.hbm_to_vmem [thread:$0]  %s103, 16, %s1635, [#allocation21]
        $region216: #{transformer_forward.1} parent=11 // pred_fallthru
          _
        // Predicated region
        $region217: #{transformer_forward.1} parent=11 // pred_check
          %p1638 = pneg %p1251
        $region218: #{transformer_forward.1} parent=11 // pred_check_branch
          %1640 = sbr.rel (%p1638) target = $region220
        $region219: #{transformer_forward.1} parent=11 // pred_region
          %s1642 = ssub.s32 16, 16
          %1643 = vsyncadd [#allocation24], %s1642
          %s1645 = sshll.u32 [#allocation23], 4
          %s1646 = int_to_ptr.vmem [resolvable:$true] %s1645
          %1648 = dma.hbm_to_vmem [thread:$0]  %s105, 16, %s1646, [#allocation24]
        $region220: #{transformer_forward.1} parent=11 // pred_fallthru
          _
        // Predicated region
        $region221: #{transformer_forward.1} parent=11 // pred_check
          %p1649 = pneg %p1272
        $region222: #{transformer_forward.1} parent=11 // pred_check_branch
          %1651 = sbr.rel (%p1649) target = $region224
        $region223: #{transformer_forward.1} parent=11 // pred_region
          %s1653 = ssub.s32 16, 16
          %1654 = vsyncadd [#allocation24], %s1653
          %s1656 = sshll.u32 [#allocation25], 4
          %s1657 = int_to_ptr.vmem [resolvable:$true] %s1656
          %1659 = dma.hbm_to_vmem [thread:$0]  %s107, 16, %s1657, [#allocation24]
        $region224: #{transformer_forward.1} parent=11 // pred_fallthru
          _
        // Predicated region
        $region225: #{transformer_forward.1} parent=11 // pred_check
          %p1660 = pneg %p1293
        $region226: #{transformer_forward.1} parent=11 // pred_check_branch
          %1662 = sbr.rel (%p1660) target = $region228
        $region227: #{transformer_forward.1} parent=11 // pred_region
          _
        $region228: #{transformer_forward.1} parent=11 // pred_fallthru
          _
        // Predicated region
        $region229: #{transformer_forward.1} parent=11 // pred_check
          %p1663 = pneg %p1314
        $region230: #{transformer_forward.1} parent=11 // pred_check_branch
          %1665 = sbr.rel (%p1663) target = $region232
        $region231: #{transformer_forward.1} parent=11 // pred_region
          _
        $region232: #{transformer_forward.1} parent=11 // pred_fallthru
          _
      $region12: #{transformer_forward.1} parent=5 // pred_fallthru
        _
      %p1666 = scmp.lt.s32.totalorder %s133, 2
      // Predicated region
      $region233: #{transformer_forward.1} parent=5 // pred_check
        %p1667 = pneg %p1666
      $region234: #{transformer_forward.1} parent=5 // pred_check_branch
        %1669 = sbr.rel (%p1667) target = $region236
      $region235: #{transformer_forward.1} parent=5 // pred_region
        // Predicated region
        $region237: #{transformer_forward.1} parent=235 // pred_check
          %p1670 = pneg %p153
        $region238: #{transformer_forward.1} parent=235 // pred_check_branch
          %1672 = sbr.rel (%p1670) target = $region240
        $region239: #{transformer_forward.1} parent=235 // pred_region
          %p1673 = scmp.lt.s32.totalorder %s133, 1
          %s1674 = scalar_select %p1673, %s133, 1
          %s1675 = smul.addr %s1674, 8
          %s1676 = scalar_lea.vmem %s1, %s1675
        $region240: #{transformer_forward.1} parent=235 // pred_fallthru
          _
      $region236: #{transformer_forward.1} parent=5 // pred_fallthru
        _
      %p1677 = scmp.le.s32.totalorder 1, %s133
      %p1678 = scmp.lt.s32.totalorder %s133, 3
      %p1679 = pnand %p1677, %p1678
      %p1680 = pneg %p1679
      // Predicated region
      $region241: #{transformer_forward.1} parent=5 // pred_check
        _
      $region242: #{transformer_forward.1} parent=5 // pred_check_branch
        %1682 = sbr.rel (%p1679) target = $region244
      $region243: #{transformer_forward.1} parent=5 // pred_region
        %s1683 = ssub.s32 %s133, 1
        // Predicated region
        $region245: #{transformer_forward.1} parent=243 // pred_check
          %p1684 = pneg %p852
        $region246: #{transformer_forward.1} parent=243 // pred_check_branch
          %1686 = sbr.rel (%p1684) target = $region248
        $region247: #{transformer_forward.1} parent=243 // pred_region
          %1687 = dma.done [#allocation3], 16
        $region248: #{transformer_forward.1} parent=243 // pred_fallthru
          _
        // Predicated region
        $region249: #{transformer_forward.1} parent=243 // pred_check
          %p1688 = pneg %p873
        $region250: #{transformer_forward.1} parent=243 // pred_check_branch
          %1690 = sbr.rel (%p1688) target = $region252
        $region251: #{transformer_forward.1} parent=243 // pred_region
          %1691 = dma.done [#allocation6], 16
        $region252: #{transformer_forward.1} parent=243 // pred_fallthru
          _
        // Predicated region
        $region253: #{transformer_forward.1} parent=243 // pred_check
          %p1692 = pneg %p894
        $region254: #{transformer_forward.1} parent=243 // pred_check_branch
          %1694 = sbr.rel (%p1692) target = $region256
        $region255: #{transformer_forward.1} parent=243 // pred_region
          %1695 = dma.done [#allocation6], 16
        $region256: #{transformer_forward.1} parent=243 // pred_fallthru
          _
        // Predicated region
        $region257: #{transformer_forward.1} parent=243 // pred_check
          %p1696 = pneg %p915
        $region258: #{transformer_forward.1} parent=243 // pred_check_branch
          %1698 = sbr.rel (%p1696) target = $region260
        $region259: #{transformer_forward.1} parent=243 // pred_region
          %1699 = dma.done [#allocation9], 16
        $region260: #{transformer_forward.1} parent=243 // pred_fallthru
          _
        // Predicated region
        $region261: #{transformer_forward.1} parent=243 // pred_check
          %p1700 = pneg %p936
        $region262: #{transformer_forward.1} parent=243 // pred_check_branch
          %1702 = sbr.rel (%p1700) target = $region264
        $region263: #{transformer_forward.1} parent=243 // pred_region
          %1703 = dma.done [#allocation9], 16
        $region264: #{transformer_forward.1} parent=243 // pred_fallthru
          _
        // Predicated region
        $region265: #{transformer_forward.1} parent=243 // pred_check
          %p1704 = pneg %p957
        $region266: #{transformer_forward.1} parent=243 // pred_check_branch
          %1706 = sbr.rel (%p1704) target = $region268
        $region267: #{transformer_forward.1} parent=243 // pred_region
          %1707 = dma.done [#allocation12], 16
        $region268: #{transformer_forward.1} parent=243 // pred_fallthru
          _
        // Predicated region
        $region269: #{transformer_forward.1} parent=243 // pred_check
          %p1708 = pneg %p978
        $region270: #{transformer_forward.1} parent=243 // pred_check_branch
          %1710 = sbr.rel (%p1708) target = $region272
        $region271: #{transformer_forward.1} parent=243 // pred_region
          %1711 = dma.done [#allocation12], 16
        $region272: #{transformer_forward.1} parent=243 // pred_fallthru
          _
        // Predicated region
        $region273: #{transformer_forward.1} parent=243 // pred_check
          %p1712 = pneg %p1083
        $region274: #{transformer_forward.1} parent=243 // pred_check_branch
          %1714 = sbr.rel (%p1712) target = $region276
        $region275: #{transformer_forward.1} parent=243 // pred_region
          %1715 = dma.done [#allocation15], 16
        $region276: #{transformer_forward.1} parent=243 // pred_fallthru
          _
        // Predicated region
        $region277: #{transformer_forward.1} parent=243 // pred_check
          %p1716 = pneg %p1104
        $region278: #{transformer_forward.1} parent=243 // pred_check_branch
          %1718 = sbr.rel (%p1716) target = $region280
        $region279: #{transformer_forward.1} parent=243 // pred_region
          %1719 = dma.done [#allocation15], 16
        $region280: #{transformer_forward.1} parent=243 // pred_fallthru
          _
        // Predicated region
        $region281: #{transformer_forward.1} parent=243 // pred_check
          %p1720 = pneg %p1167
        $region282: #{transformer_forward.1} parent=243 // pred_check_branch
          %1722 = sbr.rel (%p1720) target = $region284
        $region283: #{transformer_forward.1} parent=243 // pred_region
          %1723 = dma.done [#allocation18], 16
        $region284: #{transformer_forward.1} parent=243 // pred_fallthru
          _
        // Predicated region
        $region285: #{transformer_forward.1} parent=243 // pred_check
          %p1724 = pneg %p1188
        $region286: #{transformer_forward.1} parent=243 // pred_check_branch
          %1726 = sbr.rel (%p1724) target = $region288
        $region287: #{transformer_forward.1} parent=243 // pred_region
          %1727 = dma.done [#allocation18], 16
        $region288: #{transformer_forward.1} parent=243 // pred_fallthru
          _
        // Predicated region
        $region289: #{transformer_forward.1} parent=243 // pred_check
          %p1728 = pneg %p1209
        $region290: #{transformer_forward.1} parent=243 // pred_check_branch
          %1730 = sbr.rel (%p1728) target = $region292
        $region291: #{transformer_forward.1} parent=243 // pred_region
          %1731 = dma.done [#allocation21], 16
        $region292: #{transformer_forward.1} parent=243 // pred_fallthru
          _
        // Predicated region
        $region293: #{transformer_forward.1} parent=243 // pred_check
          %p1732 = pneg %p1230
        $region294: #{transformer_forward.1} parent=243 // pred_check_branch
          %1734 = sbr.rel (%p1732) target = $region296
        $region295: #{transformer_forward.1} parent=243 // pred_region
          %1735 = dma.done [#allocation21], 16
        $region296: #{transformer_forward.1} parent=243 // pred_fallthru
          _
        // Predicated region
        $region297: #{transformer_forward.1} parent=243 // pred_check
          %p1736 = pneg %p1251
        $region298: #{transformer_forward.1} parent=243 // pred_check_branch
          %1738 = sbr.rel (%p1736) target = $region300
        $region299: #{transformer_forward.1} parent=243 // pred_region
          %1739 = dma.done [#allocation24], 16
        $region300: #{transformer_forward.1} parent=243 // pred_fallthru
          _
        // Predicated region
        $region301: #{transformer_forward.1} parent=243 // pred_check
          %p1740 = pneg %p1272
        $region302: #{transformer_forward.1} parent=243 // pred_check_branch
          %1742 = sbr.rel (%p1740) target = $region304
        $region303: #{transformer_forward.1} parent=243 // pred_region
          %1743 = dma.done [#allocation24], 16
        $region304: #{transformer_forward.1} parent=243 // pred_fallthru
          _
        %p1744 = scmp.lt.s32.totalorder %s138, 1
        %s1745 = scalar_select %p1744, %s138, 1
        %s1746 = smul.addr %s1745, 8
        %s1747 = scalar_lea.vmem %s1, %s1746
        %p1748 = pneg %p159
        %p1749 = pneg %p156
        %p1750 = pneg %p180
        %p1751 = pneg %p177
        %p1752 = pneg %p201
        %p1753 = pneg %p198
        %p1754 = pneg %p222
        %p1755 = pneg %p219
        %p1756 = pneg %p243
        %p1757 = pneg %p240
        %p1758 = pneg %p264
        %p1759 = pneg %p261
        %p1760 = pneg %p285
        %p1761 = pneg %p282
        %p1762 = pneg %p306
        %p1763 = pneg %p303
        %p1764 = pneg %p327
        %p1765 = pneg %p324
        %p1766 = pneg %p348
        %p1767 = pneg %p345
        %p1768 = pneg %p369
        %p1769 = pneg %p366
        %p1770 = pneg %p390
        %p1771 = pneg %p387
        %p1772 = pneg %p411
        %p1773 = pneg %p408
        %p1774 = pneg %p432
        %p1775 = pneg %p429
        %p1776 = pneg %p453
        %p1777 = pneg %p450
        %p1778 = pneg %p474
        %p1779 = pneg %p471
        %p1780 = pneg %p495
        %p1781 = pneg %p492
        %p1782 = pneg %p516
        %p1783 = pneg %p513
        %p1784 = pneg %p537
        %p1785 = pneg %p534
        %p1786 = pneg %p558
        %p1787 = pneg %p555
        %p1788 = pneg %p579
        %p1789 = pneg %p576
        %p1790 = pneg %p600
        %p1791 = pneg %p597
        %p1792 = pneg %p621
        %p1793 = pneg %p618
        %p1794 = pneg %p642
        %p1795 = pneg %p639
        %p1796 = pneg %p663
        %p1797 = pneg %p660
        %p1798 = pneg %p684
        %p1799 = pneg %p681
        %p1800 = pneg %p705
        %p1801 = pneg %p702
        %p1802 = pneg %p726
        %p1803 = pneg %p723
        %p1804 = pneg %p747
        %p1805 = pneg %p744
        %p1806 = pneg %p768
        %p1807 = pneg %p765
        %p1808 = pneg %p789
        %p1809 = pneg %p786
        %p1810 = pneg %p810
        %p1811 = pneg %p807
        %p1812 = pneg %p831
        %p1813 = pneg %p828
        %p1814 = pneg %p852
        %p1815 = pneg %p849
        %p1816 = pneg %p873
        %p1817 = pneg %p870
        %p1818 = pneg %p894
        %p1819 = pneg %p891
        %p1820 = pneg %p915
        %p1821 = pneg %p912
        %p1822 = pneg %p936
        %p1823 = pneg %p933
        %p1824 = pneg %p957
        %p1825 = pneg %p954
        %p1826 = pneg %p978
        %p1827 = pneg %p975
        %p1828 = pneg %p999
        %p1829 = pneg %p996
        %p1830 = pneg %p1020
        %p1831 = pneg %p1017
        %p1832 = pneg %p1041
        %p1833 = pneg %p1038
        %p1834 = pneg %p1062
        %p1835 = pneg %p1059
        %p1836 = pneg %p1083
        %p1837 = pneg %p1080
        %p1838 = pneg %p1104
        %p1839 = pneg %p1101
        %p1840 = pneg %p1125
        %p1841 = pneg %p1122
        %p1842 = pneg %p1146
        %p1843 = pneg %p1143
        %p1844 = pneg %p1167
        %p1845 = pneg %p1164
        %p1846 = pneg %p1188
        %p1847 = pneg %p1185
        %p1848 = pneg %p1209
        %p1849 = pneg %p1206
        %p1850 = pneg %p1230
        %p1851 = pneg %p1227
        %p1852 = pneg %p1251
        %p1853 = pneg %p1248
        %p1854 = pneg %p1272
        %p1855 = pneg %p1269
        %p1856 = pneg %p1293
        %p1857 = pneg %p1290
        %p1858 = pneg %p1314
        %p1859 = pneg %p1311
        %p1860 = pneg %p1340
        %p1861 = pneg %p1337
        %p1862 = scmp.lt.s32.totalorder %s138, 1
        %s1863 = scalar_select %p1862, %s138, 1
        %s1864 = smul.addr %s1863, 8
        %s1865 = scalar_lea.vmem %s113, %s1864
        %p1866 = pneg %p1366
        %p1867 = pneg %p1363
        %s1868 = sand.u32 %s1353, 1
        %s1869 = scalar_lea.sflag [#allocation4], %s1868
        %s1870 = sand.u32 %s1353, 1
        %s1871 = smul.addr %s1870, 32
        %s1872 = scalar_lea.vmem [#allocation26], %s1871
        %p1873 = scmp.lt.s32.totalorder %s138, 1
        %s1874 = scalar_select %p1873, %s138, 1
        %s1875 = smul.addr %s1874, 8
        %s1876 = scalar_lea.vmem %s1, %s1875
        %p1877 = scmp.lt.s32.totalorder %s138, 1
        %s1878 = scalar_select %p1877, %s138, 1
        %s1879 = smul.addr %s1878, 8
        %s1880 = scalar_lea.vmem %s113, %s1879
        %s1881 = smul.u32 4, %s138
        %v1882 = vld [vmem:[%s1876] sm:$0xff]
        %v1883 = vlaneseq
        %v1884 = vand.u32 %v1883, 127
        %1885 = vset.pattern.permute.xlu0 0
        %1886 = vperm.xlu0 %1885, %v1882
        %v1887 = vpop.permute.xlu0 %1886
        %vm1888 = vcmp.eq.s32.totalorder %v1884, %v1887
        %v1889 = vsel %vm1888, 1, 0
        %v1890 = vcvt.s32.f32 %v1889
        %v1891 = vld [vmem:[%s87] sm:$0xff]
        %v1892 = vld [vmem:[%s87 + $0x8] sm:$0xff]
        %v1893 = vld [vmem:[%s87 + $0x10] sm:$0xff]
        %v1894 = vld [vmem:[%s87 + $0x18] sm:$0xff]
        %v1895 = vld [vmem:[%s87 + $0x20] sm:$0xff]
        %v1896 = vld [vmem:[%s87 + $0x28] sm:$0xff]
        %v1897 = vld [vmem:[%s87 + $0x30] sm:$0xff]
        %v1898 = vld [vmem:[%s87 + $0x38] sm:$0xff]
        %v1899 = vld [vmem:[%s87 + $0x40] sm:$0xff]
        %v1900 = vld [vmem:[%s87 + $0x48] sm:$0xff]
        %v1901 = vld [vmem:[%s87 + $0x50] sm:$0xff]
        %v1902 = vld [vmem:[%s87 + $0x58] sm:$0xff]
        %v1903 = vld [vmem:[%s87 + $0x60] sm:$0xff]
        %v1904 = vld [vmem:[%s87 + $0x68] sm:$0xff]
        %v1905 = vld [vmem:[%s87 + $0x70] sm:$0xff]
        %v1906 = vld [vmem:[%s87 + $0x78] sm:$0xff]
        %1907 = vmatprep.subr.mxu0 0.0
        %1908 = vmatpush1.msra.mxu0 %v1906
        %1909 = vmatprep.subr.mxu0 0.0
        %1910 = vmatpush1.msra.mxu0 %v1905
        %1911 = vmatprep.subr.mxu0 0.0
        %1912 = vmatpush1.msra.mxu0 %v1904
        %1913 = vmatprep.subr.mxu0 0.0
        %1914 = vmatpush1.msra.mxu0 %v1903
        %1915 = vmatprep.subr.mxu0 0.0
        %1916 = vmatpush1.msra.mxu0 %v1902
        %1917 = vmatprep.subr.mxu0 0.0
        %1918 = vmatpush1.msra.mxu0 %v1901
        %1919 = vmatprep.subr.mxu0 0.0
        %1920 = vmatpush1.msra.mxu0 %v1900
        %1921 = vmatprep.subr.mxu0 0.0
        %1922 = vmatpush1.msra.mxu0 %v1899
        %1923 = vmatprep.subr.mxu0 0.0
        %1924 = vmatpush1.msra.mxu0 %v1898
        %1925 = vmatprep.subr.mxu0 0.0
        %1926 = vmatpush1.msra.mxu0 %v1897
        %1927 = vmatprep.subr.mxu0 0.0
        %1928 = vmatpush1.msra.mxu0 %v1896
        %1929 = vmatprep.subr.mxu0 0.0
        %1930 = vmatpush1.msra.mxu0 %v1895
        %1931 = vmatprep.subr.mxu0 0.0
        %1932 = vmatpush1.msra.mxu0 %v1894
        %1933 = vmatprep.subr.mxu0 0.0
        %1934 = vmatpush1.msra.mxu0 %v1893
        %1935 = vmatprep.subr.mxu0 0.0
        %1936 = vmatpush1.msra.mxu0 %v1892
        %1937 = vmatprep.subr.mxu0 0.0
        %1938 = vmatpush1.msra.mxu0 %v1891
        %1939 = vmatprep.subr.mxu0 0.0
        %1940 = vmatpush2.msra.mxu0 0.0
        %1941 = vmatprep.subr.mxu0 0.0
        %1942 = vmatpush2.msra.mxu0 0.0
        %1943 = vmatprep.subr.mxu0 0.0
        %1944 = vmatpush2.msra.mxu0 0.0
        %1945 = vmatprep.subr.mxu0 0.0
        %1946 = vmatpush2.msra.mxu0 0.0
        %1947 = vmatprep.subr.mxu0 0.0
        %1948 = vmatpush2.msra.mxu0 0.0
        %1949 = vmatprep.subr.mxu0 0.0
        %1950 = vmatpush2.msra.mxu0 0.0
        %1951 = vmatprep.subr.mxu0 0.0
        %1952 = vmatpush2.msra.mxu0 0.0
        %1953 = vmatprep.subr.mxu0 0.0
        %1954 = vmatpush2.msra.mxu0 0.0
        %1955 = vmatprep.subr.mxu0 0.0
        %1956 = vmatpush2.msra.mxu0 0.0
        %1957 = vmatprep.subr.mxu0 0.0
        %1958 = vmatpush2.msra.mxu0 0.0
        %1959 = vmatprep.subr.mxu0 0.0
        %1960 = vmatpush2.msra.mxu0 0.0
        %1961 = vmatprep.subr.mxu0 0.0
        %1962 = vmatpush2.msra.mxu0 0.0
        %1963 = vmatprep.subr.mxu0 0.0
        %1964 = vmatpush2.msra.mxu0 0.0
        %1965 = vmatprep.subr.mxu0 0.0
        %1966 = vmatpush2.msra.mxu0 0.0
        %1967 = vmatprep.subr.mxu0 0.0
        %1968 = vmatpush2.msra.mxu0 0.0
        %1969 = vmatprep.subr.mxu0 0.0
        %1970 = vmatpush2.msra.mxu0 0.0
        %1971 = vmatprep.mubr.f32.mxu0 0.0
        %1972 = vmatmul.mubr.f32.gmra.mxu0 %v1890
        %v1973 = vpop.f32.mrf.mxu0
        %v1974 = vadd.f32 0.0, %v1973
        %v1975 = vpop.f32.mrf.mxu0
        %1976 = vdwg.mxu0
        %v1977 = vmul.f32 %v1974, 5.656854
        %v1978 = vld [vmem:[%s111] sm:$0xff]
        %v1979 = vld [vmem:[%s111 + $0x8] sm:$0xff]
        %v1980 = vld [vmem:[%s111 + $0x10] sm:$0xff]
        %v1981 = vld [vmem:[%s111 + $0x18] sm:$0xff]
        %v1982 = vld [vmem:[#allocation25] sm:$0x1]
        %v1984 = vlaneseq
        %v1985 = vshrl.u32 %v1984, 7
        %v1986 = vsub.s32 0, %v1985
        %v1987 = vrot.slane %v1982, %v1986
        %vm1989 = vcmask 261120
        %v1991 = vsel %vm1989, %v1977, 0
        %1993 = vmatprep.subr.mxu0 0.0
        %1994 = vmatpush1.msra.mxu0 0.0
        %1995 = vmatprep.subr.mxu0 0.0
        %1996 = vmatpush1.msra.mxu0 0.0
        %1997 = vmatprep.subr.mxu0 0.0
        %1998 = vmatpush1.msra.mxu0 0.0
        %1999 = vmatprep.subr.mxu0 0.0
        %2000 = vmatpush1.msra.mxu0 0.0
        %2001 = vmatprep.subr.mxu0 0.0
        %2002 = vmatpush1.msra.mxu0 0.0
        %2003 = vmatprep.subr.mxu0 0.0
        %2004 = vmatpush1.msra.mxu0 0.0
        %2005 = vmatprep.subr.mxu0 0.0
        %2006 = vmatpush1.msra.mxu0 0.0
        %2007 = vmatprep.subr.mxu0 0.0
        %2008 = vmatpush1.msra.mxu0 0.0
        %2009 = vmatprep.subr.mxu0 0.0
        %2010 = vmatpush1.msra.mxu0 0.0
        %2011 = vmatprep.subr.mxu0 0.0
        %2012 = vmatpush1.msra.mxu0 0.0
        %2013 = vmatprep.subr.mxu0 0.0
        %2014 = vmatpush1.msra.mxu0 0.0
        %2015 = vmatprep.subr.mxu0 0.0
        %2016 = vmatpush1.msra.mxu0 0.0
        %2017 = vmatprep.subr.mxu0 0.0
        %2018 = vmatpush1.msra.mxu0 %v1981
        %2019 = vmatprep.subr.mxu0 0.0
        %2020 = vmatpush1.msra.mxu0 %v1980
        %2021 = vmatprep.subr.mxu0 0.0
        %2022 = vmatpush1.msra.mxu0 %v1979
        %2023 = vmatprep.subr.mxu0 0.0
        %2024 = vmatpush1.msra.mxu0 %v1978
        %2025 = vmatprep.subr.mxu0 0.0
        %2026 = vmatpush2.msra.mxu0 0.0
        %2027 = vmatprep.subr.mxu0 0.0
        %2028 = vmatpush2.msra.mxu0 0.0
        %2029 = vmatprep.subr.mxu0 0.0
        %2030 = vmatpush2.msra.mxu0 0.0
        %2031 = vmatprep.subr.mxu0 0.0
        %2032 = vmatpush2.msra.mxu0 0.0
        %2033 = vmatprep.subr.mxu0 0.0
        %2034 = vmatpush2.msra.mxu0 0.0
        %2035 = vmatprep.subr.mxu0 0.0
        %2036 = vmatpush2.msra.mxu0 0.0
        %2037 = vmatprep.subr.mxu0 0.0
        %2038 = vmatpush2.msra.mxu0 0.0
        %2039 = vmatprep.subr.mxu0 0.0
        %2040 = vmatpush2.msra.mxu0 0.0
        %2041 = vmatprep.subr.mxu0 0.0
        %2042 = vmatpush2.msra.mxu0 0.0
        %2043 = vmatprep.subr.mxu0 0.0
        %2044 = vmatpush2.msra.mxu0 0.0
        %2045 = vmatprep.subr.mxu0 0.0
        %2046 = vmatpush2.msra.mxu0 0.0
        %2047 = vmatprep.subr.mxu0 0.0
        %2048 = vmatpush2.msra.mxu0 0.0
        %2049 = vmatprep.subr.mxu0 0.0
        %2050 = vmatpush2.msra.mxu0 0.0
        %2051 = vmatprep.subr.mxu0 0.0
        %2052 = vmatpush2.msra.mxu0 0.0
        %2053 = vmatprep.subr.mxu0 0.0
        %2054 = vmatpush2.msra.mxu0 0.0
        %2055 = vmatprep.subr.mxu0 0.0
        %2056 = vmatpush2.msra.mxu0 0.0
        %2057 = vmatprep.mubr.f32.mxu0 0.0
        %2058 = vmatmul.mubr.f32.gmra.mxu0 %v1991
        %v2059 = vpop.f32.mrf.mxu0
        %v2060 = vadd.f32 %v1987, %v2059
        %v2061 = vpop.f32.mrf.mxu0
        %2062 = vdwg.mxu0
        %2064 = vrot.lane.b32.xlu0 %v2060, 96
        %v2065 = vpop.permute.xlu0 %2064
        %vm2066 = vcmask 64512
        %v2067 = vsel %vm2066, %v2060, 0
        %v2069 = vsel %vm2066, %v2065, 0
        %2071 = vmatprep.subr.mxu0 0.0
        %2072 = vmatpush1.xpose.msra.mxu0 0.0
        %2073 = vmatprep.subr.mxu0 0.0
        %2074 = vmatpush1.xpose.msra.mxu0 0.0
        %2075 = vmatprep.subr.mxu0 0.0
        %2076 = vmatpush1.xpose.msra.mxu0 0.0
        %2077 = vmatprep.subr.mxu0 0.0
        %2078 = vmatpush1.xpose.msra.mxu0 0.0
        %2079 = vmatprep.subr.mxu0 0.0
        %2080 = vmatpush1.xpose.msra.mxu0 0.0
        %2081 = vmatprep.subr.mxu0 0.0
        %2082 = vmatpush1.xpose.msra.mxu0 0.0
        %2083 = vmatprep.subr.mxu0 0.0
        %2084 = vmatpush1.xpose.msra.mxu0 0.0
        %2085 = vmatprep.subr.mxu0 0.0
        %2086 = vmatpush1.xpose.msra.mxu0 0.0
        %2087 = vmatprep.subr.mxu0 0.0
        %2088 = vmatpush1.xpose.msra.mxu0 0.0
        %2089 = vmatprep.subr.mxu0 0.0
        %2090 = vmatpush1.xpose.msra.mxu0 0.0
        %2091 = vmatprep.subr.mxu0 0.0
        %2092 = vmatpush1.xpose.msra.mxu0 0.0
        %2093 = vmatprep.subr.mxu0 0.0
        %2094 = vmatpush1.xpose.msra.mxu0 0.0
        %2095 = vmatprep.subr.mxu0 0.0
        %2096 = vmatpush1.xpose.msra.mxu0 0.0
        %2097 = vmatprep.subr.mxu0 0.0
        %2098 = vmatpush1.xpose.msra.mxu0 0.0
        %2099 = vmatprep.subr.mxu0 0.0
        %2100 = vmatpush1.xpose.msra.mxu0 0.0
        %2101 = vmatprep.subr.mxu0 0.0
        %2102 = vmatpush1.xpose.msra.mxu0 %v2069
        %2103 = vmatprep.subr.mxu0 0.0
        %2104 = vmatpush2.xpose.msra.mxu0 0.0
        %2105 = vmatprep.subr.mxu0 0.0
        %2106 = vmatpush2.xpose.msra.mxu0 0.0
        %2107 = vmatprep.subr.mxu0 0.0
        %2108 = vmatpush2.xpose.msra.mxu0 0.0
        %2109 = vmatprep.subr.mxu0 0.0
        %2110 = vmatpush2.xpose.msra.mxu0 0.0
        %2111 = vmatprep.subr.mxu0 0.0
        %2112 = vmatpush2.xpose.msra.mxu0 0.0
        %2113 = vmatprep.subr.mxu0 0.0
        %2114 = vmatpush2.xpose.msra.mxu0 0.0
        %2115 = vmatprep.subr.mxu0 0.0
        %2116 = vmatpush2.xpose.msra.mxu0 0.0
        %2117 = vmatprep.subr.mxu0 0.0
        %2118 = vmatpush2.xpose.msra.mxu0 0.0
        %2119 = vmatprep.subr.mxu0 0.0
        %2120 = vmatpush2.xpose.msra.mxu0 0.0
        %2121 = vmatprep.subr.mxu0 0.0
        %2122 = vmatpush2.xpose.msra.mxu0 0.0
        %2123 = vmatprep.subr.mxu0 0.0
        %2124 = vmatpush2.xpose.msra.mxu0 0.0
        %2125 = vmatprep.subr.mxu0 0.0
        %2126 = vmatpush2.xpose.msra.mxu0 0.0
        %2127 = vmatprep.subr.mxu0 0.0
        %2128 = vmatpush2.xpose.msra.mxu0 0.0
        %2129 = vmatprep.subr.mxu0 0.0
        %2130 = vmatpush2.xpose.msra.mxu0 0.0
        %2131 = vmatprep.subr.mxu0 0.0
        %2132 = vmatpush2.xpose.msra.mxu0 0.0
        %2133 = vmatprep.subr.mxu0 0.0
        %2134 = vmatpush2.xpose.msra.mxu0 0.0
        %2135 = vmatprep.mubr.f32.mxu0 0.0
        %2136 = vmatmul.mubr.f32.gmra.mxu0 %v2067
        %v2137 = vpop.f32.mrf.mxu0
        %v2138 = vadd.f32 0.0, %v2137
        %v2139 = vpop.f32.mrf.mxu0
        %2140 = vdwg.mxu0
        %v2141 = vmul.f32 %v2138, 0.35355338
        %v2142 = vsel %vm2066, %v2141, -inf
        %2143 = vmax.xlane.f32.xlu0 %v2142
        %v2144 = vpop.xlane.xlu0 %2143
        %v2145 = vsub.f32 %v2141, %v2144
        %v2146 = vmul.f32 %v2145, 1.442695
        %v2147 = vpow.pop %v2146
        %v2148 = vsel %vm2066, %v2147, 0.0
        %2149 = vadd.xlane.f32.xlu0 %v2148
        %v2150 = vpop.xlane.xlu0 %2149
        %v2151 = vrcp.pop %v2150
        %v2152 = vmul.f32 %v2147, %v2151
        %2153 = vrot.lane.b32.xlu0 %v2060, 64
        %v2154 = vpop.permute.xlu0 %2153
        %v2157 = vsel %vm2066, %v2152, 0
        %2159 = vmatprep.subr.mxu0 0.0
        %2160 = vmatpush1.msra.mxu0 0.0
        %2161 = vmatprep.subr.mxu0 0.0
        %2162 = vmatpush1.msra.mxu0 0.0
        %2163 = vmatprep.subr.mxu0 0.0
        %2164 = vmatpush1.msra.mxu0 0.0
        %2165 = vmatprep.subr.mxu0 0.0
        %2166 = vmatpush1.msra.mxu0 0.0
        %2167 = vmatprep.subr.mxu0 0.0
        %2168 = vmatpush1.msra.mxu0 0.0
        %2169 = vmatprep.subr.mxu0 0.0
        %2170 = vmatpush1.msra.mxu0 0.0
        %2171 = vmatprep.subr.mxu0 0.0
        %2172 = vmatpush1.msra.mxu0 0.0
        %2173 = vmatprep.subr.mxu0 0.0
        %2174 = vmatpush1.msra.mxu0 0.0
        %2175 = vmatprep.subr.mxu0 0.0
        %2176 = vmatpush1.msra.mxu0 0.0
        %2177 = vmatprep.subr.mxu0 0.0
        %2178 = vmatpush1.msra.mxu0 0.0
        %2179 = vmatprep.subr.mxu0 0.0
        %2180 = vmatpush1.msra.mxu0 0.0
        %2181 = vmatprep.subr.mxu0 0.0
        %2182 = vmatpush1.msra.mxu0 0.0
        %2183 = vmatprep.subr.mxu0 0.0
        %2184 = vmatpush1.msra.mxu0 0.0
        %2185 = vmatprep.subr.mxu0 0.0
        %2186 = vmatpush1.msra.mxu0 0.0
        %2187 = vmatprep.subr.mxu0 0.0
        %2188 = vmatpush1.msra.mxu0 0.0
        %2189 = vmatprep.subr.mxu0 0.0
        %2190 = vmatpush1.msra.mxu0 %v2154
        %2191 = vmatprep.subr.mxu0 0.0
        %2192 = vmatpush2.msra.mxu0 0.0
        %2193 = vmatprep.subr.mxu0 0.0
        %2194 = vmatpush2.msra.mxu0 0.0
        %2195 = vmatprep.subr.mxu0 0.0
        %2196 = vmatpush2.msra.mxu0 0.0
        %2197 = vmatprep.subr.mxu0 0.0
        %2198 = vmatpush2.msra.mxu0 0.0
        %2199 = vmatprep.subr.mxu0 0.0
        %2200 = vmatpush2.msra.mxu0 0.0
        %2201 = vmatprep.subr.mxu0 0.0
        %2202 = vmatpush2.msra.mxu0 0.0
        %2203 = vmatprep.subr.mxu0 0.0
        %2204 = vmatpush2.msra.mxu0 0.0
        %2205 = vmatprep.subr.mxu0 0.0
        %2206 = vmatpush2.msra.mxu0 0.0
        %2207 = vmatprep.subr.mxu0 0.0
        %2208 = vmatpush2.msra.mxu0 0.0
        %2209 = vmatprep.subr.mxu0 0.0
        %2210 = vmatpush2.msra.mxu0 0.0
        %2211 = vmatprep.subr.mxu0 0.0
        %2212 = vmatpush2.msra.mxu0 0.0
        %2213 = vmatprep.subr.mxu0 0.0
        %2214 = vmatpush2.msra.mxu0 0.0
        %2215 = vmatprep.subr.mxu0 0.0
        %2216 = vmatpush2.msra.mxu0 0.0
        %2217 = vmatprep.subr.mxu0 0.0
        %2218 = vmatpush2.msra.mxu0 0.0
        %2219 = vmatprep.subr.mxu0 0.0
        %2220 = vmatpush2.msra.mxu0 0.0
        %2221 = vmatprep.subr.mxu0 0.0
        %2222 = vmatpush2.msra.mxu0 0.0
        %2223 = vmatprep.mubr.f32.mxu0 0.0
        %2224 = vmatmul.mubr.f32.gmra.mxu0 %v2157
        %v2225 = vpop.f32.mrf.mxu0
        %v2226 = vadd.f32 0.0, %v2225
        %v2227 = vpop.f32.mrf.mxu0
        %2228 = vdwg.mxu0
        %2229 = vrot.lane.b32.xlu0 %v2060, 120
        %v2230 = vpop.permute.xlu0 %2229
        %2231 = vrot.lane.b32.xlu0 %v2060, 88
        %v2232 = vpop.permute.xlu0 %2231
        %v2233 = vsel %vm2066, %v2230, 0
        %v2235 = vsel %vm2066, %v2232, 0
        %2237 = vmatprep.subr.mxu0 0.0
        %2238 = vmatpush1.xpose.msra.mxu0 0.0
        %2239 = vmatprep.subr.mxu0 0.0
        %2240 = vmatpush1.xpose.msra.mxu0 0.0
        %2241 = vmatprep.subr.mxu0 0.0
        %2242 = vmatpush1.xpose.msra.mxu0 0.0
        %2243 = vmatprep.subr.mxu0 0.0
        %2244 = vmatpush1.xpose.msra.mxu0 0.0
        %2245 = vmatprep.subr.mxu0 0.0
        %2246 = vmatpush1.xpose.msra.mxu0 0.0
        %2247 = vmatprep.subr.mxu0 0.0
        %2248 = vmatpush1.xpose.msra.mxu0 0.0
        %2249 = vmatprep.subr.mxu0 0.0
        %2250 = vmatpush1.xpose.msra.mxu0 0.0
        %2251 = vmatprep.subr.mxu0 0.0
        %2252 = vmatpush1.xpose.msra.mxu0 0.0
        %2253 = vmatprep.subr.mxu0 0.0
        %2254 = vmatpush1.xpose.msra.mxu0 0.0
        %2255 = vmatprep.subr.mxu0 0.0
        %2256 = vmatpush1.xpose.msra.mxu0 0.0
        %2257 = vmatprep.subr.mxu0 0.0
        %2258 = vmatpush1.xpose.msra.mxu0 0.0
        %2259 = vmatprep.subr.mxu0 0.0
        %2260 = vmatpush1.xpose.msra.mxu0 0.0
        %2261 = vmatprep.subr.mxu0 0.0
        %2262 = vmatpush1.xpose.msra.mxu0 0.0
        %2263 = vmatprep.subr.mxu0 0.0
        %2264 = vmatpush1.xpose.msra.mxu0 0.0
        %2265 = vmatprep.subr.mxu0 0.0
        %2266 = vmatpush1.xpose.msra.mxu0 0.0
        %2267 = vmatprep.subr.mxu0 0.0
        %2268 = vmatpush1.xpose.msra.mxu0 %v2235
        %2269 = vmatprep.subr.mxu0 0.0
        %2270 = vmatpush2.xpose.msra.mxu0 0.0
        %2271 = vmatprep.subr.mxu0 0.0
        %2272 = vmatpush2.xpose.msra.mxu0 0.0
        %2273 = vmatprep.subr.mxu0 0.0
        %2274 = vmatpush2.xpose.msra.mxu0 0.0
        %2275 = vmatprep.subr.mxu0 0.0
        %2276 = vmatpush2.xpose.msra.mxu0 0.0
        %2277 = vmatprep.subr.mxu0 0.0
        %2278 = vmatpush2.xpose.msra.mxu0 0.0
        %2279 = vmatprep.subr.mxu0 0.0
        %2280 = vmatpush2.xpose.msra.mxu0 0.0
        %2281 = vmatprep.subr.mxu0 0.0
        %2282 = vmatpush2.xpose.msra.mxu0 0.0
        %2283 = vmatprep.subr.mxu0 0.0
        %2284 = vmatpush2.xpose.msra.mxu0 0.0
        %2285 = vmatprep.subr.mxu0 0.0
        %2286 = vmatpush2.xpose.msra.mxu0 0.0
        %2287 = vmatprep.subr.mxu0 0.0
        %2288 = vmatpush2.xpose.msra.mxu0 0.0
        %2289 = vmatprep.subr.mxu0 0.0
        %2290 = vmatpush2.xpose.msra.mxu0 0.0
        %2291 = vmatprep.subr.mxu0 0.0
        %2292 = vmatpush2.xpose.msra.mxu0 0.0
        %2293 = vmatprep.subr.mxu0 0.0
        %2294 = vmatpush2.xpose.msra.mxu0 0.0
        %2295 = vmatprep.subr.mxu0 0.0
        %2296 = vmatpush2.xpose.msra.mxu0 0.0
        %2297 = vmatprep.subr.mxu0 0.0
        %2298 = vmatpush2.xpose.msra.mxu0 0.0
        %2299 = vmatprep.subr.mxu0 0.0
        %2300 = vmatpush2.xpose.msra.mxu0 0.0
        %2301 = vmatprep.mubr.f32.mxu0 0.0
        %2302 = vmatmul.mubr.f32.gmra.mxu0 %v2233
        %v2303 = vpop.f32.mrf.mxu0
        %v2304 = vadd.f32 0.0, %v2303
        %v2305 = vpop.f32.mrf.mxu0
        %2306 = vdwg.mxu0
        %v2307 = vmul.f32 %v2304, 0.35355338
        %v2308 = vsel %vm2066, %v2307, -inf
        %2309 = vmax.xlane.f32.xlu0 %v2308
        %v2310 = vpop.xlane.xlu0 %2309
        %v2311 = vsub.f32 %v2307, %v2310
        %v2312 = vmul.f32 %v2311, 1.442695
        %v2313 = vpow.pop %v2312
        %v2314 = vsel %vm2066, %v2313, 0.0
        %2315 = vadd.xlane.f32.xlu0 %v2314
        %v2316 = vpop.xlane.xlu0 %2315
        %v2317 = vrcp.pop %v2316
        %v2318 = vmul.f32 %v2313, %v2317
        %2319 = vrot.lane.b32.xlu0 %v2060, 56
        %v2320 = vpop.permute.xlu0 %2319
        %v2323 = vsel %vm2066, %v2318, 0
        %2325 = vmatprep.subr.mxu0 0.0
        %2326 = vmatpush1.msra.mxu0 0.0
        %2327 = vmatprep.subr.mxu0 0.0
        %2328 = vmatpush1.msra.mxu0 0.0
        %2329 = vmatprep.subr.mxu0 0.0
        %2330 = vmatpush1.msra.mxu0 0.0
        %2331 = vmatprep.subr.mxu0 0.0
        %2332 = vmatpush1.msra.mxu0 0.0
        %2333 = vmatprep.subr.mxu0 0.0
        %2334 = vmatpush1.msra.mxu0 0.0
        %2335 = vmatprep.subr.mxu0 0.0
        %2336 = vmatpush1.msra.mxu0 0.0
        %2337 = vmatprep.subr.mxu0 0.0
        %2338 = vmatpush1.msra.mxu0 0.0
        %2339 = vmatprep.subr.mxu0 0.0
        %2340 = vmatpush1.msra.mxu0 0.0
        %2341 = vmatprep.subr.mxu0 0.0
        %2342 = vmatpush1.msra.mxu0 0.0
        %2343 = vmatprep.subr.mxu0 0.0
        %2344 = vmatpush1.msra.mxu0 0.0
        %2345 = vmatprep.subr.mxu0 0.0
        %2346 = vmatpush1.msra.mxu0 0.0
        %2347 = vmatprep.subr.mxu0 0.0
        %2348 = vmatpush1.msra.mxu0 0.0
        %2349 = vmatprep.subr.mxu0 0.0
        %2350 = vmatpush1.msra.mxu0 0.0
        %2351 = vmatprep.subr.mxu0 0.0
        %2352 = vmatpush1.msra.mxu0 0.0
        %2353 = vmatprep.subr.mxu0 0.0
        %2354 = vmatpush1.msra.mxu0 0.0
        %2355 = vmatprep.subr.mxu0 0.0
        %2356 = vmatpush1.msra.mxu0 %v2320
        %2357 = vmatprep.subr.mxu0 0.0
        %2358 = vmatpush2.msra.mxu0 0.0
        %2359 = vmatprep.subr.mxu0 0.0
        %2360 = vmatpush2.msra.mxu0 0.0
        %2361 = vmatprep.subr.mxu0 0.0
        %2362 = vmatpush2.msra.mxu0 0.0
        %2363 = vmatprep.subr.mxu0 0.0
        %2364 = vmatpush2.msra.mxu0 0.0
        %2365 = vmatprep.subr.mxu0 0.0
        %2366 = vmatpush2.msra.mxu0 0.0
        %2367 = vmatprep.subr.mxu0 0.0
        %2368 = vmatpush2.msra.mxu0 0.0
        %2369 = vmatprep.subr.mxu0 0.0
        %2370 = vmatpush2.msra.mxu0 0.0
        %2371 = vmatprep.subr.mxu0 0.0
        %2372 = vmatpush2.msra.mxu0 0.0
        %2373 = vmatprep.subr.mxu0 0.0
        %2374 = vmatpush2.msra.mxu0 0.0
        %2375 = vmatprep.subr.mxu0 0.0
        %2376 = vmatpush2.msra.mxu0 0.0
        %2377 = vmatprep.subr.mxu0 0.0
        %2378 = vmatpush2.msra.mxu0 0.0
        %2379 = vmatprep.subr.mxu0 0.0
        %2380 = vmatpush2.msra.mxu0 0.0
        %2381 = vmatprep.subr.mxu0 0.0
        %2382 = vmatpush2.msra.mxu0 0.0
        %2383 = vmatprep.subr.mxu0 0.0
        %2384 = vmatpush2.msra.mxu0 0.0
        %2385 = vmatprep.subr.mxu0 0.0
        %2386 = vmatpush2.msra.mxu0 0.0
        %2387 = vmatprep.subr.mxu0 0.0
        %2388 = vmatpush2.msra.mxu0 0.0
        %2389 = vmatprep.mubr.f32.mxu0 0.0
        %2390 = vmatmul.mubr.f32.gmra.mxu0 %v2323
        %v2391 = vpop.f32.mrf.mxu0
        %v2392 = vadd.f32 0.0, %v2391
        %v2393 = vpop.f32.mrf.mxu0
        %2394 = vdwg.mxu0
        %2395 = vrot.lane.b32.xlu0 %v2060, 112
        %v2396 = vpop.permute.xlu0 %2395
        %2397 = vrot.lane.b32.xlu0 %v2060, 80
        %v2398 = vpop.permute.xlu0 %2397
        %v2399 = vsel %vm2066, %v2396, 0
        %v2401 = vsel %vm2066, %v2398, 0
        %2403 = vmatprep.subr.mxu0 0.0
        %2404 = vmatpush1.xpose.msra.mxu0 0.0
        %2405 = vmatprep.subr.mxu0 0.0
        %2406 = vmatpush1.xpose.msra.mxu0 0.0
        %2407 = vmatprep.subr.mxu0 0.0
        %2408 = vmatpush1.xpose.msra.mxu0 0.0
        %2409 = vmatprep.subr.mxu0 0.0
        %2410 = vmatpush1.xpose.msra.mxu0 0.0
        %2411 = vmatprep.subr.mxu0 0.0
        %2412 = vmatpush1.xpose.msra.mxu0 0.0
        %2413 = vmatprep.subr.mxu0 0.0
        %2414 = vmatpush1.xpose.msra.mxu0 0.0
        %2415 = vmatprep.subr.mxu0 0.0
        %2416 = vmatpush1.xpose.msra.mxu0 0.0
        %2417 = vmatprep.subr.mxu0 0.0
        %2418 = vmatpush1.xpose.msra.mxu0 0.0
        %2419 = vmatprep.subr.mxu0 0.0
        %2420 = vmatpush1.xpose.msra.mxu0 0.0
        %2421 = vmatprep.subr.mxu0 0.0
        %2422 = vmatpush1.xpose.msra.mxu0 0.0
        %2423 = vmatprep.subr.mxu0 0.0
        %2424 = vmatpush1.xpose.msra.mxu0 0.0
        %2425 = vmatprep.subr.mxu0 0.0
        %2426 = vmatpush1.xpose.msra.mxu0 0.0
        %2427 = vmatprep.subr.mxu0 0.0
        %2428 = vmatpush1.xpose.msra.mxu0 0.0
        %2429 = vmatprep.subr.mxu0 0.0
        %2430 = vmatpush1.xpose.msra.mxu0 0.0
        %2431 = vmatprep.subr.mxu0 0.0
        %2432 = vmatpush1.xpose.msra.mxu0 0.0
        %2433 = vmatprep.subr.mxu0 0.0
        %2434 = vmatpush1.xpose.msra.mxu0 %v2401
        %2435 = vmatprep.subr.mxu0 0.0
        %2436 = vmatpush2.xpose.msra.mxu0 0.0
        %2437 = vmatprep.subr.mxu0 0.0
        %2438 = vmatpush2.xpose.msra.mxu0 0.0
        %2439 = vmatprep.subr.mxu0 0.0
        %2440 = vmatpush2.xpose.msra.mxu0 0.0
        %2441 = vmatprep.subr.mxu0 0.0
        %2442 = vmatpush2.xpose.msra.mxu0 0.0
        %2443 = vmatprep.subr.mxu0 0.0
        %2444 = vmatpush2.xpose.msra.mxu0 0.0
        %2445 = vmatprep.subr.mxu0 0.0
        %2446 = vmatpush2.xpose.msra.mxu0 0.0
        %2447 = vmatprep.subr.mxu0 0.0
        %2448 = vmatpush2.xpose.msra.mxu0 0.0
        %2449 = vmatprep.subr.mxu0 0.0
        %2450 = vmatpush2.xpose.msra.mxu0 0.0
        %2451 = vmatprep.subr.mxu0 0.0
        %2452 = vmatpush2.xpose.msra.mxu0 0.0
        %2453 = vmatprep.subr.mxu0 0.0
        %2454 = vmatpush2.xpose.msra.mxu0 0.0
        %2455 = vmatprep.subr.mxu0 0.0
        %2456 = vmatpush2.xpose.msra.mxu0 0.0
        %2457 = vmatprep.subr.mxu0 0.0
        %2458 = vmatpush2.xpose.msra.mxu0 0.0
        %2459 = vmatprep.subr.mxu0 0.0
        %2460 = vmatpush2.xpose.msra.mxu0 0.0
        %2461 = vmatprep.subr.mxu0 0.0
        %2462 = vmatpush2.xpose.msra.mxu0 0.0
        %2463 = vmatprep.subr.mxu0 0.0
        %2464 = vmatpush2.xpose.msra.mxu0 0.0
        %2465 = vmatprep.subr.mxu0 0.0
        %2466 = vmatpush2.xpose.msra.mxu0 0.0
        %2467 = vmatprep.mubr.f32.mxu0 0.0
        %2468 = vmatmul.mubr.f32.gmra.mxu0 %v2399
        %v2469 = vpop.f32.mrf.mxu0
        %v2470 = vadd.f32 0.0, %v2469
        %v2471 = vpop.f32.mrf.mxu0
        %2472 = vdwg.mxu0
        %v2473 = vmul.f32 %v2470, 0.35355338
        %v2474 = vsel %vm2066, %v2473, -inf
        %2475 = vmax.xlane.f32.xlu0 %v2474
        %v2476 = vpop.xlane.xlu0 %2475
        %v2477 = vsub.f32 %v2473, %v2476
        %v2478 = vmul.f32 %v2477, 1.442695
        %v2479 = vpow.pop %v2478
        %v2480 = vsel %vm2066, %v2479, 0.0
        %2481 = vadd.xlane.f32.xlu0 %v2480
        %v2482 = vpop.xlane.xlu0 %2481
        %v2483 = vrcp.pop %v2482
        %v2484 = vmul.f32 %v2479, %v2483
        %2485 = vrot.lane.b32.xlu0 %v2060, 48
        %v2486 = vpop.permute.xlu0 %2485
        %v2489 = vsel %vm2066, %v2484, 0
        %2491 = vmatprep.subr.mxu0 0.0
        %2492 = vmatpush1.msra.mxu0 0.0
        %2493 = vmatprep.subr.mxu0 0.0
        %2494 = vmatpush1.msra.mxu0 0.0
        %2495 = vmatprep.subr.mxu0 0.0
        %2496 = vmatpush1.msra.mxu0 0.0
        %2497 = vmatprep.subr.mxu0 0.0
        %2498 = vmatpush1.msra.mxu0 0.0
        %2499 = vmatprep.subr.mxu0 0.0
        %2500 = vmatpush1.msra.mxu0 0.0
        %2501 = vmatprep.subr.mxu0 0.0
        %2502 = vmatpush1.msra.mxu0 0.0
        %2503 = vmatprep.subr.mxu0 0.0
        %2504 = vmatpush1.msra.mxu0 0.0
        %2505 = vmatprep.subr.mxu0 0.0
        %2506 = vmatpush1.msra.mxu0 0.0
        %2507 = vmatprep.subr.mxu0 0.0
        %2508 = vmatpush1.msra.mxu0 0.0
        %2509 = vmatprep.subr.mxu0 0.0
        %2510 = vmatpush1.msra.mxu0 0.0
        %2511 = vmatprep.subr.mxu0 0.0
        %2512 = vmatpush1.msra.mxu0 0.0
        %2513 = vmatprep.subr.mxu0 0.0
        %2514 = vmatpush1.msra.mxu0 0.0
        %2515 = vmatprep.subr.mxu0 0.0
        %2516 = vmatpush1.msra.mxu0 0.0
        %2517 = vmatprep.subr.mxu0 0.0
        %2518 = vmatpush1.msra.mxu0 0.0
        %2519 = vmatprep.subr.mxu0 0.0
        %2520 = vmatpush1.msra.mxu0 0.0
        %2521 = vmatprep.subr.mxu0 0.0
        %2522 = vmatpush1.msra.mxu0 %v2486
        %2523 = vmatprep.subr.mxu0 0.0
        %2524 = vmatpush2.msra.mxu0 0.0
        %2525 = vmatprep.subr.mxu0 0.0
        %2526 = vmatpush2.msra.mxu0 0.0
        %2527 = vmatprep.subr.mxu0 0.0
        %2528 = vmatpush2.msra.mxu0 0.0
        %2529 = vmatprep.subr.mxu0 0.0
        %2530 = vmatpush2.msra.mxu0 0.0
        %2531 = vmatprep.subr.mxu0 0.0
        %2532 = vmatpush2.msra.mxu0 0.0
        %2533 = vmatprep.subr.mxu0 0.0
        %2534 = vmatpush2.msra.mxu0 0.0
        %2535 = vmatprep.subr.mxu0 0.0
        %2536 = vmatpush2.msra.mxu0 0.0
        %2537 = vmatprep.subr.mxu0 0.0
        %2538 = vmatpush2.msra.mxu0 0.0
        %2539 = vmatprep.subr.mxu0 0.0
        %2540 = vmatpush2.msra.mxu0 0.0
        %2541 = vmatprep.subr.mxu0 0.0
        %2542 = vmatpush2.msra.mxu0 0.0
        %2543 = vmatprep.subr.mxu0 0.0
        %2544 = vmatpush2.msra.mxu0 0.0
        %2545 = vmatprep.subr.mxu0 0.0
        %2546 = vmatpush2.msra.mxu0 0.0
        %2547 = vmatprep.subr.mxu0 0.0
        %2548 = vmatpush2.msra.mxu0 0.0
        %2549 = vmatprep.subr.mxu0 0.0
        %2550 = vmatpush2.msra.mxu0 0.0
        %2551 = vmatprep.subr.mxu0 0.0
        %2552 = vmatpush2.msra.mxu0 0.0
        %2553 = vmatprep.subr.mxu0 0.0
        %2554 = vmatpush2.msra.mxu0 0.0
        %2555 = vmatprep.mubr.f32.mxu0 0.0
        %2556 = vmatmul.mubr.f32.gmra.mxu0 %v2489
        %v2557 = vpop.f32.mrf.mxu0
        %v2558 = vadd.f32 0.0, %v2557
        %v2559 = vpop.f32.mrf.mxu0
        %2560 = vdwg.mxu0
        %2561 = vrot.lane.b32.xlu0 %v2060, 104
        %v2562 = vpop.permute.xlu0 %2561
        %2563 = vrot.lane.b32.xlu0 %v2060, 72
        %v2564 = vpop.permute.xlu0 %2563
        %v2565 = vsel %vm2066, %v2562, 0
        %v2567 = vsel %vm2066, %v2564, 0
        %2569 = vmatprep.subr.mxu0 0.0
        %2570 = vmatpush1.xpose.msra.mxu0 0.0
        %2571 = vmatprep.subr.mxu0 0.0
        %2572 = vmatpush1.xpose.msra.mxu0 0.0
        %2573 = vmatprep.subr.mxu0 0.0
        %2574 = vmatpush1.xpose.msra.mxu0 0.0
        %2575 = vmatprep.subr.mxu0 0.0
        %2576 = vmatpush1.xpose.msra.mxu0 0.0
        %2577 = vmatprep.subr.mxu0 0.0
        %2578 = vmatpush1.xpose.msra.mxu0 0.0
        %2579 = vmatprep.subr.mxu0 0.0
        %2580 = vmatpush1.xpose.msra.mxu0 0.0
        %2581 = vmatprep.subr.mxu0 0.0
        %2582 = vmatpush1.xpose.msra.mxu0 0.0
        %2583 = vmatprep.subr.mxu0 0.0
        %2584 = vmatpush1.xpose.msra.mxu0 0.0
        %2585 = vmatprep.subr.mxu0 0.0
        %2586 = vmatpush1.xpose.msra.mxu0 0.0
        %2587 = vmatprep.subr.mxu0 0.0
        %2588 = vmatpush1.xpose.msra.mxu0 0.0
        %2589 = vmatprep.subr.mxu0 0.0
        %2590 = vmatpush1.xpose.msra.mxu0 0.0
        %2591 = vmatprep.subr.mxu0 0.0
        %2592 = vmatpush1.xpose.msra.mxu0 0.0
        %2593 = vmatprep.subr.mxu0 0.0
        %2594 = vmatpush1.xpose.msra.mxu0 0.0
        %2595 = vmatprep.subr.mxu0 0.0
        %2596 = vmatpush1.xpose.msra.mxu0 0.0
        %2597 = vmatprep.subr.mxu0 0.0
        %2598 = vmatpush1.xpose.msra.mxu0 0.0
        %2599 = vmatprep.subr.mxu0 0.0
        %2600 = vmatpush1.xpose.msra.mxu0 %v2567
        %2601 = vmatprep.subr.mxu0 0.0
        %2602 = vmatpush2.xpose.msra.mxu0 0.0
        %2603 = vmatprep.subr.mxu0 0.0
        %2604 = vmatpush2.xpose.msra.mxu0 0.0
        %2605 = vmatprep.subr.mxu0 0.0
        %2606 = vmatpush2.xpose.msra.mxu0 0.0
        %2607 = vmatprep.subr.mxu0 0.0
        %2608 = vmatpush2.xpose.msra.mxu0 0.0
        %2609 = vmatprep.subr.mxu0 0.0
        %2610 = vmatpush2.xpose.msra.mxu0 0.0
        %2611 = vmatprep.subr.mxu0 0.0
        %2612 = vmatpush2.xpose.msra.mxu0 0.0
        %2613 = vmatprep.subr.mxu0 0.0
        %2614 = vmatpush2.xpose.msra.mxu0 0.0
        %2615 = vmatprep.subr.mxu0 0.0
        %2616 = vmatpush2.xpose.msra.mxu0 0.0
        %2617 = vmatprep.subr.mxu0 0.0
        %2618 = vmatpush2.xpose.msra.mxu0 0.0
        %2619 = vmatprep.subr.mxu0 0.0
        %2620 = vmatpush2.xpose.msra.mxu0 0.0
        %2621 = vmatprep.subr.mxu0 0.0
        %2622 = vmatpush2.xpose.msra.mxu0 0.0
        %2623 = vmatprep.subr.mxu0 0.0
        %2624 = vmatpush2.xpose.msra.mxu0 0.0
        %2625 = vmatprep.subr.mxu0 0.0
        %2626 = vmatpush2.xpose.msra.mxu0 0.0
        %2627 = vmatprep.subr.mxu0 0.0
        %2628 = vmatpush2.xpose.msra.mxu0 0.0
        %2629 = vmatprep.subr.mxu0 0.0
        %2630 = vmatpush2.xpose.msra.mxu0 0.0
        %2631 = vmatprep.subr.mxu0 0.0
        %2632 = vmatpush2.xpose.msra.mxu0 0.0
        %2633 = vmatprep.mubr.f32.mxu0 0.0
        %2634 = vmatmul.mubr.f32.gmra.mxu0 %v2565
        %v2635 = vpop.f32.mrf.mxu0
        %v2636 = vadd.f32 0.0, %v2635
        %v2637 = vpop.f32.mrf.mxu0
        %2638 = vdwg.mxu0
        %v2639 = vmul.f32 %v2636, 0.35355338
        %v2640 = vsel %vm2066, %v2639, -inf
        %2641 = vmax.xlane.f32.xlu0 %v2640
        %v2642 = vpop.xlane.xlu0 %2641
        %v2643 = vsub.f32 %v2639, %v2642
        %v2644 = vmul.f32 %v2643, 1.442695
        %v2645 = vpow.pop %v2644
        %v2646 = vsel %vm2066, %v2645, 0.0
        %2647 = vadd.xlane.f32.xlu0 %v2646
        %v2648 = vpop.xlane.xlu0 %2647
        %v2649 = vrcp.pop %v2648
        %v2650 = vmul.f32 %v2645, %v2649
        %2651 = vrot.lane.b32.xlu0 %v2060, 40
        %v2652 = vpop.permute.xlu0 %2651
        %v2655 = vsel %vm2066, %v2650, 0
        %2657 = vmatprep.subr.mxu0 0.0
        %2658 = vmatpush1.msra.mxu0 0.0
        %2659 = vmatprep.subr.mxu0 0.0
        %2660 = vmatpush1.msra.mxu0 0.0
        %2661 = vmatprep.subr.mxu0 0.0
        %2662 = vmatpush1.msra.mxu0 0.0
        %2663 = vmatprep.subr.mxu0 0.0
        %2664 = vmatpush1.msra.mxu0 0.0
        %2665 = vmatprep.subr.mxu0 0.0
        %2666 = vmatpush1.msra.mxu0 0.0
        %2667 = vmatprep.subr.mxu0 0.0
        %2668 = vmatpush1.msra.mxu0 0.0
        %2669 = vmatprep.subr.mxu0 0.0
        %2670 = vmatpush1.msra.mxu0 0.0
        %2671 = vmatprep.subr.mxu0 0.0
        %2672 = vmatpush1.msra.mxu0 0.0
        %2673 = vmatprep.subr.mxu0 0.0
        %2674 = vmatpush1.msra.mxu0 0.0
        %2675 = vmatprep.subr.mxu0 0.0
        %2676 = vmatpush1.msra.mxu0 0.0
        %2677 = vmatprep.subr.mxu0 0.0
        %2678 = vmatpush1.msra.mxu0 0.0
        %2679 = vmatprep.subr.mxu0 0.0
        %2680 = vmatpush1.msra.mxu0 0.0
        %2681 = vmatprep.subr.mxu0 0.0
        %2682 = vmatpush1.msra.mxu0 0.0
        %2683 = vmatprep.subr.mxu0 0.0
        %2684 = vmatpush1.msra.mxu0 0.0
        %2685 = vmatprep.subr.mxu0 0.0
        %2686 = vmatpush1.msra.mxu0 0.0
        %2687 = vmatprep.subr.mxu0 0.0
        %2688 = vmatpush1.msra.mxu0 %v2652
        %2689 = vmatprep.subr.mxu0 0.0
        %2690 = vmatpush2.msra.mxu0 0.0
        %2691 = vmatprep.subr.mxu0 0.0
        %2692 = vmatpush2.msra.mxu0 0.0
        %2693 = vmatprep.subr.mxu0 0.0
        %2694 = vmatpush2.msra.mxu0 0.0
        %2695 = vmatprep.subr.mxu0 0.0
        %2696 = vmatpush2.msra.mxu0 0.0
        %2697 = vmatprep.subr.mxu0 0.0
        %2698 = vmatpush2.msra.mxu0 0.0
        %2699 = vmatprep.subr.mxu0 0.0
        %2700 = vmatpush2.msra.mxu0 0.0
        %2701 = vmatprep.subr.mxu0 0.0
        %2702 = vmatpush2.msra.mxu0 0.0
        %2703 = vmatprep.subr.mxu0 0.0
        %2704 = vmatpush2.msra.mxu0 0.0
        %2705 = vmatprep.subr.mxu0 0.0
        %2706 = vmatpush2.msra.mxu0 0.0
        %2707 = vmatprep.subr.mxu0 0.0
        %2708 = vmatpush2.msra.mxu0 0.0
        %2709 = vmatprep.subr.mxu0 0.0
        %2710 = vmatpush2.msra.mxu0 0.0
        %2711 = vmatprep.subr.mxu0 0.0
        %2712 = vmatpush2.msra.mxu0 0.0
        %2713 = vmatprep.subr.mxu0 0.0
        %2714 = vmatpush2.msra.mxu0 0.0
        %2715 = vmatprep.subr.mxu0 0.0
        %2716 = vmatpush2.msra.mxu0 0.0
        %2717 = vmatprep.subr.mxu0 0.0
        %2718 = vmatpush2.msra.mxu0 0.0
        %2719 = vmatprep.subr.mxu0 0.0
        %2720 = vmatpush2.msra.mxu0 0.0
        %2721 = vmatprep.mubr.f32.mxu0 0.0
        %2722 = vmatmul.mubr.f32.gmra.mxu0 %v2655
        %v2723 = vpop.f32.mrf.mxu0
        %v2724 = vadd.f32 0.0, %v2723
        %v2725 = vpop.f32.mrf.mxu0
        %2726 = vdwg.mxu0
        %2728 = vrot.lane.b32.xlu0 %v2392, 8
        %v2729 = vpop.permute.xlu0 %2728
        %2732 = vrot.lane.b32.xlu0 %v2558, 16
        %v2733 = vpop.permute.xlu0 %2732
        %2736 = vrot.lane.b32.xlu0 %v2724, 24
        %v2737 = vpop.permute.xlu0 %2736
        %v2739 = vsel %vm2066, %v2226, %v2729
        %vm2740 = vcmask 130048
        %v2741 = vsel %vm2740, %v2739, %v2733
        %vm2742 = vcmask 195584
        %v2743 = vsel %vm2742, %v2741, %v2737
        %v2744 = vld [vmem:[%s109] sm:$0xff]
        %v2745 = vld [vmem:[%s109 + $0x8] sm:$0xff]
        %v2746 = vld [vmem:[%s109 + $0x10] sm:$0xff]
        %v2747 = vld [vmem:[%s109 + $0x18] sm:$0xff]
        %v2748 = vld [vmem:[#allocation23] sm:$0x1]
        %v2750 = vlaneseq
        %v2751 = vshrl.u32 %v2750, 7
        %v2752 = vsub.s32 0, %v2751
        %v2753 = vrot.slane %v2748, %v2752
        %v2756 = vsel %vm1989, %v2743, 0
        %2758 = vmatprep.subr.mxu0 0.0
        %2759 = vmatpush1.msra.mxu0 0.0
        %2760 = vmatprep.subr.mxu0 0.0
        %2761 = vmatpush1.msra.mxu0 0.0
        %2762 = vmatprep.subr.mxu0 0.0
        %2763 = vmatpush1.msra.mxu0 0.0
        %2764 = vmatprep.subr.mxu0 0.0
        %2765 = vmatpush1.msra.mxu0 0.0
        %2766 = vmatprep.subr.mxu0 0.0
        %2767 = vmatpush1.msra.mxu0 0.0
        %2768 = vmatprep.subr.mxu0 0.0
        %2769 = vmatpush1.msra.mxu0 0.0
        %2770 = vmatprep.subr.mxu0 0.0
        %2771 = vmatpush1.msra.mxu0 0.0
        %2772 = vmatprep.subr.mxu0 0.0
        %2773 = vmatpush1.msra.mxu0 0.0
        %2774 = vmatprep.subr.mxu0 0.0
        %2775 = vmatpush1.msra.mxu0 0.0
        %2776 = vmatprep.subr.mxu0 0.0
        %2777 = vmatpush1.msra.mxu0 0.0
        %2778 = vmatprep.subr.mxu0 0.0
        %2779 = vmatpush1.msra.mxu0 0.0
        %2780 = vmatprep.subr.mxu0 0.0
        %2781 = vmatpush1.msra.mxu0 0.0
        %2782 = vmatprep.subr.mxu0 0.0
        %2783 = vmatpush1.msra.mxu0 %v2747
        %2784 = vmatprep.subr.mxu0 0.0
        %2785 = vmatpush1.msra.mxu0 %v2746
        %2786 = vmatprep.subr.mxu0 0.0
        %2787 = vmatpush1.msra.mxu0 %v2745
        %2788 = vmatprep.subr.mxu0 0.0
        %2789 = vmatpush1.msra.mxu0 %v2744
        %2790 = vmatprep.subr.mxu0 0.0
        %2791 = vmatpush2.msra.mxu0 0.0
        %2792 = vmatprep.subr.mxu0 0.0
        %2793 = vmatpush2.msra.mxu0 0.0
        %2794 = vmatprep.subr.mxu0 0.0
        %2795 = vmatpush2.msra.mxu0 0.0
        %2796 = vmatprep.subr.mxu0 0.0
        %2797 = vmatpush2.msra.mxu0 0.0
        %2798 = vmatprep.subr.mxu0 0.0
        %2799 = vmatpush2.msra.mxu0 0.0
        %2800 = vmatprep.subr.mxu0 0.0
        %2801 = vmatpush2.msra.mxu0 0.0
        %2802 = vmatprep.subr.mxu0 0.0
        %2803 = vmatpush2.msra.mxu0 0.0
        %2804 = vmatprep.subr.mxu0 0.0
        %2805 = vmatpush2.msra.mxu0 0.0
        %2806 = vmatprep.subr.mxu0 0.0
        %2807 = vmatpush2.msra.mxu0 0.0
        %2808 = vmatprep.subr.mxu0 0.0
        %2809 = vmatpush2.msra.mxu0 0.0
        %2810 = vmatprep.subr.mxu0 0.0
        %2811 = vmatpush2.msra.mxu0 0.0
        %2812 = vmatprep.subr.mxu0 0.0
        %2813 = vmatpush2.msra.mxu0 0.0
        %2814 = vmatprep.subr.mxu0 0.0
        %2815 = vmatpush2.msra.mxu0 0.0
        %2816 = vmatprep.subr.mxu0 0.0
        %2817 = vmatpush2.msra.mxu0 0.0
        %2818 = vmatprep.subr.mxu0 0.0
        %2819 = vmatpush2.msra.mxu0 0.0
        %2820 = vmatprep.subr.mxu0 0.0
        %2821 = vmatpush2.msra.mxu0 0.0
        %2822 = vmatprep.mubr.f32.mxu0 0.0
        %2823 = vmatmul.mubr.f32.gmra.mxu0 %v2756
        %v2824 = vpop.f32.mrf.mxu0
        %v2825 = vadd.f32 %v2753, %v2824
        %v2826 = vpop.f32.mrf.mxu0
        %2827 = vdwg.mxu0
        %v2828 = vadd.f32 %v1977, %v2825
        %v2829 = vsel %vm1989, %v2828, 0.0
        %2830 = vadd.xlane.f32.xlu0 %v2829
        %v2831 = vpop.xlane.xlu0 %2830
        %v2832 = vrcp.pop 32.0
        %v2833 = vmul.f32 %v2831, %v2832
        %v2834 = vsub.f32 %v2828, %v2833
        %v2835 = vmul.f32 %v2834, %v2834
        %v2836 = vsel %vm1989, %v2835, 0.0
        %2837 = vadd.xlane.f32.xlu0 %v2836
        %v2838 = vpop.xlane.xlu0 %2837
        %v2839 = vmul.f32 %v2838, %v2832
        %v2840 = vadd.f32 %v2839, 1e-05
        %v2841 = vrsqrt.pop %v2840
        %v2842 = vmul.f32 %v2834, %v2841
        %v2843 = vld [vmem:[#allocation19] sm:$0x1]
        %v2845 = vlaneseq
        %v2846 = vshrl.u32 %v2845, 7
        %v2847 = vsub.s32 0, %v2846
        %v2848 = vrot.slane %v2843, %v2847
        %v2850 = vmul.f32 %v2842, %v2848
        %v2851 = vld [vmem:[#allocation17] sm:$0x1]
        %v2853 = vlaneseq
        %v2854 = vshrl.u32 %v2853, 7
        %v2855 = vsub.s32 0, %v2854
        %v2856 = vrot.slane %v2851, %v2855
        %v2858 = vadd.f32 %v2850, %v2856
        %v2859 = vld [vmem:[%s93] sm:$0xff]
        %v2860 = vld [vmem:[%s93 + $0x8] sm:$0xff]
        %v2861 = vld [vmem:[%s93 + $0x10] sm:$0xff]
        %v2862 = vld [vmem:[%s93 + $0x18] sm:$0xff]
        %v2863 = vld [vmem:[#allocation14] sm:$0x1]
        %v2865 = vlaneseq
        %v2866 = vshrl.u32 %v2865, 7
        %v2867 = vsub.s32 0, %v2866
        %v2868 = vrot.slane %v2863, %v2867
        %v2871 = vsel %vm1989, %v2858, 0
        %2873 = vmatprep.subr.mxu0 0.0
        %2874 = vmatpush1.msra.mxu0 0.0
        %2875 = vmatprep.subr.mxu0 0.0
        %2876 = vmatpush1.msra.mxu0 0.0
        %2877 = vmatprep.subr.mxu0 0.0
        %2878 = vmatpush1.msra.mxu0 0.0
        %2879 = vmatprep.subr.mxu0 0.0
        %2880 = vmatpush1.msra.mxu0 0.0
        %2881 = vmatprep.subr.mxu0 0.0
        %2882 = vmatpush1.msra.mxu0 0.0
        %2883 = vmatprep.subr.mxu0 0.0
        %2884 = vmatpush1.msra.mxu0 0.0
        %2885 = vmatprep.subr.mxu0 0.0
        %2886 = vmatpush1.msra.mxu0 0.0
        %2887 = vmatprep.subr.mxu0 0.0
        %2888 = vmatpush1.msra.mxu0 0.0
        %2889 = vmatprep.subr.mxu0 0.0
        %2890 = vmatpush1.msra.mxu0 0.0
        %2891 = vmatprep.subr.mxu0 0.0
        %2892 = vmatpush1.msra.mxu0 0.0
        %2893 = vmatprep.subr.mxu0 0.0
        %2894 = vmatpush1.msra.mxu0 0.0
        %2895 = vmatprep.subr.mxu0 0.0
        %2896 = vmatpush1.msra.mxu0 0.0
        %2897 = vmatprep.subr.mxu0 0.0
        %2898 = vmatpush1.msra.mxu0 %v2862
        %2899 = vmatprep.subr.mxu0 0.0
        %2900 = vmatpush1.msra.mxu0 %v2861
        %2901 = vmatprep.subr.mxu0 0.0
        %2902 = vmatpush1.msra.mxu0 %v2860
        %2903 = vmatprep.subr.mxu0 0.0
        %2904 = vmatpush1.msra.mxu0 %v2859
        %2905 = vmatprep.subr.mxu0 0.0
        %2906 = vmatpush2.msra.mxu0 0.0
        %2907 = vmatprep.subr.mxu0 0.0
        %2908 = vmatpush2.msra.mxu0 0.0
        %2909 = vmatprep.subr.mxu0 0.0
        %2910 = vmatpush2.msra.mxu0 0.0
        %2911 = vmatprep.subr.mxu0 0.0
        %2912 = vmatpush2.msra.mxu0 0.0
        %2913 = vmatprep.subr.mxu0 0.0
        %2914 = vmatpush2.msra.mxu0 0.0
        %2915 = vmatprep.subr.mxu0 0.0
        %2916 = vmatpush2.msra.mxu0 0.0
        %2917 = vmatprep.subr.mxu0 0.0
        %2918 = vmatpush2.msra.mxu0 0.0
        %2919 = vmatprep.subr.mxu0 0.0
        %2920 = vmatpush2.msra.mxu0 0.0
        %2921 = vmatprep.subr.mxu0 0.0
        %2922 = vmatpush2.msra.mxu0 0.0
        %2923 = vmatprep.subr.mxu0 0.0
        %2924 = vmatpush2.msra.mxu0 0.0
        %2925 = vmatprep.subr.mxu0 0.0
        %2926 = vmatpush2.msra.mxu0 0.0
        %2927 = vmatprep.subr.mxu0 0.0
        %2928 = vmatpush2.msra.mxu0 0.0
        %2929 = vmatprep.subr.mxu0 0.0
        %2930 = vmatpush2.msra.mxu0 0.0
        %2931 = vmatprep.subr.mxu0 0.0
        %2932 = vmatpush2.msra.mxu0 0.0
        %2933 = vmatprep.subr.mxu0 0.0
        %2934 = vmatpush2.msra.mxu0 0.0
        %2935 = vmatprep.subr.mxu0 0.0
        %2936 = vmatpush2.msra.mxu0 0.0
        %2937 = vmatprep.mubr.f32.mxu0 0.0
        %2938 = vmatmul.mubr.f32.gmra.mxu0 %v2871
        %v2939 = vpop.f32.mrf.mxu0
        %v2940 = vadd.f32 %v2868, %v2939
        %v2941 = vpop.f32.mrf.mxu0
        %2942 = vdwg.mxu0
        %v2943 = vmax.f32 %v2940, 0.0
        %v2944 = vld [vmem:[%s95] sm:$0xff]
        %v2945 = vld [vmem:[%s95 + $0x8] sm:$0xff]
        %v2946 = vld [vmem:[%s95 + $0x10] sm:$0xff]
        %v2947 = vld [vmem:[%s95 + $0x18] sm:$0xff]
        %v2948 = vld [vmem:[%s95 + $0x20] sm:$0xff]
        %v2949 = vld [vmem:[%s95 + $0x28] sm:$0xff]
        %v2950 = vld [vmem:[%s95 + $0x30] sm:$0xff]
        %v2951 = vld [vmem:[%s95 + $0x38] sm:$0xff]
        %v2952 = vld [vmem:[#allocation16] sm:$0x1]
        %v2954 = vlaneseq
        %v2955 = vshrl.u32 %v2954, 7
        %v2956 = vsub.s32 0, %v2955
        %v2957 = vrot.slane %v2952, %v2956
        %vm2959 = vcmask 523264
        %v2961 = vsel %vm2959, %v2943, 0
        %2963 = vmatprep.subr.mxu0 0.0
        %2964 = vmatpush1.msra.mxu0 0.0
        %2965 = vmatprep.subr.mxu0 0.0
        %2966 = vmatpush1.msra.mxu0 0.0
        %2967 = vmatprep.subr.mxu0 0.0
        %2968 = vmatpush1.msra.mxu0 0.0
        %2969 = vmatprep.subr.mxu0 0.0
        %2970 = vmatpush1.msra.mxu0 0.0
        %2971 = vmatprep.subr.mxu0 0.0
        %2972 = vmatpush1.msra.mxu0 0.0
        %2973 = vmatprep.subr.mxu0 0.0
        %2974 = vmatpush1.msra.mxu0 0.0
        %2975 = vmatprep.subr.mxu0 0.0
        %2976 = vmatpush1.msra.mxu0 0.0
        %2977 = vmatprep.subr.mxu0 0.0
        %2978 = vmatpush1.msra.mxu0 0.0
        %2979 = vmatprep.subr.mxu0 0.0
        %2980 = vmatpush1.msra.mxu0 %v2951
        %2981 = vmatprep.subr.mxu0 0.0
        %2982 = vmatpush1.msra.mxu0 %v2950
        %2983 = vmatprep.subr.mxu0 0.0
        %2984 = vmatpush1.msra.mxu0 %v2949
        %2985 = vmatprep.subr.mxu0 0.0
        %2986 = vmatpush1.msra.mxu0 %v2948
        %2987 = vmatprep.subr.mxu0 0.0
        %2988 = vmatpush1.msra.mxu0 %v2947
        %2989 = vmatprep.subr.mxu0 0.0
        %2990 = vmatpush1.msra.mxu0 %v2946
        %2991 = vmatprep.subr.mxu0 0.0
        %2992 = vmatpush1.msra.mxu0 %v2945
        %2993 = vmatprep.subr.mxu0 0.0
        %2994 = vmatpush1.msra.mxu0 %v2944
        %2995 = vmatprep.subr.mxu0 0.0
        %2996 = vmatpush2.msra.mxu0 0.0
        %2997 = vmatprep.subr.mxu0 0.0
        %2998 = vmatpush2.msra.mxu0 0.0
        %2999 = vmatprep.subr.mxu0 0.0
        %3000 = vmatpush2.msra.mxu0 0.0
        %3001 = vmatprep.subr.mxu0 0.0
        %3002 = vmatpush2.msra.mxu0 0.0
        %3003 = vmatprep.subr.mxu0 0.0
        %3004 = vmatpush2.msra.mxu0 0.0
        %3005 = vmatprep.subr.mxu0 0.0
        %3006 = vmatpush2.msra.mxu0 0.0
        %3007 = vmatprep.subr.mxu0 0.0
        %3008 = vmatpush2.msra.mxu0 0.0
        %3009 = vmatprep.subr.mxu0 0.0
        %3010 = vmatpush2.msra.mxu0 0.0
        %3011 = vmatprep.subr.mxu0 0.0
        %3012 = vmatpush2.msra.mxu0 0.0
        %3013 = vmatprep.subr.mxu0 0.0
        %3014 = vmatpush2.msra.mxu0 0.0
        %3015 = vmatprep.subr.mxu0 0.0
        %3016 = vmatpush2.msra.mxu0 0.0
        %3017 = vmatprep.subr.mxu0 0.0
        %3018 = vmatpush2.msra.mxu0 0.0
        %3019 = vmatprep.subr.mxu0 0.0
        %3020 = vmatpush2.msra.mxu0 0.0
        %3021 = vmatprep.subr.mxu0 0.0
        %3022 = vmatpush2.msra.mxu0 0.0
        %3023 = vmatprep.subr.mxu0 0.0
        %3024 = vmatpush2.msra.mxu0 0.0
        %3025 = vmatprep.subr.mxu0 0.0
        %3026 = vmatpush2.msra.mxu0 0.0
        %3027 = vmatprep.mubr.f32.mxu0 0.0
        %3028 = vmatmul.mubr.f32.gmra.mxu0 %v2961
        %v3029 = vpop.f32.mrf.mxu0
        %v3030 = vadd.f32 %v2957, %v3029
        %v3031 = vpop.f32.mrf.mxu0
        %3032 = vdwg.mxu0
        %v3033 = vadd.f32 %v2858, %v3030
        %v3034 = vsel %vm1989, %v3033, 0.0
        %3035 = vadd.xlane.f32.xlu0 %v3034
        %v3036 = vpop.xlane.xlu0 %3035
        %v3037 = vmul.f32 %v3036, %v2832
        %v3038 = vsub.f32 %v3033, %v3037
        %v3039 = vmul.f32 %v3038, %v3038
        %v3040 = vsel %vm1989, %v3039, 0.0
        %3041 = vadd.xlane.f32.xlu0 %v3040
        %v3042 = vpop.xlane.xlu0 %3041
        %v3043 = vmul.f32 %v3042, %v2832
        %v3044 = vadd.f32 %v3043, 1e-05
        %v3045 = vrsqrt.pop %v3044
        %v3046 = vmul.f32 %v3038, %v3045
        %v3047 = vld [vmem:[#allocation22] sm:$0x1]
        %v3049 = vlaneseq
        %v3050 = vshrl.u32 %v3049, 7
        %v3051 = vsub.s32 0, %v3050
        %v3052 = vrot.slane %v3047, %v3051
        %v3054 = vmul.f32 %v3046, %v3052
        %v3055 = vld [vmem:[#allocation20] sm:$0x1]
        %v3057 = vlaneseq
        %v3058 = vshrl.u32 %v3057, 7
        %v3059 = vsub.s32 0, %v3058
        %v3060 = vrot.slane %v3055, %v3059
        %v3062 = vadd.f32 %v3054, %v3060
        %v3063 = vld [vmem:[%s7] sm:$0xff]
        %v3064 = vld [vmem:[%s7 + $0x8] sm:$0xff]
        %v3065 = vld [vmem:[%s7 + $0x10] sm:$0xff]
        %v3066 = vld [vmem:[%s7 + $0x18] sm:$0xff]
        %v3067 = vld [vmem:[%s7 + $0x20] sm:$0xff]
        %v3068 = vld [vmem:[%s7 + $0x28] sm:$0xff]
        %v3069 = vld [vmem:[%s7 + $0x30] sm:$0xff]
        %v3070 = vld [vmem:[%s7 + $0x38] sm:$0xff]
        %v3071 = vld [vmem:[%s7 + $0x40] sm:$0xff]
        %v3072 = vld [vmem:[%s7 + $0x48] sm:$0xff]
        %v3073 = vld [vmem:[%s7 + $0x50] sm:$0xff]
        %v3074 = vld [vmem:[%s7 + $0x58] sm:$0xff]
        %v3075 = vld [vmem:[%s7 + $0x60] sm:$0xff]
        %v3076 = vld [vmem:[%s7 + $0x68] sm:$0xff]
        %v3077 = vld [vmem:[%s7 + $0x70] sm:$0xff]
        %v3078 = vld [vmem:[%s7 + $0x78] sm:$0xff]
        %3079 = vmatprep.subr.mxu0 0.0
        %3080 = vmatpush1.msra.mxu0 %v3078
        %3081 = vmatprep.subr.mxu0 0.0
        %3082 = vmatpush1.msra.mxu0 %v3077
        %3083 = vmatprep.subr.mxu0 0.0
        %3084 = vmatpush1.msra.mxu0 %v3076
        %3085 = vmatprep.subr.mxu0 0.0
        %3086 = vmatpush1.msra.mxu0 %v3075
        %3087 = vmatprep.subr.mxu0 0.0
        %3088 = vmatpush1.msra.mxu0 %v3074
        %3089 = vmatprep.subr.mxu0 0.0
        %3090 = vmatpush1.msra.mxu0 %v3073
        %3091 = vmatprep.subr.mxu0 0.0
        %3092 = vmatpush1.msra.mxu0 %v3072
        %3093 = vmatprep.subr.mxu0 0.0
        %3094 = vmatpush1.msra.mxu0 %v3071
        %3095 = vmatprep.subr.mxu0 0.0
        %3096 = vmatpush1.msra.mxu0 %v3070
        %3097 = vmatprep.subr.mxu0 0.0
        %3098 = vmatpush1.msra.mxu0 %v3069
        %3099 = vmatprep.subr.mxu0 0.0
        %3100 = vmatpush1.msra.mxu0 %v3068
        %3101 = vmatprep.subr.mxu0 0.0
        %3102 = vmatpush1.msra.mxu0 %v3067
        %3103 = vmatprep.subr.mxu0 0.0
        %3104 = vmatpush1.msra.mxu0 %v3066
        %3105 = vmatprep.subr.mxu0 0.0
        %3106 = vmatpush1.msra.mxu0 %v3065
        %3107 = vmatprep.subr.mxu0 0.0
        %3108 = vmatpush1.msra.mxu0 %v3064
        %3109 = vmatprep.subr.mxu0 0.0
        %3110 = vmatpush1.msra.mxu0 %v3063
        %3111 = vmatprep.subr.mxu0 0.0
        %3112 = vmatpush2.msra.mxu0 0.0
        %3113 = vmatprep.subr.mxu0 0.0
        %3114 = vmatpush2.msra.mxu0 0.0
        %3115 = vmatprep.subr.mxu0 0.0
        %3116 = vmatpush2.msra.mxu0 0.0
        %3117 = vmatprep.subr.mxu0 0.0
        %3118 = vmatpush2.msra.mxu0 0.0
        %3119 = vmatprep.subr.mxu0 0.0
        %3120 = vmatpush2.msra.mxu0 0.0
        %3121 = vmatprep.subr.mxu0 0.0
        %3122 = vmatpush2.msra.mxu0 0.0
        %3123 = vmatprep.subr.mxu0 0.0
        %3124 = vmatpush2.msra.mxu0 0.0
        %3125 = vmatprep.subr.mxu0 0.0
        %3126 = vmatpush2.msra.mxu0 0.0
        %3127 = vmatprep.subr.mxu0 0.0
        %3128 = vmatpush2.msra.mxu0 0.0
        %3129 = vmatprep.subr.mxu0 0.0
        %3130 = vmatpush2.msra.mxu0 0.0
        %3131 = vmatprep.subr.mxu0 0.0
        %3132 = vmatpush2.msra.mxu0 0.0
        %3133 = vmatprep.subr.mxu0 0.0
        %3134 = vmatpush2.msra.mxu0 0.0
        %3135 = vmatprep.subr.mxu0 0.0
        %3136 = vmatpush2.msra.mxu0 0.0
        %3137 = vmatprep.subr.mxu0 0.0
        %3138 = vmatpush2.msra.mxu0 0.0
        %3139 = vmatprep.subr.mxu0 0.0
        %3140 = vmatpush2.msra.mxu0 0.0
        %3141 = vmatprep.subr.mxu0 0.0
        %3142 = vmatpush2.msra.mxu0 0.0
        %3143 = vmatprep.mubr.f32.mxu0 0.0
        %3144 = vmatmul.mubr.f32.gmra.mxu0 %v1890
        %v3145 = vpop.f32.mrf.mxu0
        %v3146 = vadd.f32 0.0, %v3145
        %v3147 = vpop.f32.mrf.mxu0
        %3148 = vdwg.mxu0
        %v3149 = vmul.f32 %v3146, 5.656854
        %v3150 = vld [vmem:[%s85] sm:$0xff]
        %v3151 = vadd.f32 %v3149, %v3150
        %v3152 = vld [vmem:[%s3] sm:$0xff]
        %v3153 = vld [vmem:[%s5] sm:$0xff]
        %v3154 = vld [vmem:[%s47] sm:$0xff]
        %v3155 = vld [vmem:[%s47 + $0x8] sm:$0xff]
        %v3156 = vld [vmem:[%s47 + $0x10] sm:$0xff]
        %v3157 = vld [vmem:[%s47 + $0x18] sm:$0xff]
        %v3158 = vld [vmem:[%s43] sm:$0x1]
        %v3160 = vlaneseq
        %v3161 = vshrl.u32 %v3160, 7
        %v3162 = vsub.s32 0, %v3161
        %v3163 = vrot.slane %v3158, %v3162
        %v3166 = vsel %vm1989, %v3151, 0
        %3168 = vmatprep.subr.mxu0 0.0
        %3169 = vmatpush1.msra.mxu0 0.0
        %3170 = vmatprep.subr.mxu0 0.0
        %3171 = vmatpush1.msra.mxu0 0.0
        %3172 = vmatprep.subr.mxu0 0.0
        %3173 = vmatpush1.msra.mxu0 0.0
        %3174 = vmatprep.subr.mxu0 0.0
        %3175 = vmatpush1.msra.mxu0 0.0
        %3176 = vmatprep.subr.mxu0 0.0
        %3177 = vmatpush1.msra.mxu0 0.0
        %3178 = vmatprep.subr.mxu0 0.0
        %3179 = vmatpush1.msra.mxu0 0.0
        %3180 = vmatprep.subr.mxu0 0.0
        %3181 = vmatpush1.msra.mxu0 0.0
        %3182 = vmatprep.subr.mxu0 0.0
        %3183 = vmatpush1.msra.mxu0 0.0
        %3184 = vmatprep.subr.mxu0 0.0
        %3185 = vmatpush1.msra.mxu0 0.0
        %3186 = vmatprep.subr.mxu0 0.0
        %3187 = vmatpush1.msra.mxu0 0.0
        %3188 = vmatprep.subr.mxu0 0.0
        %3189 = vmatpush1.msra.mxu0 0.0
        %3190 = vmatprep.subr.mxu0 0.0
        %3191 = vmatpush1.msra.mxu0 0.0
        %3192 = vmatprep.subr.mxu0 0.0
        %3193 = vmatpush1.msra.mxu0 %v3157
        %3194 = vmatprep.subr.mxu0 0.0
        %3195 = vmatpush1.msra.mxu0 %v3156
        %3196 = vmatprep.subr.mxu0 0.0
        %3197 = vmatpush1.msra.mxu0 %v3155
        %3198 = vmatprep.subr.mxu0 0.0
        %3199 = vmatpush1.msra.mxu0 %v3154
        %3200 = vmatprep.subr.mxu0 0.0
        %3201 = vmatpush2.msra.mxu0 0.0
        %3202 = vmatprep.subr.mxu0 0.0
        %3203 = vmatpush2.msra.mxu0 0.0
        %3204 = vmatprep.subr.mxu0 0.0
        %3205 = vmatpush2.msra.mxu0 0.0
        %3206 = vmatprep.subr.mxu0 0.0
        %3207 = vmatpush2.msra.mxu0 0.0
        %3208 = vmatprep.subr.mxu0 0.0
        %3209 = vmatpush2.msra.mxu0 0.0
        %3210 = vmatprep.subr.mxu0 0.0
        %3211 = vmatpush2.msra.mxu0 0.0
        %3212 = vmatprep.subr.mxu0 0.0
        %3213 = vmatpush2.msra.mxu0 0.0
        %3214 = vmatprep.subr.mxu0 0.0
        %3215 = vmatpush2.msra.mxu0 0.0
        %3216 = vmatprep.subr.mxu0 0.0
        %3217 = vmatpush2.msra.mxu0 0.0
        %3218 = vmatprep.subr.mxu0 0.0
        %3219 = vmatpush2.msra.mxu0 0.0
        %3220 = vmatprep.subr.mxu0 0.0
        %3221 = vmatpush2.msra.mxu0 0.0
        %3222 = vmatprep.subr.mxu0 0.0
        %3223 = vmatpush2.msra.mxu0 0.0
        %3224 = vmatprep.subr.mxu0 0.0
        %3225 = vmatpush2.msra.mxu0 0.0
        %3226 = vmatprep.subr.mxu0 0.0
        %3227 = vmatpush2.msra.mxu0 0.0
        %3228 = vmatprep.subr.mxu0 0.0
        %3229 = vmatpush2.msra.mxu0 0.0
        %3230 = vmatprep.subr.mxu0 0.0
        %3231 = vmatpush2.msra.mxu0 0.0
        %3232 = vmatprep.mubr.f32.mxu0 0.0
        %3233 = vmatmul.mubr.f32.gmra.mxu0 %v3166
        %v3234 = vpop.f32.mrf.mxu0
        %v3235 = vadd.f32 %v3163, %v3234
        %v3236 = vpop.f32.mrf.mxu0
        %3237 = vdwg.mxu0
        %3239 = vrot.lane.b32.xlu0 %v3235, 96
        %v3240 = vpop.permute.xlu0 %3239
        %v3241 = vsel %vm2066, %v3235, 0
        %v3243 = vsel %vm2066, %v3240, 0
        %3245 = vmatprep.subr.mxu0 0.0
        %3246 = vmatpush1.xpose.msra.mxu0 0.0
        %3247 = vmatprep.subr.mxu0 0.0
        %3248 = vmatpush1.xpose.msra.mxu0 0.0
        %3249 = vmatprep.subr.mxu0 0.0
        %3250 = vmatpush1.xpose.msra.mxu0 0.0
        %3251 = vmatprep.subr.mxu0 0.0
        %3252 = vmatpush1.xpose.msra.mxu0 0.0
        %3253 = vmatprep.subr.mxu0 0.0
        %3254 = vmatpush1.xpose.msra.mxu0 0.0
        %3255 = vmatprep.subr.mxu0 0.0
        %3256 = vmatpush1.xpose.msra.mxu0 0.0
        %3257 = vmatprep.subr.mxu0 0.0
        %3258 = vmatpush1.xpose.msra.mxu0 0.0
        %3259 = vmatprep.subr.mxu0 0.0
        %3260 = vmatpush1.xpose.msra.mxu0 0.0
        %3261 = vmatprep.subr.mxu0 0.0
        %3262 = vmatpush1.xpose.msra.mxu0 0.0
        %3263 = vmatprep.subr.mxu0 0.0
        %3264 = vmatpush1.xpose.msra.mxu0 0.0
        %3265 = vmatprep.subr.mxu0 0.0
        %3266 = vmatpush1.xpose.msra.mxu0 0.0
        %3267 = vmatprep.subr.mxu0 0.0
        %3268 = vmatpush1.xpose.msra.mxu0 0.0
        %3269 = vmatprep.subr.mxu0 0.0
        %3270 = vmatpush1.xpose.msra.mxu0 0.0
        %3271 = vmatprep.subr.mxu0 0.0
        %3272 = vmatpush1.xpose.msra.mxu0 0.0
        %3273 = vmatprep.subr.mxu0 0.0
        %3274 = vmatpush1.xpose.msra.mxu0 0.0
        %3275 = vmatprep.subr.mxu0 0.0
        %3276 = vmatpush1.xpose.msra.mxu0 %v3243
        %3277 = vmatprep.subr.mxu0 0.0
        %3278 = vmatpush2.xpose.msra.mxu0 0.0
        %3279 = vmatprep.subr.mxu0 0.0
        %3280 = vmatpush2.xpose.msra.mxu0 0.0
        %3281 = vmatprep.subr.mxu0 0.0
        %3282 = vmatpush2.xpose.msra.mxu0 0.0
        %3283 = vmatprep.subr.mxu0 0.0
        %3284 = vmatpush2.xpose.msra.mxu0 0.0
        %3285 = vmatprep.subr.mxu0 0.0
        %3286 = vmatpush2.xpose.msra.mxu0 0.0
        %3287 = vmatprep.subr.mxu0 0.0
        %3288 = vmatpush2.xpose.msra.mxu0 0.0
        %3289 = vmatprep.subr.mxu0 0.0
        %3290 = vmatpush2.xpose.msra.mxu0 0.0
        %3291 = vmatprep.subr.mxu0 0.0
        %3292 = vmatpush2.xpose.msra.mxu0 0.0
        %3293 = vmatprep.subr.mxu0 0.0
        %3294 = vmatpush2.xpose.msra.mxu0 0.0
        %3295 = vmatprep.subr.mxu0 0.0
        %3296 = vmatpush2.xpose.msra.mxu0 0.0
        %3297 = vmatprep.subr.mxu0 0.0
        %3298 = vmatpush2.xpose.msra.mxu0 0.0
        %3299 = vmatprep.subr.mxu0 0.0
        %3300 = vmatpush2.xpose.msra.mxu0 0.0
        %3301 = vmatprep.subr.mxu0 0.0
        %3302 = vmatpush2.xpose.msra.mxu0 0.0
        %3303 = vmatprep.subr.mxu0 0.0
        %3304 = vmatpush2.xpose.msra.mxu0 0.0
        %3305 = vmatprep.subr.mxu0 0.0
        %3306 = vmatpush2.xpose.msra.mxu0 0.0
        %3307 = vmatprep.subr.mxu0 0.0
        %3308 = vmatpush2.xpose.msra.mxu0 0.0
        %3309 = vmatprep.mubr.f32.mxu0 0.0
        %3310 = vmatmul.mubr.f32.gmra.mxu0 %v3241
        %v3311 = vpop.f32.mrf.mxu0
        %v3312 = vadd.f32 0.0, %v3311
        %v3313 = vpop.f32.mrf.mxu0
        %3314 = vdwg.mxu0
        %v3315 = vmul.f32 %v3312, 0.35355338
        %v3316 = vadd.f32 %v3315, %v3153
        %v3317 = vsel %vm2066, %v3316, -inf
        %3318 = vmax.xlane.f32.xlu0 %v3317
        %v3319 = vpop.xlane.xlu0 %3318
        %v3320 = vsub.f32 %v3316, %v3319
        %v3321 = vmul.f32 %v3320, 1.442695
        %v3322 = vpow.pop %v3321
        %v3323 = vsel %vm2066, %v3322, 0.0
        %3324 = vadd.xlane.f32.xlu0 %v3323
        %v3325 = vpop.xlane.xlu0 %3324
        %v3326 = vrcp.pop %v3325
        %v3327 = vmul.f32 %v3322, %v3326
        %3328 = vrot.lane.b32.xlu0 %v3235, 64
        %v3329 = vpop.permute.xlu0 %3328
        %v3332 = vsel %vm2066, %v3327, 0
        %3334 = vmatprep.subr.mxu0 0.0
        %3335 = vmatpush1.msra.mxu0 0.0
        %3336 = vmatprep.subr.mxu0 0.0
        %3337 = vmatpush1.msra.mxu0 0.0
        %3338 = vmatprep.subr.mxu0 0.0
        %3339 = vmatpush1.msra.mxu0 0.0
        %3340 = vmatprep.subr.mxu0 0.0
        %3341 = vmatpush1.msra.mxu0 0.0
        %3342 = vmatprep.subr.mxu0 0.0
        %3343 = vmatpush1.msra.mxu0 0.0
        %3344 = vmatprep.subr.mxu0 0.0
        %3345 = vmatpush1.msra.mxu0 0.0
        %3346 = vmatprep.subr.mxu0 0.0
        %3347 = vmatpush1.msra.mxu0 0.0
        %3348 = vmatprep.subr.mxu0 0.0
        %3349 = vmatpush1.msra.mxu0 0.0
        %3350 = vmatprep.subr.mxu0 0.0
        %3351 = vmatpush1.msra.mxu0 0.0
        %3352 = vmatprep.subr.mxu0 0.0
        %3353 = vmatpush1.msra.mxu0 0.0
        %3354 = vmatprep.subr.mxu0 0.0
        %3355 = vmatpush1.msra.mxu0 0.0
        %3356 = vmatprep.subr.mxu0 0.0
        %3357 = vmatpush1.msra.mxu0 0.0
        %3358 = vmatprep.subr.mxu0 0.0
        %3359 = vmatpush1.msra.mxu0 0.0
        %3360 = vmatprep.subr.mxu0 0.0
        %3361 = vmatpush1.msra.mxu0 0.0
        %3362 = vmatprep.subr.mxu0 0.0
        %3363 = vmatpush1.msra.mxu0 0.0
        %3364 = vmatprep.subr.mxu0 0.0
        %3365 = vmatpush1.msra.mxu0 %v3329
        %3366 = vmatprep.subr.mxu0 0.0
        %3367 = vmatpush2.msra.mxu0 0.0
        %3368 = vmatprep.subr.mxu0 0.0
        %3369 = vmatpush2.msra.mxu0 0.0
        %3370 = vmatprep.subr.mxu0 0.0
        %3371 = vmatpush2.msra.mxu0 0.0
        %3372 = vmatprep.subr.mxu0 0.0
        %3373 = vmatpush2.msra.mxu0 0.0
        %3374 = vmatprep.subr.mxu0 0.0
        %3375 = vmatpush2.msra.mxu0 0.0
        %3376 = vmatprep.subr.mxu0 0.0
        %3377 = vmatpush2.msra.mxu0 0.0
        %3378 = vmatprep.subr.mxu0 0.0
        %3379 = vmatpush2.msra.mxu0 0.0
        %3380 = vmatprep.subr.mxu0 0.0
        %3381 = vmatpush2.msra.mxu0 0.0
        %3382 = vmatprep.subr.mxu0 0.0
        %3383 = vmatpush2.msra.mxu0 0.0
        %3384 = vmatprep.subr.mxu0 0.0
        %3385 = vmatpush2.msra.mxu0 0.0
        %3386 = vmatprep.subr.mxu0 0.0
        %3387 = vmatpush2.msra.mxu0 0.0
        %3388 = vmatprep.subr.mxu0 0.0
        %3389 = vmatpush2.msra.mxu0 0.0
        %3390 = vmatprep.subr.mxu0 0.0
        %3391 = vmatpush2.msra.mxu0 0.0
        %3392 = vmatprep.subr.mxu0 0.0
        %3393 = vmatpush2.msra.mxu0 0.0
        %3394 = vmatprep.subr.mxu0 0.0
        %3395 = vmatpush2.msra.mxu0 0.0
        %3396 = vmatprep.subr.mxu0 0.0
        %3397 = vmatpush2.msra.mxu0 0.0
        %3398 = vmatprep.mubr.f32.mxu0 0.0
        %3399 = vmatmul.mubr.f32.gmra.mxu0 %v3332
        %v3400 = vpop.f32.mrf.mxu0
        %v3401 = vadd.f32 0.0, %v3400
        %v3402 = vpop.f32.mrf.mxu0
        %3403 = vdwg.mxu0
        %3404 = vrot.lane.b32.xlu0 %v3235, 120
        %v3405 = vpop.permute.xlu0 %3404
        %3406 = vrot.lane.b32.xlu0 %v3235, 88
        %v3407 = vpop.permute.xlu0 %3406
        %v3408 = vsel %vm2066, %v3405, 0
        %v3410 = vsel %vm2066, %v3407, 0
        %3412 = vmatprep.subr.mxu0 0.0
        %3413 = vmatpush1.xpose.msra.mxu0 0.0
        %3414 = vmatprep.subr.mxu0 0.0
        %3415 = vmatpush1.xpose.msra.mxu0 0.0
        %3416 = vmatprep.subr.mxu0 0.0
        %3417 = vmatpush1.xpose.msra.mxu0 0.0
        %3418 = vmatprep.subr.mxu0 0.0
        %3419 = vmatpush1.xpose.msra.mxu0 0.0
        %3420 = vmatprep.subr.mxu0 0.0
        %3421 = vmatpush1.xpose.msra.mxu0 0.0
        %3422 = vmatprep.subr.mxu0 0.0
        %3423 = vmatpush1.xpose.msra.mxu0 0.0
        %3424 = vmatprep.subr.mxu0 0.0
        %3425 = vmatpush1.xpose.msra.mxu0 0.0
        %3426 = vmatprep.subr.mxu0 0.0
        %3427 = vmatpush1.xpose.msra.mxu0 0.0
        %3428 = vmatprep.subr.mxu0 0.0
        %3429 = vmatpush1.xpose.msra.mxu0 0.0
        %3430 = vmatprep.subr.mxu0 0.0
        %3431 = vmatpush1.xpose.msra.mxu0 0.0
        %3432 = vmatprep.subr.mxu0 0.0
        %3433 = vmatpush1.xpose.msra.mxu0 0.0
        %3434 = vmatprep.subr.mxu0 0.0
        %3435 = vmatpush1.xpose.msra.mxu0 0.0
        %3436 = vmatprep.subr.mxu0 0.0
        %3437 = vmatpush1.xpose.msra.mxu0 0.0
        %3438 = vmatprep.subr.mxu0 0.0
        %3439 = vmatpush1.xpose.msra.mxu0 0.0
        %3440 = vmatprep.subr.mxu0 0.0
        %3441 = vmatpush1.xpose.msra.mxu0 0.0
        %3442 = vmatprep.subr.mxu0 0.0
        %3443 = vmatpush1.xpose.msra.mxu0 %v3410
        %3444 = vmatprep.subr.mxu0 0.0
        %3445 = vmatpush2.xpose.msra.mxu0 0.0
        %3446 = vmatprep.subr.mxu0 0.0
        %3447 = vmatpush2.xpose.msra.mxu0 0.0
        %3448 = vmatprep.subr.mxu0 0.0
        %3449 = vmatpush2.xpose.msra.mxu0 0.0
        %3450 = vmatprep.subr.mxu0 0.0
        %3451 = vmatpush2.xpose.msra.mxu0 0.0
        %3452 = vmatprep.subr.mxu0 0.0
        %3453 = vmatpush2.xpose.msra.mxu0 0.0
        %3454 = vmatprep.subr.mxu0 0.0
        %3455 = vmatpush2.xpose.msra.mxu0 0.0
        %3456 = vmatprep.subr.mxu0 0.0
        %3457 = vmatpush2.xpose.msra.mxu0 0.0
        %3458 = vmatprep.subr.mxu0 0.0
        %3459 = vmatpush2.xpose.msra.mxu0 0.0
        %3460 = vmatprep.subr.mxu0 0.0
        %3461 = vmatpush2.xpose.msra.mxu0 0.0
        %3462 = vmatprep.subr.mxu0 0.0
        %3463 = vmatpush2.xpose.msra.mxu0 0.0
        %3464 = vmatprep.subr.mxu0 0.0
        %3465 = vmatpush2.xpose.msra.mxu0 0.0
        %3466 = vmatprep.subr.mxu0 0.0
        %3467 = vmatpush2.xpose.msra.mxu0 0.0
        %3468 = vmatprep.subr.mxu0 0.0
        %3469 = vmatpush2.xpose.msra.mxu0 0.0
        %3470 = vmatprep.subr.mxu0 0.0
        %3471 = vmatpush2.xpose.msra.mxu0 0.0
        %3472 = vmatprep.subr.mxu0 0.0
        %3473 = vmatpush2.xpose.msra.mxu0 0.0
        %3474 = vmatprep.subr.mxu0 0.0
        %3475 = vmatpush2.xpose.msra.mxu0 0.0
        %3476 = vmatprep.mubr.f32.mxu0 0.0
        %3477 = vmatmul.mubr.f32.gmra.mxu0 %v3408
        %v3478 = vpop.f32.mrf.mxu0
        %v3479 = vadd.f32 0.0, %v3478
        %v3480 = vpop.f32.mrf.mxu0
        %3481 = vdwg.mxu0
        %v3482 = vmul.f32 %v3479, 0.35355338
        %v3483 = vadd.f32 %v3482, %v3153
        %v3484 = vsel %vm2066, %v3483, -inf
        %3485 = vmax.xlane.f32.xlu0 %v3484
        %v3486 = vpop.xlane.xlu0 %3485
        %v3487 = vsub.f32 %v3483, %v3486
        %v3488 = vmul.f32 %v3487, 1.442695
        %v3489 = vpow.pop %v3488
        %v3490 = vsel %vm2066, %v3489, 0.0
        %3491 = vadd.xlane.f32.xlu0 %v3490
        %v3492 = vpop.xlane.xlu0 %3491
        %v3493 = vrcp.pop %v3492
        %v3494 = vmul.f32 %v3489, %v3493
        %3495 = vrot.lane.b32.xlu0 %v3235, 56
        %v3496 = vpop.permute.xlu0 %3495
        %v3499 = vsel %vm2066, %v3494, 0
        %3501 = vmatprep.subr.mxu0 0.0
        %3502 = vmatpush1.msra.mxu0 0.0
        %3503 = vmatprep.subr.mxu0 0.0
        %3504 = vmatpush1.msra.mxu0 0.0
        %3505 = vmatprep.subr.mxu0 0.0
        %3506 = vmatpush1.msra.mxu0 0.0
        %3507 = vmatprep.subr.mxu0 0.0
        %3508 = vmatpush1.msra.mxu0 0.0
        %3509 = vmatprep.subr.mxu0 0.0
        %3510 = vmatpush1.msra.mxu0 0.0
        %3511 = vmatprep.subr.mxu0 0.0
        %3512 = vmatpush1.msra.mxu0 0.0
        %3513 = vmatprep.subr.mxu0 0.0
        %3514 = vmatpush1.msra.mxu0 0.0
        %3515 = vmatprep.subr.mxu0 0.0
        %3516 = vmatpush1.msra.mxu0 0.0
        %3517 = vmatprep.subr.mxu0 0.0
        %3518 = vmatpush1.msra.mxu0 0.0
        %3519 = vmatprep.subr.mxu0 0.0
        %3520 = vmatpush1.msra.mxu0 0.0
        %3521 = vmatprep.subr.mxu0 0.0
        %3522 = vmatpush1.msra.mxu0 0.0
        %3523 = vmatprep.subr.mxu0 0.0
        %3524 = vmatpush1.msra.mxu0 0.0
        %3525 = vmatprep.subr.mxu0 0.0
        %3526 = vmatpush1.msra.mxu0 0.0
        %3527 = vmatprep.subr.mxu0 0.0
        %3528 = vmatpush1.msra.mxu0 0.0
        %3529 = vmatprep.subr.mxu0 0.0
        %3530 = vmatpush1.msra.mxu0 0.0
        %3531 = vmatprep.subr.mxu0 0.0
        %3532 = vmatpush1.msra.mxu0 %v3496
        %3533 = vmatprep.subr.mxu0 0.0
        %3534 = vmatpush2.msra.mxu0 0.0
        %3535 = vmatprep.subr.mxu0 0.0
        %3536 = vmatpush2.msra.mxu0 0.0
        %3537 = vmatprep.subr.mxu0 0.0
        %3538 = vmatpush2.msra.mxu0 0.0
        %3539 = vmatprep.subr.mxu0 0.0
        %3540 = vmatpush2.msra.mxu0 0.0
        %3541 = vmatprep.subr.mxu0 0.0
        %3542 = vmatpush2.msra.mxu0 0.0
        %3543 = vmatprep.subr.mxu0 0.0
        %3544 = vmatpush2.msra.mxu0 0.0
        %3545 = vmatprep.subr.mxu0 0.0
        %3546 = vmatpush2.msra.mxu0 0.0
        %3547 = vmatprep.subr.mxu0 0.0
        %3548 = vmatpush2.msra.mxu0 0.0
        %3549 = vmatprep.subr.mxu0 0.0
        %3550 = vmatpush2.msra.mxu0 0.0
        %3551 = vmatprep.subr.mxu0 0.0
        %3552 = vmatpush2.msra.mxu0 0.0
        %3553 = vmatprep.subr.mxu0 0.0
        %3554 = vmatpush2.msra.mxu0 0.0
        %3555 = vmatprep.subr.mxu0 0.0
        %3556 = vmatpush2.msra.mxu0 0.0
        %3557 = vmatprep.subr.mxu0 0.0
        %3558 = vmatpush2.msra.mxu0 0.0
        %3559 = vmatprep.subr.mxu0 0.0
        %3560 = vmatpush2.msra.mxu0 0.0
        %3561 = vmatprep.subr.mxu0 0.0
        %3562 = vmatpush2.msra.mxu0 0.0
        %3563 = vmatprep.subr.mxu0 0.0
        %3564 = vmatpush2.msra.mxu0 0.0
        %3565 = vmatprep.mubr.f32.mxu0 0.0
        %3566 = vmatmul.mubr.f32.gmra.mxu0 %v3499
        %v3567 = vpop.f32.mrf.mxu0
        %v3568 = vadd.f32 0.0, %v3567
        %v3569 = vpop.f32.mrf.mxu0
        %3570 = vdwg.mxu0
        %3571 = vrot.lane.b32.xlu0 %v3235, 112
        %v3572 = vpop.permute.xlu0 %3571
        %3573 = vrot.lane.b32.xlu0 %v3235, 80
        %v3574 = vpop.permute.xlu0 %3573
        %v3575 = vsel %vm2066, %v3572, 0
        %v3577 = vsel %vm2066, %v3574, 0
        %3579 = vmatprep.subr.mxu0 0.0
        %3580 = vmatpush1.xpose.msra.mxu0 0.0
        %3581 = vmatprep.subr.mxu0 0.0
        %3582 = vmatpush1.xpose.msra.mxu0 0.0
        %3583 = vmatprep.subr.mxu0 0.0
        %3584 = vmatpush1.xpose.msra.mxu0 0.0
        %3585 = vmatprep.subr.mxu0 0.0
        %3586 = vmatpush1.xpose.msra.mxu0 0.0
        %3587 = vmatprep.subr.mxu0 0.0
        %3588 = vmatpush1.xpose.msra.mxu0 0.0
        %3589 = vmatprep.subr.mxu0 0.0
        %3590 = vmatpush1.xpose.msra.mxu0 0.0
        %3591 = vmatprep.subr.mxu0 0.0
        %3592 = vmatpush1.xpose.msra.mxu0 0.0
        %3593 = vmatprep.subr.mxu0 0.0
        %3594 = vmatpush1.xpose.msra.mxu0 0.0
        %3595 = vmatprep.subr.mxu0 0.0
        %3596 = vmatpush1.xpose.msra.mxu0 0.0
        %3597 = vmatprep.subr.mxu0 0.0
        %3598 = vmatpush1.xpose.msra.mxu0 0.0
        %3599 = vmatprep.subr.mxu0 0.0
        %3600 = vmatpush1.xpose.msra.mxu0 0.0
        %3601 = vmatprep.subr.mxu0 0.0
        %3602 = vmatpush1.xpose.msra.mxu0 0.0
        %3603 = vmatprep.subr.mxu0 0.0
        %3604 = vmatpush1.xpose.msra.mxu0 0.0
        %3605 = vmatprep.subr.mxu0 0.0
        %3606 = vmatpush1.xpose.msra.mxu0 0.0
        %3607 = vmatprep.subr.mxu0 0.0
        %3608 = vmatpush1.xpose.msra.mxu0 0.0
        %3609 = vmatprep.subr.mxu0 0.0
        %3610 = vmatpush1.xpose.msra.mxu0 %v3577
        %3611 = vmatprep.subr.mxu0 0.0
        %3612 = vmatpush2.xpose.msra.mxu0 0.0
        %3613 = vmatprep.subr.mxu0 0.0
        %3614 = vmatpush2.xpose.msra.mxu0 0.0
        %3615 = vmatprep.subr.mxu0 0.0
        %3616 = vmatpush2.xpose.msra.mxu0 0.0
        %3617 = vmatprep.subr.mxu0 0.0
        %3618 = vmatpush2.xpose.msra.mxu0 0.0
        %3619 = vmatprep.subr.mxu0 0.0
        %3620 = vmatpush2.xpose.msra.mxu0 0.0
        %3621 = vmatprep.subr.mxu0 0.0
        %3622 = vmatpush2.xpose.msra.mxu0 0.0
        %3623 = vmatprep.subr.mxu0 0.0
        %3624 = vmatpush2.xpose.msra.mxu0 0.0
        %3625 = vmatprep.subr.mxu0 0.0
        %3626 = vmatpush2.xpose.msra.mxu0 0.0
        %3627 = vmatprep.subr.mxu0 0.0
        %3628 = vmatpush2.xpose.msra.mxu0 0.0
        %3629 = vmatprep.subr.mxu0 0.0
        %3630 = vmatpush2.xpose.msra.mxu0 0.0
        %3631 = vmatprep.subr.mxu0 0.0
        %3632 = vmatpush2.xpose.msra.mxu0 0.0
        %3633 = vmatprep.subr.mxu0 0.0
        %3634 = vmatpush2.xpose.msra.mxu0 0.0
        %3635 = vmatprep.subr.mxu0 0.0
        %3636 = vmatpush2.xpose.msra.mxu0 0.0
        %3637 = vmatprep.subr.mxu0 0.0
        %3638 = vmatpush2.xpose.msra.mxu0 0.0
        %3639 = vmatprep.subr.mxu0 0.0
        %3640 = vmatpush2.xpose.msra.mxu0 0.0
        %3641 = vmatprep.subr.mxu0 0.0
        %3642 = vmatpush2.xpose.msra.mxu0 0.0
        %3643 = vmatprep.mubr.f32.mxu0 0.0
        %3644 = vmatmul.mubr.f32.gmra.mxu0 %v3575
        %v3645 = vpop.f32.mrf.mxu0
        %v3646 = vadd.f32 0.0, %v3645
        %v3647 = vpop.f32.mrf.mxu0
        %3648 = vdwg.mxu0
        %v3649 = vmul.f32 %v3646, 0.35355338
        %v3650 = vadd.f32 %v3649, %v3153
        %v3651 = vsel %vm2066, %v3650, -inf
        %3652 = vmax.xlane.f32.xlu0 %v3651
        %v3653 = vpop.xlane.xlu0 %3652
        %v3654 = vsub.f32 %v3650, %v3653
        %v3655 = vmul.f32 %v3654, 1.442695
        %v3656 = vpow.pop %v3655
        %v3657 = vsel %vm2066, %v3656, 0.0
        %3658 = vadd.xlane.f32.xlu0 %v3657
        %v3659 = vpop.xlane.xlu0 %3658
        %v3660 = vrcp.pop %v3659
        %v3661 = vmul.f32 %v3656, %v3660
        %3662 = vrot.lane.b32.xlu0 %v3235, 48
        %v3663 = vpop.permute.xlu0 %3662
        %v3666 = vsel %vm2066, %v3661, 0
        %3668 = vmatprep.subr.mxu0 0.0
        %3669 = vmatpush1.msra.mxu0 0.0
        %3670 = vmatprep.subr.mxu0 0.0
        %3671 = vmatpush1.msra.mxu0 0.0
        %3672 = vmatprep.subr.mxu0 0.0
        %3673 = vmatpush1.msra.mxu0 0.0
        %3674 = vmatprep.subr.mxu0 0.0
        %3675 = vmatpush1.msra.mxu0 0.0
        %3676 = vmatprep.subr.mxu0 0.0
        %3677 = vmatpush1.msra.mxu0 0.0
        %3678 = vmatprep.subr.mxu0 0.0
        %3679 = vmatpush1.msra.mxu0 0.0
        %3680 = vmatprep.subr.mxu0 0.0
        %3681 = vmatpush1.msra.mxu0 0.0
        %3682 = vmatprep.subr.mxu0 0.0
        %3683 = vmatpush1.msra.mxu0 0.0
        %3684 = vmatprep.subr.mxu0 0.0
        %3685 = vmatpush1.msra.mxu0 0.0
        %3686 = vmatprep.subr.mxu0 0.0
        %3687 = vmatpush1.msra.mxu0 0.0
        %3688 = vmatprep.subr.mxu0 0.0
        %3689 = vmatpush1.msra.mxu0 0.0
        %3690 = vmatprep.subr.mxu0 0.0
        %3691 = vmatpush1.msra.mxu0 0.0
        %3692 = vmatprep.subr.mxu0 0.0
        %3693 = vmatpush1.msra.mxu0 0.0
        %3694 = vmatprep.subr.mxu0 0.0
        %3695 = vmatpush1.msra.mxu0 0.0
        %3696 = vmatprep.subr.mxu0 0.0
        %3697 = vmatpush1.msra.mxu0 0.0
        %3698 = vmatprep.subr.mxu0 0.0
        %3699 = vmatpush1.msra.mxu0 %v3663
        %3700 = vmatprep.subr.mxu0 0.0
        %3701 = vmatpush2.msra.mxu0 0.0
        %3702 = vmatprep.subr.mxu0 0.0
        %3703 = vmatpush2.msra.mxu0 0.0
        %3704 = vmatprep.subr.mxu0 0.0
        %3705 = vmatpush2.msra.mxu0 0.0
        %3706 = vmatprep.subr.mxu0 0.0
        %3707 = vmatpush2.msra.mxu0 0.0
        %3708 = vmatprep.subr.mxu0 0.0
        %3709 = vmatpush2.msra.mxu0 0.0
        %3710 = vmatprep.subr.mxu0 0.0
        %3711 = vmatpush2.msra.mxu0 0.0
        %3712 = vmatprep.subr.mxu0 0.0
        %3713 = vmatpush2.msra.mxu0 0.0
        %3714 = vmatprep.subr.mxu0 0.0
        %3715 = vmatpush2.msra.mxu0 0.0
        %3716 = vmatprep.subr.mxu0 0.0
        %3717 = vmatpush2.msra.mxu0 0.0
        %3718 = vmatprep.subr.mxu0 0.0
        %3719 = vmatpush2.msra.mxu0 0.0
        %3720 = vmatprep.subr.mxu0 0.0
        %3721 = vmatpush2.msra.mxu0 0.0
        %3722 = vmatprep.subr.mxu0 0.0
        %3723 = vmatpush2.msra.mxu0 0.0
        %3724 = vmatprep.subr.mxu0 0.0
        %3725 = vmatpush2.msra.mxu0 0.0
        %3726 = vmatprep.subr.mxu0 0.0
        %3727 = vmatpush2.msra.mxu0 0.0
        %3728 = vmatprep.subr.mxu0 0.0
        %3729 = vmatpush2.msra.mxu0 0.0
        %3730 = vmatprep.subr.mxu0 0.0
        %3731 = vmatpush2.msra.mxu0 0.0
        %3732 = vmatprep.mubr.f32.mxu0 0.0
        %3733 = vmatmul.mubr.f32.gmra.mxu0 %v3666
        %v3734 = vpop.f32.mrf.mxu0
        %v3735 = vadd.f32 0.0, %v3734
        %v3736 = vpop.f32.mrf.mxu0
        %3737 = vdwg.mxu0
        %3738 = vrot.lane.b32.xlu0 %v3235, 104
        %v3739 = vpop.permute.xlu0 %3738
        %3740 = vrot.lane.b32.xlu0 %v3235, 72
        %v3741 = vpop.permute.xlu0 %3740
        %v3742 = vsel %vm2066, %v3739, 0
        %v3744 = vsel %vm2066, %v3741, 0
        %3746 = vmatprep.subr.mxu0 0.0
        %3747 = vmatpush1.xpose.msra.mxu0 0.0
        %3748 = vmatprep.subr.mxu0 0.0
        %3749 = vmatpush1.xpose.msra.mxu0 0.0
        %3750 = vmatprep.subr.mxu0 0.0
        %3751 = vmatpush1.xpose.msra.mxu0 0.0
        %3752 = vmatprep.subr.mxu0 0.0
        %3753 = vmatpush1.xpose.msra.mxu0 0.0
        %3754 = vmatprep.subr.mxu0 0.0
        %3755 = vmatpush1.xpose.msra.mxu0 0.0
        %3756 = vmatprep.subr.mxu0 0.0
        %3757 = vmatpush1.xpose.msra.mxu0 0.0
        %3758 = vmatprep.subr.mxu0 0.0
        %3759 = vmatpush1.xpose.msra.mxu0 0.0
        %3760 = vmatprep.subr.mxu0 0.0
        %3761 = vmatpush1.xpose.msra.mxu0 0.0
        %3762 = vmatprep.subr.mxu0 0.0
        %3763 = vmatpush1.xpose.msra.mxu0 0.0
        %3764 = vmatprep.subr.mxu0 0.0
        %3765 = vmatpush1.xpose.msra.mxu0 0.0
        %3766 = vmatprep.subr.mxu0 0.0
        %3767 = vmatpush1.xpose.msra.mxu0 0.0
        %3768 = vmatprep.subr.mxu0 0.0
        %3769 = vmatpush1.xpose.msra.mxu0 0.0
        %3770 = vmatprep.subr.mxu0 0.0
        %3771 = vmatpush1.xpose.msra.mxu0 0.0
        %3772 = vmatprep.subr.mxu0 0.0
        %3773 = vmatpush1.xpose.msra.mxu0 0.0
        %3774 = vmatprep.subr.mxu0 0.0
        %3775 = vmatpush1.xpose.msra.mxu0 0.0
        %3776 = vmatprep.subr.mxu0 0.0
        %3777 = vmatpush1.xpose.msra.mxu0 %v3744
        %3778 = vmatprep.subr.mxu0 0.0
        %3779 = vmatpush2.xpose.msra.mxu0 0.0
        %3780 = vmatprep.subr.mxu0 0.0
        %3781 = vmatpush2.xpose.msra.mxu0 0.0
        %3782 = vmatprep.subr.mxu0 0.0
        %3783 = vmatpush2.xpose.msra.mxu0 0.0
        %3784 = vmatprep.subr.mxu0 0.0
        %3785 = vmatpush2.xpose.msra.mxu0 0.0
        %3786 = vmatprep.subr.mxu0 0.0
        %3787 = vmatpush2.xpose.msra.mxu0 0.0
        %3788 = vmatprep.subr.mxu0 0.0
        %3789 = vmatpush2.xpose.msra.mxu0 0.0
        %3790 = vmatprep.subr.mxu0 0.0
        %3791 = vmatpush2.xpose.msra.mxu0 0.0
        %3792 = vmatprep.subr.mxu0 0.0
        %3793 = vmatpush2.xpose.msra.mxu0 0.0
        %3794 = vmatprep.subr.mxu0 0.0
        %3795 = vmatpush2.xpose.msra.mxu0 0.0
        %3796 = vmatprep.subr.mxu0 0.0
        %3797 = vmatpush2.xpose.msra.mxu0 0.0
        %3798 = vmatprep.subr.mxu0 0.0
        %3799 = vmatpush2.xpose.msra.mxu0 0.0
        %3800 = vmatprep.subr.mxu0 0.0
        %3801 = vmatpush2.xpose.msra.mxu0 0.0
        %3802 = vmatprep.subr.mxu0 0.0
        %3803 = vmatpush2.xpose.msra.mxu0 0.0
        %3804 = vmatprep.subr.mxu0 0.0
        %3805 = vmatpush2.xpose.msra.mxu0 0.0
        %3806 = vmatprep.subr.mxu0 0.0
        %3807 = vmatpush2.xpose.msra.mxu0 0.0
        %3808 = vmatprep.subr.mxu0 0.0
        %3809 = vmatpush2.xpose.msra.mxu0 0.0
        %3810 = vmatprep.mubr.f32.mxu0 0.0
        %3811 = vmatmul.mubr.f32.gmra.mxu0 %v3742
        %v3812 = vpop.f32.mrf.mxu0
        %v3813 = vadd.f32 0.0, %v3812
        %v3814 = vpop.f32.mrf.mxu0
        %3815 = vdwg.mxu0
        %v3816 = vmul.f32 %v3813, 0.35355338
        %v3817 = vadd.f32 %v3816, %v3153
        %v3818 = vsel %vm2066, %v3817, -inf
        %3819 = vmax.xlane.f32.xlu0 %v3818
        %v3820 = vpop.xlane.xlu0 %3819
        %v3821 = vsub.f32 %v3817, %v3820
        %v3822 = vmul.f32 %v3821, 1.442695
        %v3823 = vpow.pop %v3822
        %v3824 = vsel %vm2066, %v3823, 0.0
        %3825 = vadd.xlane.f32.xlu0 %v3824
        %v3826 = vpop.xlane.xlu0 %3825
        %v3827 = vrcp.pop %v3826
        %v3828 = vmul.f32 %v3823, %v3827
        %3829 = vrot.lane.b32.xlu0 %v3235, 40
        %v3830 = vpop.permute.xlu0 %3829
        %v3833 = vsel %vm2066, %v3828, 0
        %3835 = vmatprep.subr.mxu0 0.0
        %3836 = vmatpush1.msra.mxu0 0.0
        %3837 = vmatprep.subr.mxu0 0.0
        %3838 = vmatpush1.msra.mxu0 0.0
        %3839 = vmatprep.subr.mxu0 0.0
        %3840 = vmatpush1.msra.mxu0 0.0
        %3841 = vmatprep.subr.mxu0 0.0
        %3842 = vmatpush1.msra.mxu0 0.0
        %3843 = vmatprep.subr.mxu0 0.0
        %3844 = vmatpush1.msra.mxu0 0.0
        %3845 = vmatprep.subr.mxu0 0.0
        %3846 = vmatpush1.msra.mxu0 0.0
        %3847 = vmatprep.subr.mxu0 0.0
        %3848 = vmatpush1.msra.mxu0 0.0
        %3849 = vmatprep.subr.mxu0 0.0
        %3850 = vmatpush1.msra.mxu0 0.0
        %3851 = vmatprep.subr.mxu0 0.0
        %3852 = vmatpush1.msra.mxu0 0.0
        %3853 = vmatprep.subr.mxu0 0.0
        %3854 = vmatpush1.msra.mxu0 0.0
        %3855 = vmatprep.subr.mxu0 0.0
        %3856 = vmatpush1.msra.mxu0 0.0
        %3857 = vmatprep.subr.mxu0 0.0
        %3858 = vmatpush1.msra.mxu0 0.0
        %3859 = vmatprep.subr.mxu0 0.0
        %3860 = vmatpush1.msra.mxu0 0.0
        %3861 = vmatprep.subr.mxu0 0.0
        %3862 = vmatpush1.msra.mxu0 0.0
        %3863 = vmatprep.subr.mxu0 0.0
        %3864 = vmatpush1.msra.mxu0 0.0
        %3865 = vmatprep.subr.mxu0 0.0
        %3866 = vmatpush1.msra.mxu0 %v3830
        %3867 = vmatprep.subr.mxu0 0.0
        %3868 = vmatpush2.msra.mxu0 0.0
        %3869 = vmatprep.subr.mxu0 0.0
        %3870 = vmatpush2.msra.mxu0 0.0
        %3871 = vmatprep.subr.mxu0 0.0
        %3872 = vmatpush2.msra.mxu0 0.0
        %3873 = vmatprep.subr.mxu0 0.0
        %3874 = vmatpush2.msra.mxu0 0.0
        %3875 = vmatprep.subr.mxu0 0.0
        %3876 = vmatpush2.msra.mxu0 0.0
        %3877 = vmatprep.subr.mxu0 0.0
        %3878 = vmatpush2.msra.mxu0 0.0
        %3879 = vmatprep.subr.mxu0 0.0
        %3880 = vmatpush2.msra.mxu0 0.0
        %3881 = vmatprep.subr.mxu0 0.0
        %3882 = vmatpush2.msra.mxu0 0.0
        %3883 = vmatprep.subr.mxu0 0.0
        %3884 = vmatpush2.msra.mxu0 0.0
        %3885 = vmatprep.subr.mxu0 0.0
        %3886 = vmatpush2.msra.mxu0 0.0
        %3887 = vmatprep.subr.mxu0 0.0
        %3888 = vmatpush2.msra.mxu0 0.0
        %3889 = vmatprep.subr.mxu0 0.0
        %3890 = vmatpush2.msra.mxu0 0.0
        %3891 = vmatprep.subr.mxu0 0.0
        %3892 = vmatpush2.msra.mxu0 0.0
        %3893 = vmatprep.subr.mxu0 0.0
        %3894 = vmatpush2.msra.mxu0 0.0
        %3895 = vmatprep.subr.mxu0 0.0
        %3896 = vmatpush2.msra.mxu0 0.0
        %3897 = vmatprep.subr.mxu0 0.0
        %3898 = vmatpush2.msra.mxu0 0.0
        %3899 = vmatprep.mubr.f32.mxu0 0.0
        %3900 = vmatmul.mubr.f32.gmra.mxu0 %v3833
        %v3901 = vpop.f32.mrf.mxu0
        %v3902 = vadd.f32 0.0, %v3901
        %v3903 = vpop.f32.mrf.mxu0
        %3904 = vdwg.mxu0
        %3906 = vrot.lane.b32.xlu0 %v3568, 8
        %v3907 = vpop.permute.xlu0 %3906
        %3910 = vrot.lane.b32.xlu0 %v3735, 16
        %v3911 = vpop.permute.xlu0 %3910
        %3914 = vrot.lane.b32.xlu0 %v3902, 24
        %v3915 = vpop.permute.xlu0 %3914
        %v3917 = vsel %vm2066, %v3401, %v3907
        %v3918 = vsel %vm2740, %v3917, %v3911
        %v3919 = vsel %vm2742, %v3918, %v3915
        %v3920 = vld [vmem:[%s45] sm:$0xff]
        %v3921 = vld [vmem:[%s45 + $0x8] sm:$0xff]
        %v3922 = vld [vmem:[%s45 + $0x10] sm:$0xff]
        %v3923 = vld [vmem:[%s45 + $0x18] sm:$0xff]
        %v3924 = vld [vmem:[%s41] sm:$0x1]
        %v3926 = vlaneseq
        %v3927 = vshrl.u32 %v3926, 7
        %v3928 = vsub.s32 0, %v3927
        %v3929 = vrot.slane %v3924, %v3928
        %v3932 = vsel %vm1989, %v3919, 0
        %3934 = vmatprep.subr.mxu0 0.0
        %3935 = vmatpush1.msra.mxu0 0.0
        %3936 = vmatprep.subr.mxu0 0.0
        %3937 = vmatpush1.msra.mxu0 0.0
        %3938 = vmatprep.subr.mxu0 0.0
        %3939 = vmatpush1.msra.mxu0 0.0
        %3940 = vmatprep.subr.mxu0 0.0
        %3941 = vmatpush1.msra.mxu0 0.0
        %3942 = vmatprep.subr.mxu0 0.0
        %3943 = vmatpush1.msra.mxu0 0.0
        %3944 = vmatprep.subr.mxu0 0.0
        %3945 = vmatpush1.msra.mxu0 0.0
        %3946 = vmatprep.subr.mxu0 0.0
        %3947 = vmatpush1.msra.mxu0 0.0
        %3948 = vmatprep.subr.mxu0 0.0
        %3949 = vmatpush1.msra.mxu0 0.0
        %3950 = vmatprep.subr.mxu0 0.0
        %3951 = vmatpush1.msra.mxu0 0.0
        %3952 = vmatprep.subr.mxu0 0.0
        %3953 = vmatpush1.msra.mxu0 0.0
        %3954 = vmatprep.subr.mxu0 0.0
        %3955 = vmatpush1.msra.mxu0 0.0
        %3956 = vmatprep.subr.mxu0 0.0
        %3957 = vmatpush1.msra.mxu0 0.0
        %3958 = vmatprep.subr.mxu0 0.0
        %3959 = vmatpush1.msra.mxu0 %v3923
        %3960 = vmatprep.subr.mxu0 0.0
        %3961 = vmatpush1.msra.mxu0 %v3922
        %3962 = vmatprep.subr.mxu0 0.0
        %3963 = vmatpush1.msra.mxu0 %v3921
        %3964 = vmatprep.subr.mxu0 0.0
        %3965 = vmatpush1.msra.mxu0 %v3920
        %3966 = vmatprep.subr.mxu0 0.0
        %3967 = vmatpush2.msra.mxu0 0.0
        %3968 = vmatprep.subr.mxu0 0.0
        %3969 = vmatpush2.msra.mxu0 0.0
        %3970 = vmatprep.subr.mxu0 0.0
        %3971 = vmatpush2.msra.mxu0 0.0
        %3972 = vmatprep.subr.mxu0 0.0
        %3973 = vmatpush2.msra.mxu0 0.0
        %3974 = vmatprep.subr.mxu0 0.0
        %3975 = vmatpush2.msra.mxu0 0.0
        %3976 = vmatprep.subr.mxu0 0.0
        %3977 = vmatpush2.msra.mxu0 0.0
        %3978 = vmatprep.subr.mxu0 0.0
        %3979 = vmatpush2.msra.mxu0 0.0
        %3980 = vmatprep.subr.mxu0 0.0
        %3981 = vmatpush2.msra.mxu0 0.0
        %3982 = vmatprep.subr.mxu0 0.0
        %3983 = vmatpush2.msra.mxu0 0.0
        %3984 = vmatprep.subr.mxu0 0.0
        %3985 = vmatpush2.msra.mxu0 0.0
        %3986 = vmatprep.subr.mxu0 0.0
        %3987 = vmatpush2.msra.mxu0 0.0
        %3988 = vmatprep.subr.mxu0 0.0
        %3989 = vmatpush2.msra.mxu0 0.0
        %3990 = vmatprep.subr.mxu0 0.0
        %3991 = vmatpush2.msra.mxu0 0.0
        %3992 = vmatprep.subr.mxu0 0.0
        %3993 = vmatpush2.msra.mxu0 0.0
        %3994 = vmatprep.subr.mxu0 0.0
        %3995 = vmatpush2.msra.mxu0 0.0
        %3996 = vmatprep.subr.mxu0 0.0
        %3997 = vmatpush2.msra.mxu0 0.0
        %3998 = vmatprep.mubr.f32.mxu0 0.0
        %3999 = vmatmul.mubr.f32.gmra.mxu0 %v3932
        %v4000 = vpop.f32.mrf.mxu0
        %v4001 = vadd.f32 %v3929, %v4000
        %v4002 = vpop.f32.mrf.mxu0
        %4003 = vdwg.mxu0
        %v4004 = vadd.f32 %v3151, %v4001
        %v4005 = vsel %vm1989, %v4004, 0.0
        %4006 = vadd.xlane.f32.xlu0 %v4005
        %v4007 = vpop.xlane.xlu0 %4006
        %v4008 = vmul.f32 %v4007, %v2832
        %v4009 = vsub.f32 %v4004, %v4008
        %v4010 = vmul.f32 %v4009, %v4009
        %v4011 = vsel %vm1989, %v4010, 0.0
        %4012 = vadd.xlane.f32.xlu0 %v4011
        %v4013 = vpop.xlane.xlu0 %4012
        %v4014 = vmul.f32 %v4013, %v2832
        %v4015 = vadd.f32 %v4014, 1e-05
        %v4016 = vrsqrt.pop %v4015
        %v4017 = vmul.f32 %v4009, %v4016
        %v4018 = vld [vmem:[%s31] sm:$0x1]
        %v4020 = vlaneseq
        %v4021 = vshrl.u32 %v4020, 7
        %v4022 = vsub.s32 0, %v4021
        %v4023 = vrot.slane %v4018, %v4022
        %v4025 = vmul.f32 %v4017, %v4023
        %v4026 = vld [vmem:[%s29] sm:$0x1]
        %v4028 = vlaneseq
        %v4029 = vshrl.u32 %v4028, 7
        %v4030 = vsub.s32 0, %v4029
        %v4031 = vrot.slane %v4026, %v4030
        %v4033 = vadd.f32 %v4025, %v4031
        %v4034 = vld [vmem:[%s19] sm:$0xff]
        %v4035 = vld [vmem:[%s19 + $0x8] sm:$0xff]
        %v4036 = vld [vmem:[%s19 + $0x10] sm:$0xff]
        %v4037 = vld [vmem:[%s19 + $0x18] sm:$0xff]
        %v4038 = vld [vmem:[%s15] sm:$0x1]
        %v4040 = vlaneseq
        %v4041 = vshrl.u32 %v4040, 7
        %v4042 = vsub.s32 0, %v4041
        %v4043 = vrot.slane %v4038, %v4042
        %v4046 = vsel %vm1989, %v4033, 0
        %4048 = vmatprep.subr.mxu0 0.0
        %4049 = vmatpush1.msra.mxu0 0.0
        %4050 = vmatprep.subr.mxu0 0.0
        %4051 = vmatpush1.msra.mxu0 0.0
        %4052 = vmatprep.subr.mxu0 0.0
        %4053 = vmatpush1.msra.mxu0 0.0
        %4054 = vmatprep.subr.mxu0 0.0
        %4055 = vmatpush1.msra.mxu0 0.0
        %4056 = vmatprep.subr.mxu0 0.0
        %4057 = vmatpush1.msra.mxu0 0.0
        %4058 = vmatprep.subr.mxu0 0.0
        %4059 = vmatpush1.msra.mxu0 0.0
        %4060 = vmatprep.subr.mxu0 0.0
        %4061 = vmatpush1.msra.mxu0 0.0
        %4062 = vmatprep.subr.mxu0 0.0
        %4063 = vmatpush1.msra.mxu0 0.0
        %4064 = vmatprep.subr.mxu0 0.0
        %4065 = vmatpush1.msra.mxu0 0.0
        %4066 = vmatprep.subr.mxu0 0.0
        %4067 = vmatpush1.msra.mxu0 0.0
        %4068 = vmatprep.subr.mxu0 0.0
        %4069 = vmatpush1.msra.mxu0 0.0
        %4070 = vmatprep.subr.mxu0 0.0
        %4071 = vmatpush1.msra.mxu0 0.0
        %4072 = vmatprep.subr.mxu0 0.0
        %4073 = vmatpush1.msra.mxu0 %v4037
        %4074 = vmatprep.subr.mxu0 0.0
        %4075 = vmatpush1.msra.mxu0 %v4036
        %4076 = vmatprep.subr.mxu0 0.0
        %4077 = vmatpush1.msra.mxu0 %v4035
        %4078 = vmatprep.subr.mxu0 0.0
        %4079 = vmatpush1.msra.mxu0 %v4034
        %4080 = vmatprep.subr.mxu0 0.0
        %4081 = vmatpush2.msra.mxu0 0.0
        %4082 = vmatprep.subr.mxu0 0.0
        %4083 = vmatpush2.msra.mxu0 0.0
        %4084 = vmatprep.subr.mxu0 0.0
        %4085 = vmatpush2.msra.mxu0 0.0
        %4086 = vmatprep.subr.mxu0 0.0
        %4087 = vmatpush2.msra.mxu0 0.0
        %4088 = vmatprep.subr.mxu0 0.0
        %4089 = vmatpush2.msra.mxu0 0.0
        %4090 = vmatprep.subr.mxu0 0.0
        %4091 = vmatpush2.msra.mxu0 0.0
        %4092 = vmatprep.subr.mxu0 0.0
        %4093 = vmatpush2.msra.mxu0 0.0
        %4094 = vmatprep.subr.mxu0 0.0
        %4095 = vmatpush2.msra.mxu0 0.0
        %4096 = vmatprep.subr.mxu0 0.0
        %4097 = vmatpush2.msra.mxu0 0.0
        %4098 = vmatprep.subr.mxu0 0.0
        %4099 = vmatpush2.msra.mxu0 0.0
        %4100 = vmatprep.subr.mxu0 0.0
        %4101 = vmatpush2.msra.mxu0 0.0
        %4102 = vmatprep.subr.mxu0 0.0
        %4103 = vmatpush2.msra.mxu0 0.0
        %4104 = vmatprep.subr.mxu0 0.0
        %4105 = vmatpush2.msra.mxu0 0.0
        %4106 = vmatprep.subr.mxu0 0.0
        %4107 = vmatpush2.msra.mxu0 0.0
        %4108 = vmatprep.subr.mxu0 0.0
        %4109 = vmatpush2.msra.mxu0 0.0
        %4110 = vmatprep.subr.mxu0 0.0
        %4111 = vmatpush2.msra.mxu0 0.0
        %4112 = vmatprep.mubr.f32.mxu0 0.0
        %4113 = vmatmul.mubr.f32.gmra.mxu0 %v4046
        %v4114 = vpop.f32.mrf.mxu0
        %v4115 = vadd.f32 %v4043, %v4114
        %v4116 = vpop.f32.mrf.mxu0
        %4117 = vdwg.mxu0
        %4122 = vrot.lane.b32.xlu0 %v4034, 96
        %v4123 = vpop.permute.xlu0 %4122
        %4124 = vrot.lane.b32.xlu0 %v4035, 96
        %v4125 = vpop.permute.xlu0 %4124
        %4126 = vrot.lane.b32.xlu0 %v4036, 96
        %v4127 = vpop.permute.xlu0 %4126
        %4128 = vrot.lane.b32.xlu0 %v4037, 96
        %v4129 = vpop.permute.xlu0 %4128
        %4134 = vrot.lane.b32.xlu0 %v4043, 96
        %v4135 = vpop.permute.xlu0 %4134
        %v4138 = vsel %vm1989, %v3062, 0
        %4140 = vmatprep.subr.mxu0 0.0
        %4141 = vmatpush1.msra.mxu0 0.0
        %4142 = vmatprep.subr.mxu0 0.0
        %4143 = vmatpush1.msra.mxu0 0.0
        %4144 = vmatprep.subr.mxu0 0.0
        %4145 = vmatpush1.msra.mxu0 0.0
        %4146 = vmatprep.subr.mxu0 0.0
        %4147 = vmatpush1.msra.mxu0 0.0
        %4148 = vmatprep.subr.mxu0 0.0
        %4149 = vmatpush1.msra.mxu0 0.0
        %4150 = vmatprep.subr.mxu0 0.0
        %4151 = vmatpush1.msra.mxu0 0.0
        %4152 = vmatprep.subr.mxu0 0.0
        %4153 = vmatpush1.msra.mxu0 0.0
        %4154 = vmatprep.subr.mxu0 0.0
        %4155 = vmatpush1.msra.mxu0 0.0
        %4156 = vmatprep.subr.mxu0 0.0
        %4157 = vmatpush1.msra.mxu0 0.0
        %4158 = vmatprep.subr.mxu0 0.0
        %4159 = vmatpush1.msra.mxu0 0.0
        %4160 = vmatprep.subr.mxu0 0.0
        %4161 = vmatpush1.msra.mxu0 0.0
        %4162 = vmatprep.subr.mxu0 0.0
        %4163 = vmatpush1.msra.mxu0 0.0
        %4164 = vmatprep.subr.mxu0 0.0
        %4165 = vmatpush1.msra.mxu0 %v4129
        %4166 = vmatprep.subr.mxu0 0.0
        %4167 = vmatpush1.msra.mxu0 %v4127
        %4168 = vmatprep.subr.mxu0 0.0
        %4169 = vmatpush1.msra.mxu0 %v4125
        %4170 = vmatprep.subr.mxu0 0.0
        %4171 = vmatpush1.msra.mxu0 %v4123
        %4172 = vmatprep.subr.mxu0 0.0
        %4173 = vmatpush2.msra.mxu0 0.0
        %4174 = vmatprep.subr.mxu0 0.0
        %4175 = vmatpush2.msra.mxu0 0.0
        %4176 = vmatprep.subr.mxu0 0.0
        %4177 = vmatpush2.msra.mxu0 0.0
        %4178 = vmatprep.subr.mxu0 0.0
        %4179 = vmatpush2.msra.mxu0 0.0
        %4180 = vmatprep.subr.mxu0 0.0
        %4181 = vmatpush2.msra.mxu0 0.0
        %4182 = vmatprep.subr.mxu0 0.0
        %4183 = vmatpush2.msra.mxu0 0.0
        %4184 = vmatprep.subr.mxu0 0.0
        %4185 = vmatpush2.msra.mxu0 0.0
        %4186 = vmatprep.subr.mxu0 0.0
        %4187 = vmatpush2.msra.mxu0 0.0
        %4188 = vmatprep.subr.mxu0 0.0
        %4189 = vmatpush2.msra.mxu0 0.0
        %4190 = vmatprep.subr.mxu0 0.0
        %4191 = vmatpush2.msra.mxu0 0.0
        %4192 = vmatprep.subr.mxu0 0.0
        %4193 = vmatpush2.msra.mxu0 0.0
        %4194 = vmatprep.subr.mxu0 0.0
        %4195 = vmatpush2.msra.mxu0 0.0
        %4196 = vmatprep.subr.mxu0 0.0
        %4197 = vmatpush2.msra.mxu0 0.0
        %4198 = vmatprep.subr.mxu0 0.0
        %4199 = vmatpush2.msra.mxu0 0.0
        %4200 = vmatprep.subr.mxu0 0.0
        %4201 = vmatpush2.msra.mxu0 0.0
        %4202 = vmatprep.subr.mxu0 0.0
        %4203 = vmatpush2.msra.mxu0 0.0
        %4204 = vmatprep.mubr.f32.mxu0 0.0
        %4205 = vmatmul.mubr.f32.gmra.mxu0 %v4138
        %v4206 = vpop.f32.mrf.mxu0
        %v4207 = vadd.f32 %v4135, %v4206
        %v4208 = vpop.f32.mrf.mxu0
        %4209 = vdwg.mxu0
        %v4211 = vsel %vm2066, %v4115, 0
        %v4214 = vsel %vm2066, %v4207, 0
        %4216 = vmatprep.subr.mxu0 0.0
        %4217 = vmatpush1.xpose.msra.mxu0 0.0
        %4218 = vmatprep.subr.mxu0 0.0
        %4219 = vmatpush1.xpose.msra.mxu0 0.0
        %4220 = vmatprep.subr.mxu0 0.0
        %4221 = vmatpush1.xpose.msra.mxu0 0.0
        %4222 = vmatprep.subr.mxu0 0.0
        %4223 = vmatpush1.xpose.msra.mxu0 0.0
        %4224 = vmatprep.subr.mxu0 0.0
        %4225 = vmatpush1.xpose.msra.mxu0 0.0
        %4226 = vmatprep.subr.mxu0 0.0
        %4227 = vmatpush1.xpose.msra.mxu0 0.0
        %4228 = vmatprep.subr.mxu0 0.0
        %4229 = vmatpush1.xpose.msra.mxu0 0.0
        %4230 = vmatprep.subr.mxu0 0.0
        %4231 = vmatpush1.xpose.msra.mxu0 0.0
        %4232 = vmatprep.subr.mxu0 0.0
        %4233 = vmatpush1.xpose.msra.mxu0 0.0
        %4234 = vmatprep.subr.mxu0 0.0
        %4235 = vmatpush1.xpose.msra.mxu0 0.0
        %4236 = vmatprep.subr.mxu0 0.0
        %4237 = vmatpush1.xpose.msra.mxu0 0.0
        %4238 = vmatprep.subr.mxu0 0.0
        %4239 = vmatpush1.xpose.msra.mxu0 0.0
        %4240 = vmatprep.subr.mxu0 0.0
        %4241 = vmatpush1.xpose.msra.mxu0 0.0
        %4242 = vmatprep.subr.mxu0 0.0
        %4243 = vmatpush1.xpose.msra.mxu0 0.0
        %4244 = vmatprep.subr.mxu0 0.0
        %4245 = vmatpush1.xpose.msra.mxu0 0.0
        %4246 = vmatprep.subr.mxu0 0.0
        %4247 = vmatpush1.xpose.msra.mxu0 %v4214
        %4248 = vmatprep.subr.mxu0 0.0
        %4249 = vmatpush2.xpose.msra.mxu0 0.0
        %4250 = vmatprep.subr.mxu0 0.0
        %4251 = vmatpush2.xpose.msra.mxu0 0.0
        %4252 = vmatprep.subr.mxu0 0.0
        %4253 = vmatpush2.xpose.msra.mxu0 0.0
        %4254 = vmatprep.subr.mxu0 0.0
        %4255 = vmatpush2.xpose.msra.mxu0 0.0
        %4256 = vmatprep.subr.mxu0 0.0
        %4257 = vmatpush2.xpose.msra.mxu0 0.0
        %4258 = vmatprep.subr.mxu0 0.0
        %4259 = vmatpush2.xpose.msra.mxu0 0.0
        %4260 = vmatprep.subr.mxu0 0.0
        %4261 = vmatpush2.xpose.msra.mxu0 0.0
        %4262 = vmatprep.subr.mxu0 0.0
        %4263 = vmatpush2.xpose.msra.mxu0 0.0
        %4264 = vmatprep.subr.mxu0 0.0
        %4265 = vmatpush2.xpose.msra.mxu0 0.0
        %4266 = vmatprep.subr.mxu0 0.0
        %4267 = vmatpush2.xpose.msra.mxu0 0.0
        %4268 = vmatprep.subr.mxu0 0.0
        %4269 = vmatpush2.xpose.msra.mxu0 0.0
        %4270 = vmatprep.subr.mxu0 0.0
        %4271 = vmatpush2.xpose.msra.mxu0 0.0
        %4272 = vmatprep.subr.mxu0 0.0
        %4273 = vmatpush2.xpose.msra.mxu0 0.0
        %4274 = vmatprep.subr.mxu0 0.0
        %4275 = vmatpush2.xpose.msra.mxu0 0.0
        %4276 = vmatprep.subr.mxu0 0.0
        %4277 = vmatpush2.xpose.msra.mxu0 0.0
        %4278 = vmatprep.subr.mxu0 0.0
        %4279 = vmatpush2.xpose.msra.mxu0 0.0
        %4280 = vmatprep.mubr.f32.mxu0 0.0
        %4281 = vmatmul.mubr.f32.gmra.mxu0 %v4211
        %v4282 = vpop.f32.mrf.mxu0
        %v4283 = vadd.f32 0.0, %v4282
        %v4284 = vpop.f32.mrf.mxu0
        %4285 = vdwg.mxu0
        %v4286 = vmul.f32 %v4283, 0.35355338
        %v4287 = vadd.f32 %v4286, %v3152
        %v4288 = vsel %vm2066, %v4287, -inf
        %4289 = vmax.xlane.f32.xlu0 %v4288
        %v4290 = vpop.xlane.xlu0 %4289
        %v4291 = vsub.f32 %v4287, %v4290
        %v4292 = vmul.f32 %v4291, 1.442695
        %v4293 = vpow.pop %v4292
        %v4294 = vsel %vm2066, %v4293, 0.0
        %4295 = vadd.xlane.f32.xlu0 %v4294
        %v4296 = vpop.xlane.xlu0 %4295
        %v4297 = vrcp.pop %v4296
        %v4298 = vmul.f32 %v4293, %v4297
        %4299 = vrot.lane.b32.xlu0 %v4207, 96
        %v4300 = vpop.permute.xlu0 %4299
        %v4303 = vsel %vm2066, %v4298, 0
        %4305 = vmatprep.subr.mxu0 0.0
        %4306 = vmatpush1.msra.mxu0 0.0
        %4307 = vmatprep.subr.mxu0 0.0
        %4308 = vmatpush1.msra.mxu0 0.0
        %4309 = vmatprep.subr.mxu0 0.0
        %4310 = vmatpush1.msra.mxu0 0.0
        %4311 = vmatprep.subr.mxu0 0.0
        %4312 = vmatpush1.msra.mxu0 0.0
        %4313 = vmatprep.subr.mxu0 0.0
        %4314 = vmatpush1.msra.mxu0 0.0
        %4315 = vmatprep.subr.mxu0 0.0
        %4316 = vmatpush1.msra.mxu0 0.0
        %4317 = vmatprep.subr.mxu0 0.0
        %4318 = vmatpush1.msra.mxu0 0.0
        %4319 = vmatprep.subr.mxu0 0.0
        %4320 = vmatpush1.msra.mxu0 0.0
        %4321 = vmatprep.subr.mxu0 0.0
        %4322 = vmatpush1.msra.mxu0 0.0
        %4323 = vmatprep.subr.mxu0 0.0
        %4324 = vmatpush1.msra.mxu0 0.0
        %4325 = vmatprep.subr.mxu0 0.0
        %4326 = vmatpush1.msra.mxu0 0.0
        %4327 = vmatprep.subr.mxu0 0.0
        %4328 = vmatpush1.msra.mxu0 0.0
        %4329 = vmatprep.subr.mxu0 0.0
        %4330 = vmatpush1.msra.mxu0 0.0
        %4331 = vmatprep.subr.mxu0 0.0
        %4332 = vmatpush1.msra.mxu0 0.0
        %4333 = vmatprep.subr.mxu0 0.0
        %4334 = vmatpush1.msra.mxu0 0.0
        %4335 = vmatprep.subr.mxu0 0.0
        %4336 = vmatpush1.msra.mxu0 %v4300
        %4337 = vmatprep.subr.mxu0 0.0
        %4338 = vmatpush2.msra.mxu0 0.0
        %4339 = vmatprep.subr.mxu0 0.0
        %4340 = vmatpush2.msra.mxu0 0.0
        %4341 = vmatprep.subr.mxu0 0.0
        %4342 = vmatpush2.msra.mxu0 0.0
        %4343 = vmatprep.subr.mxu0 0.0
        %4344 = vmatpush2.msra.mxu0 0.0
        %4345 = vmatprep.subr.mxu0 0.0
        %4346 = vmatpush2.msra.mxu0 0.0
        %4347 = vmatprep.subr.mxu0 0.0
        %4348 = vmatpush2.msra.mxu0 0.0
        %4349 = vmatprep.subr.mxu0 0.0
        %4350 = vmatpush2.msra.mxu0 0.0
        %4351 = vmatprep.subr.mxu0 0.0
        %4352 = vmatpush2.msra.mxu0 0.0
        %4353 = vmatprep.subr.mxu0 0.0
        %4354 = vmatpush2.msra.mxu0 0.0
        %4355 = vmatprep.subr.mxu0 0.0
        %4356 = vmatpush2.msra.mxu0 0.0
        %4357 = vmatprep.subr.mxu0 0.0
        %4358 = vmatpush2.msra.mxu0 0.0
        %4359 = vmatprep.subr.mxu0 0.0
        %4360 = vmatpush2.msra.mxu0 0.0
        %4361 = vmatprep.subr.mxu0 0.0
        %4362 = vmatpush2.msra.mxu0 0.0
        %4363 = vmatprep.subr.mxu0 0.0
        %4364 = vmatpush2.msra.mxu0 0.0
        %4365 = vmatprep.subr.mxu0 0.0
        %4366 = vmatpush2.msra.mxu0 0.0
        %4367 = vmatprep.subr.mxu0 0.0
        %4368 = vmatpush2.msra.mxu0 0.0
        %4369 = vmatprep.mubr.f32.mxu0 0.0
        %4370 = vmatmul.mubr.f32.gmra.mxu0 %v4303
        %v4371 = vpop.f32.mrf.mxu0
        %v4372 = vadd.f32 0.0, %v4371
        %v4373 = vpop.f32.mrf.mxu0
        %4374 = vdwg.mxu0
        %4375 = vrot.lane.b32.xlu0 %v4115, 120
        %v4376 = vpop.permute.xlu0 %4375
        %4377 = vrot.lane.b32.xlu0 %v4207, 120
        %v4378 = vpop.permute.xlu0 %4377
        %v4379 = vsel %vm2066, %v4376, 0
        %v4381 = vsel %vm2066, %v4378, 0
        %4383 = vmatprep.subr.mxu0 0.0
        %4384 = vmatpush1.xpose.msra.mxu0 0.0
        %4385 = vmatprep.subr.mxu0 0.0
        %4386 = vmatpush1.xpose.msra.mxu0 0.0
        %4387 = vmatprep.subr.mxu0 0.0
        %4388 = vmatpush1.xpose.msra.mxu0 0.0
        %4389 = vmatprep.subr.mxu0 0.0
        %4390 = vmatpush1.xpose.msra.mxu0 0.0
        %4391 = vmatprep.subr.mxu0 0.0
        %4392 = vmatpush1.xpose.msra.mxu0 0.0
        %4393 = vmatprep.subr.mxu0 0.0
        %4394 = vmatpush1.xpose.msra.mxu0 0.0
        %4395 = vmatprep.subr.mxu0 0.0
        %4396 = vmatpush1.xpose.msra.mxu0 0.0
        %4397 = vmatprep.subr.mxu0 0.0
        %4398 = vmatpush1.xpose.msra.mxu0 0.0
        %4399 = vmatprep.subr.mxu0 0.0
        %4400 = vmatpush1.xpose.msra.mxu0 0.0
        %4401 = vmatprep.subr.mxu0 0.0
        %4402 = vmatpush1.xpose.msra.mxu0 0.0
        %4403 = vmatprep.subr.mxu0 0.0
        %4404 = vmatpush1.xpose.msra.mxu0 0.0
        %4405 = vmatprep.subr.mxu0 0.0
        %4406 = vmatpush1.xpose.msra.mxu0 0.0
        %4407 = vmatprep.subr.mxu0 0.0
        %4408 = vmatpush1.xpose.msra.mxu0 0.0
        %4409 = vmatprep.subr.mxu0 0.0
        %4410 = vmatpush1.xpose.msra.mxu0 0.0
        %4411 = vmatprep.subr.mxu0 0.0
        %4412 = vmatpush1.xpose.msra.mxu0 0.0
        %4413 = vmatprep.subr.mxu0 0.0
        %4414 = vmatpush1.xpose.msra.mxu0 %v4381
        %4415 = vmatprep.subr.mxu0 0.0
        %4416 = vmatpush2.xpose.msra.mxu0 0.0
        %4417 = vmatprep.subr.mxu0 0.0
        %4418 = vmatpush2.xpose.msra.mxu0 0.0
        %4419 = vmatprep.subr.mxu0 0.0
        %4420 = vmatpush2.xpose.msra.mxu0 0.0
        %4421 = vmatprep.subr.mxu0 0.0
        %4422 = vmatpush2.xpose.msra.mxu0 0.0
        %4423 = vmatprep.subr.mxu0 0.0
        %4424 = vmatpush2.xpose.msra.mxu0 0.0
        %4425 = vmatprep.subr.mxu0 0.0
        %4426 = vmatpush2.xpose.msra.mxu0 0.0
        %4427 = vmatprep.subr.mxu0 0.0
        %4428 = vmatpush2.xpose.msra.mxu0 0.0
        %4429 = vmatprep.subr.mxu0 0.0
        %4430 = vmatpush2.xpose.msra.mxu0 0.0
        %4431 = vmatprep.subr.mxu0 0.0
        %4432 = vmatpush2.xpose.msra.mxu0 0.0
        %4433 = vmatprep.subr.mxu0 0.0
        %4434 = vmatpush2.xpose.msra.mxu0 0.0
        %4435 = vmatprep.subr.mxu0 0.0
        %4436 = vmatpush2.xpose.msra.mxu0 0.0
        %4437 = vmatprep.subr.mxu0 0.0
        %4438 = vmatpush2.xpose.msra.mxu0 0.0
        %4439 = vmatprep.subr.mxu0 0.0
        %4440 = vmatpush2.xpose.msra.mxu0 0.0
        %4441 = vmatprep.subr.mxu0 0.0
        %4442 = vmatpush2.xpose.msra.mxu0 0.0
        %4443 = vmatprep.subr.mxu0 0.0
        %4444 = vmatpush2.xpose.msra.mxu0 0.0
        %4445 = vmatprep.subr.mxu0 0.0
        %4446 = vmatpush2.xpose.msra.mxu0 0.0
        %4447 = vmatprep.mubr.f32.mxu0 0.0
        %4448 = vmatmul.mubr.f32.gmra.mxu0 %v4379
        %v4449 = vpop.f32.mrf.mxu0
        %v4450 = vadd.f32 0.0, %v4449
        %v4451 = vpop.f32.mrf.mxu0
        %4452 = vdwg.mxu0
        %v4453 = vmul.f32 %v4450, 0.35355338
        %v4454 = vadd.f32 %v4453, %v3152
        %v4455 = vsel %vm2066, %v4454, -inf
        %4456 = vmax.xlane.f32.xlu0 %v4455
        %v4457 = vpop.xlane.xlu0 %4456
        %v4458 = vsub.f32 %v4454, %v4457
        %v4459 = vmul.f32 %v4458, 1.442695
        %v4460 = vpow.pop %v4459
        %v4461 = vsel %vm2066, %v4460, 0.0
        %4462 = vadd.xlane.f32.xlu0 %v4461
        %v4463 = vpop.xlane.xlu0 %4462
        %v4464 = vrcp.pop %v4463
        %v4465 = vmul.f32 %v4460, %v4464
        %4466 = vrot.lane.b32.xlu0 %v4207, 88
        %v4467 = vpop.permute.xlu0 %4466
        %v4470 = vsel %vm2066, %v4465, 0
        %4472 = vmatprep.subr.mxu0 0.0
        %4473 = vmatpush1.msra.mxu0 0.0
        %4474 = vmatprep.subr.mxu0 0.0
        %4475 = vmatpush1.msra.mxu0 0.0
        %4476 = vmatprep.subr.mxu0 0.0
        %4477 = vmatpush1.msra.mxu0 0.0
        %4478 = vmatprep.subr.mxu0 0.0
        %4479 = vmatpush1.msra.mxu0 0.0
        %4480 = vmatprep.subr.mxu0 0.0
        %4481 = vmatpush1.msra.mxu0 0.0
        %4482 = vmatprep.subr.mxu0 0.0
        %4483 = vmatpush1.msra.mxu0 0.0
        %4484 = vmatprep.subr.mxu0 0.0
        %4485 = vmatpush1.msra.mxu0 0.0
        %4486 = vmatprep.subr.mxu0 0.0
        %4487 = vmatpush1.msra.mxu0 0.0
        %4488 = vmatprep.subr.mxu0 0.0
        %4489 = vmatpush1.msra.mxu0 0.0
        %4490 = vmatprep.subr.mxu0 0.0
        %4491 = vmatpush1.msra.mxu0 0.0
        %4492 = vmatprep.subr.mxu0 0.0
        %4493 = vmatpush1.msra.mxu0 0.0
        %4494 = vmatprep.subr.mxu0 0.0
        %4495 = vmatpush1.msra.mxu0 0.0
        %4496 = vmatprep.subr.mxu0 0.0
        %4497 = vmatpush1.msra.mxu0 0.0
        %4498 = vmatprep.subr.mxu0 0.0
        %4499 = vmatpush1.msra.mxu0 0.0
        %4500 = vmatprep.subr.mxu0 0.0
        %4501 = vmatpush1.msra.mxu0 0.0
        %4502 = vmatprep.subr.mxu0 0.0
        %4503 = vmatpush1.msra.mxu0 %v4467
        %4504 = vmatprep.subr.mxu0 0.0
        %4505 = vmatpush2.msra.mxu0 0.0
        %4506 = vmatprep.subr.mxu0 0.0
        %4507 = vmatpush2.msra.mxu0 0.0
        %4508 = vmatprep.subr.mxu0 0.0
        %4509 = vmatpush2.msra.mxu0 0.0
        %4510 = vmatprep.subr.mxu0 0.0
        %4511 = vmatpush2.msra.mxu0 0.0
        %4512 = vmatprep.subr.mxu0 0.0
        %4513 = vmatpush2.msra.mxu0 0.0
        %4514 = vmatprep.subr.mxu0 0.0
        %4515 = vmatpush2.msra.mxu0 0.0
        %4516 = vmatprep.subr.mxu0 0.0
        %4517 = vmatpush2.msra.mxu0 0.0
        %4518 = vmatprep.subr.mxu0 0.0
        %4519 = vmatpush2.msra.mxu0 0.0
        %4520 = vmatprep.subr.mxu0 0.0
        %4521 = vmatpush2.msra.mxu0 0.0
        %4522 = vmatprep.subr.mxu0 0.0
        %4523 = vmatpush2.msra.mxu0 0.0
        %4524 = vmatprep.subr.mxu0 0.0
        %4525 = vmatpush2.msra.mxu0 0.0
        %4526 = vmatprep.subr.mxu0 0.0
        %4527 = vmatpush2.msra.mxu0 0.0
        %4528 = vmatprep.subr.mxu0 0.0
        %4529 = vmatpush2.msra.mxu0 0.0
        %4530 = vmatprep.subr.mxu0 0.0
        %4531 = vmatpush2.msra.mxu0 0.0
        %4532 = vmatprep.subr.mxu0 0.0
        %4533 = vmatpush2.msra.mxu0 0.0
        %4534 = vmatprep.subr.mxu0 0.0
        %4535 = vmatpush2.msra.mxu0 0.0
        %4536 = vmatprep.mubr.f32.mxu0 0.0
        %4537 = vmatmul.mubr.f32.gmra.mxu0 %v4470
        %v4538 = vpop.f32.mrf.mxu0
        %v4539 = vadd.f32 0.0, %v4538
        %v4540 = vpop.f32.mrf.mxu0
        %4541 = vdwg.mxu0
        %4542 = vrot.lane.b32.xlu0 %v4115, 112
        %v4543 = vpop.permute.xlu0 %4542
        %4544 = vrot.lane.b32.xlu0 %v4207, 112
        %v4545 = vpop.permute.xlu0 %4544
        %v4546 = vsel %vm2066, %v4543, 0
        %v4548 = vsel %vm2066, %v4545, 0
        %4550 = vmatprep.subr.mxu0 0.0
        %4551 = vmatpush1.xpose.msra.mxu0 0.0
        %4552 = vmatprep.subr.mxu0 0.0
        %4553 = vmatpush1.xpose.msra.mxu0 0.0
        %4554 = vmatprep.subr.mxu0 0.0
        %4555 = vmatpush1.xpose.msra.mxu0 0.0
        %4556 = vmatprep.subr.mxu0 0.0
        %4557 = vmatpush1.xpose.msra.mxu0 0.0
        %4558 = vmatprep.subr.mxu0 0.0
        %4559 = vmatpush1.xpose.msra.mxu0 0.0
        %4560 = vmatprep.subr.mxu0 0.0
        %4561 = vmatpush1.xpose.msra.mxu0 0.0
        %4562 = vmatprep.subr.mxu0 0.0
        %4563 = vmatpush1.xpose.msra.mxu0 0.0
        %4564 = vmatprep.subr.mxu0 0.0
        %4565 = vmatpush1.xpose.msra.mxu0 0.0
        %4566 = vmatprep.subr.mxu0 0.0
        %4567 = vmatpush1.xpose.msra.mxu0 0.0
        %4568 = vmatprep.subr.mxu0 0.0
        %4569 = vmatpush1.xpose.msra.mxu0 0.0
        %4570 = vmatprep.subr.mxu0 0.0
        %4571 = vmatpush1.xpose.msra.mxu0 0.0
        %4572 = vmatprep.subr.mxu0 0.0
        %4573 = vmatpush1.xpose.msra.mxu0 0.0
        %4574 = vmatprep.subr.mxu0 0.0
        %4575 = vmatpush1.xpose.msra.mxu0 0.0
        %4576 = vmatprep.subr.mxu0 0.0
        %4577 = vmatpush1.xpose.msra.mxu0 0.0
        %4578 = vmatprep.subr.mxu0 0.0
        %4579 = vmatpush1.xpose.msra.mxu0 0.0
        %4580 = vmatprep.subr.mxu0 0.0
        %4581 = vmatpush1.xpose.msra.mxu0 %v4548
        %4582 = vmatprep.subr.mxu0 0.0
        %4583 = vmatpush2.xpose.msra.mxu0 0.0
        %4584 = vmatprep.subr.mxu0 0.0
        %4585 = vmatpush2.xpose.msra.mxu0 0.0
        %4586 = vmatprep.subr.mxu0 0.0
        %4587 = vmatpush2.xpose.msra.mxu0 0.0
        %4588 = vmatprep.subr.mxu0 0.0
        %4589 = vmatpush2.xpose.msra.mxu0 0.0
        %4590 = vmatprep.subr.mxu0 0.0
        %4591 = vmatpush2.xpose.msra.mxu0 0.0
        %4592 = vmatprep.subr.mxu0 0.0
        %4593 = vmatpush2.xpose.msra.mxu0 0.0
        %4594 = vmatprep.subr.mxu0 0.0
        %4595 = vmatpush2.xpose.msra.mxu0 0.0
        %4596 = vmatprep.subr.mxu0 0.0
        %4597 = vmatpush2.xpose.msra.mxu0 0.0
        %4598 = vmatprep.subr.mxu0 0.0
        %4599 = vmatpush2.xpose.msra.mxu0 0.0
        %4600 = vmatprep.subr.mxu0 0.0
        %4601 = vmatpush2.xpose.msra.mxu0 0.0
        %4602 = vmatprep.subr.mxu0 0.0
        %4603 = vmatpush2.xpose.msra.mxu0 0.0
        %4604 = vmatprep.subr.mxu0 0.0
        %4605 = vmatpush2.xpose.msra.mxu0 0.0
        %4606 = vmatprep.subr.mxu0 0.0
        %4607 = vmatpush2.xpose.msra.mxu0 0.0
        %4608 = vmatprep.subr.mxu0 0.0
        %4609 = vmatpush2.xpose.msra.mxu0 0.0
        %4610 = vmatprep.subr.mxu0 0.0
        %4611 = vmatpush2.xpose.msra.mxu0 0.0
        %4612 = vmatprep.subr.mxu0 0.0
        %4613 = vmatpush2.xpose.msra.mxu0 0.0
        %4614 = vmatprep.mubr.f32.mxu0 0.0
        %4615 = vmatmul.mubr.f32.gmra.mxu0 %v4546
        %v4616 = vpop.f32.mrf.mxu0
        %v4617 = vadd.f32 0.0, %v4616
        %v4618 = vpop.f32.mrf.mxu0
        %4619 = vdwg.mxu0
        %v4620 = vmul.f32 %v4617, 0.35355338
        %v4621 = vadd.f32 %v4620, %v3152
        %v4622 = vsel %vm2066, %v4621, -inf
        %4623 = vmax.xlane.f32.xlu0 %v4622
        %v4624 = vpop.xlane.xlu0 %4623
        %v4625 = vsub.f32 %v4621, %v4624
        %v4626 = vmul.f32 %v4625, 1.442695
        %v4627 = vpow.pop %v4626
        %v4628 = vsel %vm2066, %v4627, 0.0
        %4629 = vadd.xlane.f32.xlu0 %v4628
        %v4630 = vpop.xlane.xlu0 %4629
        %v4631 = vrcp.pop %v4630
        %v4632 = vmul.f32 %v4627, %v4631
        %4633 = vrot.lane.b32.xlu0 %v4207, 80
        %v4634 = vpop.permute.xlu0 %4633
        %v4637 = vsel %vm2066, %v4632, 0
        %4639 = vmatprep.subr.mxu0 0.0
        %4640 = vmatpush1.msra.mxu0 0.0
        %4641 = vmatprep.subr.mxu0 0.0
        %4642 = vmatpush1.msra.mxu0 0.0
        %4643 = vmatprep.subr.mxu0 0.0
        %4644 = vmatpush1.msra.mxu0 0.0
        %4645 = vmatprep.subr.mxu0 0.0
        %4646 = vmatpush1.msra.mxu0 0.0
        %4647 = vmatprep.subr.mxu0 0.0
        %4648 = vmatpush1.msra.mxu0 0.0
        %4649 = vmatprep.subr.mxu0 0.0
        %4650 = vmatpush1.msra.mxu0 0.0
        %4651 = vmatprep.subr.mxu0 0.0
        %4652 = vmatpush1.msra.mxu0 0.0
        %4653 = vmatprep.subr.mxu0 0.0
        %4654 = vmatpush1.msra.mxu0 0.0
        %4655 = vmatprep.subr.mxu0 0.0
        %4656 = vmatpush1.msra.mxu0 0.0
        %4657 = vmatprep.subr.mxu0 0.0
        %4658 = vmatpush1.msra.mxu0 0.0
        %4659 = vmatprep.subr.mxu0 0.0
        %4660 = vmatpush1.msra.mxu0 0.0
        %4661 = vmatprep.subr.mxu0 0.0
        %4662 = vmatpush1.msra.mxu0 0.0
        %4663 = vmatprep.subr.mxu0 0.0
        %4664 = vmatpush1.msra.mxu0 0.0
        %4665 = vmatprep.subr.mxu0 0.0
        %4666 = vmatpush1.msra.mxu0 0.0
        %4667 = vmatprep.subr.mxu0 0.0
        %4668 = vmatpush1.msra.mxu0 0.0
        %4669 = vmatprep.subr.mxu0 0.0
        %4670 = vmatpush1.msra.mxu0 %v4634
        %4671 = vmatprep.subr.mxu0 0.0
        %4672 = vmatpush2.msra.mxu0 0.0
        %4673 = vmatprep.subr.mxu0 0.0
        %4674 = vmatpush2.msra.mxu0 0.0
        %4675 = vmatprep.subr.mxu0 0.0
        %4676 = vmatpush2.msra.mxu0 0.0
        %4677 = vmatprep.subr.mxu0 0.0
        %4678 = vmatpush2.msra.mxu0 0.0
        %4679 = vmatprep.subr.mxu0 0.0
        %4680 = vmatpush2.msra.mxu0 0.0
        %4681 = vmatprep.subr.mxu0 0.0
        %4682 = vmatpush2.msra.mxu0 0.0
        %4683 = vmatprep.subr.mxu0 0.0
        %4684 = vmatpush2.msra.mxu0 0.0
        %4685 = vmatprep.subr.mxu0 0.0
        %4686 = vmatpush2.msra.mxu0 0.0
        %4687 = vmatprep.subr.mxu0 0.0
        %4688 = vmatpush2.msra.mxu0 0.0
        %4689 = vmatprep.subr.mxu0 0.0
        %4690 = vmatpush2.msra.mxu0 0.0
        %4691 = vmatprep.subr.mxu0 0.0
        %4692 = vmatpush2.msra.mxu0 0.0
        %4693 = vmatprep.subr.mxu0 0.0
        %4694 = vmatpush2.msra.mxu0 0.0
        %4695 = vmatprep.subr.mxu0 0.0
        %4696 = vmatpush2.msra.mxu0 0.0
        %4697 = vmatprep.subr.mxu0 0.0
        %4698 = vmatpush2.msra.mxu0 0.0
        %4699 = vmatprep.subr.mxu0 0.0
        %4700 = vmatpush2.msra.mxu0 0.0
        %4701 = vmatprep.subr.mxu0 0.0
        %4702 = vmatpush2.msra.mxu0 0.0
        %4703 = vmatprep.mubr.f32.mxu0 0.0
        %4704 = vmatmul.mubr.f32.gmra.mxu0 %v4637
        %v4705 = vpop.f32.mrf.mxu0
        %v4706 = vadd.f32 0.0, %v4705
        %v4707 = vpop.f32.mrf.mxu0
        %4708 = vdwg.mxu0
        %4709 = vrot.lane.b32.xlu0 %v4115, 104
        %v4710 = vpop.permute.xlu0 %4709
        %4711 = vrot.lane.b32.xlu0 %v4207, 104
        %v4712 = vpop.permute.xlu0 %4711
        %v4713 = vsel %vm2066, %v4710, 0
        %v4715 = vsel %vm2066, %v4712, 0
        %4717 = vmatprep.subr.mxu0 0.0
        %4718 = vmatpush1.xpose.msra.mxu0 0.0
        %4719 = vmatprep.subr.mxu0 0.0
        %4720 = vmatpush1.xpose.msra.mxu0 0.0
        %4721 = vmatprep.subr.mxu0 0.0
        %4722 = vmatpush1.xpose.msra.mxu0 0.0
        %4723 = vmatprep.subr.mxu0 0.0
        %4724 = vmatpush1.xpose.msra.mxu0 0.0
        %4725 = vmatprep.subr.mxu0 0.0
        %4726 = vmatpush1.xpose.msra.mxu0 0.0
        %4727 = vmatprep.subr.mxu0 0.0
        %4728 = vmatpush1.xpose.msra.mxu0 0.0
        %4729 = vmatprep.subr.mxu0 0.0
        %4730 = vmatpush1.xpose.msra.mxu0 0.0
        %4731 = vmatprep.subr.mxu0 0.0
        %4732 = vmatpush1.xpose.msra.mxu0 0.0
        %4733 = vmatprep.subr.mxu0 0.0
        %4734 = vmatpush1.xpose.msra.mxu0 0.0
        %4735 = vmatprep.subr.mxu0 0.0
        %4736 = vmatpush1.xpose.msra.mxu0 0.0
        %4737 = vmatprep.subr.mxu0 0.0
        %4738 = vmatpush1.xpose.msra.mxu0 0.0
        %4739 = vmatprep.subr.mxu0 0.0
        %4740 = vmatpush1.xpose.msra.mxu0 0.0
        %4741 = vmatprep.subr.mxu0 0.0
        %4742 = vmatpush1.xpose.msra.mxu0 0.0
        %4743 = vmatprep.subr.mxu0 0.0
        %4744 = vmatpush1.xpose.msra.mxu0 0.0
        %4745 = vmatprep.subr.mxu0 0.0
        %4746 = vmatpush1.xpose.msra.mxu0 0.0
        %4747 = vmatprep.subr.mxu0 0.0
        %4748 = vmatpush1.xpose.msra.mxu0 %v4715
        %4749 = vmatprep.subr.mxu0 0.0
        %4750 = vmatpush2.xpose.msra.mxu0 0.0
        %4751 = vmatprep.subr.mxu0 0.0
        %4752 = vmatpush2.xpose.msra.mxu0 0.0
        %4753 = vmatprep.subr.mxu0 0.0
        %4754 = vmatpush2.xpose.msra.mxu0 0.0
        %4755 = vmatprep.subr.mxu0 0.0
        %4756 = vmatpush2.xpose.msra.mxu0 0.0
        %4757 = vmatprep.subr.mxu0 0.0
        %4758 = vmatpush2.xpose.msra.mxu0 0.0
        %4759 = vmatprep.subr.mxu0 0.0
        %4760 = vmatpush2.xpose.msra.mxu0 0.0
        %4761 = vmatprep.subr.mxu0 0.0
        %4762 = vmatpush2.xpose.msra.mxu0 0.0
        %4763 = vmatprep.subr.mxu0 0.0
        %4764 = vmatpush2.xpose.msra.mxu0 0.0
        %4765 = vmatprep.subr.mxu0 0.0
        %4766 = vmatpush2.xpose.msra.mxu0 0.0
        %4767 = vmatprep.subr.mxu0 0.0
        %4768 = vmatpush2.xpose.msra.mxu0 0.0
        %4769 = vmatprep.subr.mxu0 0.0
        %4770 = vmatpush2.xpose.msra.mxu0 0.0
        %4771 = vmatprep.subr.mxu0 0.0
        %4772 = vmatpush2.xpose.msra.mxu0 0.0
        %4773 = vmatprep.subr.mxu0 0.0
        %4774 = vmatpush2.xpose.msra.mxu0 0.0
        %4775 = vmatprep.subr.mxu0 0.0
        %4776 = vmatpush2.xpose.msra.mxu0 0.0
        %4777 = vmatprep.subr.mxu0 0.0
        %4778 = vmatpush2.xpose.msra.mxu0 0.0
        %4779 = vmatprep.subr.mxu0 0.0
        %4780 = vmatpush2.xpose.msra.mxu0 0.0
        %4781 = vmatprep.mubr.f32.mxu0 0.0
        %4782 = vmatmul.mubr.f32.gmra.mxu0 %v4713
        %v4783 = vpop.f32.mrf.mxu0
        %v4784 = vadd.f32 0.0, %v4783
        %v4785 = vpop.f32.mrf.mxu0
        %4786 = vdwg.mxu0
        %v4787 = vmul.f32 %v4784, 0.35355338
        %v4788 = vadd.f32 %v4787, %v3152
        %v4789 = vsel %vm2066, %v4788, -inf
        %4790 = vmax.xlane.f32.xlu0 %v4789
        %v4791 = vpop.xlane.xlu0 %4790
        %v4792 = vsub.f32 %v4788, %v4791
        %v4793 = vmul.f32 %v4792, 1.442695
        %v4794 = vpow.pop %v4793
        %v4795 = vsel %vm2066, %v4794, 0.0
        %4796 = vadd.xlane.f32.xlu0 %v4795
        %v4797 = vpop.xlane.xlu0 %4796
        %v4798 = vrcp.pop %v4797
        %v4799 = vmul.f32 %v4794, %v4798
        %4800 = vrot.lane.b32.xlu0 %v4207, 72
        %v4801 = vpop.permute.xlu0 %4800
        %v4804 = vsel %vm2066, %v4799, 0
        %4806 = vmatprep.subr.mxu0 0.0
        %4807 = vmatpush1.msra.mxu0 0.0
        %4808 = vmatprep.subr.mxu0 0.0
        %4809 = vmatpush1.msra.mxu0 0.0
        %4810 = vmatprep.subr.mxu0 0.0
        %4811 = vmatpush1.msra.mxu0 0.0
        %4812 = vmatprep.subr.mxu0 0.0
        %4813 = vmatpush1.msra.mxu0 0.0
        %4814 = vmatprep.subr.mxu0 0.0
        %4815 = vmatpush1.msra.mxu0 0.0
        %4816 = vmatprep.subr.mxu0 0.0
        %4817 = vmatpush1.msra.mxu0 0.0
        %4818 = vmatprep.subr.mxu0 0.0
        %4819 = vmatpush1.msra.mxu0 0.0
        %4820 = vmatprep.subr.mxu0 0.0
        %4821 = vmatpush1.msra.mxu0 0.0
        %4822 = vmatprep.subr.mxu0 0.0
        %4823 = vmatpush1.msra.mxu0 0.0
        %4824 = vmatprep.subr.mxu0 0.0
        %4825 = vmatpush1.msra.mxu0 0.0
        %4826 = vmatprep.subr.mxu0 0.0
        %4827 = vmatpush1.msra.mxu0 0.0
        %4828 = vmatprep.subr.mxu0 0.0
        %4829 = vmatpush1.msra.mxu0 0.0
        %4830 = vmatprep.subr.mxu0 0.0
        %4831 = vmatpush1.msra.mxu0 0.0
        %4832 = vmatprep.subr.mxu0 0.0
        %4833 = vmatpush1.msra.mxu0 0.0
        %4834 = vmatprep.subr.mxu0 0.0
        %4835 = vmatpush1.msra.mxu0 0.0
        %4836 = vmatprep.subr.mxu0 0.0
        %4837 = vmatpush1.msra.mxu0 %v4801
        %4838 = vmatprep.subr.mxu0 0.0
        %4839 = vmatpush2.msra.mxu0 0.0
        %4840 = vmatprep.subr.mxu0 0.0
        %4841 = vmatpush2.msra.mxu0 0.0
        %4842 = vmatprep.subr.mxu0 0.0
        %4843 = vmatpush2.msra.mxu0 0.0
        %4844 = vmatprep.subr.mxu0 0.0
        %4845 = vmatpush2.msra.mxu0 0.0
        %4846 = vmatprep.subr.mxu0 0.0
        %4847 = vmatpush2.msra.mxu0 0.0
        %4848 = vmatprep.subr.mxu0 0.0
        %4849 = vmatpush2.msra.mxu0 0.0
        %4850 = vmatprep.subr.mxu0 0.0
        %4851 = vmatpush2.msra.mxu0 0.0
        %4852 = vmatprep.subr.mxu0 0.0
        %4853 = vmatpush2.msra.mxu0 0.0
        %4854 = vmatprep.subr.mxu0 0.0
        %4855 = vmatpush2.msra.mxu0 0.0
        %4856 = vmatprep.subr.mxu0 0.0
        %4857 = vmatpush2.msra.mxu0 0.0
        %4858 = vmatprep.subr.mxu0 0.0
        %4859 = vmatpush2.msra.mxu0 0.0
        %4860 = vmatprep.subr.mxu0 0.0
        %4861 = vmatpush2.msra.mxu0 0.0
        %4862 = vmatprep.subr.mxu0 0.0
        %4863 = vmatpush2.msra.mxu0 0.0
        %4864 = vmatprep.subr.mxu0 0.0
        %4865 = vmatpush2.msra.mxu0 0.0
        %4866 = vmatprep.subr.mxu0 0.0
        %4867 = vmatpush2.msra.mxu0 0.0
        %4868 = vmatprep.subr.mxu0 0.0
        %4869 = vmatpush2.msra.mxu0 0.0
        %4870 = vmatprep.mubr.f32.mxu0 0.0
        %4871 = vmatmul.mubr.f32.gmra.mxu0 %v4804
        %v4872 = vpop.f32.mrf.mxu0
        %v4873 = vadd.f32 0.0, %v4872
        %v4874 = vpop.f32.mrf.mxu0
        %4875 = vdwg.mxu0
        %4877 = vrot.lane.b32.xlu0 %v4539, 8
        %v4878 = vpop.permute.xlu0 %4877
        %4881 = vrot.lane.b32.xlu0 %v4706, 16
        %v4882 = vpop.permute.xlu0 %4881
        %4885 = vrot.lane.b32.xlu0 %v4873, 24
        %v4886 = vpop.permute.xlu0 %4885
        %v4888 = vsel %vm2066, %v4372, %v4878
        %v4889 = vsel %vm2740, %v4888, %v4882
        %v4890 = vsel %vm2742, %v4889, %v4886
        %v4891 = vld [vmem:[%s17] sm:$0xff]
        %v4892 = vld [vmem:[%s17 + $0x8] sm:$0xff]
        %v4893 = vld [vmem:[%s17 + $0x10] sm:$0xff]
        %v4894 = vld [vmem:[%s17 + $0x18] sm:$0xff]
        %v4895 = vld [vmem:[%s13] sm:$0x1]
        %v4897 = vlaneseq
        %v4898 = vshrl.u32 %v4897, 7
        %v4899 = vsub.s32 0, %v4898
        %v4900 = vrot.slane %v4895, %v4899
        %v4903 = vsel %vm1989, %v4890, 0
        %4905 = vmatprep.subr.mxu0 0.0
        %4906 = vmatpush1.msra.mxu0 0.0
        %4907 = vmatprep.subr.mxu0 0.0
        %4908 = vmatpush1.msra.mxu0 0.0
        %4909 = vmatprep.subr.mxu0 0.0
        %4910 = vmatpush1.msra.mxu0 0.0
        %4911 = vmatprep.subr.mxu0 0.0
        %4912 = vmatpush1.msra.mxu0 0.0
        %4913 = vmatprep.subr.mxu0 0.0
        %4914 = vmatpush1.msra.mxu0 0.0
        %4915 = vmatprep.subr.mxu0 0.0
        %4916 = vmatpush1.msra.mxu0 0.0
        %4917 = vmatprep.subr.mxu0 0.0
        %4918 = vmatpush1.msra.mxu0 0.0
        %4919 = vmatprep.subr.mxu0 0.0
        %4920 = vmatpush1.msra.mxu0 0.0
        %4921 = vmatprep.subr.mxu0 0.0
        %4922 = vmatpush1.msra.mxu0 0.0
        %4923 = vmatprep.subr.mxu0 0.0
        %4924 = vmatpush1.msra.mxu0 0.0
        %4925 = vmatprep.subr.mxu0 0.0
        %4926 = vmatpush1.msra.mxu0 0.0
        %4927 = vmatprep.subr.mxu0 0.0
        %4928 = vmatpush1.msra.mxu0 0.0
        %4929 = vmatprep.subr.mxu0 0.0
        %4930 = vmatpush1.msra.mxu0 %v4894
        %4931 = vmatprep.subr.mxu0 0.0
        %4932 = vmatpush1.msra.mxu0 %v4893
        %4933 = vmatprep.subr.mxu0 0.0
        %4934 = vmatpush1.msra.mxu0 %v4892
        %4935 = vmatprep.subr.mxu0 0.0
        %4936 = vmatpush1.msra.mxu0 %v4891
        %4937 = vmatprep.subr.mxu0 0.0
        %4938 = vmatpush2.msra.mxu0 0.0
        %4939 = vmatprep.subr.mxu0 0.0
        %4940 = vmatpush2.msra.mxu0 0.0
        %4941 = vmatprep.subr.mxu0 0.0
        %4942 = vmatpush2.msra.mxu0 0.0
        %4943 = vmatprep.subr.mxu0 0.0
        %4944 = vmatpush2.msra.mxu0 0.0
        %4945 = vmatprep.subr.mxu0 0.0
        %4946 = vmatpush2.msra.mxu0 0.0
        %4947 = vmatprep.subr.mxu0 0.0
        %4948 = vmatpush2.msra.mxu0 0.0
        %4949 = vmatprep.subr.mxu0 0.0
        %4950 = vmatpush2.msra.mxu0 0.0
        %4951 = vmatprep.subr.mxu0 0.0
        %4952 = vmatpush2.msra.mxu0 0.0
        %4953 = vmatprep.subr.mxu0 0.0
        %4954 = vmatpush2.msra.mxu0 0.0
        %4955 = vmatprep.subr.mxu0 0.0
        %4956 = vmatpush2.msra.mxu0 0.0
        %4957 = vmatprep.subr.mxu0 0.0
        %4958 = vmatpush2.msra.mxu0 0.0
        %4959 = vmatprep.subr.mxu0 0.0
        %4960 = vmatpush2.msra.mxu0 0.0
        %4961 = vmatprep.subr.mxu0 0.0
        %4962 = vmatpush2.msra.mxu0 0.0
        %4963 = vmatprep.subr.mxu0 0.0
        %4964 = vmatpush2.msra.mxu0 0.0
        %4965 = vmatprep.subr.mxu0 0.0
        %4966 = vmatpush2.msra.mxu0 0.0
        %4967 = vmatprep.subr.mxu0 0.0
        %4968 = vmatpush2.msra.mxu0 0.0
        %4969 = vmatprep.mubr.f32.mxu0 0.0
        %4970 = vmatmul.mubr.f32.gmra.mxu0 %v4903
        %v4971 = vpop.f32.mrf.mxu0
        %v4972 = vadd.f32 %v4900, %v4971
        %v4973 = vpop.f32.mrf.mxu0
        %4974 = vdwg.mxu0
        %v4975 = vadd.f32 %v4033, %v4972
        %v4976 = vsel %vm1989, %v4975, 0.0
        %4977 = vadd.xlane.f32.xlu0 %v4976
        %v4978 = vpop.xlane.xlu0 %4977
        %v4979 = vmul.f32 %v4978, %v2832
        %v4980 = vsub.f32 %v4975, %v4979
        %v4981 = vmul.f32 %v4980, %v4980
        %v4982 = vsel %vm1989, %v4981, 0.0
        %4983 = vadd.xlane.f32.xlu0 %v4982
        %v4984 = vpop.xlane.xlu0 %4983
        %v4985 = vmul.f32 %v4984, %v2832
        %v4986 = vadd.f32 %v4985, 1e-05
        %v4987 = vrsqrt.pop %v4986
        %v4988 = vmul.f32 %v4980, %v4987
        %v4989 = vld [vmem:[%s35] sm:$0x1]
        %v4991 = vlaneseq
        %v4992 = vshrl.u32 %v4991, 7
        %v4993 = vsub.s32 0, %v4992
        %v4994 = vrot.slane %v4989, %v4993
        %v4996 = vmul.f32 %v4988, %v4994
        %v4997 = vld [vmem:[%s33] sm:$0x1]
        %v4999 = vlaneseq
        %v5000 = vshrl.u32 %v4999, 7
        %v5001 = vsub.s32 0, %v5000
        %v5002 = vrot.slane %v4997, %v5001
        %v5004 = vadd.f32 %v4996, %v5002
        %v5005 = vld [vmem:[%s25] sm:$0xff]
        %v5006 = vld [vmem:[%s25 + $0x8] sm:$0xff]
        %v5007 = vld [vmem:[%s25 + $0x10] sm:$0xff]
        %v5008 = vld [vmem:[%s25 + $0x18] sm:$0xff]
        %v5009 = vld [vmem:[%s21] sm:$0x1]
        %v5011 = vlaneseq
        %v5012 = vshrl.u32 %v5011, 7
        %v5013 = vsub.s32 0, %v5012
        %v5014 = vrot.slane %v5009, %v5013
        %v5017 = vsel %vm1989, %v5004, 0
        %5019 = vmatprep.subr.mxu0 0.0
        %5020 = vmatpush1.msra.mxu0 0.0
        %5021 = vmatprep.subr.mxu0 0.0
        %5022 = vmatpush1.msra.mxu0 0.0
        %5023 = vmatprep.subr.mxu0 0.0
        %5024 = vmatpush1.msra.mxu0 0.0
        %5025 = vmatprep.subr.mxu0 0.0
        %5026 = vmatpush1.msra.mxu0 0.0
        %5027 = vmatprep.subr.mxu0 0.0
        %5028 = vmatpush1.msra.mxu0 0.0
        %5029 = vmatprep.subr.mxu0 0.0
        %5030 = vmatpush1.msra.mxu0 0.0
        %5031 = vmatprep.subr.mxu0 0.0
        %5032 = vmatpush1.msra.mxu0 0.0
        %5033 = vmatprep.subr.mxu0 0.0
        %5034 = vmatpush1.msra.mxu0 0.0
        %5035 = vmatprep.subr.mxu0 0.0
        %5036 = vmatpush1.msra.mxu0 0.0
        %5037 = vmatprep.subr.mxu0 0.0
        %5038 = vmatpush1.msra.mxu0 0.0
        %5039 = vmatprep.subr.mxu0 0.0
        %5040 = vmatpush1.msra.mxu0 0.0
        %5041 = vmatprep.subr.mxu0 0.0
        %5042 = vmatpush1.msra.mxu0 0.0
        %5043 = vmatprep.subr.mxu0 0.0
        %5044 = vmatpush1.msra.mxu0 %v5008
        %5045 = vmatprep.subr.mxu0 0.0
        %5046 = vmatpush1.msra.mxu0 %v5007
        %5047 = vmatprep.subr.mxu0 0.0
        %5048 = vmatpush1.msra.mxu0 %v5006
        %5049 = vmatprep.subr.mxu0 0.0
        %5050 = vmatpush1.msra.mxu0 %v5005
        %5051 = vmatprep.subr.mxu0 0.0
        %5052 = vmatpush2.msra.mxu0 0.0
        %5053 = vmatprep.subr.mxu0 0.0
        %5054 = vmatpush2.msra.mxu0 0.0
        %5055 = vmatprep.subr.mxu0 0.0
        %5056 = vmatpush2.msra.mxu0 0.0
        %5057 = vmatprep.subr.mxu0 0.0
        %5058 = vmatpush2.msra.mxu0 0.0
        %5059 = vmatprep.subr.mxu0 0.0
        %5060 = vmatpush2.msra.mxu0 0.0
        %5061 = vmatprep.subr.mxu0 0.0
        %5062 = vmatpush2.msra.mxu0 0.0
        %5063 = vmatprep.subr.mxu0 0.0
        %5064 = vmatpush2.msra.mxu0 0.0
        %5065 = vmatprep.subr.mxu0 0.0
        %5066 = vmatpush2.msra.mxu0 0.0
        %5067 = vmatprep.subr.mxu0 0.0
        %5068 = vmatpush2.msra.mxu0 0.0
        %5069 = vmatprep.subr.mxu0 0.0
        %5070 = vmatpush2.msra.mxu0 0.0
        %5071 = vmatprep.subr.mxu0 0.0
        %5072 = vmatpush2.msra.mxu0 0.0
        %5073 = vmatprep.subr.mxu0 0.0
        %5074 = vmatpush2.msra.mxu0 0.0
        %5075 = vmatprep.subr.mxu0 0.0
        %5076 = vmatpush2.msra.mxu0 0.0
        %5077 = vmatprep.subr.mxu0 0.0
        %5078 = vmatpush2.msra.mxu0 0.0
        %5079 = vmatprep.subr.mxu0 0.0
        %5080 = vmatpush2.msra.mxu0 0.0
        %5081 = vmatprep.subr.mxu0 0.0
        %5082 = vmatpush2.msra.mxu0 0.0
        %5083 = vmatprep.mubr.f32.mxu0 0.0
        %5084 = vmatmul.mubr.f32.gmra.mxu0 %v5017
        %v5085 = vpop.f32.mrf.mxu0
        %v5086 = vadd.f32 %v5014, %v5085
        %v5087 = vpop.f32.mrf.mxu0
        %5088 = vdwg.mxu0
        %v5089 = vmax.f32 %v5086, 0.0
        %v5090 = vld [vmem:[%s27] sm:$0xff]
        %v5091 = vld [vmem:[%s27 + $0x8] sm:$0xff]
        %v5092 = vld [vmem:[%s27 + $0x10] sm:$0xff]
        %v5093 = vld [vmem:[%s27 + $0x18] sm:$0xff]
        %v5094 = vld [vmem:[%s27 + $0x20] sm:$0xff]
        %v5095 = vld [vmem:[%s27 + $0x28] sm:$0xff]
        %v5096 = vld [vmem:[%s27 + $0x30] sm:$0xff]
        %v5097 = vld [vmem:[%s27 + $0x38] sm:$0xff]
        %v5098 = vld [vmem:[%s23] sm:$0x1]
        %v5100 = vlaneseq
        %v5101 = vshrl.u32 %v5100, 7
        %v5102 = vsub.s32 0, %v5101
        %v5103 = vrot.slane %v5098, %v5102
        %v5106 = vsel %vm2959, %v5089, 0
        %5108 = vmatprep.subr.mxu0 0.0
        %5109 = vmatpush1.msra.mxu0 0.0
        %5110 = vmatprep.subr.mxu0 0.0
        %5111 = vmatpush1.msra.mxu0 0.0
        %5112 = vmatprep.subr.mxu0 0.0
        %5113 = vmatpush1.msra.mxu0 0.0
        %5114 = vmatprep.subr.mxu0 0.0
        %5115 = vmatpush1.msra.mxu0 0.0
        %5116 = vmatprep.subr.mxu0 0.0
        %5117 = vmatpush1.msra.mxu0 0.0
        %5118 = vmatprep.subr.mxu0 0.0
        %5119 = vmatpush1.msra.mxu0 0.0
        %5120 = vmatprep.subr.mxu0 0.0
        %5121 = vmatpush1.msra.mxu0 0.0
        %5122 = vmatprep.subr.mxu0 0.0
        %5123 = vmatpush1.msra.mxu0 0.0
        %5124 = vmatprep.subr.mxu0 0.0
        %5125 = vmatpush1.msra.mxu0 %v5097
        %5126 = vmatprep.subr.mxu0 0.0
        %5127 = vmatpush1.msra.mxu0 %v5096
        %5128 = vmatprep.subr.mxu0 0.0
        %5129 = vmatpush1.msra.mxu0 %v5095
        %5130 = vmatprep.subr.mxu0 0.0
        %5131 = vmatpush1.msra.mxu0 %v5094
        %5132 = vmatprep.subr.mxu0 0.0
        %5133 = vmatpush1.msra.mxu0 %v5093
        %5134 = vmatprep.subr.mxu0 0.0
        %5135 = vmatpush1.msra.mxu0 %v5092
        %5136 = vmatprep.subr.mxu0 0.0
        %5137 = vmatpush1.msra.mxu0 %v5091
        %5138 = vmatprep.subr.mxu0 0.0
        %5139 = vmatpush1.msra.mxu0 %v5090
        %5140 = vmatprep.subr.mxu0 0.0
        %5141 = vmatpush2.msra.mxu0 0.0
        %5142 = vmatprep.subr.mxu0 0.0
        %5143 = vmatpush2.msra.mxu0 0.0
        %5144 = vmatprep.subr.mxu0 0.0
        %5145 = vmatpush2.msra.mxu0 0.0
        %5146 = vmatprep.subr.mxu0 0.0
        %5147 = vmatpush2.msra.mxu0 0.0
        %5148 = vmatprep.subr.mxu0 0.0
        %5149 = vmatpush2.msra.mxu0 0.0
        %5150 = vmatprep.subr.mxu0 0.0
        %5151 = vmatpush2.msra.mxu0 0.0
        %5152 = vmatprep.subr.mxu0 0.0
        %5153 = vmatpush2.msra.mxu0 0.0
        %5154 = vmatprep.subr.mxu0 0.0
        %5155 = vmatpush2.msra.mxu0 0.0
        %5156 = vmatprep.subr.mxu0 0.0
        %5157 = vmatpush2.msra.mxu0 0.0
        %5158 = vmatprep.subr.mxu0 0.0
        %5159 = vmatpush2.msra.mxu0 0.0
        %5160 = vmatprep.subr.mxu0 0.0
        %5161 = vmatpush2.msra.mxu0 0.0
        %5162 = vmatprep.subr.mxu0 0.0
        %5163 = vmatpush2.msra.mxu0 0.0
        %5164 = vmatprep.subr.mxu0 0.0
        %5165 = vmatpush2.msra.mxu0 0.0
        %5166 = vmatprep.subr.mxu0 0.0
        %5167 = vmatpush2.msra.mxu0 0.0
        %5168 = vmatprep.subr.mxu0 0.0
        %5169 = vmatpush2.msra.mxu0 0.0
        %5170 = vmatprep.subr.mxu0 0.0
        %5171 = vmatpush2.msra.mxu0 0.0
        %5172 = vmatprep.mubr.f32.mxu0 0.0
        %5173 = vmatmul.mubr.f32.gmra.mxu0 %v5106
        %v5174 = vpop.f32.mrf.mxu0
        %v5175 = vadd.f32 %v5103, %v5174
        %v5176 = vpop.f32.mrf.mxu0
        %5177 = vdwg.mxu0
        %v5178 = vadd.f32 %v5004, %v5175
        %v5179 = vsel %vm1989, %v5178, 0.0
        %5180 = vadd.xlane.f32.xlu0 %v5179
        %v5181 = vpop.xlane.xlu0 %5180
        %v5182 = vmul.f32 %v5181, %v2832
        %v5183 = vsub.f32 %v5178, %v5182
        %v5184 = vmul.f32 %v5183, %v5183
        %v5185 = vsel %vm1989, %v5184, 0.0
        %5186 = vadd.xlane.f32.xlu0 %v5185
        %v5187 = vpop.xlane.xlu0 %5186
        %v5188 = vmul.f32 %v5187, %v2832
        %v5189 = vadd.f32 %v5188, 1e-05
        %v5190 = vrsqrt.pop %v5189
        %v5191 = vmul.f32 %v5183, %v5190
        %v5192 = vld [vmem:[%s39] sm:$0x1]
        %v5194 = vlaneseq
        %v5195 = vshrl.u32 %v5194, 7
        %v5196 = vsub.s32 0, %v5195
        %v5197 = vrot.slane %v5192, %v5196
        %v5199 = vmul.f32 %v5191, %v5197
        %v5200 = vld [vmem:[%s37] sm:$0x1]
        %v5202 = vlaneseq
        %v5203 = vshrl.u32 %v5202, 7
        %v5204 = vsub.s32 0, %v5203
        %v5205 = vrot.slane %v5200, %v5204
        %v5207 = vadd.f32 %v5199, %v5205
        %v5208 = vld [vmem:[%s83] sm:$0xff]
        %v5209 = vld [vmem:[%s83 + $0x8] sm:$0xff]
        %v5210 = vld [vmem:[%s83 + $0x10] sm:$0xff]
        %v5211 = vld [vmem:[%s83 + $0x18] sm:$0xff]
        %v5212 = vld [vmem:[#allocation13] sm:$0x1]
        %v5214 = vlaneseq
        %v5215 = vshrl.u32 %v5214, 7
        %v5216 = vsub.s32 0, %v5215
        %v5217 = vrot.slane %v5212, %v5216
        %v5220 = vsel %vm1989, %v5207, 0
        %5222 = vmatprep.subr.mxu0 0.0
        %5223 = vmatpush1.msra.mxu0 0.0
        %5224 = vmatprep.subr.mxu0 0.0
        %5225 = vmatpush1.msra.mxu0 0.0
        %5226 = vmatprep.subr.mxu0 0.0
        %5227 = vmatpush1.msra.mxu0 0.0
        %5228 = vmatprep.subr.mxu0 0.0
        %5229 = vmatpush1.msra.mxu0 0.0
        %5230 = vmatprep.subr.mxu0 0.0
        %5231 = vmatpush1.msra.mxu0 0.0
        %5232 = vmatprep.subr.mxu0 0.0
        %5233 = vmatpush1.msra.mxu0 0.0
        %5234 = vmatprep.subr.mxu0 0.0
        %5235 = vmatpush1.msra.mxu0 0.0
        %5236 = vmatprep.subr.mxu0 0.0
        %5237 = vmatpush1.msra.mxu0 0.0
        %5238 = vmatprep.subr.mxu0 0.0
        %5239 = vmatpush1.msra.mxu0 0.0
        %5240 = vmatprep.subr.mxu0 0.0
        %5241 = vmatpush1.msra.mxu0 0.0
        %5242 = vmatprep.subr.mxu0 0.0
        %5243 = vmatpush1.msra.mxu0 0.0
        %5244 = vmatprep.subr.mxu0 0.0
        %5245 = vmatpush1.msra.mxu0 0.0
        %5246 = vmatprep.subr.mxu0 0.0
        %5247 = vmatpush1.msra.mxu0 %v5211
        %5248 = vmatprep.subr.mxu0 0.0
        %5249 = vmatpush1.msra.mxu0 %v5210
        %5250 = vmatprep.subr.mxu0 0.0
        %5251 = vmatpush1.msra.mxu0 %v5209
        %5252 = vmatprep.subr.mxu0 0.0
        %5253 = vmatpush1.msra.mxu0 %v5208
        %5254 = vmatprep.subr.mxu0 0.0
        %5255 = vmatpush2.msra.mxu0 0.0
        %5256 = vmatprep.subr.mxu0 0.0
        %5257 = vmatpush2.msra.mxu0 0.0
        %5258 = vmatprep.subr.mxu0 0.0
        %5259 = vmatpush2.msra.mxu0 0.0
        %5260 = vmatprep.subr.mxu0 0.0
        %5261 = vmatpush2.msra.mxu0 0.0
        %5262 = vmatprep.subr.mxu0 0.0
        %5263 = vmatpush2.msra.mxu0 0.0
        %5264 = vmatprep.subr.mxu0 0.0
        %5265 = vmatpush2.msra.mxu0 0.0
        %5266 = vmatprep.subr.mxu0 0.0
        %5267 = vmatpush2.msra.mxu0 0.0
        %5268 = vmatprep.subr.mxu0 0.0
        %5269 = vmatpush2.msra.mxu0 0.0
        %5270 = vmatprep.subr.mxu0 0.0
        %5271 = vmatpush2.msra.mxu0 0.0
        %5272 = vmatprep.subr.mxu0 0.0
        %5273 = vmatpush2.msra.mxu0 0.0
        %5274 = vmatprep.subr.mxu0 0.0
        %5275 = vmatpush2.msra.mxu0 0.0
        %5276 = vmatprep.subr.mxu0 0.0
        %5277 = vmatpush2.msra.mxu0 0.0
        %5278 = vmatprep.subr.mxu0 0.0
        %5279 = vmatpush2.msra.mxu0 0.0
        %5280 = vmatprep.subr.mxu0 0.0
        %5281 = vmatpush2.msra.mxu0 0.0
        %5282 = vmatprep.subr.mxu0 0.0
        %5283 = vmatpush2.msra.mxu0 0.0
        %5284 = vmatprep.subr.mxu0 0.0
        %5285 = vmatpush2.msra.mxu0 0.0
        %5286 = vmatprep.mubr.f32.mxu0 0.0
        %5287 = vmatmul.mubr.f32.gmra.mxu0 %v5220
        %v5288 = vpop.f32.mrf.mxu0
        %v5289 = vadd.f32 %v5217, %v5288
        %v5290 = vpop.f32.mrf.mxu0
        %5291 = vdwg.mxu0
        %5293 = vrot.lane.b32.xlu0 %v5289, 96
        %v5294 = vpop.permute.xlu0 %5293
        %v5295 = vsel %vm2066, %v5289, 0
        %v5297 = vsel %vm2066, %v5294, 0
        %5299 = vmatprep.subr.mxu0 0.0
        %5300 = vmatpush1.xpose.msra.mxu0 0.0
        %5301 = vmatprep.subr.mxu0 0.0
        %5302 = vmatpush1.xpose.msra.mxu0 0.0
        %5303 = vmatprep.subr.mxu0 0.0
        %5304 = vmatpush1.xpose.msra.mxu0 0.0
        %5305 = vmatprep.subr.mxu0 0.0
        %5306 = vmatpush1.xpose.msra.mxu0 0.0
        %5307 = vmatprep.subr.mxu0 0.0
        %5308 = vmatpush1.xpose.msra.mxu0 0.0
        %5309 = vmatprep.subr.mxu0 0.0
        %5310 = vmatpush1.xpose.msra.mxu0 0.0
        %5311 = vmatprep.subr.mxu0 0.0
        %5312 = vmatpush1.xpose.msra.mxu0 0.0
        %5313 = vmatprep.subr.mxu0 0.0
        %5314 = vmatpush1.xpose.msra.mxu0 0.0
        %5315 = vmatprep.subr.mxu0 0.0
        %5316 = vmatpush1.xpose.msra.mxu0 0.0
        %5317 = vmatprep.subr.mxu0 0.0
        %5318 = vmatpush1.xpose.msra.mxu0 0.0
        %5319 = vmatprep.subr.mxu0 0.0
        %5320 = vmatpush1.xpose.msra.mxu0 0.0
        %5321 = vmatprep.subr.mxu0 0.0
        %5322 = vmatpush1.xpose.msra.mxu0 0.0
        %5323 = vmatprep.subr.mxu0 0.0
        %5324 = vmatpush1.xpose.msra.mxu0 0.0
        %5325 = vmatprep.subr.mxu0 0.0
        %5326 = vmatpush1.xpose.msra.mxu0 0.0
        %5327 = vmatprep.subr.mxu0 0.0
        %5328 = vmatpush1.xpose.msra.mxu0 0.0
        %5329 = vmatprep.subr.mxu0 0.0
        %5330 = vmatpush1.xpose.msra.mxu0 %v5297
        %5331 = vmatprep.subr.mxu0 0.0
        %5332 = vmatpush2.xpose.msra.mxu0 0.0
        %5333 = vmatprep.subr.mxu0 0.0
        %5334 = vmatpush2.xpose.msra.mxu0 0.0
        %5335 = vmatprep.subr.mxu0 0.0
        %5336 = vmatpush2.xpose.msra.mxu0 0.0
        %5337 = vmatprep.subr.mxu0 0.0
        %5338 = vmatpush2.xpose.msra.mxu0 0.0
        %5339 = vmatprep.subr.mxu0 0.0
        %5340 = vmatpush2.xpose.msra.mxu0 0.0
        %5341 = vmatprep.subr.mxu0 0.0
        %5342 = vmatpush2.xpose.msra.mxu0 0.0
        %5343 = vmatprep.subr.mxu0 0.0
        %5344 = vmatpush2.xpose.msra.mxu0 0.0
        %5345 = vmatprep.subr.mxu0 0.0
        %5346 = vmatpush2.xpose.msra.mxu0 0.0
        %5347 = vmatprep.subr.mxu0 0.0
        %5348 = vmatpush2.xpose.msra.mxu0 0.0
        %5349 = vmatprep.subr.mxu0 0.0
        %5350 = vmatpush2.xpose.msra.mxu0 0.0
        %5351 = vmatprep.subr.mxu0 0.0
        %5352 = vmatpush2.xpose.msra.mxu0 0.0
        %5353 = vmatprep.subr.mxu0 0.0
        %5354 = vmatpush2.xpose.msra.mxu0 0.0
        %5355 = vmatprep.subr.mxu0 0.0
        %5356 = vmatpush2.xpose.msra.mxu0 0.0
        %5357 = vmatprep.subr.mxu0 0.0
        %5358 = vmatpush2.xpose.msra.mxu0 0.0
        %5359 = vmatprep.subr.mxu0 0.0
        %5360 = vmatpush2.xpose.msra.mxu0 0.0
        %5361 = vmatprep.subr.mxu0 0.0
        %5362 = vmatpush2.xpose.msra.mxu0 0.0
        %5363 = vmatprep.mubr.f32.mxu0 0.0
        %5364 = vmatmul.mubr.f32.gmra.mxu0 %v5295
        %v5365 = vpop.f32.mrf.mxu0
        %v5366 = vadd.f32 0.0, %v5365
        %v5367 = vpop.f32.mrf.mxu0
        %5368 = vdwg.mxu0
        %v5369 = vmul.f32 %v5366, 0.35355338
        %v5370 = vadd.f32 %v5369, %v3153
        %v5371 = vsel %vm2066, %v5370, -inf
        %5372 = vmax.xlane.f32.xlu0 %v5371
        %v5373 = vpop.xlane.xlu0 %5372
        %v5374 = vsub.f32 %v5370, %v5373
        %v5375 = vmul.f32 %v5374, 1.442695
        %v5376 = vpow.pop %v5375
        %v5377 = vsel %vm2066, %v5376, 0.0
        %5378 = vadd.xlane.f32.xlu0 %v5377
        %v5379 = vpop.xlane.xlu0 %5378
        %v5380 = vrcp.pop %v5379
        %v5381 = vmul.f32 %v5376, %v5380
        %5382 = vrot.lane.b32.xlu0 %v5289, 64
        %v5383 = vpop.permute.xlu0 %5382
        %v5386 = vsel %vm2066, %v5381, 0
        %5388 = vmatprep.subr.mxu0 0.0
        %5389 = vmatpush1.msra.mxu0 0.0
        %5390 = vmatprep.subr.mxu0 0.0
        %5391 = vmatpush1.msra.mxu0 0.0
        %5392 = vmatprep.subr.mxu0 0.0
        %5393 = vmatpush1.msra.mxu0 0.0
        %5394 = vmatprep.subr.mxu0 0.0
        %5395 = vmatpush1.msra.mxu0 0.0
        %5396 = vmatprep.subr.mxu0 0.0
        %5397 = vmatpush1.msra.mxu0 0.0
        %5398 = vmatprep.subr.mxu0 0.0
        %5399 = vmatpush1.msra.mxu0 0.0
        %5400 = vmatprep.subr.mxu0 0.0
        %5401 = vmatpush1.msra.mxu0 0.0
        %5402 = vmatprep.subr.mxu0 0.0
        %5403 = vmatpush1.msra.mxu0 0.0
        %5404 = vmatprep.subr.mxu0 0.0
        %5405 = vmatpush1.msra.mxu0 0.0
        %5406 = vmatprep.subr.mxu0 0.0
        %5407 = vmatpush1.msra.mxu0 0.0
        %5408 = vmatprep.subr.mxu0 0.0
        %5409 = vmatpush1.msra.mxu0 0.0
        %5410 = vmatprep.subr.mxu0 0.0
        %5411 = vmatpush1.msra.mxu0 0.0
        %5412 = vmatprep.subr.mxu0 0.0
        %5413 = vmatpush1.msra.mxu0 0.0
        %5414 = vmatprep.subr.mxu0 0.0
        %5415 = vmatpush1.msra.mxu0 0.0
        %5416 = vmatprep.subr.mxu0 0.0
        %5417 = vmatpush1.msra.mxu0 0.0
        %5418 = vmatprep.subr.mxu0 0.0
        %5419 = vmatpush1.msra.mxu0 %v5383
        %5420 = vmatprep.subr.mxu0 0.0
        %5421 = vmatpush2.msra.mxu0 0.0
        %5422 = vmatprep.subr.mxu0 0.0
        %5423 = vmatpush2.msra.mxu0 0.0
        %5424 = vmatprep.subr.mxu0 0.0
        %5425 = vmatpush2.msra.mxu0 0.0
        %5426 = vmatprep.subr.mxu0 0.0
        %5427 = vmatpush2.msra.mxu0 0.0
        %5428 = vmatprep.subr.mxu0 0.0
        %5429 = vmatpush2.msra.mxu0 0.0
        %5430 = vmatprep.subr.mxu0 0.0
        %5431 = vmatpush2.msra.mxu0 0.0
        %5432 = vmatprep.subr.mxu0 0.0
        %5433 = vmatpush2.msra.mxu0 0.0
        %5434 = vmatprep.subr.mxu0 0.0
        %5435 = vmatpush2.msra.mxu0 0.0
        %5436 = vmatprep.subr.mxu0 0.0
        %5437 = vmatpush2.msra.mxu0 0.0
        %5438 = vmatprep.subr.mxu0 0.0
        %5439 = vmatpush2.msra.mxu0 0.0
        %5440 = vmatprep.subr.mxu0 0.0
        %5441 = vmatpush2.msra.mxu0 0.0
        %5442 = vmatprep.subr.mxu0 0.0
        %5443 = vmatpush2.msra.mxu0 0.0
        %5444 = vmatprep.subr.mxu0 0.0
        %5445 = vmatpush2.msra.mxu0 0.0
        %5446 = vmatprep.subr.mxu0 0.0
        %5447 = vmatpush2.msra.mxu0 0.0
        %5448 = vmatprep.subr.mxu0 0.0
        %5449 = vmatpush2.msra.mxu0 0.0
        %5450 = vmatprep.subr.mxu0 0.0
        %5451 = vmatpush2.msra.mxu0 0.0
        %5452 = vmatprep.mubr.f32.mxu0 0.0
        %5453 = vmatmul.mubr.f32.gmra.mxu0 %v5386
        %v5454 = vpop.f32.mrf.mxu0
        %v5455 = vadd.f32 0.0, %v5454
        %v5456 = vpop.f32.mrf.mxu0
        %5457 = vdwg.mxu0
        %5458 = vrot.lane.b32.xlu0 %v5289, 120
        %v5459 = vpop.permute.xlu0 %5458
        %5460 = vrot.lane.b32.xlu0 %v5289, 88
        %v5461 = vpop.permute.xlu0 %5460
        %v5462 = vsel %vm2066, %v5459, 0
        %v5464 = vsel %vm2066, %v5461, 0
        %5466 = vmatprep.subr.mxu0 0.0
        %5467 = vmatpush1.xpose.msra.mxu0 0.0
        %5468 = vmatprep.subr.mxu0 0.0
        %5469 = vmatpush1.xpose.msra.mxu0 0.0
        %5470 = vmatprep.subr.mxu0 0.0
        %5471 = vmatpush1.xpose.msra.mxu0 0.0
        %5472 = vmatprep.subr.mxu0 0.0
        %5473 = vmatpush1.xpose.msra.mxu0 0.0
        %5474 = vmatprep.subr.mxu0 0.0
        %5475 = vmatpush1.xpose.msra.mxu0 0.0
        %5476 = vmatprep.subr.mxu0 0.0
        %5477 = vmatpush1.xpose.msra.mxu0 0.0
        %5478 = vmatprep.subr.mxu0 0.0
        %5479 = vmatpush1.xpose.msra.mxu0 0.0
        %5480 = vmatprep.subr.mxu0 0.0
        %5481 = vmatpush1.xpose.msra.mxu0 0.0
        %5482 = vmatprep.subr.mxu0 0.0
        %5483 = vmatpush1.xpose.msra.mxu0 0.0
        %5484 = vmatprep.subr.mxu0 0.0
        %5485 = vmatpush1.xpose.msra.mxu0 0.0
        %5486 = vmatprep.subr.mxu0 0.0
        %5487 = vmatpush1.xpose.msra.mxu0 0.0
        %5488 = vmatprep.subr.mxu0 0.0
        %5489 = vmatpush1.xpose.msra.mxu0 0.0
        %5490 = vmatprep.subr.mxu0 0.0
        %5491 = vmatpush1.xpose.msra.mxu0 0.0
        %5492 = vmatprep.subr.mxu0 0.0
        %5493 = vmatpush1.xpose.msra.mxu0 0.0
        %5494 = vmatprep.subr.mxu0 0.0
        %5495 = vmatpush1.xpose.msra.mxu0 0.0
        %5496 = vmatprep.subr.mxu0 0.0
        %5497 = vmatpush1.xpose.msra.mxu0 %v5464
        %5498 = vmatprep.subr.mxu0 0.0
        %5499 = vmatpush2.xpose.msra.mxu0 0.0
        %5500 = vmatprep.subr.mxu0 0.0
        %5501 = vmatpush2.xpose.msra.mxu0 0.0
        %5502 = vmatprep.subr.mxu0 0.0
        %5503 = vmatpush2.xpose.msra.mxu0 0.0
        %5504 = vmatprep.subr.mxu0 0.0
        %5505 = vmatpush2.xpose.msra.mxu0 0.0
        %5506 = vmatprep.subr.mxu0 0.0
        %5507 = vmatpush2.xpose.msra.mxu0 0.0
        %5508 = vmatprep.subr.mxu0 0.0
        %5509 = vmatpush2.xpose.msra.mxu0 0.0
        %5510 = vmatprep.subr.mxu0 0.0
        %5511 = vmatpush2.xpose.msra.mxu0 0.0
        %5512 = vmatprep.subr.mxu0 0.0
        %5513 = vmatpush2.xpose.msra.mxu0 0.0
        %5514 = vmatprep.subr.mxu0 0.0
        %5515 = vmatpush2.xpose.msra.mxu0 0.0
        %5516 = vmatprep.subr.mxu0 0.0
        %5517 = vmatpush2.xpose.msra.mxu0 0.0
        %5518 = vmatprep.subr.mxu0 0.0
        %5519 = vmatpush2.xpose.msra.mxu0 0.0
        %5520 = vmatprep.subr.mxu0 0.0
        %5521 = vmatpush2.xpose.msra.mxu0 0.0
        %5522 = vmatprep.subr.mxu0 0.0
        %5523 = vmatpush2.xpose.msra.mxu0 0.0
        %5524 = vmatprep.subr.mxu0 0.0
        %5525 = vmatpush2.xpose.msra.mxu0 0.0
        %5526 = vmatprep.subr.mxu0 0.0
        %5527 = vmatpush2.xpose.msra.mxu0 0.0
        %5528 = vmatprep.subr.mxu0 0.0
        %5529 = vmatpush2.xpose.msra.mxu0 0.0
        %5530 = vmatprep.mubr.f32.mxu0 0.0
        %5531 = vmatmul.mubr.f32.gmra.mxu0 %v5462
        %v5532 = vpop.f32.mrf.mxu0
        %v5533 = vadd.f32 0.0, %v5532
        %v5534 = vpop.f32.mrf.mxu0
        %5535 = vdwg.mxu0
        %v5536 = vmul.f32 %v5533, 0.35355338
        %v5537 = vadd.f32 %v5536, %v3153
        %v5538 = vsel %vm2066, %v5537, -inf
        %5539 = vmax.xlane.f32.xlu0 %v5538
        %v5540 = vpop.xlane.xlu0 %5539
        %v5541 = vsub.f32 %v5537, %v5540
        %v5542 = vmul.f32 %v5541, 1.442695
        %v5543 = vpow.pop %v5542
        %v5544 = vsel %vm2066, %v5543, 0.0
        %5545 = vadd.xlane.f32.xlu0 %v5544
        %v5546 = vpop.xlane.xlu0 %5545
        %v5547 = vrcp.pop %v5546
        %v5548 = vmul.f32 %v5543, %v5547
        %5549 = vrot.lane.b32.xlu0 %v5289, 56
        %v5550 = vpop.permute.xlu0 %5549
        %v5553 = vsel %vm2066, %v5548, 0
        %5555 = vmatprep.subr.mxu0 0.0
        %5556 = vmatpush1.msra.mxu0 0.0
        %5557 = vmatprep.subr.mxu0 0.0
        %5558 = vmatpush1.msra.mxu0 0.0
        %5559 = vmatprep.subr.mxu0 0.0
        %5560 = vmatpush1.msra.mxu0 0.0
        %5561 = vmatprep.subr.mxu0 0.0
        %5562 = vmatpush1.msra.mxu0 0.0
        %5563 = vmatprep.subr.mxu0 0.0
        %5564 = vmatpush1.msra.mxu0 0.0
        %5565 = vmatprep.subr.mxu0 0.0
        %5566 = vmatpush1.msra.mxu0 0.0
        %5567 = vmatprep.subr.mxu0 0.0
        %5568 = vmatpush1.msra.mxu0 0.0
        %5569 = vmatprep.subr.mxu0 0.0
        %5570 = vmatpush1.msra.mxu0 0.0
        %5571 = vmatprep.subr.mxu0 0.0
        %5572 = vmatpush1.msra.mxu0 0.0
        %5573 = vmatprep.subr.mxu0 0.0
        %5574 = vmatpush1.msra.mxu0 0.0
        %5575 = vmatprep.subr.mxu0 0.0
        %5576 = vmatpush1.msra.mxu0 0.0
        %5577 = vmatprep.subr.mxu0 0.0
        %5578 = vmatpush1.msra.mxu0 0.0
        %5579 = vmatprep.subr.mxu0 0.0
        %5580 = vmatpush1.msra.mxu0 0.0
        %5581 = vmatprep.subr.mxu0 0.0
        %5582 = vmatpush1.msra.mxu0 0.0
        %5583 = vmatprep.subr.mxu0 0.0
        %5584 = vmatpush1.msra.mxu0 0.0
        %5585 = vmatprep.subr.mxu0 0.0
        %5586 = vmatpush1.msra.mxu0 %v5550
        %5587 = vmatprep.subr.mxu0 0.0
        %5588 = vmatpush2.msra.mxu0 0.0
        %5589 = vmatprep.subr.mxu0 0.0
        %5590 = vmatpush2.msra.mxu0 0.0
        %5591 = vmatprep.subr.mxu0 0.0
        %5592 = vmatpush2.msra.mxu0 0.0
        %5593 = vmatprep.subr.mxu0 0.0
        %5594 = vmatpush2.msra.mxu0 0.0
        %5595 = vmatprep.subr.mxu0 0.0
        %5596 = vmatpush2.msra.mxu0 0.0
        %5597 = vmatprep.subr.mxu0 0.0
        %5598 = vmatpush2.msra.mxu0 0.0
        %5599 = vmatprep.subr.mxu0 0.0
        %5600 = vmatpush2.msra.mxu0 0.0
        %5601 = vmatprep.subr.mxu0 0.0
        %5602 = vmatpush2.msra.mxu0 0.0
        %5603 = vmatprep.subr.mxu0 0.0
        %5604 = vmatpush2.msra.mxu0 0.0
        %5605 = vmatprep.subr.mxu0 0.0
        %5606 = vmatpush2.msra.mxu0 0.0
        %5607 = vmatprep.subr.mxu0 0.0
        %5608 = vmatpush2.msra.mxu0 0.0
        %5609 = vmatprep.subr.mxu0 0.0
        %5610 = vmatpush2.msra.mxu0 0.0
        %5611 = vmatprep.subr.mxu0 0.0
        %5612 = vmatpush2.msra.mxu0 0.0
        %5613 = vmatprep.subr.mxu0 0.0
        %5614 = vmatpush2.msra.mxu0 0.0
        %5615 = vmatprep.subr.mxu0 0.0
        %5616 = vmatpush2.msra.mxu0 0.0
        %5617 = vmatprep.subr.mxu0 0.0
        %5618 = vmatpush2.msra.mxu0 0.0
        %5619 = vmatprep.mubr.f32.mxu0 0.0
        %5620 = vmatmul.mubr.f32.gmra.mxu0 %v5553
        %v5621 = vpop.f32.mrf.mxu0
        %v5622 = vadd.f32 0.0, %v5621
        %v5623 = vpop.f32.mrf.mxu0
        %5624 = vdwg.mxu0
        %5625 = vrot.lane.b32.xlu0 %v5289, 112
        %v5626 = vpop.permute.xlu0 %5625
        %5627 = vrot.lane.b32.xlu0 %v5289, 80
        %v5628 = vpop.permute.xlu0 %5627
        %v5629 = vsel %vm2066, %v5626, 0
        %v5631 = vsel %vm2066, %v5628, 0
        %5633 = vmatprep.subr.mxu0 0.0
        %5634 = vmatpush1.xpose.msra.mxu0 0.0
        %5635 = vmatprep.subr.mxu0 0.0
        %5636 = vmatpush1.xpose.msra.mxu0 0.0
        %5637 = vmatprep.subr.mxu0 0.0
        %5638 = vmatpush1.xpose.msra.mxu0 0.0
        %5639 = vmatprep.subr.mxu0 0.0
        %5640 = vmatpush1.xpose.msra.mxu0 0.0
        %5641 = vmatprep.subr.mxu0 0.0
        %5642 = vmatpush1.xpose.msra.mxu0 0.0
        %5643 = vmatprep.subr.mxu0 0.0
        %5644 = vmatpush1.xpose.msra.mxu0 0.0
        %5645 = vmatprep.subr.mxu0 0.0
        %5646 = vmatpush1.xpose.msra.mxu0 0.0
        %5647 = vmatprep.subr.mxu0 0.0
        %5648 = vmatpush1.xpose.msra.mxu0 0.0
        %5649 = vmatprep.subr.mxu0 0.0
        %5650 = vmatpush1.xpose.msra.mxu0 0.0
        %5651 = vmatprep.subr.mxu0 0.0
        %5652 = vmatpush1.xpose.msra.mxu0 0.0
        %5653 = vmatprep.subr.mxu0 0.0
        %5654 = vmatpush1.xpose.msra.mxu0 0.0
        %5655 = vmatprep.subr.mxu0 0.0
        %5656 = vmatpush1.xpose.msra.mxu0 0.0
        %5657 = vmatprep.subr.mxu0 0.0
        %5658 = vmatpush1.xpose.msra.mxu0 0.0
        %5659 = vmatprep.subr.mxu0 0.0
        %5660 = vmatpush1.xpose.msra.mxu0 0.0
        %5661 = vmatprep.subr.mxu0 0.0
        %5662 = vmatpush1.xpose.msra.mxu0 0.0
        %5663 = vmatprep.subr.mxu0 0.0
        %5664 = vmatpush1.xpose.msra.mxu0 %v5631
        %5665 = vmatprep.subr.mxu0 0.0
        %5666 = vmatpush2.xpose.msra.mxu0 0.0
        %5667 = vmatprep.subr.mxu0 0.0
        %5668 = vmatpush2.xpose.msra.mxu0 0.0
        %5669 = vmatprep.subr.mxu0 0.0
        %5670 = vmatpush2.xpose.msra.mxu0 0.0
        %5671 = vmatprep.subr.mxu0 0.0
        %5672 = vmatpush2.xpose.msra.mxu0 0.0
        %5673 = vmatprep.subr.mxu0 0.0
        %5674 = vmatpush2.xpose.msra.mxu0 0.0
        %5675 = vmatprep.subr.mxu0 0.0
        %5676 = vmatpush2.xpose.msra.mxu0 0.0
        %5677 = vmatprep.subr.mxu0 0.0
        %5678 = vmatpush2.xpose.msra.mxu0 0.0
        %5679 = vmatprep.subr.mxu0 0.0
        %5680 = vmatpush2.xpose.msra.mxu0 0.0
        %5681 = vmatprep.subr.mxu0 0.0
        %5682 = vmatpush2.xpose.msra.mxu0 0.0
        %5683 = vmatprep.subr.mxu0 0.0
        %5684 = vmatpush2.xpose.msra.mxu0 0.0
        %5685 = vmatprep.subr.mxu0 0.0
        %5686 = vmatpush2.xpose.msra.mxu0 0.0
        %5687 = vmatprep.subr.mxu0 0.0
        %5688 = vmatpush2.xpose.msra.mxu0 0.0
        %5689 = vmatprep.subr.mxu0 0.0
        %5690 = vmatpush2.xpose.msra.mxu0 0.0
        %5691 = vmatprep.subr.mxu0 0.0
        %5692 = vmatpush2.xpose.msra.mxu0 0.0
        %5693 = vmatprep.subr.mxu0 0.0
        %5694 = vmatpush2.xpose.msra.mxu0 0.0
        %5695 = vmatprep.subr.mxu0 0.0
        %5696 = vmatpush2.xpose.msra.mxu0 0.0
        %5697 = vmatprep.mubr.f32.mxu0 0.0
        %5698 = vmatmul.mubr.f32.gmra.mxu0 %v5629
        %v5699 = vpop.f32.mrf.mxu0
        %v5700 = vadd.f32 0.0, %v5699
        %v5701 = vpop.f32.mrf.mxu0
        %5702 = vdwg.mxu0
        %v5703 = vmul.f32 %v5700, 0.35355338
        %v5704 = vadd.f32 %v5703, %v3153
        %v5705 = vsel %vm2066, %v5704, -inf
        %5706 = vmax.xlane.f32.xlu0 %v5705
        %v5707 = vpop.xlane.xlu0 %5706
        %v5708 = vsub.f32 %v5704, %v5707
        %v5709 = vmul.f32 %v5708, 1.442695
        %v5710 = vpow.pop %v5709
        %v5711 = vsel %vm2066, %v5710, 0.0
        %5712 = vadd.xlane.f32.xlu0 %v5711
        %v5713 = vpop.xlane.xlu0 %5712
        %v5714 = vrcp.pop %v5713
        %v5715 = vmul.f32 %v5710, %v5714
        %5716 = vrot.lane.b32.xlu0 %v5289, 48
        %v5717 = vpop.permute.xlu0 %5716
        %v5720 = vsel %vm2066, %v5715, 0
        %5722 = vmatprep.subr.mxu0 0.0
        %5723 = vmatpush1.msra.mxu0 0.0
        %5724 = vmatprep.subr.mxu0 0.0
        %5725 = vmatpush1.msra.mxu0 0.0
        %5726 = vmatprep.subr.mxu0 0.0
        %5727 = vmatpush1.msra.mxu0 0.0
        %5728 = vmatprep.subr.mxu0 0.0
        %5729 = vmatpush1.msra.mxu0 0.0
        %5730 = vmatprep.subr.mxu0 0.0
        %5731 = vmatpush1.msra.mxu0 0.0
        %5732 = vmatprep.subr.mxu0 0.0
        %5733 = vmatpush1.msra.mxu0 0.0
        %5734 = vmatprep.subr.mxu0 0.0
        %5735 = vmatpush1.msra.mxu0 0.0
        %5736 = vmatprep.subr.mxu0 0.0
        %5737 = vmatpush1.msra.mxu0 0.0
        %5738 = vmatprep.subr.mxu0 0.0
        %5739 = vmatpush1.msra.mxu0 0.0
        %5740 = vmatprep.subr.mxu0 0.0
        %5741 = vmatpush1.msra.mxu0 0.0
        %5742 = vmatprep.subr.mxu0 0.0
        %5743 = vmatpush1.msra.mxu0 0.0
        %5744 = vmatprep.subr.mxu0 0.0
        %5745 = vmatpush1.msra.mxu0 0.0
        %5746 = vmatprep.subr.mxu0 0.0
        %5747 = vmatpush1.msra.mxu0 0.0
        %5748 = vmatprep.subr.mxu0 0.0
        %5749 = vmatpush1.msra.mxu0 0.0
        %5750 = vmatprep.subr.mxu0 0.0
        %5751 = vmatpush1.msra.mxu0 0.0
        %5752 = vmatprep.subr.mxu0 0.0
        %5753 = vmatpush1.msra.mxu0 %v5717
        %5754 = vmatprep.subr.mxu0 0.0
        %5755 = vmatpush2.msra.mxu0 0.0
        %5756 = vmatprep.subr.mxu0 0.0
        %5757 = vmatpush2.msra.mxu0 0.0
        %5758 = vmatprep.subr.mxu0 0.0
        %5759 = vmatpush2.msra.mxu0 0.0
        %5760 = vmatprep.subr.mxu0 0.0
        %5761 = vmatpush2.msra.mxu0 0.0
        %5762 = vmatprep.subr.mxu0 0.0
        %5763 = vmatpush2.msra.mxu0 0.0
        %5764 = vmatprep.subr.mxu0 0.0
        %5765 = vmatpush2.msra.mxu0 0.0
        %5766 = vmatprep.subr.mxu0 0.0
        %5767 = vmatpush2.msra.mxu0 0.0
        %5768 = vmatprep.subr.mxu0 0.0
        %5769 = vmatpush2.msra.mxu0 0.0
        %5770 = vmatprep.subr.mxu0 0.0
        %5771 = vmatpush2.msra.mxu0 0.0
        %5772 = vmatprep.subr.mxu0 0.0
        %5773 = vmatpush2.msra.mxu0 0.0
        %5774 = vmatprep.subr.mxu0 0.0
        %5775 = vmatpush2.msra.mxu0 0.0
        %5776 = vmatprep.subr.mxu0 0.0
        %5777 = vmatpush2.msra.mxu0 0.0
        %5778 = vmatprep.subr.mxu0 0.0
        %5779 = vmatpush2.msra.mxu0 0.0
        %5780 = vmatprep.subr.mxu0 0.0
        %5781 = vmatpush2.msra.mxu0 0.0
        %5782 = vmatprep.subr.mxu0 0.0
        %5783 = vmatpush2.msra.mxu0 0.0
        %5784 = vmatprep.subr.mxu0 0.0
        %5785 = vmatpush2.msra.mxu0 0.0
        %5786 = vmatprep.mubr.f32.mxu0 0.0
        %5787 = vmatmul.mubr.f32.gmra.mxu0 %v5720
        %v5788 = vpop.f32.mrf.mxu0
        %v5789 = vadd.f32 0.0, %v5788
        %v5790 = vpop.f32.mrf.mxu0
        %5791 = vdwg.mxu0
        %5792 = vrot.lane.b32.xlu0 %v5289, 104
        %v5793 = vpop.permute.xlu0 %5792
        %5794 = vrot.lane.b32.xlu0 %v5289, 72
        %v5795 = vpop.permute.xlu0 %5794
        %v5796 = vsel %vm2066, %v5793, 0
        %v5798 = vsel %vm2066, %v5795, 0
        %5800 = vmatprep.subr.mxu0 0.0
        %5801 = vmatpush1.xpose.msra.mxu0 0.0
        %5802 = vmatprep.subr.mxu0 0.0
        %5803 = vmatpush1.xpose.msra.mxu0 0.0
        %5804 = vmatprep.subr.mxu0 0.0
        %5805 = vmatpush1.xpose.msra.mxu0 0.0
        %5806 = vmatprep.subr.mxu0 0.0
        %5807 = vmatpush1.xpose.msra.mxu0 0.0
        %5808 = vmatprep.subr.mxu0 0.0
        %5809 = vmatpush1.xpose.msra.mxu0 0.0
        %5810 = vmatprep.subr.mxu0 0.0
        %5811 = vmatpush1.xpose.msra.mxu0 0.0
        %5812 = vmatprep.subr.mxu0 0.0
        %5813 = vmatpush1.xpose.msra.mxu0 0.0
        %5814 = vmatprep.subr.mxu0 0.0
        %5815 = vmatpush1.xpose.msra.mxu0 0.0
        %5816 = vmatprep.subr.mxu0 0.0
        %5817 = vmatpush1.xpose.msra.mxu0 0.0
        %5818 = vmatprep.subr.mxu0 0.0
        %5819 = vmatpush1.xpose.msra.mxu0 0.0
        %5820 = vmatprep.subr.mxu0 0.0
        %5821 = vmatpush1.xpose.msra.mxu0 0.0
        %5822 = vmatprep.subr.mxu0 0.0
        %5823 = vmatpush1.xpose.msra.mxu0 0.0
        %5824 = vmatprep.subr.mxu0 0.0
        %5825 = vmatpush1.xpose.msra.mxu0 0.0
        %5826 = vmatprep.subr.mxu0 0.0
        %5827 = vmatpush1.xpose.msra.mxu0 0.0
        %5828 = vmatprep.subr.mxu0 0.0
        %5829 = vmatpush1.xpose.msra.mxu0 0.0
        %5830 = vmatprep.subr.mxu0 0.0
        %5831 = vmatpush1.xpose.msra.mxu0 %v5798
        %5832 = vmatprep.subr.mxu0 0.0
        %5833 = vmatpush2.xpose.msra.mxu0 0.0
        %5834 = vmatprep.subr.mxu0 0.0
        %5835 = vmatpush2.xpose.msra.mxu0 0.0
        %5836 = vmatprep.subr.mxu0 0.0
        %5837 = vmatpush2.xpose.msra.mxu0 0.0
        %5838 = vmatprep.subr.mxu0 0.0
        %5839 = vmatpush2.xpose.msra.mxu0 0.0
        %5840 = vmatprep.subr.mxu0 0.0
        %5841 = vmatpush2.xpose.msra.mxu0 0.0
        %5842 = vmatprep.subr.mxu0 0.0
        %5843 = vmatpush2.xpose.msra.mxu0 0.0
        %5844 = vmatprep.subr.mxu0 0.0
        %5845 = vmatpush2.xpose.msra.mxu0 0.0
        %5846 = vmatprep.subr.mxu0 0.0
        %5847 = vmatpush2.xpose.msra.mxu0 0.0
        %5848 = vmatprep.subr.mxu0 0.0
        %5849 = vmatpush2.xpose.msra.mxu0 0.0
        %5850 = vmatprep.subr.mxu0 0.0
        %5851 = vmatpush2.xpose.msra.mxu0 0.0
        %5852 = vmatprep.subr.mxu0 0.0
        %5853 = vmatpush2.xpose.msra.mxu0 0.0
        %5854 = vmatprep.subr.mxu0 0.0
        %5855 = vmatpush2.xpose.msra.mxu0 0.0
        %5856 = vmatprep.subr.mxu0 0.0
        %5857 = vmatpush2.xpose.msra.mxu0 0.0
        %5858 = vmatprep.subr.mxu0 0.0
        %5859 = vmatpush2.xpose.msra.mxu0 0.0
        %5860 = vmatprep.subr.mxu0 0.0
        %5861 = vmatpush2.xpose.msra.mxu0 0.0
        %5862 = vmatprep.subr.mxu0 0.0
        %5863 = vmatpush2.xpose.msra.mxu0 0.0
        %5864 = vmatprep.mubr.f32.mxu0 0.0
        %5865 = vmatmul.mubr.f32.gmra.mxu0 %v5796
        %v5866 = vpop.f32.mrf.mxu0
        %v5867 = vadd.f32 0.0, %v5866
        %v5868 = vpop.f32.mrf.mxu0
        %5869 = vdwg.mxu0
        %v5870 = vmul.f32 %v5867, 0.35355338
        %v5871 = vadd.f32 %v5870, %v3153
        %v5872 = vsel %vm2066, %v5871, -inf
        %5873 = vmax.xlane.f32.xlu0 %v5872
        %v5874 = vpop.xlane.xlu0 %5873
        %v5875 = vsub.f32 %v5871, %v5874
        %v5876 = vmul.f32 %v5875, 1.442695
        %v5877 = vpow.pop %v5876
        %v5878 = vsel %vm2066, %v5877, 0.0
        %5879 = vadd.xlane.f32.xlu0 %v5878
        %v5880 = vpop.xlane.xlu0 %5879
        %v5881 = vrcp.pop %v5880
        %v5882 = vmul.f32 %v5877, %v5881
        %5883 = vrot.lane.b32.xlu0 %v5289, 40
        %v5884 = vpop.permute.xlu0 %5883
        %v5887 = vsel %vm2066, %v5882, 0
        %5889 = vmatprep.subr.mxu0 0.0
        %5890 = vmatpush1.msra.mxu0 0.0
        %5891 = vmatprep.subr.mxu0 0.0
        %5892 = vmatpush1.msra.mxu0 0.0
        %5893 = vmatprep.subr.mxu0 0.0
        %5894 = vmatpush1.msra.mxu0 0.0
        %5895 = vmatprep.subr.mxu0 0.0
        %5896 = vmatpush1.msra.mxu0 0.0
        %5897 = vmatprep.subr.mxu0 0.0
        %5898 = vmatpush1.msra.mxu0 0.0
        %5899 = vmatprep.subr.mxu0 0.0
        %5900 = vmatpush1.msra.mxu0 0.0
        %5901 = vmatprep.subr.mxu0 0.0
        %5902 = vmatpush1.msra.mxu0 0.0
        %5903 = vmatprep.subr.mxu0 0.0
        %5904 = vmatpush1.msra.mxu0 0.0
        %5905 = vmatprep.subr.mxu0 0.0
        %5906 = vmatpush1.msra.mxu0 0.0
        %5907 = vmatprep.subr.mxu0 0.0
        %5908 = vmatpush1.msra.mxu0 0.0
        %5909 = vmatprep.subr.mxu0 0.0
        %5910 = vmatpush1.msra.mxu0 0.0
        %5911 = vmatprep.subr.mxu0 0.0
        %5912 = vmatpush1.msra.mxu0 0.0
        %5913 = vmatprep.subr.mxu0 0.0
        %5914 = vmatpush1.msra.mxu0 0.0
        %5915 = vmatprep.subr.mxu0 0.0
        %5916 = vmatpush1.msra.mxu0 0.0
        %5917 = vmatprep.subr.mxu0 0.0
        %5918 = vmatpush1.msra.mxu0 0.0
        %5919 = vmatprep.subr.mxu0 0.0
        %5920 = vmatpush1.msra.mxu0 %v5884
        %5921 = vmatprep.subr.mxu0 0.0
        %5922 = vmatpush2.msra.mxu0 0.0
        %5923 = vmatprep.subr.mxu0 0.0
        %5924 = vmatpush2.msra.mxu0 0.0
        %5925 = vmatprep.subr.mxu0 0.0
        %5926 = vmatpush2.msra.mxu0 0.0
        %5927 = vmatprep.subr.mxu0 0.0
        %5928 = vmatpush2.msra.mxu0 0.0
        %5929 = vmatprep.subr.mxu0 0.0
        %5930 = vmatpush2.msra.mxu0 0.0
        %5931 = vmatprep.subr.mxu0 0.0
        %5932 = vmatpush2.msra.mxu0 0.0
        %5933 = vmatprep.subr.mxu0 0.0
        %5934 = vmatpush2.msra.mxu0 0.0
        %5935 = vmatprep.subr.mxu0 0.0
        %5936 = vmatpush2.msra.mxu0 0.0
        %5937 = vmatprep.subr.mxu0 0.0
        %5938 = vmatpush2.msra.mxu0 0.0
        %5939 = vmatprep.subr.mxu0 0.0
        %5940 = vmatpush2.msra.mxu0 0.0
        %5941 = vmatprep.subr.mxu0 0.0
        %5942 = vmatpush2.msra.mxu0 0.0
        %5943 = vmatprep.subr.mxu0 0.0
        %5944 = vmatpush2.msra.mxu0 0.0
        %5945 = vmatprep.subr.mxu0 0.0
        %5946 = vmatpush2.msra.mxu0 0.0
        %5947 = vmatprep.subr.mxu0 0.0
        %5948 = vmatpush2.msra.mxu0 0.0
        %5949 = vmatprep.subr.mxu0 0.0
        %5950 = vmatpush2.msra.mxu0 0.0
        %5951 = vmatprep.subr.mxu0 0.0
        %5952 = vmatpush2.msra.mxu0 0.0
        %5953 = vmatprep.mubr.f32.mxu0 0.0
        %5954 = vmatmul.mubr.f32.gmra.mxu0 %v5887
        %v5955 = vpop.f32.mrf.mxu0
        %v5956 = vadd.f32 0.0, %v5955
        %v5957 = vpop.f32.mrf.mxu0
        %5958 = vdwg.mxu0
        %5960 = vrot.lane.b32.xlu0 %v5622, 8
        %v5961 = vpop.permute.xlu0 %5960
        %5964 = vrot.lane.b32.xlu0 %v5789, 16
        %v5965 = vpop.permute.xlu0 %5964
        %5968 = vrot.lane.b32.xlu0 %v5956, 24
        %v5969 = vpop.permute.xlu0 %5968
        %v5971 = vsel %vm2066, %v5455, %v5961
        %v5972 = vsel %vm2740, %v5971, %v5965
        %v5973 = vsel %vm2742, %v5972, %v5969
        %v5974 = vld [vmem:[%s81] sm:$0xff]
        %v5975 = vld [vmem:[%s81 + $0x8] sm:$0xff]
        %v5976 = vld [vmem:[%s81 + $0x10] sm:$0xff]
        %v5977 = vld [vmem:[%s81 + $0x18] sm:$0xff]
        %v5978 = vld [vmem:[#allocation11] sm:$0x1]
        %v5980 = vlaneseq
        %v5981 = vshrl.u32 %v5980, 7
        %v5982 = vsub.s32 0, %v5981
        %v5983 = vrot.slane %v5978, %v5982
        %v5986 = vsel %vm1989, %v5973, 0
        %5988 = vmatprep.subr.mxu0 0.0
        %5989 = vmatpush1.msra.mxu0 0.0
        %5990 = vmatprep.subr.mxu0 0.0
        %5991 = vmatpush1.msra.mxu0 0.0
        %5992 = vmatprep.subr.mxu0 0.0
        %5993 = vmatpush1.msra.mxu0 0.0
        %5994 = vmatprep.subr.mxu0 0.0
        %5995 = vmatpush1.msra.mxu0 0.0
        %5996 = vmatprep.subr.mxu0 0.0
        %5997 = vmatpush1.msra.mxu0 0.0
        %5998 = vmatprep.subr.mxu0 0.0
        %5999 = vmatpush1.msra.mxu0 0.0
        %6000 = vmatprep.subr.mxu0 0.0
        %6001 = vmatpush1.msra.mxu0 0.0
        %6002 = vmatprep.subr.mxu0 0.0
        %6003 = vmatpush1.msra.mxu0 0.0
        %6004 = vmatprep.subr.mxu0 0.0
        %6005 = vmatpush1.msra.mxu0 0.0
        %6006 = vmatprep.subr.mxu0 0.0
        %6007 = vmatpush1.msra.mxu0 0.0
        %6008 = vmatprep.subr.mxu0 0.0
        %6009 = vmatpush1.msra.mxu0 0.0
        %6010 = vmatprep.subr.mxu0 0.0
        %6011 = vmatpush1.msra.mxu0 0.0
        %6012 = vmatprep.subr.mxu0 0.0
        %6013 = vmatpush1.msra.mxu0 %v5977
        %6014 = vmatprep.subr.mxu0 0.0
        %6015 = vmatpush1.msra.mxu0 %v5976
        %6016 = vmatprep.subr.mxu0 0.0
        %6017 = vmatpush1.msra.mxu0 %v5975
        %6018 = vmatprep.subr.mxu0 0.0
        %6019 = vmatpush1.msra.mxu0 %v5974
        %6020 = vmatprep.subr.mxu0 0.0
        %6021 = vmatpush2.msra.mxu0 0.0
        %6022 = vmatprep.subr.mxu0 0.0
        %6023 = vmatpush2.msra.mxu0 0.0
        %6024 = vmatprep.subr.mxu0 0.0
        %6025 = vmatpush2.msra.mxu0 0.0
        %6026 = vmatprep.subr.mxu0 0.0
        %6027 = vmatpush2.msra.mxu0 0.0
        %6028 = vmatprep.subr.mxu0 0.0
        %6029 = vmatpush2.msra.mxu0 0.0
        %6030 = vmatprep.subr.mxu0 0.0
        %6031 = vmatpush2.msra.mxu0 0.0
        %6032 = vmatprep.subr.mxu0 0.0
        %6033 = vmatpush2.msra.mxu0 0.0
        %6034 = vmatprep.subr.mxu0 0.0
        %6035 = vmatpush2.msra.mxu0 0.0
        %6036 = vmatprep.subr.mxu0 0.0
        %6037 = vmatpush2.msra.mxu0 0.0
        %6038 = vmatprep.subr.mxu0 0.0
        %6039 = vmatpush2.msra.mxu0 0.0
        %6040 = vmatprep.subr.mxu0 0.0
        %6041 = vmatpush2.msra.mxu0 0.0
        %6042 = vmatprep.subr.mxu0 0.0
        %6043 = vmatpush2.msra.mxu0 0.0
        %6044 = vmatprep.subr.mxu0 0.0
        %6045 = vmatpush2.msra.mxu0 0.0
        %6046 = vmatprep.subr.mxu0 0.0
        %6047 = vmatpush2.msra.mxu0 0.0
        %6048 = vmatprep.subr.mxu0 0.0
        %6049 = vmatpush2.msra.mxu0 0.0
        %6050 = vmatprep.subr.mxu0 0.0
        %6051 = vmatpush2.msra.mxu0 0.0
        %6052 = vmatprep.mubr.f32.mxu0 0.0
        %6053 = vmatmul.mubr.f32.gmra.mxu0 %v5986
        %v6054 = vpop.f32.mrf.mxu0
        %v6055 = vadd.f32 %v5983, %v6054
        %v6056 = vpop.f32.mrf.mxu0
        %6057 = vdwg.mxu0
        %v6058 = vadd.f32 %v5207, %v6055
        %v6059 = vsel %vm1989, %v6058, 0.0
        %6060 = vadd.xlane.f32.xlu0 %v6059
        %v6061 = vpop.xlane.xlu0 %6060
        %v6062 = vmul.f32 %v6061, %v2832
        %v6063 = vsub.f32 %v6058, %v6062
        %v6064 = vmul.f32 %v6063, %v6063
        %v6065 = vsel %vm1989, %v6064, 0.0
        %6066 = vadd.xlane.f32.xlu0 %v6065
        %v6067 = vpop.xlane.xlu0 %6066
        %v6068 = vmul.f32 %v6067, %v2832
        %v6069 = vadd.f32 %v6068, 1e-05
        %v6070 = vrsqrt.pop %v6069
        %v6071 = vmul.f32 %v6063, %v6070
        %v6072 = vld [vmem:[#allocation2] sm:$0x1]
        %v6074 = vlaneseq
        %v6075 = vshrl.u32 %v6074, 7
        %v6076 = vsub.s32 0, %v6075
        %v6077 = vrot.slane %v6072, %v6076
        %v6079 = vmul.f32 %v6071, %v6077
        %v6080 = vld [vmem:[%s65] sm:$0x1]
        %v6082 = vlaneseq
        %v6083 = vshrl.u32 %v6082, 7
        %v6084 = vsub.s32 0, %v6083
        %v6085 = vrot.slane %v6080, %v6084
        %v6087 = vadd.f32 %v6079, %v6085
        %v6088 = vld [vmem:[%s55] sm:$0xff]
        %v6089 = vld [vmem:[%s55 + $0x8] sm:$0xff]
        %v6090 = vld [vmem:[%s55 + $0x10] sm:$0xff]
        %v6091 = vld [vmem:[%s55 + $0x18] sm:$0xff]
        %v6092 = vld [vmem:[%s51] sm:$0x1]
        %v6094 = vlaneseq
        %v6095 = vshrl.u32 %v6094, 7
        %v6096 = vsub.s32 0, %v6095
        %v6097 = vrot.slane %v6092, %v6096
        %v6100 = vsel %vm1989, %v6087, 0
        %6102 = vmatprep.subr.mxu0 0.0
        %6103 = vmatpush1.msra.mxu0 0.0
        %6104 = vmatprep.subr.mxu0 0.0
        %6105 = vmatpush1.msra.mxu0 0.0
        %6106 = vmatprep.subr.mxu0 0.0
        %6107 = vmatpush1.msra.mxu0 0.0
        %6108 = vmatprep.subr.mxu0 0.0
        %6109 = vmatpush1.msra.mxu0 0.0
        %6110 = vmatprep.subr.mxu0 0.0
        %6111 = vmatpush1.msra.mxu0 0.0
        %6112 = vmatprep.subr.mxu0 0.0
        %6113 = vmatpush1.msra.mxu0 0.0
        %6114 = vmatprep.subr.mxu0 0.0
        %6115 = vmatpush1.msra.mxu0 0.0
        %6116 = vmatprep.subr.mxu0 0.0
        %6117 = vmatpush1.msra.mxu0 0.0
        %6118 = vmatprep.subr.mxu0 0.0
        %6119 = vmatpush1.msra.mxu0 0.0
        %6120 = vmatprep.subr.mxu0 0.0
        %6121 = vmatpush1.msra.mxu0 0.0
        %6122 = vmatprep.subr.mxu0 0.0
        %6123 = vmatpush1.msra.mxu0 0.0
        %6124 = vmatprep.subr.mxu0 0.0
        %6125 = vmatpush1.msra.mxu0 0.0
        %6126 = vmatprep.subr.mxu0 0.0
        %6127 = vmatpush1.msra.mxu0 %v6091
        %6128 = vmatprep.subr.mxu0 0.0
        %6129 = vmatpush1.msra.mxu0 %v6090
        %6130 = vmatprep.subr.mxu0 0.0
        %6131 = vmatpush1.msra.mxu0 %v6089
        %6132 = vmatprep.subr.mxu0 0.0
        %6133 = vmatpush1.msra.mxu0 %v6088
        %6134 = vmatprep.subr.mxu0 0.0
        %6135 = vmatpush2.msra.mxu0 0.0
        %6136 = vmatprep.subr.mxu0 0.0
        %6137 = vmatpush2.msra.mxu0 0.0
        %6138 = vmatprep.subr.mxu0 0.0
        %6139 = vmatpush2.msra.mxu0 0.0
        %6140 = vmatprep.subr.mxu0 0.0
        %6141 = vmatpush2.msra.mxu0 0.0
        %6142 = vmatprep.subr.mxu0 0.0
        %6143 = vmatpush2.msra.mxu0 0.0
        %6144 = vmatprep.subr.mxu0 0.0
        %6145 = vmatpush2.msra.mxu0 0.0
        %6146 = vmatprep.subr.mxu0 0.0
        %6147 = vmatpush2.msra.mxu0 0.0
        %6148 = vmatprep.subr.mxu0 0.0
        %6149 = vmatpush2.msra.mxu0 0.0
        %6150 = vmatprep.subr.mxu0 0.0
        %6151 = vmatpush2.msra.mxu0 0.0
        %6152 = vmatprep.subr.mxu0 0.0
        %6153 = vmatpush2.msra.mxu0 0.0
        %6154 = vmatprep.subr.mxu0 0.0
        %6155 = vmatpush2.msra.mxu0 0.0
        %6156 = vmatprep.subr.mxu0 0.0
        %6157 = vmatpush2.msra.mxu0 0.0
        %6158 = vmatprep.subr.mxu0 0.0
        %6159 = vmatpush2.msra.mxu0 0.0
        %6160 = vmatprep.subr.mxu0 0.0
        %6161 = vmatpush2.msra.mxu0 0.0
        %6162 = vmatprep.subr.mxu0 0.0
        %6163 = vmatpush2.msra.mxu0 0.0
        %6164 = vmatprep.subr.mxu0 0.0
        %6165 = vmatpush2.msra.mxu0 0.0
        %6166 = vmatprep.mubr.f32.mxu0 0.0
        %6167 = vmatmul.mubr.f32.gmra.mxu0 %v6100
        %v6168 = vpop.f32.mrf.mxu0
        %v6169 = vadd.f32 %v6097, %v6168
        %v6170 = vpop.f32.mrf.mxu0
        %6171 = vdwg.mxu0
        %6176 = vrot.lane.b32.xlu0 %v6088, 96
        %v6177 = vpop.permute.xlu0 %6176
        %6178 = vrot.lane.b32.xlu0 %v6089, 96
        %v6179 = vpop.permute.xlu0 %6178
        %6180 = vrot.lane.b32.xlu0 %v6090, 96
        %v6181 = vpop.permute.xlu0 %6180
        %6182 = vrot.lane.b32.xlu0 %v6091, 96
        %v6183 = vpop.permute.xlu0 %6182
        %6188 = vrot.lane.b32.xlu0 %v6097, 96
        %v6189 = vpop.permute.xlu0 %6188
        %6191 = vmatprep.subr.mxu0 0.0
        %6192 = vmatpush1.msra.mxu0 0.0
        %6193 = vmatprep.subr.mxu0 0.0
        %6194 = vmatpush1.msra.mxu0 0.0
        %6195 = vmatprep.subr.mxu0 0.0
        %6196 = vmatpush1.msra.mxu0 0.0
        %6197 = vmatprep.subr.mxu0 0.0
        %6198 = vmatpush1.msra.mxu0 0.0
        %6199 = vmatprep.subr.mxu0 0.0
        %6200 = vmatpush1.msra.mxu0 0.0
        %6201 = vmatprep.subr.mxu0 0.0
        %6202 = vmatpush1.msra.mxu0 0.0
        %6203 = vmatprep.subr.mxu0 0.0
        %6204 = vmatpush1.msra.mxu0 0.0
        %6205 = vmatprep.subr.mxu0 0.0
        %6206 = vmatpush1.msra.mxu0 0.0
        %6207 = vmatprep.subr.mxu0 0.0
        %6208 = vmatpush1.msra.mxu0 0.0
        %6209 = vmatprep.subr.mxu0 0.0
        %6210 = vmatpush1.msra.mxu0 0.0
        %6211 = vmatprep.subr.mxu0 0.0
        %6212 = vmatpush1.msra.mxu0 0.0
        %6213 = vmatprep.subr.mxu0 0.0
        %6214 = vmatpush1.msra.mxu0 0.0
        %6215 = vmatprep.subr.mxu0 0.0
        %6216 = vmatpush1.msra.mxu0 %v6183
        %6217 = vmatprep.subr.mxu0 0.0
        %6218 = vmatpush1.msra.mxu0 %v6181
        %6219 = vmatprep.subr.mxu0 0.0
        %6220 = vmatpush1.msra.mxu0 %v6179
        %6221 = vmatprep.subr.mxu0 0.0
        %6222 = vmatpush1.msra.mxu0 %v6177
        %6223 = vmatprep.subr.mxu0 0.0
        %6224 = vmatpush2.msra.mxu0 0.0
        %6225 = vmatprep.subr.mxu0 0.0
        %6226 = vmatpush2.msra.mxu0 0.0
        %6227 = vmatprep.subr.mxu0 0.0
        %6228 = vmatpush2.msra.mxu0 0.0
        %6229 = vmatprep.subr.mxu0 0.0
        %6230 = vmatpush2.msra.mxu0 0.0
        %6231 = vmatprep.subr.mxu0 0.0
        %6232 = vmatpush2.msra.mxu0 0.0
        %6233 = vmatprep.subr.mxu0 0.0
        %6234 = vmatpush2.msra.mxu0 0.0
        %6235 = vmatprep.subr.mxu0 0.0
        %6236 = vmatpush2.msra.mxu0 0.0
        %6237 = vmatprep.subr.mxu0 0.0
        %6238 = vmatpush2.msra.mxu0 0.0
        %6239 = vmatprep.subr.mxu0 0.0
        %6240 = vmatpush2.msra.mxu0 0.0
        %6241 = vmatprep.subr.mxu0 0.0
        %6242 = vmatpush2.msra.mxu0 0.0
        %6243 = vmatprep.subr.mxu0 0.0
        %6244 = vmatpush2.msra.mxu0 0.0
        %6245 = vmatprep.subr.mxu0 0.0
        %6246 = vmatpush2.msra.mxu0 0.0
        %6247 = vmatprep.subr.mxu0 0.0
        %6248 = vmatpush2.msra.mxu0 0.0
        %6249 = vmatprep.subr.mxu0 0.0
        %6250 = vmatpush2.msra.mxu0 0.0
        %6251 = vmatprep.subr.mxu0 0.0
        %6252 = vmatpush2.msra.mxu0 0.0
        %6253 = vmatprep.subr.mxu0 0.0
        %6254 = vmatpush2.msra.mxu0 0.0
        %6255 = vmatprep.mubr.f32.mxu0 0.0
        %6256 = vmatmul.mubr.f32.gmra.mxu0 %v4138
        %v6257 = vpop.f32.mrf.mxu0
        %v6258 = vadd.f32 %v6189, %v6257
        %v6259 = vpop.f32.mrf.mxu0
        %6260 = vdwg.mxu0
        %v6262 = vsel %vm2066, %v6169, 0
        %v6265 = vsel %vm2066, %v6258, 0
        %6267 = vmatprep.subr.mxu0 0.0
        %6268 = vmatpush1.xpose.msra.mxu0 0.0
        %6269 = vmatprep.subr.mxu0 0.0
        %6270 = vmatpush1.xpose.msra.mxu0 0.0
        %6271 = vmatprep.subr.mxu0 0.0
        %6272 = vmatpush1.xpose.msra.mxu0 0.0
        %6273 = vmatprep.subr.mxu0 0.0
        %6274 = vmatpush1.xpose.msra.mxu0 0.0
        %6275 = vmatprep.subr.mxu0 0.0
        %6276 = vmatpush1.xpose.msra.mxu0 0.0
        %6277 = vmatprep.subr.mxu0 0.0
        %6278 = vmatpush1.xpose.msra.mxu0 0.0
        %6279 = vmatprep.subr.mxu0 0.0
        %6280 = vmatpush1.xpose.msra.mxu0 0.0
        %6281 = vmatprep.subr.mxu0 0.0
        %6282 = vmatpush1.xpose.msra.mxu0 0.0
        %6283 = vmatprep.subr.mxu0 0.0
        %6284 = vmatpush1.xpose.msra.mxu0 0.0
        %6285 = vmatprep.subr.mxu0 0.0
        %6286 = vmatpush1.xpose.msra.mxu0 0.0
        %6287 = vmatprep.subr.mxu0 0.0
        %6288 = vmatpush1.xpose.msra.mxu0 0.0
        %6289 = vmatprep.subr.mxu0 0.0
        %6290 = vmatpush1.xpose.msra.mxu0 0.0
        %6291 = vmatprep.subr.mxu0 0.0
        %6292 = vmatpush1.xpose.msra.mxu0 0.0
        %6293 = vmatprep.subr.mxu0 0.0
        %6294 = vmatpush1.xpose.msra.mxu0 0.0
        %6295 = vmatprep.subr.mxu0 0.0
        %6296 = vmatpush1.xpose.msra.mxu0 0.0
        %6297 = vmatprep.subr.mxu0 0.0
        %6298 = vmatpush1.xpose.msra.mxu0 %v6265
        %6299 = vmatprep.subr.mxu0 0.0
        %6300 = vmatpush2.xpose.msra.mxu0 0.0
        %6301 = vmatprep.subr.mxu0 0.0
        %6302 = vmatpush2.xpose.msra.mxu0 0.0
        %6303 = vmatprep.subr.mxu0 0.0
        %6304 = vmatpush2.xpose.msra.mxu0 0.0
        %6305 = vmatprep.subr.mxu0 0.0
        %6306 = vmatpush2.xpose.msra.mxu0 0.0
        %6307 = vmatprep.subr.mxu0 0.0
        %6308 = vmatpush2.xpose.msra.mxu0 0.0
        %6309 = vmatprep.subr.mxu0 0.0
        %6310 = vmatpush2.xpose.msra.mxu0 0.0
        %6311 = vmatprep.subr.mxu0 0.0
        %6312 = vmatpush2.xpose.msra.mxu0 0.0
        %6313 = vmatprep.subr.mxu0 0.0
        %6314 = vmatpush2.xpose.msra.mxu0 0.0
        %6315 = vmatprep.subr.mxu0 0.0
        %6316 = vmatpush2.xpose.msra.mxu0 0.0
        %6317 = vmatprep.subr.mxu0 0.0
        %6318 = vmatpush2.xpose.msra.mxu0 0.0
        %6319 = vmatprep.subr.mxu0 0.0
        %6320 = vmatpush2.xpose.msra.mxu0 0.0
        %6321 = vmatprep.subr.mxu0 0.0
        %6322 = vmatpush2.xpose.msra.mxu0 0.0
        %6323 = vmatprep.subr.mxu0 0.0
        %6324 = vmatpush2.xpose.msra.mxu0 0.0
        %6325 = vmatprep.subr.mxu0 0.0
        %6326 = vmatpush2.xpose.msra.mxu0 0.0
        %6327 = vmatprep.subr.mxu0 0.0
        %6328 = vmatpush2.xpose.msra.mxu0 0.0
        %6329 = vmatprep.subr.mxu0 0.0
        %6330 = vmatpush2.xpose.msra.mxu0 0.0
        %6331 = vmatprep.mubr.f32.mxu0 0.0
        %6332 = vmatmul.mubr.f32.gmra.mxu0 %v6262
        %v6333 = vpop.f32.mrf.mxu0
        %v6334 = vadd.f32 0.0, %v6333
        %v6335 = vpop.f32.mrf.mxu0
        %6336 = vdwg.mxu0
        %v6337 = vmul.f32 %v6334, 0.35355338
        %v6338 = vadd.f32 %v6337, %v3152
        %v6339 = vsel %vm2066, %v6338, -inf
        %6340 = vmax.xlane.f32.xlu0 %v6339
        %v6341 = vpop.xlane.xlu0 %6340
        %v6342 = vsub.f32 %v6338, %v6341
        %v6343 = vmul.f32 %v6342, 1.442695
        %v6344 = vpow.pop %v6343
        %v6345 = vsel %vm2066, %v6344, 0.0
        %6346 = vadd.xlane.f32.xlu0 %v6345
        %v6347 = vpop.xlane.xlu0 %6346
        %v6348 = vrcp.pop %v6347
        %v6349 = vmul.f32 %v6344, %v6348
        %6350 = vst.msk [vmem:[%s1872] sm:$0xff] %vm2066, %v6349
        %6351 = vrot.lane.b32.xlu0 %v6258, 96
        %v6352 = vpop.permute.xlu0 %6351
        %v6355 = vsel %vm2066, %v6349, 0
        %6357 = vmatprep.subr.mxu0 0.0
        %6358 = vmatpush1.msra.mxu0 0.0
        %6359 = vmatprep.subr.mxu0 0.0
        %6360 = vmatpush1.msra.mxu0 0.0
        %6361 = vmatprep.subr.mxu0 0.0
        %6362 = vmatpush1.msra.mxu0 0.0
        %6363 = vmatprep.subr.mxu0 0.0
        %6364 = vmatpush1.msra.mxu0 0.0
        %6365 = vmatprep.subr.mxu0 0.0
        %6366 = vmatpush1.msra.mxu0 0.0
        %6367 = vmatprep.subr.mxu0 0.0
        %6368 = vmatpush1.msra.mxu0 0.0
        %6369 = vmatprep.subr.mxu0 0.0
        %6370 = vmatpush1.msra.mxu0 0.0
        %6371 = vmatprep.subr.mxu0 0.0
        %6372 = vmatpush1.msra.mxu0 0.0
        %6373 = vmatprep.subr.mxu0 0.0
        %6374 = vmatpush1.msra.mxu0 0.0
        %6375 = vmatprep.subr.mxu0 0.0
        %6376 = vmatpush1.msra.mxu0 0.0
        %6377 = vmatprep.subr.mxu0 0.0
        %6378 = vmatpush1.msra.mxu0 0.0
        %6379 = vmatprep.subr.mxu0 0.0
        %6380 = vmatpush1.msra.mxu0 0.0
        %6381 = vmatprep.subr.mxu0 0.0
        %6382 = vmatpush1.msra.mxu0 0.0
        %6383 = vmatprep.subr.mxu0 0.0
        %6384 = vmatpush1.msra.mxu0 0.0
        %6385 = vmatprep.subr.mxu0 0.0
        %6386 = vmatpush1.msra.mxu0 0.0
        %6387 = vmatprep.subr.mxu0 0.0
        %6388 = vmatpush1.msra.mxu0 %v6352
        %6389 = vmatprep.subr.mxu0 0.0
        %6390 = vmatpush2.msra.mxu0 0.0
        %6391 = vmatprep.subr.mxu0 0.0
        %6392 = vmatpush2.msra.mxu0 0.0
        %6393 = vmatprep.subr.mxu0 0.0
        %6394 = vmatpush2.msra.mxu0 0.0
        %6395 = vmatprep.subr.mxu0 0.0
        %6396 = vmatpush2.msra.mxu0 0.0
        %6397 = vmatprep.subr.mxu0 0.0
        %6398 = vmatpush2.msra.mxu0 0.0
        %6399 = vmatprep.subr.mxu0 0.0
        %6400 = vmatpush2.msra.mxu0 0.0
        %6401 = vmatprep.subr.mxu0 0.0
        %6402 = vmatpush2.msra.mxu0 0.0
        %6403 = vmatprep.subr.mxu0 0.0
        %6404 = vmatpush2.msra.mxu0 0.0
        %6405 = vmatprep.subr.mxu0 0.0
        %6406 = vmatpush2.msra.mxu0 0.0
        %6407 = vmatprep.subr.mxu0 0.0
        %6408 = vmatpush2.msra.mxu0 0.0
        %6409 = vmatprep.subr.mxu0 0.0
        %6410 = vmatpush2.msra.mxu0 0.0
        %6411 = vmatprep.subr.mxu0 0.0
        %6412 = vmatpush2.msra.mxu0 0.0
        %6413 = vmatprep.subr.mxu0 0.0
        %6414 = vmatpush2.msra.mxu0 0.0
        %6415 = vmatprep.subr.mxu0 0.0
        %6416 = vmatpush2.msra.mxu0 0.0
        %6417 = vmatprep.subr.mxu0 0.0
        %6418 = vmatpush2.msra.mxu0 0.0
        %6419 = vmatprep.subr.mxu0 0.0
        %6420 = vmatpush2.msra.mxu0 0.0
        %6421 = vmatprep.mubr.f32.mxu0 0.0
        %6422 = vmatmul.mubr.f32.gmra.mxu0 %v6355
        %v6423 = vpop.f32.mrf.mxu0
        %v6424 = vadd.f32 0.0, %v6423
        %v6425 = vpop.f32.mrf.mxu0
        %6426 = vdwg.mxu0
        %6427 = vrot.lane.b32.xlu0 %v6169, 120
        %v6428 = vpop.permute.xlu0 %6427
        %6429 = vrot.lane.b32.xlu0 %v6258, 120
        %v6430 = vpop.permute.xlu0 %6429
        %v6431 = vsel %vm2066, %v6428, 0
        %v6433 = vsel %vm2066, %v6430, 0
        %6435 = vmatprep.subr.mxu0 0.0
        %6436 = vmatpush1.xpose.msra.mxu0 0.0
        %6437 = vmatprep.subr.mxu0 0.0
        %6438 = vmatpush1.xpose.msra.mxu0 0.0
        %6439 = vmatprep.subr.mxu0 0.0
        %6440 = vmatpush1.xpose.msra.mxu0 0.0
        %6441 = vmatprep.subr.mxu0 0.0
        %6442 = vmatpush1.xpose.msra.mxu0 0.0
        %6443 = vmatprep.subr.mxu0 0.0
        %6444 = vmatpush1.xpose.msra.mxu0 0.0
        %6445 = vmatprep.subr.mxu0 0.0
        %6446 = vmatpush1.xpose.msra.mxu0 0.0
        %6447 = vmatprep.subr.mxu0 0.0
        %6448 = vmatpush1.xpose.msra.mxu0 0.0
        %6449 = vmatprep.subr.mxu0 0.0
        %6450 = vmatpush1.xpose.msra.mxu0 0.0
        %6451 = vmatprep.subr.mxu0 0.0
        %6452 = vmatpush1.xpose.msra.mxu0 0.0
        %6453 = vmatprep.subr.mxu0 0.0
        %6454 = vmatpush1.xpose.msra.mxu0 0.0
        %6455 = vmatprep.subr.mxu0 0.0
        %6456 = vmatpush1.xpose.msra.mxu0 0.0
        %6457 = vmatprep.subr.mxu0 0.0
        %6458 = vmatpush1.xpose.msra.mxu0 0.0
        %6459 = vmatprep.subr.mxu0 0.0
        %6460 = vmatpush1.xpose.msra.mxu0 0.0
        %6461 = vmatprep.subr.mxu0 0.0
        %6462 = vmatpush1.xpose.msra.mxu0 0.0
        %6463 = vmatprep.subr.mxu0 0.0
        %6464 = vmatpush1.xpose.msra.mxu0 0.0
        %6465 = vmatprep.subr.mxu0 0.0
        %6466 = vmatpush1.xpose.msra.mxu0 %v6433
        %6467 = vmatprep.subr.mxu0 0.0
        %6468 = vmatpush2.xpose.msra.mxu0 0.0
        %6469 = vmatprep.subr.mxu0 0.0
        %6470 = vmatpush2.xpose.msra.mxu0 0.0
        %6471 = vmatprep.subr.mxu0 0.0
        %6472 = vmatpush2.xpose.msra.mxu0 0.0
        %6473 = vmatprep.subr.mxu0 0.0
        %6474 = vmatpush2.xpose.msra.mxu0 0.0
        %6475 = vmatprep.subr.mxu0 0.0
        %6476 = vmatpush2.xpose.msra.mxu0 0.0
        %6477 = vmatprep.subr.mxu0 0.0
        %6478 = vmatpush2.xpose.msra.mxu0 0.0
        %6479 = vmatprep.subr.mxu0 0.0
        %6480 = vmatpush2.xpose.msra.mxu0 0.0
        %6481 = vmatprep.subr.mxu0 0.0
        %6482 = vmatpush2.xpose.msra.mxu0 0.0
        %6483 = vmatprep.subr.mxu0 0.0
        %6484 = vmatpush2.xpose.msra.mxu0 0.0
        %6485 = vmatprep.subr.mxu0 0.0
        %6486 = vmatpush2.xpose.msra.mxu0 0.0
        %6487 = vmatprep.subr.mxu0 0.0
        %6488 = vmatpush2.xpose.msra.mxu0 0.0
        %6489 = vmatprep.subr.mxu0 0.0
        %6490 = vmatpush2.xpose.msra.mxu0 0.0
        %6491 = vmatprep.subr.mxu0 0.0
        %6492 = vmatpush2.xpose.msra.mxu0 0.0
        %6493 = vmatprep.subr.mxu0 0.0
        %6494 = vmatpush2.xpose.msra.mxu0 0.0
        %6495 = vmatprep.subr.mxu0 0.0
        %6496 = vmatpush2.xpose.msra.mxu0 0.0
        %6497 = vmatprep.subr.mxu0 0.0
        %6498 = vmatpush2.xpose.msra.mxu0 0.0
        %6499 = vmatprep.mubr.f32.mxu0 0.0
        %6500 = vmatmul.mubr.f32.gmra.mxu0 %v6431
        %v6501 = vpop.f32.mrf.mxu0
        %v6502 = vadd.f32 0.0, %v6501
        %v6503 = vpop.f32.mrf.mxu0
        %6504 = vdwg.mxu0
        %v6505 = vmul.f32 %v6502, 0.35355338
        %v6506 = vadd.f32 %v6505, %v3152
        %v6507 = vsel %vm2066, %v6506, -inf
        %6508 = vmax.xlane.f32.xlu0 %v6507
        %v6509 = vpop.xlane.xlu0 %6508
        %v6510 = vsub.f32 %v6506, %v6509
        %v6511 = vmul.f32 %v6510, 1.442695
        %v6512 = vpow.pop %v6511
        %v6513 = vsel %vm2066, %v6512, 0.0
        %6514 = vadd.xlane.f32.xlu0 %v6513
        %v6515 = vpop.xlane.xlu0 %6514
        %v6516 = vrcp.pop %v6515
        %v6517 = vmul.f32 %v6512, %v6516
        %s6518 = scalar_lea.vmem %s1872, 8 [#allocation26]
        %6519 = vst.msk [vmem:[%s6518] sm:$0xff] %vm2066, %v6517
        %6520 = vrot.lane.b32.xlu0 %v6258, 88
        %v6521 = vpop.permute.xlu0 %6520
        %v6524 = vsel %vm2066, %v6517, 0
        %6526 = vmatprep.subr.mxu0 0.0
        %6527 = vmatpush1.msra.mxu0 0.0
        %6528 = vmatprep.subr.mxu0 0.0
        %6529 = vmatpush1.msra.mxu0 0.0
        %6530 = vmatprep.subr.mxu0 0.0
        %6531 = vmatpush1.msra.mxu0 0.0
        %6532 = vmatprep.subr.mxu0 0.0
        %6533 = vmatpush1.msra.mxu0 0.0
        %6534 = vmatprep.subr.mxu0 0.0
        %6535 = vmatpush1.msra.mxu0 0.0
        %6536 = vmatprep.subr.mxu0 0.0
        %6537 = vmatpush1.msra.mxu0 0.0
        %6538 = vmatprep.subr.mxu0 0.0
        %6539 = vmatpush1.msra.mxu0 0.0
        %6540 = vmatprep.subr.mxu0 0.0
        %6541 = vmatpush1.msra.mxu0 0.0
        %6542 = vmatprep.subr.mxu0 0.0
        %6543 = vmatpush1.msra.mxu0 0.0
        %6544 = vmatprep.subr.mxu0 0.0
        %6545 = vmatpush1.msra.mxu0 0.0
        %6546 = vmatprep.subr.mxu0 0.0
        %6547 = vmatpush1.msra.mxu0 0.0
        %6548 = vmatprep.subr.mxu0 0.0
        %6549 = vmatpush1.msra.mxu0 0.0
        %6550 = vmatprep.subr.mxu0 0.0
        %6551 = vmatpush1.msra.mxu0 0.0
        %6552 = vmatprep.subr.mxu0 0.0
        %6553 = vmatpush1.msra.mxu0 0.0
        %6554 = vmatprep.subr.mxu0 0.0
        %6555 = vmatpush1.msra.mxu0 0.0
        %6556 = vmatprep.subr.mxu0 0.0
        %6557 = vmatpush1.msra.mxu0 %v6521
        %6558 = vmatprep.subr.mxu0 0.0
        %6559 = vmatpush2.msra.mxu0 0.0
        %6560 = vmatprep.subr.mxu0 0.0
        %6561 = vmatpush2.msra.mxu0 0.0
        %6562 = vmatprep.subr.mxu0 0.0
        %6563 = vmatpush2.msra.mxu0 0.0
        %6564 = vmatprep.subr.mxu0 0.0
        %6565 = vmatpush2.msra.mxu0 0.0
        %6566 = vmatprep.subr.mxu0 0.0
        %6567 = vmatpush2.msra.mxu0 0.0
        %6568 = vmatprep.subr.mxu0 0.0
        %6569 = vmatpush2.msra.mxu0 0.0
        %6570 = vmatprep.subr.mxu0 0.0
        %6571 = vmatpush2.msra.mxu0 0.0
        %6572 = vmatprep.subr.mxu0 0.0
        %6573 = vmatpush2.msra.mxu0 0.0
        %6574 = vmatprep.subr.mxu0 0.0
        %6575 = vmatpush2.msra.mxu0 0.0
        %6576 = vmatprep.subr.mxu0 0.0
        %6577 = vmatpush2.msra.mxu0 0.0
        %6578 = vmatprep.subr.mxu0 0.0
        %6579 = vmatpush2.msra.mxu0 0.0
        %6580 = vmatprep.subr.mxu0 0.0
        %6581 = vmatpush2.msra.mxu0 0.0
        %6582 = vmatprep.subr.mxu0 0.0
        %6583 = vmatpush2.msra.mxu0 0.0
        %6584 = vmatprep.subr.mxu0 0.0
        %6585 = vmatpush2.msra.mxu0 0.0
        %6586 = vmatprep.subr.mxu0 0.0
        %6587 = vmatpush2.msra.mxu0 0.0
        %6588 = vmatprep.subr.mxu0 0.0
        %6589 = vmatpush2.msra.mxu0 0.0
        %6590 = vmatprep.mubr.f32.mxu0 0.0
        %6591 = vmatmul.mubr.f32.gmra.mxu0 %v6524
        %v6592 = vpop.f32.mrf.mxu0
        %v6593 = vadd.f32 0.0, %v6592
        %v6594 = vpop.f32.mrf.mxu0
        %6595 = vdwg.mxu0
        %6596 = vrot.lane.b32.xlu0 %v6169, 112
        %v6597 = vpop.permute.xlu0 %6596
        %6598 = vrot.lane.b32.xlu0 %v6258, 112
        %v6599 = vpop.permute.xlu0 %6598
        %v6600 = vsel %vm2066, %v6597, 0
        %v6602 = vsel %vm2066, %v6599, 0
        %6604 = vmatprep.subr.mxu0 0.0
        %6605 = vmatpush1.xpose.msra.mxu0 0.0
        %6606 = vmatprep.subr.mxu0 0.0
        %6607 = vmatpush1.xpose.msra.mxu0 0.0
        %6608 = vmatprep.subr.mxu0 0.0
        %6609 = vmatpush1.xpose.msra.mxu0 0.0
        %6610 = vmatprep.subr.mxu0 0.0
        %6611 = vmatpush1.xpose.msra.mxu0 0.0
        %6612 = vmatprep.subr.mxu0 0.0
        %6613 = vmatpush1.xpose.msra.mxu0 0.0
        %6614 = vmatprep.subr.mxu0 0.0
        %6615 = vmatpush1.xpose.msra.mxu0 0.0
        %6616 = vmatprep.subr.mxu0 0.0
        %6617 = vmatpush1.xpose.msra.mxu0 0.0
        %6618 = vmatprep.subr.mxu0 0.0
        %6619 = vmatpush1.xpose.msra.mxu0 0.0
        %6620 = vmatprep.subr.mxu0 0.0
        %6621 = vmatpush1.xpose.msra.mxu0 0.0
        %6622 = vmatprep.subr.mxu0 0.0
        %6623 = vmatpush1.xpose.msra.mxu0 0.0
        %6624 = vmatprep.subr.mxu0 0.0
        %6625 = vmatpush1.xpose.msra.mxu0 0.0
        %6626 = vmatprep.subr.mxu0 0.0
        %6627 = vmatpush1.xpose.msra.mxu0 0.0
        %6628 = vmatprep.subr.mxu0 0.0
        %6629 = vmatpush1.xpose.msra.mxu0 0.0
        %6630 = vmatprep.subr.mxu0 0.0
        %6631 = vmatpush1.xpose.msra.mxu0 0.0
        %6632 = vmatprep.subr.mxu0 0.0
        %6633 = vmatpush1.xpose.msra.mxu0 0.0
        %6634 = vmatprep.subr.mxu0 0.0
        %6635 = vmatpush1.xpose.msra.mxu0 %v6602
        %6636 = vmatprep.subr.mxu0 0.0
        %6637 = vmatpush2.xpose.msra.mxu0 0.0
        %6638 = vmatprep.subr.mxu0 0.0
        %6639 = vmatpush2.xpose.msra.mxu0 0.0
        %6640 = vmatprep.subr.mxu0 0.0
        %6641 = vmatpush2.xpose.msra.mxu0 0.0
        %6642 = vmatprep.subr.mxu0 0.0
        %6643 = vmatpush2.xpose.msra.mxu0 0.0
        %6644 = vmatprep.subr.mxu0 0.0
        %6645 = vmatpush2.xpose.msra.mxu0 0.0
        %6646 = vmatprep.subr.mxu0 0.0
        %6647 = vmatpush2.xpose.msra.mxu0 0.0
        %6648 = vmatprep.subr.mxu0 0.0
        %6649 = vmatpush2.xpose.msra.mxu0 0.0
        %6650 = vmatprep.subr.mxu0 0.0
        %6651 = vmatpush2.xpose.msra.mxu0 0.0
        %6652 = vmatprep.subr.mxu0 0.0
        %6653 = vmatpush2.xpose.msra.mxu0 0.0
        %6654 = vmatprep.subr.mxu0 0.0
        %6655 = vmatpush2.xpose.msra.mxu0 0.0
        %6656 = vmatprep.subr.mxu0 0.0
        %6657 = vmatpush2.xpose.msra.mxu0 0.0
        %6658 = vmatprep.subr.mxu0 0.0
        %6659 = vmatpush2.xpose.msra.mxu0 0.0
        %6660 = vmatprep.subr.mxu0 0.0
        %6661 = vmatpush2.xpose.msra.mxu0 0.0
        %6662 = vmatprep.subr.mxu0 0.0
        %6663 = vmatpush2.xpose.msra.mxu0 0.0
        %6664 = vmatprep.subr.mxu0 0.0
        %6665 = vmatpush2.xpose.msra.mxu0 0.0
        %6666 = vmatprep.subr.mxu0 0.0
        %6667 = vmatpush2.xpose.msra.mxu0 0.0
        %6668 = vmatprep.mubr.f32.mxu0 0.0
        %6669 = vmatmul.mubr.f32.gmra.mxu0 %v6600
        %v6670 = vpop.f32.mrf.mxu0
        %v6671 = vadd.f32 0.0, %v6670
        %v6672 = vpop.f32.mrf.mxu0
        %6673 = vdwg.mxu0
        %v6674 = vmul.f32 %v6671, 0.35355338
        %v6675 = vadd.f32 %v6674, %v3152
        %v6676 = vsel %vm2066, %v6675, -inf
        %6677 = vmax.xlane.f32.xlu0 %v6676
        %v6678 = vpop.xlane.xlu0 %6677
        %v6679 = vsub.f32 %v6675, %v6678
        %v6680 = vmul.f32 %v6679, 1.442695
        %v6681 = vpow.pop %v6680
        %v6682 = vsel %vm2066, %v6681, 0.0
        %6683 = vadd.xlane.f32.xlu0 %v6682
        %v6684 = vpop.xlane.xlu0 %6683
        %v6685 = vrcp.pop %v6684
        %v6686 = vmul.f32 %v6681, %v6685
        %s6687 = scalar_lea.vmem %s1872, 16 [#allocation26]
        %6688 = vst.msk [vmem:[%s6687] sm:$0xff] %vm2066, %v6686
        %6689 = vrot.lane.b32.xlu0 %v6258, 80
        %v6690 = vpop.permute.xlu0 %6689
        %v6693 = vsel %vm2066, %v6686, 0
        %6695 = vmatprep.subr.mxu0 0.0
        %6696 = vmatpush1.msra.mxu0 0.0
        %6697 = vmatprep.subr.mxu0 0.0
        %6698 = vmatpush1.msra.mxu0 0.0
        %6699 = vmatprep.subr.mxu0 0.0
        %6700 = vmatpush1.msra.mxu0 0.0
        %6701 = vmatprep.subr.mxu0 0.0
        %6702 = vmatpush1.msra.mxu0 0.0
        %6703 = vmatprep.subr.mxu0 0.0
        %6704 = vmatpush1.msra.mxu0 0.0
        %6705 = vmatprep.subr.mxu0 0.0
        %6706 = vmatpush1.msra.mxu0 0.0
        %6707 = vmatprep.subr.mxu0 0.0
        %6708 = vmatpush1.msra.mxu0 0.0
        %6709 = vmatprep.subr.mxu0 0.0
        %6710 = vmatpush1.msra.mxu0 0.0
        %6711 = vmatprep.subr.mxu0 0.0
        %6712 = vmatpush1.msra.mxu0 0.0
        %6713 = vmatprep.subr.mxu0 0.0
        %6714 = vmatpush1.msra.mxu0 0.0
        %6715 = vmatprep.subr.mxu0 0.0
        %6716 = vmatpush1.msra.mxu0 0.0
        %6717 = vmatprep.subr.mxu0 0.0
        %6718 = vmatpush1.msra.mxu0 0.0
        %6719 = vmatprep.subr.mxu0 0.0
        %6720 = vmatpush1.msra.mxu0 0.0
        %6721 = vmatprep.subr.mxu0 0.0
        %6722 = vmatpush1.msra.mxu0 0.0
        %6723 = vmatprep.subr.mxu0 0.0
        %6724 = vmatpush1.msra.mxu0 0.0
        %6725 = vmatprep.subr.mxu0 0.0
        %6726 = vmatpush1.msra.mxu0 %v6690
        %6727 = vmatprep.subr.mxu0 0.0
        %6728 = vmatpush2.msra.mxu0 0.0
        %6729 = vmatprep.subr.mxu0 0.0
        %6730 = vmatpush2.msra.mxu0 0.0
        %6731 = vmatprep.subr.mxu0 0.0
        %6732 = vmatpush2.msra.mxu0 0.0
        %6733 = vmatprep.subr.mxu0 0.0
        %6734 = vmatpush2.msra.mxu0 0.0
        %6735 = vmatprep.subr.mxu0 0.0
        %6736 = vmatpush2.msra.mxu0 0.0
        %6737 = vmatprep.subr.mxu0 0.0
        %6738 = vmatpush2.msra.mxu0 0.0
        %6739 = vmatprep.subr.mxu0 0.0
        %6740 = vmatpush2.msra.mxu0 0.0
        %6741 = vmatprep.subr.mxu0 0.0
        %6742 = vmatpush2.msra.mxu0 0.0
        %6743 = vmatprep.subr.mxu0 0.0
        %6744 = vmatpush2.msra.mxu0 0.0
        %6745 = vmatprep.subr.mxu0 0.0
        %6746 = vmatpush2.msra.mxu0 0.0
        %6747 = vmatprep.subr.mxu0 0.0
        %6748 = vmatpush2.msra.mxu0 0.0
        %6749 = vmatprep.subr.mxu0 0.0
        %6750 = vmatpush2.msra.mxu0 0.0
        %6751 = vmatprep.subr.mxu0 0.0
        %6752 = vmatpush2.msra.mxu0 0.0
        %6753 = vmatprep.subr.mxu0 0.0
        %6754 = vmatpush2.msra.mxu0 0.0
        %6755 = vmatprep.subr.mxu0 0.0
        %6756 = vmatpush2.msra.mxu0 0.0
        %6757 = vmatprep.subr.mxu0 0.0
        %6758 = vmatpush2.msra.mxu0 0.0
        %6759 = vmatprep.mubr.f32.mxu0 0.0
        %6760 = vmatmul.mubr.f32.gmra.mxu0 %v6693
        %v6761 = vpop.f32.mrf.mxu0
        %v6762 = vadd.f32 0.0, %v6761
        %v6763 = vpop.f32.mrf.mxu0
        %6764 = vdwg.mxu0
        %6765 = vrot.lane.b32.xlu0 %v6169, 104
        %v6766 = vpop.permute.xlu0 %6765
        %6767 = vrot.lane.b32.xlu0 %v6258, 104
        %v6768 = vpop.permute.xlu0 %6767
        %v6769 = vsel %vm2066, %v6766, 0
        %v6771 = vsel %vm2066, %v6768, 0
        %6773 = vmatprep.subr.mxu0 0.0
        %6774 = vmatpush1.xpose.msra.mxu0 0.0
        %6775 = vmatprep.subr.mxu0 0.0
        %6776 = vmatpush1.xpose.msra.mxu0 0.0
        %6777 = vmatprep.subr.mxu0 0.0
        %6778 = vmatpush1.xpose.msra.mxu0 0.0
        %6779 = vmatprep.subr.mxu0 0.0
        %6780 = vmatpush1.xpose.msra.mxu0 0.0
        %6781 = vmatprep.subr.mxu0 0.0
        %6782 = vmatpush1.xpose.msra.mxu0 0.0
        %6783 = vmatprep.subr.mxu0 0.0
        %6784 = vmatpush1.xpose.msra.mxu0 0.0
        %6785 = vmatprep.subr.mxu0 0.0
        %6786 = vmatpush1.xpose.msra.mxu0 0.0
        %6787 = vmatprep.subr.mxu0 0.0
        %6788 = vmatpush1.xpose.msra.mxu0 0.0
        %6789 = vmatprep.subr.mxu0 0.0
        %6790 = vmatpush1.xpose.msra.mxu0 0.0
        %6791 = vmatprep.subr.mxu0 0.0
        %6792 = vmatpush1.xpose.msra.mxu0 0.0
        %6793 = vmatprep.subr.mxu0 0.0
        %6794 = vmatpush1.xpose.msra.mxu0 0.0
        %6795 = vmatprep.subr.mxu0 0.0
        %6796 = vmatpush1.xpose.msra.mxu0 0.0
        %6797 = vmatprep.subr.mxu0 0.0
        %6798 = vmatpush1.xpose.msra.mxu0 0.0
        %6799 = vmatprep.subr.mxu0 0.0
        %6800 = vmatpush1.xpose.msra.mxu0 0.0
        %6801 = vmatprep.subr.mxu0 0.0
        %6802 = vmatpush1.xpose.msra.mxu0 0.0
        %6803 = vmatprep.subr.mxu0 0.0
        %6804 = vmatpush1.xpose.msra.mxu0 %v6771
        %6805 = vmatprep.subr.mxu0 0.0
        %6806 = vmatpush2.xpose.msra.mxu0 0.0
        %6807 = vmatprep.subr.mxu0 0.0
        %6808 = vmatpush2.xpose.msra.mxu0 0.0
        %6809 = vmatprep.subr.mxu0 0.0
        %6810 = vmatpush2.xpose.msra.mxu0 0.0
        %6811 = vmatprep.subr.mxu0 0.0
        %6812 = vmatpush2.xpose.msra.mxu0 0.0
        %6813 = vmatprep.subr.mxu0 0.0
        %6814 = vmatpush2.xpose.msra.mxu0 0.0
        %6815 = vmatprep.subr.mxu0 0.0
        %6816 = vmatpush2.xpose.msra.mxu0 0.0
        %6817 = vmatprep.subr.mxu0 0.0
        %6818 = vmatpush2.xpose.msra.mxu0 0.0
        %6819 = vmatprep.subr.mxu0 0.0
        %6820 = vmatpush2.xpose.msra.mxu0 0.0
        %6821 = vmatprep.subr.mxu0 0.0
        %6822 = vmatpush2.xpose.msra.mxu0 0.0
        %6823 = vmatprep.subr.mxu0 0.0
        %6824 = vmatpush2.xpose.msra.mxu0 0.0
        %6825 = vmatprep.subr.mxu0 0.0
        %6826 = vmatpush2.xpose.msra.mxu0 0.0
        %6827 = vmatprep.subr.mxu0 0.0
        %6828 = vmatpush2.xpose.msra.mxu0 0.0
        %6829 = vmatprep.subr.mxu0 0.0
        %6830 = vmatpush2.xpose.msra.mxu0 0.0
        %6831 = vmatprep.subr.mxu0 0.0
        %6832 = vmatpush2.xpose.msra.mxu0 0.0
        %6833 = vmatprep.subr.mxu0 0.0
        %6834 = vmatpush2.xpose.msra.mxu0 0.0
        %6835 = vmatprep.subr.mxu0 0.0
        %6836 = vmatpush2.xpose.msra.mxu0 0.0
        %6837 = vmatprep.mubr.f32.mxu0 0.0
        %6838 = vmatmul.mubr.f32.gmra.mxu0 %v6769
        %v6839 = vpop.f32.mrf.mxu0
        %v6840 = vadd.f32 0.0, %v6839
        %v6841 = vpop.f32.mrf.mxu0
        %6842 = vdwg.mxu0
        %v6843 = vmul.f32 %v6840, 0.35355338
        %v6844 = vadd.f32 %v6843, %v3152
        %v6845 = vsel %vm2066, %v6844, -inf
        %6846 = vmax.xlane.f32.xlu0 %v6845
        %v6847 = vpop.xlane.xlu0 %6846
        %v6848 = vsub.f32 %v6844, %v6847
        %v6849 = vmul.f32 %v6848, 1.442695
        %v6850 = vpow.pop %v6849
        %v6851 = vsel %vm2066, %v6850, 0.0
        %6852 = vadd.xlane.f32.xlu0 %v6851
        %v6853 = vpop.xlane.xlu0 %6852
        %v6854 = vrcp.pop %v6853
        %v6855 = vmul.f32 %v6850, %v6854
        %s6856 = scalar_lea.vmem %s1872, 24 [#allocation26]
        %6857 = vst.msk [vmem:[%s6856] sm:$0xff] %vm2066, %v6855
        %6858 = vrot.lane.b32.xlu0 %v6258, 72
        %v6859 = vpop.permute.xlu0 %6858
        %v6862 = vsel %vm2066, %v6855, 0
        %6864 = vmatprep.subr.mxu0 0.0
        %6865 = vmatpush1.msra.mxu0 0.0
        %6866 = vmatprep.subr.mxu0 0.0
        %6867 = vmatpush1.msra.mxu0 0.0
        %6868 = vmatprep.subr.mxu0 0.0
        %6869 = vmatpush1.msra.mxu0 0.0
        %6870 = vmatprep.subr.mxu0 0.0
        %6871 = vmatpush1.msra.mxu0 0.0
        %6872 = vmatprep.subr.mxu0 0.0
        %6873 = vmatpush1.msra.mxu0 0.0
        %6874 = vmatprep.subr.mxu0 0.0
        %6875 = vmatpush1.msra.mxu0 0.0
        %6876 = vmatprep.subr.mxu0 0.0
        %6877 = vmatpush1.msra.mxu0 0.0
        %6878 = vmatprep.subr.mxu0 0.0
        %6879 = vmatpush1.msra.mxu0 0.0
        %6880 = vmatprep.subr.mxu0 0.0
        %6881 = vmatpush1.msra.mxu0 0.0
        %6882 = vmatprep.subr.mxu0 0.0
        %6883 = vmatpush1.msra.mxu0 0.0
        %6884 = vmatprep.subr.mxu0 0.0
        %6885 = vmatpush1.msra.mxu0 0.0
        %6886 = vmatprep.subr.mxu0 0.0
        %6887 = vmatpush1.msra.mxu0 0.0
        %6888 = vmatprep.subr.mxu0 0.0
        %6889 = vmatpush1.msra.mxu0 0.0
        %6890 = vmatprep.subr.mxu0 0.0
        %6891 = vmatpush1.msra.mxu0 0.0
        %6892 = vmatprep.subr.mxu0 0.0
        %6893 = vmatpush1.msra.mxu0 0.0
        %6894 = vmatprep.subr.mxu0 0.0
        %6895 = vmatpush1.msra.mxu0 %v6859
        %6896 = vmatprep.subr.mxu0 0.0
        %6897 = vmatpush2.msra.mxu0 0.0
        %6898 = vmatprep.subr.mxu0 0.0
        %6899 = vmatpush2.msra.mxu0 0.0
        %6900 = vmatprep.subr.mxu0 0.0
        %6901 = vmatpush2.msra.mxu0 0.0
        %6902 = vmatprep.subr.mxu0 0.0
        %6903 = vmatpush2.msra.mxu0 0.0
        %6904 = vmatprep.subr.mxu0 0.0
        %6905 = vmatpush2.msra.mxu0 0.0
        %6906 = vmatprep.subr.mxu0 0.0
        %6907 = vmatpush2.msra.mxu0 0.0
        %6908 = vmatprep.subr.mxu0 0.0
        %6909 = vmatpush2.msra.mxu0 0.0
        %6910 = vmatprep.subr.mxu0 0.0
        %6911 = vmatpush2.msra.mxu0 0.0
        %6912 = vmatprep.subr.mxu0 0.0
        %6913 = vmatpush2.msra.mxu0 0.0
        %6914 = vmatprep.subr.mxu0 0.0
        %6915 = vmatpush2.msra.mxu0 0.0
        %6916 = vmatprep.subr.mxu0 0.0
        %6917 = vmatpush2.msra.mxu0 0.0
        %6918 = vmatprep.subr.mxu0 0.0
        %6919 = vmatpush2.msra.mxu0 0.0
        %6920 = vmatprep.subr.mxu0 0.0
        %6921 = vmatpush2.msra.mxu0 0.0
        %6922 = vmatprep.subr.mxu0 0.0
        %6923 = vmatpush2.msra.mxu0 0.0
        %6924 = vmatprep.subr.mxu0 0.0
        %6925 = vmatpush2.msra.mxu0 0.0
        %6926 = vmatprep.subr.mxu0 0.0
        %6927 = vmatpush2.msra.mxu0 0.0
        %6928 = vmatprep.mubr.f32.mxu0 0.0
        %6929 = vmatmul.mubr.f32.gmra.mxu0 %v6862
        %v6930 = vpop.f32.mrf.mxu0
        %v6931 = vadd.f32 0.0, %v6930
        %v6932 = vpop.f32.mrf.mxu0
        %6933 = vdwg.mxu0
        %6935 = vrot.lane.b32.xlu0 %v6593, 8
        %v6936 = vpop.permute.xlu0 %6935
        %6939 = vrot.lane.b32.xlu0 %v6762, 16
        %v6940 = vpop.permute.xlu0 %6939
        %6943 = vrot.lane.b32.xlu0 %v6931, 24
        %v6944 = vpop.permute.xlu0 %6943
        %v6946 = vsel %vm2066, %v6424, %v6936
        %v6947 = vsel %vm2740, %v6946, %v6940
        %v6948 = vsel %vm2742, %v6947, %v6944
        %v6949 = vld [vmem:[%s53] sm:$0xff]
        %v6950 = vld [vmem:[%s53 + $0x8] sm:$0xff]
        %v6951 = vld [vmem:[%s53 + $0x10] sm:$0xff]
        %v6952 = vld [vmem:[%s53 + $0x18] sm:$0xff]
        %v6953 = vld [vmem:[%s49] sm:$0x1]
        %v6955 = vlaneseq
        %v6956 = vshrl.u32 %v6955, 7
        %v6957 = vsub.s32 0, %v6956
        %v6958 = vrot.slane %v6953, %v6957
        %v6961 = vsel %vm1989, %v6948, 0
        %6963 = vmatprep.subr.mxu0 0.0
        %6964 = vmatpush1.msra.mxu0 0.0
        %6965 = vmatprep.subr.mxu0 0.0
        %6966 = vmatpush1.msra.mxu0 0.0
        %6967 = vmatprep.subr.mxu0 0.0
        %6968 = vmatpush1.msra.mxu0 0.0
        %6969 = vmatprep.subr.mxu0 0.0
        %6970 = vmatpush1.msra.mxu0 0.0
        %6971 = vmatprep.subr.mxu0 0.0
        %6972 = vmatpush1.msra.mxu0 0.0
        %6973 = vmatprep.subr.mxu0 0.0
        %6974 = vmatpush1.msra.mxu0 0.0
        %6975 = vmatprep.subr.mxu0 0.0
        %6976 = vmatpush1.msra.mxu0 0.0
        %6977 = vmatprep.subr.mxu0 0.0
        %6978 = vmatpush1.msra.mxu0 0.0
        %6979 = vmatprep.subr.mxu0 0.0
        %6980 = vmatpush1.msra.mxu0 0.0
        %6981 = vmatprep.subr.mxu0 0.0
        %6982 = vmatpush1.msra.mxu0 0.0
        %6983 = vmatprep.subr.mxu0 0.0
        %6984 = vmatpush1.msra.mxu0 0.0
        %6985 = vmatprep.subr.mxu0 0.0
        %6986 = vmatpush1.msra.mxu0 0.0
        %6987 = vmatprep.subr.mxu0 0.0
        %6988 = vmatpush1.msra.mxu0 %v6952
        %6989 = vmatprep.subr.mxu0 0.0
        %6990 = vmatpush1.msra.mxu0 %v6951
        %6991 = vmatprep.subr.mxu0 0.0
        %6992 = vmatpush1.msra.mxu0 %v6950
        %6993 = vmatprep.subr.mxu0 0.0
        %6994 = vmatpush1.msra.mxu0 %v6949
        %6995 = vmatprep.subr.mxu0 0.0
        %6996 = vmatpush2.msra.mxu0 0.0
        %6997 = vmatprep.subr.mxu0 0.0
        %6998 = vmatpush2.msra.mxu0 0.0
        %6999 = vmatprep.subr.mxu0 0.0
        %7000 = vmatpush2.msra.mxu0 0.0
        %7001 = vmatprep.subr.mxu0 0.0
        %7002 = vmatpush2.msra.mxu0 0.0
        %7003 = vmatprep.subr.mxu0 0.0
        %7004 = vmatpush2.msra.mxu0 0.0
        %7005 = vmatprep.subr.mxu0 0.0
        %7006 = vmatpush2.msra.mxu0 0.0
        %7007 = vmatprep.subr.mxu0 0.0
        %7008 = vmatpush2.msra.mxu0 0.0
        %7009 = vmatprep.subr.mxu0 0.0
        %7010 = vmatpush2.msra.mxu0 0.0
        %7011 = vmatprep.subr.mxu0 0.0
        %7012 = vmatpush2.msra.mxu0 0.0
        %7013 = vmatprep.subr.mxu0 0.0
        %7014 = vmatpush2.msra.mxu0 0.0
        %7015 = vmatprep.subr.mxu0 0.0
        %7016 = vmatpush2.msra.mxu0 0.0
        %7017 = vmatprep.subr.mxu0 0.0
        %7018 = vmatpush2.msra.mxu0 0.0
        %7019 = vmatprep.subr.mxu0 0.0
        %7020 = vmatpush2.msra.mxu0 0.0
        %7021 = vmatprep.subr.mxu0 0.0
        %7022 = vmatpush2.msra.mxu0 0.0
        %7023 = vmatprep.subr.mxu0 0.0
        %7024 = vmatpush2.msra.mxu0 0.0
        %7025 = vmatprep.subr.mxu0 0.0
        %7026 = vmatpush2.msra.mxu0 0.0
        %7027 = vmatprep.mubr.f32.mxu0 0.0
        %7028 = vmatmul.mubr.f32.gmra.mxu0 %v6961
        %v7029 = vpop.f32.mrf.mxu0
        %v7030 = vadd.f32 %v6958, %v7029
        %v7031 = vpop.f32.mrf.mxu0
        %7032 = vdwg.mxu0
        %v7033 = vadd.f32 %v6087, %v7030
        %v7034 = vsel %vm1989, %v7033, 0.0
        %7035 = vadd.xlane.f32.xlu0 %v7034
        %v7036 = vpop.xlane.xlu0 %7035
        %v7037 = vmul.f32 %v7036, %v2832
        %v7038 = vsub.f32 %v7033, %v7037
        %v7039 = vmul.f32 %v7038, %v7038
        %v7040 = vsel %vm1989, %v7039, 0.0
        %7041 = vadd.xlane.f32.xlu0 %v7040
        %v7042 = vpop.xlane.xlu0 %7041
        %v7043 = vmul.f32 %v7042, %v2832
        %v7044 = vadd.f32 %v7043, 1e-05
        %v7045 = vrsqrt.pop %v7044
        %v7046 = vmul.f32 %v7038, %v7045
        %v7047 = vld [vmem:[#allocation7] sm:$0x1]
        %v7049 = vlaneseq
        %v7050 = vshrl.u32 %v7049, 7
        %v7051 = vsub.s32 0, %v7050
        %v7052 = vrot.slane %v7047, %v7051
        %v7054 = vmul.f32 %v7046, %v7052
        %v7055 = vld [vmem:[#allocation5] sm:$0x1]
        %v7057 = vlaneseq
        %v7058 = vshrl.u32 %v7057, 7
        %v7059 = vsub.s32 0, %v7058
        %v7060 = vrot.slane %v7055, %v7059
        %v7062 = vadd.f32 %v7054, %v7060
        %v7063 = vld [vmem:[%s61] sm:$0xff]
        %v7064 = vld [vmem:[%s61 + $0x8] sm:$0xff]
        %v7065 = vld [vmem:[%s61 + $0x10] sm:$0xff]
        %v7066 = vld [vmem:[%s61 + $0x18] sm:$0xff]
        %v7067 = vld [vmem:[%s57] sm:$0x1]
        %v7069 = vlaneseq
        %v7070 = vshrl.u32 %v7069, 7
        %v7071 = vsub.s32 0, %v7070
        %v7072 = vrot.slane %v7067, %v7071
        %v7075 = vsel %vm1989, %v7062, 0
        %7077 = vmatprep.subr.mxu0 0.0
        %7078 = vmatpush1.msra.mxu0 0.0
        %7079 = vmatprep.subr.mxu0 0.0
        %7080 = vmatpush1.msra.mxu0 0.0
        %7081 = vmatprep.subr.mxu0 0.0
        %7082 = vmatpush1.msra.mxu0 0.0
        %7083 = vmatprep.subr.mxu0 0.0
        %7084 = vmatpush1.msra.mxu0 0.0
        %7085 = vmatprep.subr.mxu0 0.0
        %7086 = vmatpush1.msra.mxu0 0.0
        %7087 = vmatprep.subr.mxu0 0.0
        %7088 = vmatpush1.msra.mxu0 0.0
        %7089 = vmatprep.subr.mxu0 0.0
        %7090 = vmatpush1.msra.mxu0 0.0
        %7091 = vmatprep.subr.mxu0 0.0
        %7092 = vmatpush1.msra.mxu0 0.0
        %7093 = vmatprep.subr.mxu0 0.0
        %7094 = vmatpush1.msra.mxu0 0.0
        %7095 = vmatprep.subr.mxu0 0.0
        %7096 = vmatpush1.msra.mxu0 0.0
        %7097 = vmatprep.subr.mxu0 0.0
        %7098 = vmatpush1.msra.mxu0 0.0
        %7099 = vmatprep.subr.mxu0 0.0
        %7100 = vmatpush1.msra.mxu0 0.0
        %7101 = vmatprep.subr.mxu0 0.0
        %7102 = vmatpush1.msra.mxu0 %v7066
        %7103 = vmatprep.subr.mxu0 0.0
        %7104 = vmatpush1.msra.mxu0 %v7065
        %7105 = vmatprep.subr.mxu0 0.0
        %7106 = vmatpush1.msra.mxu0 %v7064
        %7107 = vmatprep.subr.mxu0 0.0
        %7108 = vmatpush1.msra.mxu0 %v7063
        %7109 = vmatprep.subr.mxu0 0.0
        %7110 = vmatpush2.msra.mxu0 0.0
        %7111 = vmatprep.subr.mxu0 0.0
        %7112 = vmatpush2.msra.mxu0 0.0
        %7113 = vmatprep.subr.mxu0 0.0
        %7114 = vmatpush2.msra.mxu0 0.0
        %7115 = vmatprep.subr.mxu0 0.0
        %7116 = vmatpush2.msra.mxu0 0.0
        %7117 = vmatprep.subr.mxu0 0.0
        %7118 = vmatpush2.msra.mxu0 0.0
        %7119 = vmatprep.subr.mxu0 0.0
        %7120 = vmatpush2.msra.mxu0 0.0
        %7121 = vmatprep.subr.mxu0 0.0
        %7122 = vmatpush2.msra.mxu0 0.0
        %7123 = vmatprep.subr.mxu0 0.0
        %7124 = vmatpush2.msra.mxu0 0.0
        %7125 = vmatprep.subr.mxu0 0.0
        %7126 = vmatpush2.msra.mxu0 0.0
        %7127 = vmatprep.subr.mxu0 0.0
        %7128 = vmatpush2.msra.mxu0 0.0
        %7129 = vmatprep.subr.mxu0 0.0
        %7130 = vmatpush2.msra.mxu0 0.0
        %7131 = vmatprep.subr.mxu0 0.0
        %7132 = vmatpush2.msra.mxu0 0.0
        %7133 = vmatprep.subr.mxu0 0.0
        %7134 = vmatpush2.msra.mxu0 0.0
        %7135 = vmatprep.subr.mxu0 0.0
        %7136 = vmatpush2.msra.mxu0 0.0
        %7137 = vmatprep.subr.mxu0 0.0
        %7138 = vmatpush2.msra.mxu0 0.0
        %7139 = vmatprep.subr.mxu0 0.0
        %7140 = vmatpush2.msra.mxu0 0.0
        %7141 = vmatprep.mubr.f32.mxu0 0.0
        %7142 = vmatmul.mubr.f32.gmra.mxu0 %v7075
        %v7143 = vpop.f32.mrf.mxu0
        %v7144 = vadd.f32 %v7072, %v7143
        %v7145 = vpop.f32.mrf.mxu0
        %7146 = vdwg.mxu0
        %v7147 = vmax.f32 %v7144, 0.0
        %v7148 = vld [vmem:[%s63] sm:$0xff]
        %v7149 = vld [vmem:[%s63 + $0x8] sm:$0xff]
        %v7150 = vld [vmem:[%s63 + $0x10] sm:$0xff]
        %v7151 = vld [vmem:[%s63 + $0x18] sm:$0xff]
        %v7152 = vld [vmem:[%s63 + $0x20] sm:$0xff]
        %v7153 = vld [vmem:[%s63 + $0x28] sm:$0xff]
        %v7154 = vld [vmem:[%s63 + $0x30] sm:$0xff]
        %v7155 = vld [vmem:[%s63 + $0x38] sm:$0xff]
        %v7156 = vld [vmem:[%s59] sm:$0x1]
        %v7158 = vlaneseq
        %v7159 = vshrl.u32 %v7158, 7
        %v7160 = vsub.s32 0, %v7159
        %v7161 = vrot.slane %v7156, %v7160
        %v7164 = vsel %vm2959, %v7147, 0
        %7166 = vmatprep.subr.mxu0 0.0
        %7167 = vmatpush1.msra.mxu0 0.0
        %7168 = vmatprep.subr.mxu0 0.0
        %7169 = vmatpush1.msra.mxu0 0.0
        %7170 = vmatprep.subr.mxu0 0.0
        %7171 = vmatpush1.msra.mxu0 0.0
        %7172 = vmatprep.subr.mxu0 0.0
        %7173 = vmatpush1.msra.mxu0 0.0
        %7174 = vmatprep.subr.mxu0 0.0
        %7175 = vmatpush1.msra.mxu0 0.0
        %7176 = vmatprep.subr.mxu0 0.0
        %7177 = vmatpush1.msra.mxu0 0.0
        %7178 = vmatprep.subr.mxu0 0.0
        %7179 = vmatpush1.msra.mxu0 0.0
        %7180 = vmatprep.subr.mxu0 0.0
        %7181 = vmatpush1.msra.mxu0 0.0
        %7182 = vmatprep.subr.mxu0 0.0
        %7183 = vmatpush1.msra.mxu0 %v7155
        %7184 = vmatprep.subr.mxu0 0.0
        %7185 = vmatpush1.msra.mxu0 %v7154
        %7186 = vmatprep.subr.mxu0 0.0
        %7187 = vmatpush1.msra.mxu0 %v7153
        %7188 = vmatprep.subr.mxu0 0.0
        %7189 = vmatpush1.msra.mxu0 %v7152
        %7190 = vmatprep.subr.mxu0 0.0
        %7191 = vmatpush1.msra.mxu0 %v7151
        %7192 = vmatprep.subr.mxu0 0.0
        %7193 = vmatpush1.msra.mxu0 %v7150
        %7194 = vmatprep.subr.mxu0 0.0
        %7195 = vmatpush1.msra.mxu0 %v7149
        %7196 = vmatprep.subr.mxu0 0.0
        %7197 = vmatpush1.msra.mxu0 %v7148
        %7198 = vmatprep.subr.mxu0 0.0
        %7199 = vmatpush2.msra.mxu0 0.0
        %7200 = vmatprep.subr.mxu0 0.0
        %7201 = vmatpush2.msra.mxu0 0.0
        %7202 = vmatprep.subr.mxu0 0.0
        %7203 = vmatpush2.msra.mxu0 0.0
        %7204 = vmatprep.subr.mxu0 0.0
        %7205 = vmatpush2.msra.mxu0 0.0
        %7206 = vmatprep.subr.mxu0 0.0
        %7207 = vmatpush2.msra.mxu0 0.0
        %7208 = vmatprep.subr.mxu0 0.0
        %7209 = vmatpush2.msra.mxu0 0.0
        %7210 = vmatprep.subr.mxu0 0.0
        %7211 = vmatpush2.msra.mxu0 0.0
        %7212 = vmatprep.subr.mxu0 0.0
        %7213 = vmatpush2.msra.mxu0 0.0
        %7214 = vmatprep.subr.mxu0 0.0
        %7215 = vmatpush2.msra.mxu0 0.0
        %7216 = vmatprep.subr.mxu0 0.0
        %7217 = vmatpush2.msra.mxu0 0.0
        %7218 = vmatprep.subr.mxu0 0.0
        %7219 = vmatpush2.msra.mxu0 0.0
        %7220 = vmatprep.subr.mxu0 0.0
        %7221 = vmatpush2.msra.mxu0 0.0
        %7222 = vmatprep.subr.mxu0 0.0
        %7223 = vmatpush2.msra.mxu0 0.0
        %7224 = vmatprep.subr.mxu0 0.0
        %7225 = vmatpush2.msra.mxu0 0.0
        %7226 = vmatprep.subr.mxu0 0.0
        %7227 = vmatpush2.msra.mxu0 0.0
        %7228 = vmatprep.subr.mxu0 0.0
        %7229 = vmatpush2.msra.mxu0 0.0
        %7230 = vmatprep.mubr.f32.mxu0 0.0
        %7231 = vmatmul.mubr.f32.gmra.mxu0 %v7164
        %v7232 = vpop.f32.mrf.mxu0
        %v7233 = vadd.f32 %v7161, %v7232
        %v7234 = vpop.f32.mrf.mxu0
        %7235 = vdwg.mxu0
        %v7236 = vadd.f32 %v7062, %v7233
        %v7237 = vsel %vm1989, %v7236, 0.0
        %7238 = vadd.xlane.f32.xlu0 %v7237
        %v7239 = vpop.xlane.xlu0 %7238
        %v7240 = vmul.f32 %v7239, %v2832
        %v7241 = vsub.f32 %v7236, %v7240
        %v7242 = vmul.f32 %v7241, %v7241
        %v7243 = vsel %vm1989, %v7242, 0.0
        %7244 = vadd.xlane.f32.xlu0 %v7243
        %v7245 = vpop.xlane.xlu0 %7244
        %v7246 = vmul.f32 %v7245, %v2832
        %v7247 = vadd.f32 %v7246, 1e-05
        %v7248 = vrsqrt.pop %v7247
        %v7249 = vmul.f32 %v7241, %v7248
        %v7250 = vld [vmem:[#allocation10] sm:$0x1]
        %v7252 = vlaneseq
        %v7253 = vshrl.u32 %v7252, 7
        %v7254 = vsub.s32 0, %v7253
        %v7255 = vrot.slane %v7250, %v7254
        %v7257 = vmul.f32 %v7249, %v7255
        %v7258 = vld [vmem:[#allocation8] sm:$0x1]
        %v7260 = vlaneseq
        %v7261 = vshrl.u32 %v7260, 7
        %v7262 = vsub.s32 0, %v7261
        %v7263 = vrot.slane %v7258, %v7262
        %v7265 = vadd.f32 %v7257, %v7263
        %v7266 = vld [vmem:[%s11] sm:$0xff]
        %v7267 = vld [vmem:[%s11 + $0x8] sm:$0xff]
        %v7268 = vld [vmem:[%s11 + $0x10] sm:$0xff]
        %v7269 = vld [vmem:[%s11 + $0x18] sm:$0xff]
        %v7270 = vld [vmem:[%s9] sm:$0x1]
        %v7272 = vlaneseq
        %v7273 = vshrl.u32 %v7272, 7
        %v7274 = vsub.s32 0, %v7273
        %v7275 = vrot.slane %v7270, %v7274
        %v7278 = vsel %vm1989, %v7265, 0
        %7280 = vmatprep.subr.mxu0 0.0
        %7281 = vmatpush1.msra.mxu0 0.0
        %7282 = vmatprep.subr.mxu0 0.0
        %7283 = vmatpush1.msra.mxu0 0.0
        %7284 = vmatprep.subr.mxu0 0.0
        %7285 = vmatpush1.msra.mxu0 0.0
        %7286 = vmatprep.subr.mxu0 0.0
        %7287 = vmatpush1.msra.mxu0 0.0
        %7288 = vmatprep.subr.mxu0 0.0
        %7289 = vmatpush1.msra.mxu0 0.0
        %7290 = vmatprep.subr.mxu0 0.0
        %7291 = vmatpush1.msra.mxu0 0.0
        %7292 = vmatprep.subr.mxu0 0.0
        %7293 = vmatpush1.msra.mxu0 0.0
        %7294 = vmatprep.subr.mxu0 0.0
        %7295 = vmatpush1.msra.mxu0 0.0
        %7296 = vmatprep.subr.mxu0 0.0
        %7297 = vmatpush1.msra.mxu0 0.0
        %7298 = vmatprep.subr.mxu0 0.0
        %7299 = vmatpush1.msra.mxu0 0.0
        %7300 = vmatprep.subr.mxu0 0.0
        %7301 = vmatpush1.msra.mxu0 0.0
        %7302 = vmatprep.subr.mxu0 0.0
        %7303 = vmatpush1.msra.mxu0 0.0
        %7304 = vmatprep.subr.mxu0 0.0
        %7305 = vmatpush1.msra.mxu0 %v7269
        %7306 = vmatprep.subr.mxu0 0.0
        %7307 = vmatpush1.msra.mxu0 %v7268
        %7308 = vmatprep.subr.mxu0 0.0
        %7309 = vmatpush1.msra.mxu0 %v7267
        %7310 = vmatprep.subr.mxu0 0.0
        %7311 = vmatpush1.msra.mxu0 %v7266
        %7312 = vmatprep.subr.mxu0 0.0
        %7313 = vmatpush2.msra.mxu0 0.0
        %7314 = vmatprep.subr.mxu0 0.0
        %7315 = vmatpush2.msra.mxu0 0.0
        %7316 = vmatprep.subr.mxu0 0.0
        %7317 = vmatpush2.msra.mxu0 0.0
        %7318 = vmatprep.subr.mxu0 0.0
        %7319 = vmatpush2.msra.mxu0 0.0
        %7320 = vmatprep.subr.mxu0 0.0
        %7321 = vmatpush2.msra.mxu0 0.0
        %7322 = vmatprep.subr.mxu0 0.0
        %7323 = vmatpush2.msra.mxu0 0.0
        %7324 = vmatprep.subr.mxu0 0.0
        %7325 = vmatpush2.msra.mxu0 0.0
        %7326 = vmatprep.subr.mxu0 0.0
        %7327 = vmatpush2.msra.mxu0 0.0
        %7328 = vmatprep.subr.mxu0 0.0
        %7329 = vmatpush2.msra.mxu0 0.0
        %7330 = vmatprep.subr.mxu0 0.0
        %7331 = vmatpush2.msra.mxu0 0.0
        %7332 = vmatprep.subr.mxu0 0.0
        %7333 = vmatpush2.msra.mxu0 0.0
        %7334 = vmatprep.subr.mxu0 0.0
        %7335 = vmatpush2.msra.mxu0 0.0
        %7336 = vmatprep.subr.mxu0 0.0
        %7337 = vmatpush2.msra.mxu0 0.0
        %7338 = vmatprep.subr.mxu0 0.0
        %7339 = vmatpush2.msra.mxu0 0.0
        %7340 = vmatprep.subr.mxu0 0.0
        %7341 = vmatpush2.msra.mxu0 0.0
        %7342 = vmatprep.subr.mxu0 0.0
        %7343 = vmatpush2.msra.mxu0 0.0
        %7344 = vmatprep.mubr.f32.mxu0 0.0
        %7345 = vmatmul.mubr.f32.gmra.mxu0 %v7278
        %v7346 = vpop.f32.mrf.mxu0
        %v7347 = vadd.f32 %v7275, %v7346
        %v7348 = vpop.f32.mrf.mxu0
        %7349 = vdwg.mxu0
        %vm7350 = vcmask 39936
        %7351 = vst.msk [vmem:[%s1880] sm:$0xff] %vm7350, %v7347
        %p7352 = scmp.lt.s32.totalorder %s138, 1
        %s7353 = scalar_select %p7352, %s138, 1
        %s7354 = smul.addr %s7353, 8
        %s7355 = scalar_lea.vmem %s113, %s7354
        %s7356 = sand.u32 %s1353, 1
        %s7357 = scalar_lea.sflag [#allocation4], %s7356
        %s7358 = sand.u32 %s1353, 1
        %s7359 = smul.addr %s7358, 32
        %s7360 = scalar_lea.vmem [#allocation26], %s7359
        // Predicated region
        $region305: #{transformer_forward.1} parent=243 // pred_check
          %p7361 = pneg %p1337
        $region306: #{transformer_forward.1} parent=243 // pred_check_branch
          %7363 = sbr.rel (%p7361) target = $region308
        $region307: #{transformer_forward.1} parent=243 // pred_region
          _
        $region308: #{transformer_forward.1} parent=243 // pred_fallthru
          _
        // Predicated region
        $region309: #{transformer_forward.1} parent=243 // pred_check
          %p7364 = pneg %p1363
        $region310: #{transformer_forward.1} parent=243 // pred_check_branch
          %7366 = sbr.rel (%p7364) target = $region312
        $region311: #{transformer_forward.1} parent=243 // pred_region
          %s7367 = smul.u32 4, %s138
          %s7369 = ssub.s32 512, 512
          %7370 = vsyncadd %s7357, %s7369
          %s7371 = smul.addr %s7367, 128
          %s7372 = scalar_lea.hbm %s115, %s7371
          %s7373 = sshll.u32 %s7360, 4
          %s7374 = int_to_ptr.vmem [resolvable:$true] %s7373
          %7379 = dma.vmem_to_hbm [thread:$0]  %s7374, 512, %s7372, %s7357, 128, 128, 8
        $region312: #{transformer_forward.1} parent=243 // pred_fallthru
          _
      $region244: #{transformer_forward.1} parent=5 // pred_fallthru
        _
      %p7380 = scmp.le.s32.totalorder 2, %s133
      // Predicated region
      $region313: #{transformer_forward.1} parent=5 // pred_check
        %p7381 = pneg %p7380
      $region314: #{transformer_forward.1} parent=5 // pred_check_branch
        %7383 = sbr.rel (%p7381) target = $region316
      $region315: #{transformer_forward.1} parent=5 // pred_region
        %s7384 = ssub.s32 %s133, 2
        // Predicated region
        $region317: #{transformer_forward.1} parent=315 // pred_check
          %p7385 = pneg %p1343
        $region318: #{transformer_forward.1} parent=315 // pred_check_branch
          %7387 = sbr.rel (%p7385) target = $region320
        $region319: #{transformer_forward.1} parent=315 // pred_region
          %p7388 = scmp.lt.s32.totalorder %s139, 1
          %s7389 = scalar_select %p7388, %s139, 1
          %s7390 = smul.addr %s7389, 8
          %s7391 = scalar_lea.vmem %s113, %s7390
        $region320: #{transformer_forward.1} parent=315 // pred_fallthru
          _
        // Predicated region
        $region321: #{transformer_forward.1} parent=315 // pred_check
          %p7392 = pneg %p1369
        $region322: #{transformer_forward.1} parent=315 // pred_check_branch
          %7394 = sbr.rel (%p7392) target = $region324
        $region323: #{transformer_forward.1} parent=315 // pred_region
          %s7395 = sand.u32 %s1354, 1
          %s7396 = scalar_lea.sflag [#allocation4], %s7395
          %s7397 = sand.u32 %s1354, 1
          %s7398 = smul.addr %s7397, 32
          %s7399 = scalar_lea.vmem [#allocation26], %s7398
          %7400 = dma.done %s7396, 512
        $region324: #{transformer_forward.1} parent=315 // pred_fallthru
          _
      $region316: #{transformer_forward.1} parent=5 // pred_fallthru
        _
    $region6: #{transformer_forward.1} parent=1 // loop_footer
      %s137 = sadd.s32 1, %s133
    $region7: #{transformer_forward.1} parent=1 // loop_footer_branch
      %132 = sbr.rel target = $region3
    $region8: #{transformer_forward.1} parent=1 // loop_exit
      _
    %7401 = vsyncpa [#allocation3], 1
    %s7402 = scalar_lea.sflag [#allocation3], 1
    %7403 = vsyncpa %s7402, 1
    %7404 = vsyncpa [#allocation6], 1
    %7405 = vsyncpa [#allocation9], 1
    %7406 = vsyncpa [#allocation12], 1
    %7407 = vsyncpa [#allocation15], 1
    %7408 = vsyncpa [#allocation18], 1
    %7409 = vsyncpa [#allocation21], 1
    %7410 = vsyncpa [#allocation24], 1
    %7411 = vsyncpa [#allocation4], 1
    %s7412 = scalar_lea.sflag [#allocation4], 1
    %7413 = vsyncpa %s7412, 1

</llo_original>
